<compile_context>
chip_gen: v6e
topology: v6e:2x2x1
jax: 0.10.0
libtpu: 0.0.40
codegen_flags: <defaults>
</compile_context>

<pallas_src>
import functools

import jax
import jax.numpy as jnp
from jax.experimental import pallas as pl
from jax.experimental.pallas import tpu as pltpu


def _round_up(x, m):
    return (x + m - 1) // m * m


def _cpad(c):
    return max(128, _round_up(c, 128))


# ----------------------------------------------------------------------------
# Fused tiled matmul kernel:  out = maybe_relu((x @ w) * scale + bias [+ res])
# ----------------------------------------------------------------------------
def _fused_matmul_kernel(*refs, apply_relu, has_res):
    if has_res:
        x_ref, w_ref, scale_ref, bias_ref, res_ref, o_ref, acc_ref = refs
    else:
        x_ref, w_ref, scale_ref, bias_ref, o_ref, acc_ref = refs
        res_ref = None

    k = pl.program_id(2)

    @pl.when(k == 0)
    def _():
        acc_ref[...] = jnp.zeros_like(acc_ref)

    acc_ref[...] += jnp.dot(x_ref[...], w_ref[...],
                            preferred_element_type=jnp.float32)

    @pl.when(k == pl.num_programs(2) - 1)
    def _():
        out = acc_ref[...] * scale_ref[...] + bias_ref[...]
        if has_res:
            out = out + res_ref[...].astype(jnp.float32)
        if apply_relu:
            out = jnp.maximum(out, 0.0)
        o_ref[...] = out.astype(o_ref.dtype)


def fused_matmul(x, w, scale, bias, res=None, *, apply_relu=False,
                 out_dtype=jnp.bfloat16, tm=256, tn=256, tk=512):
    """x:(M,K) w:(K,N) scale/bias:(N,) res:(M,N)|None -> (M,N) out_dtype."""
    M, K = x.shape
    _, N = w.shape

    tm = min(tm, _round_up(M, 16))     # bf16 sublane-friendly row tile
    tn = min(tn, _round_up(N, 128))    # lane-dense output columns
    tk = min(tk, _round_up(K, 128))
    Mp, Np, Kp = _round_up(M, tm), _round_up(N, tn), _round_up(K, tk)

    xb = jnp.pad(x.astype(jnp.bfloat16), ((0, Mp - M), (0, Kp - K)))
    wb = jnp.pad(w.astype(jnp.bfloat16), ((0, Kp - K), (0, Np - N)))
    sc = jnp.pad(scale.astype(jnp.float32), (0, Np - N)).reshape(1, Np)
    bi = jnp.pad(bias.astype(jnp.float32), (0, Np - N)).reshape(1, Np)

    has_res = res is not None
    inputs = [xb, wb, sc, bi]
    in_specs = [
        pl.BlockSpec((tm, tk), lambda i, j, k: (i, k)),
        pl.BlockSpec((tk, tn), lambda i, j, k: (k, j)),
        pl.BlockSpec((1, tn), lambda i, j, k: (0, j)),
        pl.BlockSpec((1, tn), lambda i, j, k: (0, j)),
    ]
    if has_res:
        inputs.append(jnp.pad(res.astype(jnp.bfloat16),
                              ((0, Mp - M), (0, Np - N))))
        in_specs.append(pl.BlockSpec((tm, tn), lambda i, j, k: (i, j)))

    out = pl.pallas_call(
        functools.partial(_fused_matmul_kernel,
                          apply_relu=apply_relu, has_res=has_res),
        out_shape=jax.ShapeDtypeStruct((Mp, Np), out_dtype),
        grid_spec=pltpu.PrefetchScalarGridSpec(
            num_scalar_prefetch=0,
            grid=(Mp // tm, Np // tn, Kp // tk),
            in_specs=in_specs,
            out_specs=pl.BlockSpec((tm, tn), lambda i, j, k: (i, j)),
            scratch_shapes=[pltpu.VMEM((tm, tn), jnp.float32)],
        ),
        compiler_params=pltpu.CompilerParams(
            dimension_semantics=("parallel", "parallel", "arbitrary"),
            # Tiles above use ~2 MiB live incl. double-buffering: fits v5e/v6e
            # (128 MiB) and v7x (64 MiB) with huge headroom.
            vmem_limit_bytes=32 * 1024 * 1024,
        ),
    )(*inputs)
    if (Mp, Np) != (M, N):
        out = out[:M, :N]
    return out


# ----------------------------------------------------------------------------
# Max-pool kernel (running max over the 9 window taps, tiled over rows)
# ----------------------------------------------------------------------------
def _maxpool_kernel(p_ref, o_ref):
    o_ref[...] = jnp.max(p_ref[...], axis=0)


def _max_pool_3x3_s2_p1(x):
    n, h, w, c = x.shape
    k, stride, pad = 3, 2, 1
    ho = (h + 2 * pad - k) // stride + 1
    wo = (w + 2 * pad - k) // stride + 1
    xp = jnp.pad(x, ((0, 0), (pad, pad), (pad, pad), (0, 0)),
                 constant_values=-jnp.inf)
    cols = []
    for i in range(k):
        for j in range(k):
            cols.append(xp[:, i:i + stride * ho:stride,
                           j:j + stride * wo:stride, :])
    patches = jnp.stack(cols, axis=0).reshape(k * k, n * ho * wo, c)

    m = n * ho * wo
    tm = min(256, _round_up(m, 16))
    mp = _round_up(m, tm)
    if mp != m:
        patches = jnp.pad(patches, ((0, 0), (0, mp - m), (0, 0)))

    out = pl.pallas_call(
        _maxpool_kernel,
        out_shape=jax.ShapeDtypeStruct((mp, c), x.dtype),
        grid_spec=pltpu.PrefetchScalarGridSpec(
            num_scalar_prefetch=0,
            grid=(mp // tm,),
            in_specs=[pl.BlockSpec((k * k, tm, c), lambda i: (0, i, 0))],
            out_specs=pl.BlockSpec((tm, c), lambda i: (i, 0)),
        ),
        compiler_params=pltpu.CompilerParams(
            dimension_semantics=("parallel",)),
    )(patches)
    return out[:m].reshape(n, ho, wo, c)


# ----------------------------------------------------------------------------
# Fused global-avg-pool + fc kernel (dropout is eval-mode identity)
# ----------------------------------------------------------------------------
def _avgpool_fc_kernel(x_ref, w_ref, b_ref, o_ref):
    pooled = jnp.mean(x_ref[...].astype(jnp.float32), axis=1)      # (N, C)
    o_ref[...] = (jnp.dot(pooled, w_ref[...],
                          preferred_element_type=jnp.float32) + b_ref[...])


def _avgpool_fc(x_nhwc, fc_w, fc_b):
    n, h, w, c = x_nhwc.shape
    cnum = fc_w.shape[0]
    return pl.pallas_call(
        _avgpool_fc_kernel,
        out_shape=jax.ShapeDtypeStruct((n, cnum), jnp.float32),
    )(x_nhwc.reshape(n, h * w, c),
      fc_w.T.astype(jnp.float32),
      fc_b.reshape(1, cnum).astype(jnp.float32))


# ----------------------------------------------------------------------------
# Plain-JAX glue: im2col, BN folding
# ----------------------------------------------------------------------------
def _im2col(x, kh, kw, stride, pad):
    n, h, w, c = x.shape
    xp = jnp.pad(x, ((0, 0), (pad, pad), (pad, pad), (0, 0)))
    ho = (h + 2 * pad - kh) // stride + 1
    wo = (w + 2 * pad - kw) // stride + 1
    cols = []
    for i in range(kh):
        for j in range(kw):
            cols.append(xp[:, i:i + stride * ho:stride,
                           j:j + stride * wo:stride, :])
    patches = jnp.stack(cols, axis=3)                 # (N, Ho, Wo, kh*kw, C)
    return patches.reshape(n * ho * wo, kh * kw * c), (n, ho, wo)


def _fold_bn(bn, eps=1e-5):
    scale = bn["gamma"] / jnp.sqrt(bn["var"] + eps)
    bias = bn["beta"] - bn["mean"] * scale
    return scale, bias


def _conv2d(x, w_mat, kh, kw, stride, pad, scale, bias, res=None, relu=False):
    patches, (n, ho, wo) = _im2col(x, kh, kw, stride, pad)
    cout = w_mat.shape[1]
    res_flat = None if res is None else res.reshape(n * ho * wo, cout)
    out = fused_matmul(patches, w_mat, scale, bias, res_flat, apply_relu=relu)
    return out.reshape(n, ho, wo, cout)


# ----------------------------------------------------------------------------
# ResNet blocks / model
# ----------------------------------------------------------------------------
def _resnet_block(x, p, stride):
    cout = p["w1"].shape[1]                       # lane-padded out channels
    ones = jnp.ones((cout,), jnp.float32)
    zeros = jnp.zeros((cout,), jnp.float32)

    # 1x1 shortcut conv (no BN in the reference model), no ReLU.
    identity = _conv2d(x, p["ws"], 1, 1, stride, 0, ones, zeros, None,
                       relu=False)

    s1, b1 = _fold_bn(p["bn1"])
    h = _conv2d(x, p["w1"], 3, 3, stride, 1, s1, b1, None, relu=True)

    s2, b2 = _fold_bn(p["bn2"])
    return _conv2d(h, p["w2"], 3, 3, 1, 1, s2, b2, identity, relu=True)


def resnet_forward(params, x_nchw):
    x = jnp.transpose(x_nchw, (0, 2, 3, 1)).astype(jnp.bfloat16)  # NCHW->NHWC

    s, b = _fold_bn(params["bn1"])
    x = _conv2d(x, params["conv1"], 7, 7, 2, 3, s, b, None, relu=True)
    x = _max_pool_3x3_s2_p1(x)

    x = _resnet_block(x, params["layer1"], stride=1)
    x = _resnet_block(x, params["layer2"], stride=2)
    x = _resnet_block(x, params["layer3"], stride=2)

    # layer3 output has exactly 256 real channels (no padding) -> fc directly.
    return _avgpool_fc(x, params["fc_w"], params["fc_b"])


# ----------------------------------------------------------------------------
# Deterministic synthetic parameters (PyTorch layouts converted to im2col
# matmul layout, channel dims pre-padded to lane-dense multiples of 128 with
# zeros so padded channels stay exactly zero through the network).
# ----------------------------------------------------------------------------
def init_params(key, class_num):
    keys = iter(jax.random.split(key, 64))

    def conv_w(cout, cin, kh, kw, cin_pad=None, cout_pad=None):
        cin_pad = cin if cin_pad is None else cin_pad
        cout_pad = cout if cout_pad is None else cout_pad
        w = 0.1 * jax.random.normal(next(keys), (cout, cin, kh, kw),
                                    jnp.float32)
        w = jnp.transpose(w, (2, 3, 1, 0))                  # (kh,kw,cin,cout)
        w = jnp.pad(w, ((0, 0), (0, 0),
                        (0, cin_pad - cin), (0, cout_pad - cout)))
        return w.reshape(kh * kw * cin_pad, cout_pad)

    def bn(c, c_pad=None):
        c_pad = c if c_pad is None else c_pad
        p = c_pad - c
        return dict(
            gamma=jnp.pad(1.0 + 0.1 * jax.random.normal(next(keys), (c,),
                                                        jnp.float32), (0, p)),
            beta=jnp.pad(0.1 * jax.random.normal(next(keys), (c,),
                                                 jnp.float32), (0, p)),
            mean=jnp.pad(0.1 * jax.random.normal(next(keys), (c,),
                                                 jnp.float32), (0, p)),
            var=jnp.pad(jax.random.uniform(next(keys), (c,), jnp.float32,
                                           minval=0.5, maxval=1.5),
                        (0, p), constant_values=1.0),
        )

    def block(cin, cout):
        cinp, coutp = _cpad(cin), _cpad(cout)
        return dict(
            w1=conv_w(cout, cin, 3, 3, cinp, coutp),
            w2=conv_w(cout, cout, 3, 3, coutp, coutp),
            ws=conv_w(cout, cin, 1, 1, cinp, coutp),
            bn1=bn(cout, coutp),
            bn2=bn(cout, coutp),
        )

    return dict(
        conv1=conv_w(32, 1, 7, 7, 1, _cpad(32)),
        bn1=bn(32, _cpad(32)),
        layer1=block(32, 64),
        layer2=block(64, 128),
        layer3=block(128, 256),
        fc_w=0.1 * jax.random.normal(next(keys), (class_num, 256),
                                     jnp.float32),
        fc_b=0.1 * jax.random.normal(next(keys), (class_num,), jnp.float32),
    )


if __name__ == "__main__":
    class_num = 10
    key = jax.random.PRNGKey(0)
    k_params, k_x = jax.random.split(key)
    params = init_params(k_params, class_num)
    # PyTorch-style NCHW input: batch=2, 1 channel, 32x32 spatial.
    x = jax.random.normal(k_x, (2, 1, 32, 32), jnp.float32)

    fwd = jax.jit(resnet_forward)
    out = fwd(params, x)
    jax.block_until_ready(out)
    assert out.shape == (2, class_num)
    print("KERNEL_OK")
</pallas_src>

<mosaic_0001>
module attributes {stable_mosaic.version = 11 : i64} {
  func.func @_fused_matmul_kernel(%arg0: i32, %arg1: i32, %arg2: i32, %arg3: memref<256x128xbf16, #tpu.memory_space<vmem>>, %arg4: memref<128x128xbf16, #tpu.memory_space<vmem>>, %arg5: memref<1x128xf32, #tpu.memory_space<vmem>>, %arg6: memref<1x128xf32, #tpu.memory_space<vmem>>, %arg7: memref<256x128xbf16, #tpu.memory_space<vmem>>, %arg8: memref<256x128xf32, #tpu.memory_space<vmem>>) attributes {dimension_semantics = [#tpu.dimension_semantics<parallel>, #tpu.dimension_semantics<parallel>, #tpu.dimension_semantics<arbitrary>], iteration_bounds = array<i64: 2, 1, 1>, scalar_prefetch = 0 : i64, scratch_operands = 1 : i64, tpu.core_type = #tpu.core_type<tc>, window_params = [{transform_indices = @transform_0, window_bounds = array<i64: 256, 128>}, {transform_indices = @transform_1, window_bounds = array<i64: 128, 128>}, {transform_indices = @transform_2, window_bounds = array<i64: 1, 128>}, {transform_indices = @transform_3, window_bounds = array<i64: 1, 128>}, {transform_indices = @transform_4, window_bounds = array<i64: 256, 128>}]} {
    %c0_i32 = arith.constant 0 : i32
    %0 = arith.cmpi eq, %arg2, %c0_i32 : i32
    %1 = arith.extui %0 : i1 to i32
    %c0_i32_0 = arith.constant 0 : i32
    %2 = arith.cmpi ne, %1, %c0_i32_0 : i32
    scf.if %2 {
      %cst_10 = arith.constant 0.000000e+00 : f32
      %12 = vector.broadcast %cst_10 : f32 to vector<256x128xf32>
      %c0_11 = arith.constant 0 : index
      %c0_12 = arith.constant 0 : index
      %13 = vector.load %arg8[%c0_11, %c0_12] : memref<256x128xf32, #tpu.memory_space<vmem>>, vector<256x128xf32>
      tpu.vector_store %arg8[%c0_11, %c0_12], %12 {strides = array<i32>} : memref<256x128xf32, #tpu.memory_space<vmem>>, vector<256x128xf32>,
    } else {
    }
    %c0 = arith.constant 0 : index
    %c0_1 = arith.constant 0 : index
    %3 = vector.load %arg8[%c0, %c0_1] : memref<256x128xf32, #tpu.memory_space<vmem>>, vector<256x128xf32>
    %c0_2 = arith.constant 0 : index
    %c0_3 = arith.constant 0 : index
    %4 = vector.load %arg3[%c0_2, %c0_3] : memref<256x128xbf16, #tpu.memory_space<vmem>>, vector<256x128xbf16>
    %c0_4 = arith.constant 0 : index
    %c0_5 = arith.constant 0 : index
    %5 = vector.load %arg4[%c0_4, %c0_5] : memref<128x128xbf16, #tpu.memory_space<vmem>>, vector<128x128xbf16>
    %cst = arith.constant dense<0.000000e+00> : vector<256x128xf32>
    %6 = tpu.matmul %4, %5, %cst {dimension_numbers = #tpu.dot_dimension_numbers<[1], [0], [0], [1], [0, 0, 1, 1], [], []>} : vector<256x128xbf16>, vector<128x128xbf16>, vector<256x128xf32> -> vector<256x128xf32>
    %7 = arith.addf %3, %6 : vector<256x128xf32>
    %c0_6 = arith.constant 0 : index
    %c0_7 = arith.constant 0 : index
    %8 = vector.load %arg8[%c0_6, %c0_7] : memref<256x128xf32, #tpu.memory_space<vmem>>, vector<256x128xf32>
    tpu.vector_store %arg8[%c0_6, %c0_7], %7 {strides = array<i32>} : memref<256x128xf32, #tpu.memory_space<vmem>>, vector<256x128xf32>,
    %c0_i32_8 = arith.constant 0 : i32
    %9 = arith.cmpi eq, %arg2, %c0_i32_8 : i32
    %10 = arith.extui %9 : i1 to i32
    %c0_i32_9 = arith.constant 0 : i32
    %11 = arith.cmpi ne, %10, %c0_i32_9 : i32
    scf.if %11 {
      %c0_10 = arith.constant 0 : index
      %c0_11 = arith.constant 0 : index
      %12 = vector.load %arg8[%c0_10, %c0_11] : memref<256x128xf32, #tpu.memory_space<vmem>>, vector<256x128xf32>
      %c0_12 = arith.constant 0 : index
      %c0_13 = arith.constant 0 : index
      %13 = vector.load %arg5[%c0_12, %c0_13] : memref<1x128xf32, #tpu.memory_space<vmem>>, vector<1x128xf32>
      %14 = vector.broadcast %13 : vector<1x128xf32> to vector<256x128xf32>
      %15 = arith.mulf %12, %14 : vector<256x128xf32>
      %c0_14 = arith.constant 0 : index
      %c0_15 = arith.constant 0 : index
      %16 = vector.load %arg6[%c0_14, %c0_15] : memref<1x128xf32, #tpu.memory_space<vmem>>, vector<1x128xf32>
      %17 = vector.broadcast %16 : vector<1x128xf32> to vector<256x128xf32>
      %18 = arith.addf %15, %17 : vector<256x128xf32>
      %cst_16 = arith.constant 0.000000e+00 : f32
      %19 = vector.broadcast %cst_16 : f32 to vector<256x128xf32>
      %20 = arith.maximumf %18, %19 : vector<256x128xf32>
      %21 = arith.truncf %20 : vector<256x128xf32> to vector<256x128xbf16>
      %c0_17 = arith.constant 0 : index
      %c0_18 = arith.constant 0 : index
      %22 = vector.load %arg7[%c0_17, %c0_18] : memref<256x128xbf16, #tpu.memory_space<vmem>>, vector<256x128xbf16>
      tpu.vector_store %arg7[%c0_17, %c0_18], %21 {strides = array<i32>} : memref<256x128xbf16, #tpu.memory_space<vmem>>, vector<256x128xbf16>,
    } else {
    }
    return
  }
  func.func @transform_0(%arg0: i32, %arg1: i32, %arg2: i32) -> (i32, i32) {
    %c0_i32 = arith.constant 0 : i32
    return %arg0, %arg2 : i32, i32
  }
  func.func @transform_1(%arg0: i32, %arg1: i32, %arg2: i32) -> (i32, i32) {
    %c0_i32 = arith.constant 0 : i32
    return %arg2, %arg1 : i32, i32
  }
  func.func @transform_2(%arg0: i32, %arg1: i32, %arg2: i32) -> (i32, i32) {
    %c0_i32 = arith.constant 0 : i32
    %c0_i32_0 = arith.constant 0 : i32
    return %c0_i32, %arg1 : i32, i32
  }
  func.func @transform_3(%arg0: i32, %arg1: i32, %arg2: i32) -> (i32, i32) {
    %c0_i32 = arith.constant 0 : i32
    %c0_i32_0 = arith.constant 0 : i32
    return %c0_i32, %arg1 : i32, i32
  }
  func.func @transform_4(%arg0: i32, %arg1: i32, %arg2: i32) -> (i32, i32) {
    %c0_i32 = arith.constant 0 : i32
    return %arg0, %arg1 : i32, i32
  }
}

module attributes {stable_mosaic.version = 11 : i64} {
  func.func @_maxpool_kernel(%arg0: i32, %arg1: memref<9x128x128xbf16, #tpu.memory_space<vmem>>, %arg2: memref<128x128xbf16, #tpu.memory_space<vmem>>) attributes {dimension_semantics = [#tpu.dimension_semantics<parallel>], iteration_bounds = array<i64: 1>, scalar_prefetch = 0 : i64, scratch_operands = 0 : i64, tpu.core_type = #tpu.core_type<tc>, window_params = [{transform_indices = @transform_0, window_bounds = array<i64: 9, 128, 128>}, {transform_indices = @transform_1, window_bounds = array<i64: 128, 128>}]} {
    %c0 = arith.constant 0 : index
    %c0_0 = arith.constant 0 : index
    %c0_1 = arith.constant 0 : index
    %0 = vector.load %arg1[%c0, %c0_0, %c0_1] : memref<9x128x128xbf16, #tpu.memory_space<vmem>>, vector<9x128x128xbf16>
    %cst = arith.constant dense<0xFF80> : vector<128x128xbf16>
    %1 = vector.multi_reduction <maximumf>, %0, %cst [0] : vector<9x128x128xbf16> to vector<128x128xbf16>
    %c0_2 = arith.constant 0 : index
    %c0_3 = arith.constant 0 : index
    %2 = vector.load %arg2[%c0_2, %c0_3] : memref<128x128xbf16, #tpu.memory_space<vmem>>, vector<128x128xbf16>
    tpu.vector_store %arg2[%c0_2, %c0_3], %1 {strides = array<i32>} : memref<128x128xbf16, #tpu.memory_space<vmem>>, vector<128x128xbf16>,
    return
  }
  func.func @transform_0(%arg0: i32) -> (i32, i32, i32) {
    %c0_i32 = arith.constant 0 : i32
    %c0_i32_0 = arith.constant 0 : i32
    %c0_i32_1 = arith.constant 0 : i32
    return %c0_i32, %arg0, %c0_i32_0 : i32, i32, i32
  }
  func.func @transform_1(%arg0: i32) -> (i32, i32) {
    %c0_i32 = arith.constant 0 : i32
    %c0_i32_0 = arith.constant 0 : i32
    return %arg0, %c0_i32 : i32, i32
  }
}

module attributes {stable_mosaic.version = 11 : i64} {
  func.func @_fused_matmul_kernel(%arg0: i32, %arg1: i32, %arg2: i32, %arg3: memref<128x512xbf16, #tpu.memory_space<vmem>>, %arg4: memref<512x128xbf16, #tpu.memory_space<vmem>>, %arg5: memref<1x128xf32, #tpu.memory_space<vmem>>, %arg6: memref<1x128xf32, #tpu.memory_space<vmem>>, %arg7: memref<128x128xbf16, #tpu.memory_space<vmem>>, %arg8: memref<128x128xf32, #tpu.memory_space<vmem>>) attributes {dimension_semantics = [#tpu.dimension_semantics<parallel>, #tpu.dimension_semantics<parallel>, #tpu.dimension_semantics<arbitrary>], iteration_bounds = array<i64: 1, 1, 3>, scalar_prefetch = 0 : i64, scratch_operands = 1 : i64, tpu.core_type = #tpu.core_type<tc>, window_params = [{transform_indices = @transform_0, window_bounds = array<i64: 128, 512>}, {transform_indices = @transform_1, window_bounds = array<i64: 512, 128>}, {transform_indices = @transform_2, window_bounds = array<i64: 1, 128>}, {transform_indices = @transform_3, window_bounds = array<i64: 1, 128>}, {transform_indices = @transform_4, window_bounds = array<i64: 128, 128>}]} {
    %c0_i32 = arith.constant 0 : i32
    %0 = arith.cmpi eq, %arg2, %c0_i32 : i32
    %1 = arith.extui %0 : i1 to i32
    %c0_i32_0 = arith.constant 0 : i32
    %2 = arith.cmpi ne, %1, %c0_i32_0 : i32
    scf.if %2 {
      %cst_9 = arith.constant 0.000000e+00 : f32
      %12 = vector.broadcast %cst_9 : f32 to vector<128x128xf32>
      %c0_10 = arith.constant 0 : index
      %c0_11 = arith.constant 0 : index
      %13 = vector.load %arg8[%c0_10, %c0_11] : memref<128x128xf32, #tpu.memory_space<vmem>>, vector<128x128xf32>
      tpu.vector_store %arg8[%c0_10, %c0_11], %12 {strides = array<i32>} : memref<128x128xf32, #tpu.memory_space<vmem>>, vector<128x128xf32>,
    } else {
    }
    %c0 = arith.constant 0 : index
    %c0_1 = arith.constant 0 : index
    %3 = vector.load %arg8[%c0, %c0_1] : memref<128x128xf32, #tpu.memory_space<vmem>>, vector<128x128xf32>
    %c0_2 = arith.constant 0 : index
    %c0_3 = arith.constant 0 : index
    %4 = vector.load %arg3[%c0_2, %c0_3] : memref<128x512xbf16, #tpu.memory_space<vmem>>, vector<128x512xbf16>
    %c0_4 = arith.constant 0 : index
    %c0_5 = arith.constant 0 : index
    %5 = vector.load %arg4[%c0_4, %c0_5] : memref<512x128xbf16, #tpu.memory_space<vmem>>, vector<512x128xbf16>
    %cst = arith.constant dense<0.000000e+00> : vector<128x128xf32>
    %6 = tpu.matmul %4, %5, %cst {dimension_numbers = #tpu.dot_dimension_numbers<[1], [0], [0], [1], [0, 0, 1, 1], [], []>} : vector<128x512xbf16>, vector<512x128xbf16>, vector<128x128xf32> -> vector<128x128xf32>
    %7 = arith.addf %3, %6 : vector<128x128xf32>
    %c0_6 = arith.constant 0 : index
    %c0_7 = arith.constant 0 : index
    %8 = vector.load %arg8[%c0_6, %c0_7] : memref<128x128xf32, #tpu.memory_space<vmem>>, vector<128x128xf32>
    tpu.vector_store %arg8[%c0_6, %c0_7], %7 {strides = array<i32>} : memref<128x128xf32, #tpu.memory_space<vmem>>, vector<128x128xf32>,
    %c2_i32 = arith.constant 2 : i32
    %9 = arith.cmpi eq, %arg2, %c2_i32 : i32
    %10 = arith.extui %9 : i1 to i32
    %c0_i32_8 = arith.constant 0 : i32
    %11 = arith.cmpi ne, %10, %c0_i32_8 : i32
    scf.if %11 {
      %c0_9 = arith.constant 0 : index
      %c0_10 = arith.constant 0 : index
      %12 = vector.load %arg8[%c0_9, %c0_10] : memref<128x128xf32, #tpu.memory_space<vmem>>, vector<128x128xf32>
      %c0_11 = arith.constant 0 : index
      %c0_12 = arith.constant 0 : index
      %13 = vector.load %arg5[%c0_11, %c0_12] : memref<1x128xf32, #tpu.memory_space<vmem>>, vector<1x128xf32>
      %14 = vector.broadcast %13 : vector<1x128xf32> to vector<128x128xf32>
      %15 = arith.mulf %12, %14 : vector<128x128xf32>
      %c0_13 = arith.constant 0 : index
      %c0_14 = arith.constant 0 : index
      %16 = vector.load %arg6[%c0_13, %c0_14] : memref<1x128xf32, #tpu.memory_space<vmem>>, vector<1x128xf32>
      %17 = vector.broadcast %16 : vector<1x128xf32> to vector<128x128xf32>
      %18 = arith.addf %15, %17 : vector<128x128xf32>
      %cst_15 = arith.constant 0.000000e+00 : f32
      %19 = vector.broadcast %cst_15 : f32 to vector<128x128xf32>
      %20 = arith.maximumf %18, %19 : vector<128x128xf32>
      %21 = arith.truncf %20 : vector<128x128xf32> to vector<128x128xbf16>
      %c0_16 = arith.constant 0 : index
      %c0_17 = arith.constant 0 : index
      %22 = vector.load %arg7[%c0_16, %c0_17] : memref<128x128xbf16, #tpu.memory_space<vmem>>, vector<128x128xbf16>
      tpu.vector_store %arg7[%c0_16, %c0_17], %21 {strides = array<i32>} : memref<128x128xbf16, #tpu.memory_space<vmem>>, vector<128x128xbf16>,
    } else {
    }
    return
  }
  func.func @transform_0(%arg0: i32, %arg1: i32, %arg2: i32) -> (i32, i32) {
    %c0_i32 = arith.constant 0 : i32
    return %arg0, %arg2 : i32, i32
  }
  func.func @transform_1(%arg0: i32, %arg1: i32, %arg2: i32) -> (i32, i32) {
    %c0_i32 = arith.constant 0 : i32
    return %arg2, %arg1 : i32, i32
  }
  func.func @transform_2(%arg0: i32, %arg1: i32, %arg2: i32) -> (i32, i32) {
    %c0_i32 = arith.constant 0 : i32
    %c0_i32_0 = arith.constant 0 : i32
    return %c0_i32, %arg1 : i32, i32
  }
  func.func @transform_3(%arg0: i32, %arg1: i32, %arg2: i32) -> (i32, i32) {
    %c0_i32 = arith.constant 0 : i32
    %c0_i32_0 = arith.constant 0 : i32
    return %c0_i32, %arg1 : i32, i32
  }
  func.func @transform_4(%arg0: i32, %arg1: i32, %arg2: i32) -> (i32, i32) {
    %c0_i32 = arith.constant 0 : i32
    return %arg0, %arg1 : i32, i32
  }
}

module attributes {stable_mosaic.version = 11 : i64} {
  func.func @_fused_matmul_kernel(%arg0: i32, %arg1: i32, %arg2: i32, %arg3: memref<128x128xbf16, #tpu.memory_space<vmem>>, %arg4: memref<128x128xbf16, #tpu.memory_space<vmem>>, %arg5: memref<1x128xf32, #tpu.memory_space<vmem>>, %arg6: memref<1x128xf32, #tpu.memory_space<vmem>>, %arg7: memref<128x128xbf16, #tpu.memory_space<vmem>>, %arg8: memref<128x128xf32, #tpu.memory_space<vmem>>) attributes {dimension_semantics = [#tpu.dimension_semantics<parallel>, #tpu.dimension_semantics<parallel>, #tpu.dimension_semantics<arbitrary>], iteration_bounds = array<i64: 1, 1, 1>, scalar_prefetch = 0 : i64, scratch_operands = 1 : i64, tpu.core_type = #tpu.core_type<tc>, window_params = [{transform_indices = @transform_0, window_bounds = array<i64: 128, 128>}, {transform_indices = @transform_1, window_bounds = array<i64: 128, 128>}, {transform_indices = @transform_2, window_bounds = array<i64: 1, 128>}, {transform_indices = @transform_3, window_bounds = array<i64: 1, 128>}, {transform_indices = @transform_4, window_bounds = array<i64: 128, 128>}]} {
    %c0_i32 = arith.constant 0 : i32
    %0 = arith.cmpi eq, %arg2, %c0_i32 : i32
    %1 = arith.extui %0 : i1 to i32
    %c0_i32_0 = arith.constant 0 : i32
    %2 = arith.cmpi ne, %1, %c0_i32_0 : i32
    scf.if %2 {
      %cst_10 = arith.constant 0.000000e+00 : f32
      %12 = vector.broadcast %cst_10 : f32 to vector<128x128xf32>
      %c0_11 = arith.constant 0 : index
      %c0_12 = arith.constant 0 : index
      %13 = vector.load %arg8[%c0_11, %c0_12] : memref<128x128xf32, #tpu.memory_space<vmem>>, vector<128x128xf32>
      tpu.vector_store %arg8[%c0_11, %c0_12], %12 {strides = array<i32>} : memref<128x128xf32, #tpu.memory_space<vmem>>, vector<128x128xf32>,
    } else {
    }
    %c0 = arith.constant 0 : index
    %c0_1 = arith.constant 0 : index
    %3 = vector.load %arg8[%c0, %c0_1] : memref<128x128xf32, #tpu.memory_space<vmem>>, vector<128x128xf32>
    %c0_2 = arith.constant 0 : index
    %c0_3 = arith.constant 0 : index
    %4 = vector.load %arg3[%c0_2, %c0_3] : memref<128x128xbf16, #tpu.memory_space<vmem>>, vector<128x128xbf16>
    %c0_4 = arith.constant 0 : index
    %c0_5 = arith.constant 0 : index
    %5 = vector.load %arg4[%c0_4, %c0_5] : memref<128x128xbf16, #tpu.memory_space<vmem>>, vector<128x128xbf16>
    %cst = arith.constant dense<0.000000e+00> : vector<128x128xf32>
    %6 = tpu.matmul %4, %5, %cst {dimension_numbers = #tpu.dot_dimension_numbers<[1], [0], [0], [1], [0, 0, 1, 1], [], []>} : vector<128x128xbf16>, vector<128x128xbf16>, vector<128x128xf32> -> vector<128x128xf32>
    %7 = arith.addf %3, %6 : vector<128x128xf32>
    %c0_6 = arith.constant 0 : index
    %c0_7 = arith.constant 0 : index
    %8 = vector.load %arg8[%c0_6, %c0_7] : memref<128x128xf32, #tpu.memory_space<vmem>>, vector<128x128xf32>
    tpu.vector_store %arg8[%c0_6, %c0_7], %7 {strides = array<i32>} : memref<128x128xf32, #tpu.memory_space<vmem>>, vector<128x128xf32>,
    %c0_i32_8 = arith.constant 0 : i32
    %9 = arith.cmpi eq, %arg2, %c0_i32_8 : i32
    %10 = arith.extui %9 : i1 to i32
    %c0_i32_9 = arith.constant 0 : i32
    %11 = arith.cmpi ne, %10, %c0_i32_9 : i32
    scf.if %11 {
      %c0_10 = arith.constant 0 : index
      %c0_11 = arith.constant 0 : index
      %12 = vector.load %arg8[%c0_10, %c0_11] : memref<128x128xf32, #tpu.memory_space<vmem>>, vector<128x128xf32>
      %c0_12 = arith.constant 0 : index
      %c0_13 = arith.constant 0 : index
      %13 = vector.load %arg5[%c0_12, %c0_13] : memref<1x128xf32, #tpu.memory_space<vmem>>, vector<1x128xf32>
      %14 = vector.broadcast %13 : vector<1x128xf32> to vector<128x128xf32>
      %15 = arith.mulf %12, %14 : vector<128x128xf32>
      %c0_14 = arith.constant 0 : index
      %c0_15 = arith.constant 0 : index
      %16 = vector.load %arg6[%c0_14, %c0_15] : memref<1x128xf32, #tpu.memory_space<vmem>>, vector<1x128xf32>
      %17 = vector.broadcast %16 : vector<1x128xf32> to vector<128x128xf32>
      %18 = arith.addf %15, %17 : vector<128x128xf32>
      %19 = arith.truncf %18 : vector<128x128xf32> to vector<128x128xbf16>
      %c0_16 = arith.constant 0 : index
      %c0_17 = arith.constant 0 : index
      %20 = vector.load %arg7[%c0_16, %c0_17] : memref<128x128xbf16, #tpu.memory_space<vmem>>, vector<128x128xbf16>
      tpu.vector_store %arg7[%c0_16, %c0_17], %19 {strides = array<i32>} : memref<128x128xbf16, #tpu.memory_space<vmem>>, vector<128x128xbf16>,
    } else {
    }
    return
  }
  func.func @transform_0(%arg0: i32, %arg1: i32, %arg2: i32) -> (i32, i32) {
    %c0_i32 = arith.constant 0 : i32
    return %arg0, %arg2 : i32, i32
  }
  func.func @transform_1(%arg0: i32, %arg1: i32, %arg2: i32) -> (i32, i32) {
    %c0_i32 = arith.constant 0 : i32
    return %arg2, %arg1 : i32, i32
  }
  func.func @transform_2(%arg0: i32, %arg1: i32, %arg2: i32) -> (i32, i32) {
    %c0_i32 = arith.constant 0 : i32
    %c0_i32_0 = arith.constant 0 : i32
    return %c0_i32, %arg1 : i32, i32
  }
  func.func @transform_3(%arg0: i32, %arg1: i32, %arg2: i32) -> (i32, i32) {
    %c0_i32 = arith.constant 0 : i32
    %c0_i32_0 = arith.constant 0 : i32
    return %c0_i32, %arg1 : i32, i32
  }
  func.func @transform_4(%arg0: i32, %arg1: i32, %arg2: i32) -> (i32, i32) {
    %c0_i32 = arith.constant 0 : i32
    return %arg0, %arg1 : i32, i32
  }
}

module attributes {stable_mosaic.version = 11 : i64} {
  func.func @_fused_matmul_kernel(%arg0: i32, %arg1: i32, %arg2: i32, %arg3: memref<128x512xbf16, #tpu.memory_space<vmem>>, %arg4: memref<512x128xbf16, #tpu.memory_space<vmem>>, %arg5: memref<1x128xf32, #tpu.memory_space<vmem>>, %arg6: memref<1x128xf32, #tpu.memory_space<vmem>>, %arg7: memref<128x128xbf16, #tpu.memory_space<vmem>>, %arg8: memref<128x128xbf16, #tpu.memory_space<vmem>>, %arg9: memref<128x128xf32, #tpu.memory_space<vmem>>) attributes {dimension_semantics = [#tpu.dimension_semantics<parallel>, #tpu.dimension_semantics<parallel>, #tpu.dimension_semantics<arbitrary>], iteration_bounds = array<i64: 1, 1, 3>, scalar_prefetch = 0 : i64, scratch_operands = 1 : i64, tpu.core_type = #tpu.core_type<tc>, window_params = [{transform_indices = @transform_0, window_bounds = array<i64: 128, 512>}, {transform_indices = @transform_1, window_bounds = array<i64: 512, 128>}, {transform_indices = @transform_2, window_bounds = array<i64: 1, 128>}, {transform_indices = @transform_3, window_bounds = array<i64: 1, 128>}, {transform_indices = @transform_4, window_bounds = array<i64: 128, 128>}, {transform_indices = @transform_5, window_bounds = array<i64: 128, 128>}]} {
    %c0_i32 = arith.constant 0 : i32
    %0 = arith.cmpi eq, %arg2, %c0_i32 : i32
    %1 = arith.extui %0 : i1 to i32
    %c0_i32_0 = arith.constant 0 : i32
    %2 = arith.cmpi ne, %1, %c0_i32_0 : i32
    scf.if %2 {
      %cst_9 = arith.constant 0.000000e+00 : f32
      %12 = vector.broadcast %cst_9 : f32 to vector<128x128xf32>
      %c0_10 = arith.constant 0 : index
      %c0_11 = arith.constant 0 : index
      %13 = vector.load %arg9[%c0_10, %c0_11] : memref<128x128xf32, #tpu.memory_space<vmem>>, vector<128x128xf32>
      tpu.vector_store %arg9[%c0_10, %c0_11], %12 {strides = array<i32>} : memref<128x128xf32, #tpu.memory_space<vmem>>, vector<128x128xf32>,
    } else {
    }
    %c0 = arith.constant 0 : index
    %c0_1 = arith.constant 0 : index
    %3 = vector.load %arg9[%c0, %c0_1] : memref<128x128xf32, #tpu.memory_space<vmem>>, vector<128x128xf32>
    %c0_2 = arith.constant 0 : index
    %c0_3 = arith.constant 0 : index
    %4 = vector.load %arg3[%c0_2, %c0_3] : memref<128x512xbf16, #tpu.memory_space<vmem>>, vector<128x512xbf16>
    %c0_4 = arith.constant 0 : index
    %c0_5 = arith.constant 0 : index
    %5 = vector.load %arg4[%c0_4, %c0_5] : memref<512x128xbf16, #tpu.memory_space<vmem>>, vector<512x128xbf16>
    %cst = arith.constant dense<0.000000e+00> : vector<128x128xf32>
    %6 = tpu.matmul %4, %5, %cst {dimension_numbers = #tpu.dot_dimension_numbers<[1], [0], [0], [1], [0, 0, 1, 1], [], []>} : vector<128x512xbf16>, vector<512x128xbf16>, vector<128x128xf32> -> vector<128x128xf32>
    %7 = arith.addf %3, %6 : vector<128x128xf32>
    %c0_6 = arith.constant 0 : index
    %c0_7 = arith.constant 0 : index
    %8 = vector.load %arg9[%c0_6, %c0_7] : memref<128x128xf32, #tpu.memory_space<vmem>>, vector<128x128xf32>
    tpu.vector_store %arg9[%c0_6, %c0_7], %7 {strides = array<i32>} : memref<128x128xf32, #tpu.memory_space<vmem>>, vector<128x128xf32>,
    %c2_i32 = arith.constant 2 : i32
    %9 = arith.cmpi eq, %arg2, %c2_i32 : i32
    %10 = arith.extui %9 : i1 to i32
    %c0_i32_8 = arith.constant 0 : i32
    %11 = arith.cmpi ne, %10, %c0_i32_8 : i32
    scf.if %11 {
      %c0_9 = arith.constant 0 : index
      %c0_10 = arith.constant 0 : index
      %12 = vector.load %arg9[%c0_9, %c0_10] : memref<128x128xf32, #tpu.memory_space<vmem>>, vector<128x128xf32>
      %c0_11 = arith.constant 0 : index
      %c0_12 = arith.constant 0 : index
      %13 = vector.load %arg5[%c0_11, %c0_12] : memref<1x128xf32, #tpu.memory_space<vmem>>, vector<1x128xf32>
      %14 = vector.broadcast %13 : vector<1x128xf32> to vector<128x128xf32>
      %15 = arith.mulf %12, %14 : vector<128x128xf32>
      %c0_13 = arith.constant 0 : index
      %c0_14 = arith.constant 0 : index
      %16 = vector.load %arg6[%c0_13, %c0_14] : memref<1x128xf32, #tpu.memory_space<vmem>>, vector<1x128xf32>
      %17 = vector.broadcast %16 : vector<1x128xf32> to vector<128x128xf32>
      %18 = arith.addf %15, %17 : vector<128x128xf32>
      %c0_15 = arith.constant 0 : index
      %c0_16 = arith.constant 0 : index
      %19 = vector.load %arg7[%c0_15, %c0_16] : memref<128x128xbf16, #tpu.memory_space<vmem>>, vector<128x128xbf16>
      %20 = arith.extf %19 : vector<128x128xbf16> to vector<128x128xf32>
      %21 = arith.addf %18, %20 : vector<128x128xf32>
      %cst_17 = arith.constant 0.000000e+00 : f32
      %22 = vector.broadcast %cst_17 : f32 to vector<128x128xf32>
      %23 = arith.maximumf %21, %22 : vector<128x128xf32>
      %24 = arith.truncf %23 : vector<128x128xf32> to vector<128x128xbf16>
      %c0_18 = arith.constant 0 : index
      %c0_19 = arith.constant 0 : index
      %25 = vector.load %arg8[%c0_18, %c0_19] : memref<128x128xbf16, #tpu.memory_space<vmem>>, vector<128x128xbf16>
      tpu.vector_store %arg8[%c0_18, %c0_19], %24 {strides = array<i32>} : memref<128x128xbf16, #tpu.memory_space<vmem>>, vector<128x128xbf16>,
    } else {
    }
    return
  }
  func.func @transform_0(%arg0: i32, %arg1: i32, %arg2: i32) -> (i32, i32) {
    %c0_i32 = arith.constant 0 : i32
    return %arg0, %arg2 : i32, i32
  }
  func.func @transform_1(%arg0: i32, %arg1: i32, %arg2: i32) -> (i32, i32) {
    %c0_i32 = arith.constant 0 : i32
    return %arg2, %arg1 : i32, i32
  }
  func.func @transform_2(%arg0: i32, %arg1: i32, %arg2: i32) -> (i32, i32) {
    %c0_i32 = arith.constant 0 : i32
    %c0_i32_0 = arith.constant 0 : i32
    return %c0_i32, %arg1 : i32, i32
  }
  func.func @transform_3(%arg0: i32, %arg1: i32, %arg2: i32) -> (i32, i32) {
    %c0_i32 = arith.constant 0 : i32
    %c0_i32_0 = arith.constant 0 : i32
    return %c0_i32, %arg1 : i32, i32
  }
  func.func @transform_4(%arg0: i32, %arg1: i32, %arg2: i32) -> (i32, i32) {
    %c0_i32 = arith.constant 0 : i32
    return %arg0, %arg1 : i32, i32
  }
  func.func @transform_5(%arg0: i32, %arg1: i32, %arg2: i32) -> (i32, i32) {
    %c0_i32 = arith.constant 0 : i32
    return %arg0, %arg1 : i32, i32
  }
}

module attributes {stable_mosaic.version = 11 : i64} {
  func.func @_fused_matmul_kernel(%arg0: i32, %arg1: i32, %arg2: i32, %arg3: memref<32x512xbf16, #tpu.memory_space<vmem>>, %arg4: memref<512x128xbf16, #tpu.memory_space<vmem>>, %arg5: memref<1x128xf32, #tpu.memory_space<vmem>>, %arg6: memref<1x128xf32, #tpu.memory_space<vmem>>, %arg7: memref<32x128xbf16, #tpu.memory_space<vmem>>, %arg8: memref<32x128xf32, #tpu.memory_space<vmem>>) attributes {dimension_semantics = [#tpu.dimension_semantics<parallel>, #tpu.dimension_semantics<parallel>, #tpu.dimension_semantics<arbitrary>], iteration_bounds = array<i64: 1, 1, 3>, scalar_prefetch = 0 : i64, scratch_operands = 1 : i64, tpu.core_type = #tpu.core_type<tc>, window_params = [{transform_indices = @transform_0, window_bounds = array<i64: 32, 512>}, {transform_indices = @transform_1, window_bounds = array<i64: 512, 128>}, {transform_indices = @transform_2, window_bounds = array<i64: 1, 128>}, {transform_indices = @transform_3, window_bounds = array<i64: 1, 128>}, {transform_indices = @transform_4, window_bounds = array<i64: 32, 128>}]} {
    %c0_i32 = arith.constant 0 : i32
    %0 = arith.cmpi eq, %arg2, %c0_i32 : i32
    %1 = arith.extui %0 : i1 to i32
    %c0_i32_0 = arith.constant 0 : i32
    %2 = arith.cmpi ne, %1, %c0_i32_0 : i32
    scf.if %2 {
      %cst_9 = arith.constant 0.000000e+00 : f32
      %12 = vector.broadcast %cst_9 : f32 to vector<32x128xf32>
      %c0_10 = arith.constant 0 : index
      %c0_11 = arith.constant 0 : index
      %13 = vector.load %arg8[%c0_10, %c0_11] : memref<32x128xf32, #tpu.memory_space<vmem>>, vector<32x128xf32>
      tpu.vector_store %arg8[%c0_10, %c0_11], %12 {strides = array<i32>} : memref<32x128xf32, #tpu.memory_space<vmem>>, vector<32x128xf32>,
    } else {
    }
    %c0 = arith.constant 0 : index
    %c0_1 = arith.constant 0 : index
    %3 = vector.load %arg8[%c0, %c0_1] : memref<32x128xf32, #tpu.memory_space<vmem>>, vector<32x128xf32>
    %c0_2 = arith.constant 0 : index
    %c0_3 = arith.constant 0 : index
    %4 = vector.load %arg3[%c0_2, %c0_3] : memref<32x512xbf16, #tpu.memory_space<vmem>>, vector<32x512xbf16>
    %c0_4 = arith.constant 0 : index
    %c0_5 = arith.constant 0 : index
    %5 = vector.load %arg4[%c0_4, %c0_5] : memref<512x128xbf16, #tpu.memory_space<vmem>>, vector<512x128xbf16>
    %cst = arith.constant dense<0.000000e+00> : vector<32x128xf32>
    %6 = tpu.matmul %4, %5, %cst {dimension_numbers = #tpu.dot_dimension_numbers<[1], [0], [0], [1], [0, 0, 1, 1], [], []>} : vector<32x512xbf16>, vector<512x128xbf16>, vector<32x128xf32> -> vector<32x128xf32>
    %7 = arith.addf %3, %6 : vector<32x128xf32>
    %c0_6 = arith.constant 0 : index
    %c0_7 = arith.constant 0 : index
    %8 = vector.load %arg8[%c0_6, %c0_7] : memref<32x128xf32, #tpu.memory_space<vmem>>, vector<32x128xf32>
    tpu.vector_store %arg8[%c0_6, %c0_7], %7 {strides = array<i32>} : memref<32x128xf32, #tpu.memory_space<vmem>>, vector<32x128xf32>,
    %c2_i32 = arith.constant 2 : i32
    %9 = arith.cmpi eq, %arg2, %c2_i32 : i32
    %10 = arith.extui %9 : i1 to i32
    %c0_i32_8 = arith.constant 0 : i32
    %11 = arith.cmpi ne, %10, %c0_i32_8 : i32
    scf.if %11 {
      %c0_9 = arith.constant 0 : index
      %c0_10 = arith.constant 0 : index
      %12 = vector.load %arg8[%c0_9, %c0_10] : memref<32x128xf32, #tpu.memory_space<vmem>>, vector<32x128xf32>
      %c0_11 = arith.constant 0 : index
      %c0_12 = arith.constant 0 : index
      %13 = vector.load %arg5[%c0_11, %c0_12] : memref<1x128xf32, #tpu.memory_space<vmem>>, vector<1x128xf32>
      %14 = vector.broadcast %13 : vector<1x128xf32> to vector<32x128xf32>
      %15 = arith.mulf %12, %14 : vector<32x128xf32>
      %c0_13 = arith.constant 0 : index
      %c0_14 = arith.constant 0 : index
      %16 = vector.load %arg6[%c0_13, %c0_14] : memref<1x128xf32, #tpu.memory_space<vmem>>, vector<1x128xf32>
      %17 = vector.broadcast %16 : vector<1x128xf32> to vector<32x128xf32>
      %18 = arith.addf %15, %17 : vector<32x128xf32>
      %cst_15 = arith.constant 0.000000e+00 : f32
      %19 = vector.broadcast %cst_15 : f32 to vector<32x128xf32>
      %20 = arith.maximumf %18, %19 : vector<32x128xf32>
      %21 = arith.truncf %20 : vector<32x128xf32> to vector<32x128xbf16>
      %c0_16 = arith.constant 0 : index
      %c0_17 = arith.constant 0 : index
      %22 = vector.load %arg7[%c0_16, %c0_17] : memref<32x128xbf16, #tpu.memory_space<vmem>>, vector<32x128xbf16>
      tpu.vector_store %arg7[%c0_16, %c0_17], %21 {strides = array<i32>} : memref<32x128xbf16, #tpu.memory_space<vmem>>, vector<32x128xbf16>,
    } else {
    }
    return
  }
  func.func @transform_0(%arg0: i32, %arg1: i32, %arg2: i32) -> (i32, i32) {
    %c0_i32 = arith.constant 0 : i32
    return %arg0, %arg2 : i32, i32
  }
  func.func @transform_1(%arg0: i32, %arg1: i32, %arg2: i32) -> (i32, i32) {
    %c0_i32 = arith.constant 0 : i32
    return %arg2, %arg1 : i32, i32
  }
  func.func @transform_2(%arg0: i32, %arg1: i32, %arg2: i32) -> (i32, i32) {
    %c0_i32 = arith.constant 0 : i32
    %c0_i32_0 = arith.constant 0 : i32
    return %c0_i32, %arg1 : i32, i32
  }
  func.func @transform_3(%arg0: i32, %arg1: i32, %arg2: i32) -> (i32, i32) {
    %c0_i32 = arith.constant 0 : i32
    %c0_i32_0 = arith.constant 0 : i32
    return %c0_i32, %arg1 : i32, i32
  }
  func.func @transform_4(%arg0: i32, %arg1: i32, %arg2: i32) -> (i32, i32) {
    %c0_i32 = arith.constant 0 : i32
    return %arg0, %arg1 : i32, i32
  }
}

module attributes {stable_mosaic.version = 11 : i64} {
  func.func @_fused_matmul_kernel(%arg0: i32, %arg1: i32, %arg2: i32, %arg3: memref<32x128xbf16, #tpu.memory_space<vmem>>, %arg4: memref<128x128xbf16, #tpu.memory_space<vmem>>, %arg5: memref<1x128xf32, #tpu.memory_space<vmem>>, %arg6: memref<1x128xf32, #tpu.memory_space<vmem>>, %arg7: memref<32x128xbf16, #tpu.memory_space<vmem>>, %arg8: memref<32x128xf32, #tpu.memory_space<vmem>>) attributes {dimension_semantics = [#tpu.dimension_semantics<parallel>, #tpu.dimension_semantics<parallel>, #tpu.dimension_semantics<arbitrary>], iteration_bounds = array<i64: 1, 1, 1>, scalar_prefetch = 0 : i64, scratch_operands = 1 : i64, tpu.core_type = #tpu.core_type<tc>, window_params = [{transform_indices = @transform_0, window_bounds = array<i64: 32, 128>}, {transform_indices = @transform_1, window_bounds = array<i64: 128, 128>}, {transform_indices = @transform_2, window_bounds = array<i64: 1, 128>}, {transform_indices = @transform_3, window_bounds = array<i64: 1, 128>}, {transform_indices = @transform_4, window_bounds = array<i64: 32, 128>}]} {
    %c0_i32 = arith.constant 0 : i32
    %0 = arith.cmpi eq, %arg2, %c0_i32 : i32
    %1 = arith.extui %0 : i1 to i32
    %c0_i32_0 = arith.constant 0 : i32
    %2 = arith.cmpi ne, %1, %c0_i32_0 : i32
    scf.if %2 {
      %cst_10 = arith.constant 0.000000e+00 : f32
      %12 = vector.broadcast %cst_10 : f32 to vector<32x128xf32>
      %c0_11 = arith.constant 0 : index
      %c0_12 = arith.constant 0 : index
      %13 = vector.load %arg8[%c0_11, %c0_12] : memref<32x128xf32, #tpu.memory_space<vmem>>, vector<32x128xf32>
      tpu.vector_store %arg8[%c0_11, %c0_12], %12 {strides = array<i32>} : memref<32x128xf32, #tpu.memory_space<vmem>>, vector<32x128xf32>,
    } else {
    }
    %c0 = arith.constant 0 : index
    %c0_1 = arith.constant 0 : index
    %3 = vector.load %arg8[%c0, %c0_1] : memref<32x128xf32, #tpu.memory_space<vmem>>, vector<32x128xf32>
    %c0_2 = arith.constant 0 : index
    %c0_3 = arith.constant 0 : index
    %4 = vector.load %arg3[%c0_2, %c0_3] : memref<32x128xbf16, #tpu.memory_space<vmem>>, vector<32x128xbf16>
    %c0_4 = arith.constant 0 : index
    %c0_5 = arith.constant 0 : index
    %5 = vector.load %arg4[%c0_4, %c0_5] : memref<128x128xbf16, #tpu.memory_space<vmem>>, vector<128x128xbf16>
    %cst = arith.constant dense<0.000000e+00> : vector<32x128xf32>
    %6 = tpu.matmul %4, %5, %cst {dimension_numbers = #tpu.dot_dimension_numbers<[1], [0], [0], [1], [0, 0, 1, 1], [], []>} : vector<32x128xbf16>, vector<128x128xbf16>, vector<32x128xf32> -> vector<32x128xf32>
    %7 = arith.addf %3, %6 : vector<32x128xf32>
    %c0_6 = arith.constant 0 : index
    %c0_7 = arith.constant 0 : index
    %8 = vector.load %arg8[%c0_6, %c0_7] : memref<32x128xf32, #tpu.memory_space<vmem>>, vector<32x128xf32>
    tpu.vector_store %arg8[%c0_6, %c0_7], %7 {strides = array<i32>} : memref<32x128xf32, #tpu.memory_space<vmem>>, vector<32x128xf32>,
    %c0_i32_8 = arith.constant 0 : i32
    %9 = arith.cmpi eq, %arg2, %c0_i32_8 : i32
    %10 = arith.extui %9 : i1 to i32
    %c0_i32_9 = arith.constant 0 : i32
    %11 = arith.cmpi ne, %10, %c0_i32_9 : i32
    scf.if %11 {
      %c0_10 = arith.constant 0 : index
      %c0_11 = arith.constant 0 : index
      %12 = vector.load %arg8[%c0_10, %c0_11] : memref<32x128xf32, #tpu.memory_space<vmem>>, vector<32x128xf32>
      %c0_12 = arith.constant 0 : index
      %c0_13 = arith.constant 0 : index
      %13 = vector.load %arg5[%c0_12, %c0_13] : memref<1x128xf32, #tpu.memory_space<vmem>>, vector<1x128xf32>
      %14 = vector.broadcast %13 : vector<1x128xf32> to vector<32x128xf32>
      %15 = arith.mulf %12, %14 : vector<32x128xf32>
      %c0_14 = arith.constant 0 : index
      %c0_15 = arith.constant 0 : index
      %16 = vector.load %arg6[%c0_14, %c0_15] : memref<1x128xf32, #tpu.memory_space<vmem>>, vector<1x128xf32>
      %17 = vector.broadcast %16 : vector<1x128xf32> to vector<32x128xf32>
      %18 = arith.addf %15, %17 : vector<32x128xf32>
      %19 = arith.truncf %18 : vector<32x128xf32> to vector<32x128xbf16>
      %c0_16 = arith.constant 0 : index
      %c0_17 = arith.constant 0 : index
      %20 = vector.load %arg7[%c0_16, %c0_17] : memref<32x128xbf16, #tpu.memory_space<vmem>>, vector<32x128xbf16>
      tpu.vector_store %arg7[%c0_16, %c0_17], %19 {strides = array<i32>} : memref<32x128xbf16, #tpu.memory_space<vmem>>, vector<32x128xbf16>,
    } else {
    }
    return
  }
  func.func @transform_0(%arg0: i32, %arg1: i32, %arg2: i32) -> (i32, i32) {
    %c0_i32 = arith.constant 0 : i32
    return %arg0, %arg2 : i32, i32
  }
  func.func @transform_1(%arg0: i32, %arg1: i32, %arg2: i32) -> (i32, i32) {
    %c0_i32 = arith.constant 0 : i32
    return %arg2, %arg1 : i32, i32
  }
  func.func @transform_2(%arg0: i32, %arg1: i32, %arg2: i32) -> (i32, i32) {
    %c0_i32 = arith.constant 0 : i32
    %c0_i32_0 = arith.constant 0 : i32
    return %c0_i32, %arg1 : i32, i32
  }
  func.func @transform_3(%arg0: i32, %arg1: i32, %arg2: i32) -> (i32, i32) {
    %c0_i32 = arith.constant 0 : i32
    %c0_i32_0 = arith.constant 0 : i32
    return %c0_i32, %arg1 : i32, i32
  }
  func.func @transform_4(%arg0: i32, %arg1: i32, %arg2: i32) -> (i32, i32) {
    %c0_i32 = arith.constant 0 : i32
    return %arg0, %arg1 : i32, i32
  }
}

module attributes {stable_mosaic.version = 11 : i64} {
  func.func @_fused_matmul_kernel(%arg0: i32, %arg1: i32, %arg2: i32, %arg3: memref<32x512xbf16, #tpu.memory_space<vmem>>, %arg4: memref<512x128xbf16, #tpu.memory_space<vmem>>, %arg5: memref<1x128xf32, #tpu.memory_space<vmem>>, %arg6: memref<1x128xf32, #tpu.memory_space<vmem>>, %arg7: memref<32x128xbf16, #tpu.memory_space<vmem>>, %arg8: memref<32x128xbf16, #tpu.memory_space<vmem>>, %arg9: memref<32x128xf32, #tpu.memory_space<vmem>>) attributes {dimension_semantics = [#tpu.dimension_semantics<parallel>, #tpu.dimension_semantics<parallel>, #tpu.dimension_semantics<arbitrary>], iteration_bounds = array<i64: 1, 1, 3>, scalar_prefetch = 0 : i64, scratch_operands = 1 : i64, tpu.core_type = #tpu.core_type<tc>, window_params = [{transform_indices = @transform_0, window_bounds = array<i64: 32, 512>}, {transform_indices = @transform_1, window_bounds = array<i64: 512, 128>}, {transform_indices = @transform_2, window_bounds = array<i64: 1, 128>}, {transform_indices = @transform_3, window_bounds = array<i64: 1, 128>}, {transform_indices = @transform_4, window_bounds = array<i64: 32, 128>}, {transform_indices = @transform_5, window_bounds = array<i64: 32, 128>}]} {
    %c0_i32 = arith.constant 0 : i32
    %0 = arith.cmpi eq, %arg2, %c0_i32 : i32
    %1 = arith.extui %0 : i1 to i32
    %c0_i32_0 = arith.constant 0 : i32
    %2 = arith.cmpi ne, %1, %c0_i32_0 : i32
    scf.if %2 {
      %cst_9 = arith.constant 0.000000e+00 : f32
      %12 = vector.broadcast %cst_9 : f32 to vector<32x128xf32>
      %c0_10 = arith.constant 0 : index
      %c0_11 = arith.constant 0 : index
      %13 = vector.load %arg9[%c0_10, %c0_11] : memref<32x128xf32, #tpu.memory_space<vmem>>, vector<32x128xf32>
      tpu.vector_store %arg9[%c0_10, %c0_11], %12 {strides = array<i32>} : memref<32x128xf32, #tpu.memory_space<vmem>>, vector<32x128xf32>,
    } else {
    }
    %c0 = arith.constant 0 : index
    %c0_1 = arith.constant 0 : index
    %3 = vector.load %arg9[%c0, %c0_1] : memref<32x128xf32, #tpu.memory_space<vmem>>, vector<32x128xf32>
    %c0_2 = arith.constant 0 : index
    %c0_3 = arith.constant 0 : index
    %4 = vector.load %arg3[%c0_2, %c0_3] : memref<32x512xbf16, #tpu.memory_space<vmem>>, vector<32x512xbf16>
    %c0_4 = arith.constant 0 : index
    %c0_5 = arith.constant 0 : index
    %5 = vector.load %arg4[%c0_4, %c0_5] : memref<512x128xbf16, #tpu.memory_space<vmem>>, vector<512x128xbf16>
    %cst = arith.constant dense<0.000000e+00> : vector<32x128xf32>
    %6 = tpu.matmul %4, %5, %cst {dimension_numbers = #tpu.dot_dimension_numbers<[1], [0], [0], [1], [0, 0, 1, 1], [], []>} : vector<32x512xbf16>, vector<512x128xbf16>, vector<32x128xf32> -> vector<32x128xf32>
    %7 = arith.addf %3, %6 : vector<32x128xf32>
    %c0_6 = arith.constant 0 : index
    %c0_7 = arith.constant 0 : index
    %8 = vector.load %arg9[%c0_6, %c0_7] : memref<32x128xf32, #tpu.memory_space<vmem>>, vector<32x128xf32>
    tpu.vector_store %arg9[%c0_6, %c0_7], %7 {strides = array<i32>} : memref<32x128xf32, #tpu.memory_space<vmem>>, vector<32x128xf32>,
    %c2_i32 = arith.constant 2 : i32
    %9 = arith.cmpi eq, %arg2, %c2_i32 : i32
    %10 = arith.extui %9 : i1 to i32
    %c0_i32_8 = arith.constant 0 : i32
    %11 = arith.cmpi ne, %10, %c0_i32_8 : i32
    scf.if %11 {
      %c0_9 = arith.constant 0 : index
      %c0_10 = arith.constant 0 : index
      %12 = vector.load %arg9[%c0_9, %c0_10] : memref<32x128xf32, #tpu.memory_space<vmem>>, vector<32x128xf32>
      %c0_11 = arith.constant 0 : index
      %c0_12 = arith.constant 0 : index
      %13 = vector.load %arg5[%c0_11, %c0_12] : memref<1x128xf32, #tpu.memory_space<vmem>>, vector<1x128xf32>
      %14 = vector.broadcast %13 : vector<1x128xf32> to vector<32x128xf32>
      %15 = arith.mulf %12, %14 : vector<32x128xf32>
      %c0_13 = arith.constant 0 : index
      %c0_14 = arith.constant 0 : index
      %16 = vector.load %arg6[%c0_13, %c0_14] : memref<1x128xf32, #tpu.memory_space<vmem>>, vector<1x128xf32>
      %17 = vector.broadcast %16 : vector<1x128xf32> to vector<32x128xf32>
      %18 = arith.addf %15, %17 : vector<32x128xf32>
      %c0_15 = arith.constant 0 : index
      %c0_16 = arith.constant 0 : index
      %19 = vector.load %arg7[%c0_15, %c0_16] : memref<32x128xbf16, #tpu.memory_space<vmem>>, vector<32x128xbf16>
      %20 = arith.extf %19 : vector<32x128xbf16> to vector<32x128xf32>
      %21 = arith.addf %18, %20 : vector<32x128xf32>
      %cst_17 = arith.constant 0.000000e+00 : f32
      %22 = vector.broadcast %cst_17 : f32 to vector<32x128xf32>
      %23 = arith.maximumf %21, %22 : vector<32x128xf32>
      %24 = arith.truncf %23 : vector<32x128xf32> to vector<32x128xbf16>
      %c0_18 = arith.constant 0 : index
      %c0_19 = arith.constant 0 : index
      %25 = vector.load %arg8[%c0_18, %c0_19] : memref<32x128xbf16, #tpu.memory_space<vmem>>, vector<32x128xbf16>
      tpu.vector_store %arg8[%c0_18, %c0_19], %24 {strides = array<i32>} : memref<32x128xbf16, #tpu.memory_space<vmem>>, vector<32x128xbf16>,
    } else {
    }
    return
  }
  func.func @transform_0(%arg0: i32, %arg1: i32, %arg2: i32) -> (i32, i32) {
    %c0_i32 = arith.constant 0 : i32
    return %arg0, %arg2 : i32, i32
  }
  func.func @transform_1(%arg0: i32, %arg1: i32, %arg2: i32) -> (i32, i32) {
    %c0_i32 = arith.constant 0 : i32
    return %arg2, %arg1 : i32, i32
  }
  func.func @transform_2(%arg0: i32, %arg1: i32, %arg2: i32) -> (i32, i32) {
    %c0_i32 = arith.constant 0 : i32
    %c0_i32_0 = arith.constant 0 : i32
    return %c0_i32, %arg1 : i32, i32
  }
  func.func @transform_3(%arg0: i32, %arg1: i32, %arg2: i32) -> (i32, i32) {
    %c0_i32 = arith.constant 0 : i32
    %c0_i32_0 = arith.constant 0 : i32
    return %c0_i32, %arg1 : i32, i32
  }
  func.func @transform_4(%arg0: i32, %arg1: i32, %arg2: i32) -> (i32, i32) {
    %c0_i32 = arith.constant 0 : i32
    return %arg0, %arg1 : i32, i32
  }
  func.func @transform_5(%arg0: i32, %arg1: i32, %arg2: i32) -> (i32, i32) {
    %c0_i32 = arith.constant 0 : i32
    return %arg0, %arg1 : i32, i32
  }
}

module attributes {stable_mosaic.version = 11 : i64} {
  func.func @_fused_matmul_kernel(%arg0: i32, %arg1: i32, %arg2: i32, %arg3: memref<16x512xbf16, #tpu.memory_space<vmem>>, %arg4: memref<512x256xbf16, #tpu.memory_space<vmem>>, %arg5: memref<1x256xf32, #tpu.memory_space<vmem>>, %arg6: memref<1x256xf32, #tpu.memory_space<vmem>>, %arg7: memref<16x256xbf16, #tpu.memory_space<vmem>>, %arg8: memref<16x256xf32, #tpu.memory_space<vmem>>) attributes {dimension_semantics = [#tpu.dimension_semantics<parallel>, #tpu.dimension_semantics<parallel>, #tpu.dimension_semantics<arbitrary>], iteration_bounds = array<i64: 1, 1, 3>, scalar_prefetch = 0 : i64, scratch_operands = 1 : i64, tpu.core_type = #tpu.core_type<tc>, window_params = [{transform_indices = @transform_0, window_bounds = array<i64: 16, 512>}, {transform_indices = @transform_1, window_bounds = array<i64: 512, 256>}, {transform_indices = @transform_2, window_bounds = array<i64: 1, 256>}, {transform_indices = @transform_3, window_bounds = array<i64: 1, 256>}, {transform_indices = @transform_4, window_bounds = array<i64: 16, 256>}]} {
    %c0_i32 = arith.constant 0 : i32
    %0 = arith.cmpi eq, %arg2, %c0_i32 : i32
    %1 = arith.extui %0 : i1 to i32
    %c0_i32_0 = arith.constant 0 : i32
    %2 = arith.cmpi ne, %1, %c0_i32_0 : i32
    scf.if %2 {
      %cst_9 = arith.constant 0.000000e+00 : f32
      %12 = vector.broadcast %cst_9 : f32 to vector<16x256xf32>
      %c0_10 = arith.constant 0 : index
      %c0_11 = arith.constant 0 : index
      %13 = vector.load %arg8[%c0_10, %c0_11] : memref<16x256xf32, #tpu.memory_space<vmem>>, vector<16x256xf32>
      tpu.vector_store %arg8[%c0_10, %c0_11], %12 {strides = array<i32>} : memref<16x256xf32, #tpu.memory_space<vmem>>, vector<16x256xf32>,
    } else {
    }
    %c0 = arith.constant 0 : index
    %c0_1 = arith.constant 0 : index
    %3 = vector.load %arg8[%c0, %c0_1] : memref<16x256xf32, #tpu.memory_space<vmem>>, vector<16x256xf32>
    %c0_2 = arith.constant 0 : index
    %c0_3 = arith.constant 0 : index
    %4 = vector.load %arg3[%c0_2, %c0_3] : memref<16x512xbf16, #tpu.memory_space<vmem>>, vector<16x512xbf16>
    %c0_4 = arith.constant 0 : index
    %c0_5 = arith.constant 0 : index
    %5 = vector.load %arg4[%c0_4, %c0_5] : memref<512x256xbf16, #tpu.memory_space<vmem>>, vector<512x256xbf16>
    %cst = arith.constant dense<0.000000e+00> : vector<16x256xf32>
    %6 = tpu.matmul %4, %5, %cst {dimension_numbers = #tpu.dot_dimension_numbers<[1], [0], [0], [1], [0, 0, 1, 1], [], []>} : vector<16x512xbf16>, vector<512x256xbf16>, vector<16x256xf32> -> vector<16x256xf32>
    %7 = arith.addf %3, %6 : vector<16x256xf32>
    %c0_6 = arith.constant 0 : index
    %c0_7 = arith.constant 0 : index
    %8 = vector.load %arg8[%c0_6, %c0_7] : memref<16x256xf32, #tpu.memory_space<vmem>>, vector<16x256xf32>
    tpu.vector_store %arg8[%c0_6, %c0_7], %7 {strides = array<i32>} : memref<16x256xf32, #tpu.memory_space<vmem>>, vector<16x256xf32>,
    %c2_i32 = arith.constant 2 : i32
    %9 = arith.cmpi eq, %arg2, %c2_i32 : i32
    %10 = arith.extui %9 : i1 to i32
    %c0_i32_8 = arith.constant 0 : i32
    %11 = arith.cmpi ne, %10, %c0_i32_8 : i32
    scf.if %11 {
      %c0_9 = arith.constant 0 : index
      %c0_10 = arith.constant 0 : index
      %12 = vector.load %arg8[%c0_9, %c0_10] : memref<16x256xf32, #tpu.memory_space<vmem>>, vector<16x256xf32>
      %c0_11 = arith.constant 0 : index
      %c0_12 = arith.constant 0 : index
      %13 = vector.load %arg5[%c0_11, %c0_12] : memref<1x256xf32, #tpu.memory_space<vmem>>, vector<1x256xf32>
      %14 = vector.broadcast %13 : vector<1x256xf32> to vector<16x256xf32>
      %15 = arith.mulf %12, %14 : vector<16x256xf32>
      %c0_13 = arith.constant 0 : index
      %c0_14 = arith.constant 0 : index
      %16 = vector.load %arg6[%c0_13, %c0_14] : memref<1x256xf32, #tpu.memory_space<vmem>>, vector<1x256xf32>
      %17 = vector.broadcast %16 : vector<1x256xf32> to vector<16x256xf32>
      %18 = arith.addf %15, %17 : vector<16x256xf32>
      %cst_15 = arith.constant 0.000000e+00 : f32
      %19 = vector.broadcast %cst_15 : f32 to vector<16x256xf32>
      %20 = arith.maximumf %18, %19 : vector<16x256xf32>
      %21 = arith.truncf %20 : vector<16x256xf32> to vector<16x256xbf16>
      %c0_16 = arith.constant 0 : index
      %c0_17 = arith.constant 0 : index
      %22 = vector.load %arg7[%c0_16, %c0_17] : memref<16x256xbf16, #tpu.memory_space<vmem>>, vector<16x256xbf16>
      tpu.vector_store %arg7[%c0_16, %c0_17], %21 {strides = array<i32>} : memref<16x256xbf16, #tpu.memory_space<vmem>>, vector<16x256xbf16>,
    } else {
    }
    return
  }
  func.func @transform_0(%arg0: i32, %arg1: i32, %arg2: i32) -> (i32, i32) {
    %c0_i32 = arith.constant 0 : i32
    return %arg0, %arg2 : i32, i32
  }
  func.func @transform_1(%arg0: i32, %arg1: i32, %arg2: i32) -> (i32, i32) {
    %c0_i32 = arith.constant 0 : i32
    return %arg2, %arg1 : i32, i32
  }
  func.func @transform_2(%arg0: i32, %arg1: i32, %arg2: i32) -> (i32, i32) {
    %c0_i32 = arith.constant 0 : i32
    %c0_i32_0 = arith.constant 0 : i32
    return %c0_i32, %arg1 : i32, i32
  }
  func.func @transform_3(%arg0: i32, %arg1: i32, %arg2: i32) -> (i32, i32) {
    %c0_i32 = arith.constant 0 : i32
    %c0_i32_0 = arith.constant 0 : i32
    return %c0_i32, %arg1 : i32, i32
  }
  func.func @transform_4(%arg0: i32, %arg1: i32, %arg2: i32) -> (i32, i32) {
    %c0_i32 = arith.constant 0 : i32
    return %arg0, %arg1 : i32, i32
  }
}

module attributes {stable_mosaic.version = 11 : i64} {
  func.func @_fused_matmul_kernel(%arg0: i32, %arg1: i32, %arg2: i32, %arg3: memref<16x512xbf16, #tpu.memory_space<vmem>>, %arg4: memref<512x256xbf16, #tpu.memory_space<vmem>>, %arg5: memref<1x256xf32, #tpu.memory_space<vmem>>, %arg6: memref<1x256xf32, #tpu.memory_space<vmem>>, %arg7: memref<16x256xbf16, #tpu.memory_space<vmem>>, %arg8: memref<16x256xbf16, #tpu.memory_space<vmem>>, %arg9: memref<16x256xf32, #tpu.memory_space<vmem>>) attributes {dimension_semantics = [#tpu.dimension_semantics<parallel>, #tpu.dimension_semantics<parallel>, #tpu.dimension_semantics<arbitrary>], iteration_bounds = array<i64: 1, 1, 5>, scalar_prefetch = 0 : i64, scratch_operands = 1 : i64, tpu.core_type = #tpu.core_type<tc>, window_params = [{transform_indices = @transform_0, window_bounds = array<i64: 16, 512>}, {transform_indices = @transform_1, window_bounds = array<i64: 512, 256>}, {transform_indices = @transform_2, window_bounds = array<i64: 1, 256>}, {transform_indices = @transform_3, window_bounds = array<i64: 1, 256>}, {transform_indices = @transform_4, window_bounds = array<i64: 16, 256>}, {transform_indices = @transform_5, window_bounds = array<i64: 16, 256>}]} {
    %c0_i32 = arith.constant 0 : i32
    %0 = arith.cmpi eq, %arg2, %c0_i32 : i32
    %1 = arith.extui %0 : i1 to i32
    %c0_i32_0 = arith.constant 0 : i32
    %2 = arith.cmpi ne, %1, %c0_i32_0 : i32
    scf.if %2 {
      %cst_9 = arith.constant 0.000000e+00 : f32
      %12 = vector.broadcast %cst_9 : f32 to vector<16x256xf32>
      %c0_10 = arith.constant 0 : index
      %c0_11 = arith.constant 0 : index
      %13 = vector.load %arg9[%c0_10, %c0_11] : memref<16x256xf32, #tpu.memory_space<vmem>>, vector<16x256xf32>
      tpu.vector_store %arg9[%c0_10, %c0_11], %12 {strides = array<i32>} : memref<16x256xf32, #tpu.memory_space<vmem>>, vector<16x256xf32>,
    } else {
    }
    %c0 = arith.constant 0 : index
    %c0_1 = arith.constant 0 : index
    %3 = vector.load %arg9[%c0, %c0_1] : memref<16x256xf32, #tpu.memory_space<vmem>>, vector<16x256xf32>
    %c0_2 = arith.constant 0 : index
    %c0_3 = arith.constant 0 : index
    %4 = vector.load %arg3[%c0_2, %c0_3] : memref<16x512xbf16, #tpu.memory_space<vmem>>, vector<16x512xbf16>
    %c0_4 = arith.constant 0 : index
    %c0_5 = arith.constant 0 : index
    %5 = vector.load %arg4[%c0_4, %c0_5] : memref<512x256xbf16, #tpu.memory_space<vmem>>, vector<512x256xbf16>
    %cst = arith.constant dense<0.000000e+00> : vector<16x256xf32>
    %6 = tpu.matmul %4, %5, %cst {dimension_numbers = #tpu.dot_dimension_numbers<[1], [0], [0], [1], [0, 0, 1, 1], [], []>} : vector<16x512xbf16>, vector<512x256xbf16>, vector<16x256xf32> -> vector<16x256xf32>
    %7 = arith.addf %3, %6 : vector<16x256xf32>
    %c0_6 = arith.constant 0 : index
    %c0_7 = arith.constant 0 : index
    %8 = vector.load %arg9[%c0_6, %c0_7] : memref<16x256xf32, #tpu.memory_space<vmem>>, vector<16x256xf32>
    tpu.vector_store %arg9[%c0_6, %c0_7], %7 {strides = array<i32>} : memref<16x256xf32, #tpu.memory_space<vmem>>, vector<16x256xf32>,
    %c4_i32 = arith.constant 4 : i32
    %9 = arith.cmpi eq, %arg2, %c4_i32 : i32
    %10 = arith.extui %9 : i1 to i32
    %c0_i32_8 = arith.constant 0 : i32
    %11 = arith.cmpi ne, %10, %c0_i32_8 : i32
    scf.if %11 {
      %c0_9 = arith.constant 0 : index
      %c0_10 = arith.constant 0 : index
      %12 = vector.load %arg9[%c0_9, %c0_10] : memref<16x256xf32, #tpu.memory_space<vmem>>, vector<16x256xf32>
      %c0_11 = arith.constant 0 : index
      %c0_12 = arith.constant 0 : index
      %13 = vector.load %arg5[%c0_11, %c0_12] : memref<1x256xf32, #tpu.memory_space<vmem>>, vector<1x256xf32>
      %14 = vector.broadcast %13 : vector<1x256xf32> to vector<16x256xf32>
      %15 = arith.mulf %12, %14 : vector<16x256xf32>
      %c0_13 = arith.constant 0 : index
      %c0_14 = arith.constant 0 : index
      %16 = vector.load %arg6[%c0_13, %c0_14] : memref<1x256xf32, #tpu.memory_space<vmem>>, vector<1x256xf32>
      %17 = vector.broadcast %16 : vector<1x256xf32> to vector<16x256xf32>
      %18 = arith.addf %15, %17 : vector<16x256xf32>
      %c0_15 = arith.constant 0 : index
      %c0_16 = arith.constant 0 : index
      %19 = vector.load %arg7[%c0_15, %c0_16] : memref<16x256xbf16, #tpu.memory_space<vmem>>, vector<16x256xbf16>
      %20 = arith.extf %19 : vector<16x256xbf16> to vector<16x256xf32>
      %21 = arith.addf %18, %20 : vector<16x256xf32>
      %cst_17 = arith.constant 0.000000e+00 : f32
      %22 = vector.broadcast %cst_17 : f32 to vector<16x256xf32>
      %23 = arith.maximumf %21, %22 : vector<16x256xf32>
      %24 = arith.truncf %23 : vector<16x256xf32> to vector<16x256xbf16>
      %c0_18 = arith.constant 0 : index
      %c0_19 = arith.constant 0 : index
      %25 = vector.load %arg8[%c0_18, %c0_19] : memref<16x256xbf16, #tpu.memory_space<vmem>>, vector<16x256xbf16>
      tpu.vector_store %arg8[%c0_18, %c0_19], %24 {strides = array<i32>} : memref<16x256xbf16, #tpu.memory_space<vmem>>, vector<16x256xbf16>,
    } else {
    }
    return
  }
  func.func @transform_0(%arg0: i32, %arg1: i32, %arg2: i32) -> (i32, i32) {
    %c0_i32 = arith.constant 0 : i32
    return %arg0, %arg2 : i32, i32
  }
  func.func @transform_1(%arg0: i32, %arg1: i32, %arg2: i32) -> (i32, i32) {
    %c0_i32 = arith.constant 0 : i32
    return %arg2, %arg1 : i32, i32
  }
  func.func @transform_2(%arg0: i32, %arg1: i32, %arg2: i32) -> (i32, i32) {
    %c0_i32 = arith.constant 0 : i32
    %c0_i32_0 = arith.constant 0 : i32
    return %c0_i32, %arg1 : i32, i32
  }
  func.func @transform_3(%arg0: i32, %arg1: i32, %arg2: i32) -> (i32, i32) {
    %c0_i32 = arith.constant 0 : i32
    %c0_i32_0 = arith.constant 0 : i32
    return %c0_i32, %arg1 : i32, i32
  }
  func.func @transform_4(%arg0: i32, %arg1: i32, %arg2: i32) -> (i32, i32) {
    %c0_i32 = arith.constant 0 : i32
    return %arg0, %arg1 : i32, i32
  }
  func.func @transform_5(%arg0: i32, %arg1: i32, %arg2: i32) -> (i32, i32) {
    %c0_i32 = arith.constant 0 : i32
    return %arg0, %arg1 : i32, i32
  }
}

module attributes {stable_mosaic.version = 11 : i64} {
  func.func @_fused_matmul_kernel(%arg0: i32, %arg1: i32, %arg2: i32, %arg3: memref<16x128xbf16, #tpu.memory_space<vmem>>, %arg4: memref<128x256xbf16, #tpu.memory_space<vmem>>, %arg5: memref<1x256xf32, #tpu.memory_space<vmem>>, %arg6: memref<1x256xf32, #tpu.memory_space<vmem>>, %arg7: memref<16x256xbf16, #tpu.memory_space<vmem>>, %arg8: memref<16x256xf32, #tpu.memory_space<vmem>>) attributes {dimension_semantics = [#tpu.dimension_semantics<parallel>, #tpu.dimension_semantics<parallel>, #tpu.dimension_semantics<arbitrary>], iteration_bounds = array<i64: 1, 1, 1>, scalar_prefetch = 0 : i64, scratch_operands = 1 : i64, tpu.core_type = #tpu.core_type<tc>, window_params = [{transform_indices = @transform_0, window_bounds = array<i64: 16, 128>}, {transform_indices = @transform_1, window_bounds = array<i64: 128, 256>}, {transform_indices = @transform_2, window_bounds = array<i64: 1, 256>}, {transform_indices = @transform_3, window_bounds = array<i64: 1, 256>}, {transform_indices = @transform_4, window_bounds = array<i64: 16, 256>}]} {
    %c0_i32 = arith.constant 0 : i32
    %0 = arith.cmpi eq, %arg2, %c0_i32 : i32
    %1 = arith.extui %0 : i1 to i32
    %c0_i32_0 = arith.constant 0 : i32
    %2 = arith.cmpi ne, %1, %c0_i32_0 : i32
    scf.if %2 {
      %cst_10 = arith.constant 0.000000e+00 : f32
      %12 = vector.broadcast %cst_10 : f32 to vector<16x256xf32>
      %c0_11 = arith.constant 0 : index
      %c0_12 = arith.constant 0 : index
      %13 = vector.load %arg8[%c0_11, %c0_12] : memref<16x256xf32, #tpu.memory_space<vmem>>, vector<16x256xf32>
      tpu.vector_store %arg8[%c0_11, %c0_12], %12 {strides = array<i32>} : memref<16x256xf32, #tpu.memory_space<vmem>>, vector<16x256xf32>,
    } else {
    }
    %c0 = arith.constant 0 : index
    %c0_1 = arith.constant 0 : index
    %3 = vector.load %arg8[%c0, %c0_1] : memref<16x256xf32, #tpu.memory_space<vmem>>, vector<16x256xf32>
    %c0_2 = arith.constant 0 : index
    %c0_3 = arith.constant 0 : index
    %4 = vector.load %arg3[%c0_2, %c0_3] : memref<16x128xbf16, #tpu.memory_space<vmem>>, vector<16x128xbf16>
    %c0_4 = arith.constant 0 : index
    %c0_5 = arith.constant 0 : index
    %5 = vector.load %arg4[%c0_4, %c0_5] : memref<128x256xbf16, #tpu.memory_space<vmem>>, vector<128x256xbf16>
    %cst = arith.constant dense<0.000000e+00> : vector<16x256xf32>
    %6 = tpu.matmul %4, %5, %cst {dimension_numbers = #tpu.dot_dimension_numbers<[1], [0], [0], [1], [0, 0, 1, 1], [], []>} : vector<16x128xbf16>, vector<128x256xbf16>, vector<16x256xf32> -> vector<16x256xf32>
    %7 = arith.addf %3, %6 : vector<16x256xf32>
    %c0_6 = arith.constant 0 : index
    %c0_7 = arith.constant 0 : index
    %8 = vector.load %arg8[%c0_6, %c0_7] : memref<16x256xf32, #tpu.memory_space<vmem>>, vector<16x256xf32>
    tpu.vector_store %arg8[%c0_6, %c0_7], %7 {strides = array<i32>} : memref<16x256xf32, #tpu.memory_space<vmem>>, vector<16x256xf32>,
    %c0_i32_8 = arith.constant 0 : i32
    %9 = arith.cmpi eq, %arg2, %c0_i32_8 : i32
    %10 = arith.extui %9 : i1 to i32
    %c0_i32_9 = arith.constant 0 : i32
    %11 = arith.cmpi ne, %10, %c0_i32_9 : i32
    scf.if %11 {
      %c0_10 = arith.constant 0 : index
      %c0_11 = arith.constant 0 : index
      %12 = vector.load %arg8[%c0_10, %c0_11] : memref<16x256xf32, #tpu.memory_space<vmem>>, vector<16x256xf32>
      %c0_12 = arith.constant 0 : index
      %c0_13 = arith.constant 0 : index
      %13 = vector.load %arg5[%c0_12, %c0_13] : memref<1x256xf32, #tpu.memory_space<vmem>>, vector<1x256xf32>
      %14 = vector.broadcast %13 : vector<1x256xf32> to vector<16x256xf32>
      %15 = arith.mulf %12, %14 : vector<16x256xf32>
      %c0_14 = arith.constant 0 : index
      %c0_15 = arith.constant 0 : index
      %16 = vector.load %arg6[%c0_14, %c0_15] : memref<1x256xf32, #tpu.memory_space<vmem>>, vector<1x256xf32>
      %17 = vector.broadcast %16 : vector<1x256xf32> to vector<16x256xf32>
      %18 = arith.addf %15, %17 : vector<16x256xf32>
      %19 = arith.truncf %18 : vector<16x256xf32> to vector<16x256xbf16>
      %c0_16 = arith.constant 0 : index
      %c0_17 = arith.constant 0 : index
      %20 = vector.load %arg7[%c0_16, %c0_17] : memref<16x256xbf16, #tpu.memory_space<vmem>>, vector<16x256xbf16>
      tpu.vector_store %arg7[%c0_16, %c0_17], %19 {strides = array<i32>} : memref<16x256xbf16, #tpu.memory_space<vmem>>, vector<16x256xbf16>,
    } else {
    }
    return
  }
  func.func @transform_0(%arg0: i32, %arg1: i32, %arg2: i32) -> (i32, i32) {
    %c0_i32 = arith.constant 0 : i32
    return %arg0, %arg2 : i32, i32
  }
  func.func @transform_1(%arg0: i32, %arg1: i32, %arg2: i32) -> (i32, i32) {
    %c0_i32 = arith.constant 0 : i32
    return %arg2, %arg1 : i32, i32
  }
  func.func @transform_2(%arg0: i32, %arg1: i32, %arg2: i32) -> (i32, i32) {
    %c0_i32 = arith.constant 0 : i32
    %c0_i32_0 = arith.constant 0 : i32
    return %c0_i32, %arg1 : i32, i32
  }
  func.func @transform_3(%arg0: i32, %arg1: i32, %arg2: i32) -> (i32, i32) {
    %c0_i32 = arith.constant 0 : i32
    %c0_i32_0 = arith.constant 0 : i32
    return %c0_i32, %arg1 : i32, i32
  }
  func.func @transform_4(%arg0: i32, %arg1: i32, %arg2: i32) -> (i32, i32) {
    %c0_i32 = arith.constant 0 : i32
    return %arg0, %arg1 : i32, i32
  }
}

module attributes {stable_mosaic.version = 11 : i64} {
  func.func @_avgpool_fc_kernel(%arg0: memref<2x4x256xbf16, #tpu.memory_space<vmem>>, %arg1: memref<256x10xf32, #tpu.memory_space<vmem>>, %arg2: memref<1x10xf32, #tpu.memory_space<vmem>>, %arg3: memref<2x10xf32, #tpu.memory_space<vmem>>) attributes {dimension_semantics = [], scalar_prefetch = 0 : i64, scratch_operands = 0 : i64, tpu.core_type = #tpu.core_type<tc>} {
    %c0 = arith.constant 0 : index
    %c0_0 = arith.constant 0 : index
    %c0_1 = arith.constant 0 : index
    %0 = vector.load %arg0[%c0, %c0_0, %c0_1] : memref<2x4x256xbf16, #tpu.memory_space<vmem>>, vector<2x4x256xbf16>
    %1 = arith.extf %0 : vector<2x4x256xbf16> to vector<2x4x256xf32>
    %cst = arith.constant dense<0.000000e+00> : vector<2x256xf32>
    %2 = vector.multi_reduction <add>, %1, %cst [1] : vector<2x4x256xf32> to vector<2x256xf32>
    %cst_2 = arith.constant 4.000000e+00 : f32
    %3 = vector.broadcast %cst_2 : f32 to vector<2x256xf32>
    %4 = arith.divf %2, %3 : vector<2x256xf32>
    %c0_3 = arith.constant 0 : index
    %c0_4 = arith.constant 0 : index
    %5 = vector.load %arg1[%c0_3, %c0_4] : memref<256x10xf32, #tpu.memory_space<vmem>>, vector<256x10xf32>
    %cst_5 = arith.constant dense<0.000000e+00> : vector<2x10xf32>
    %6 = tpu.matmul %4, %5, %cst_5 {dimension_numbers = #tpu.dot_dimension_numbers<[1], [0], [0], [1], [0, 0, 1, 1], [], []>} : vector<2x256xf32>, vector<256x10xf32>, vector<2x10xf32> -> vector<2x10xf32>
    %c0_6 = arith.constant 0 : index
    %c0_7 = arith.constant 0 : index
    %7 = vector.load %arg2[%c0_6, %c0_7] : memref<1x10xf32, #tpu.memory_space<vmem>>, vector<1x10xf32>
    %8 = vector.broadcast %7 : vector<1x10xf32> to vector<2x10xf32>
    %9 = arith.addf %6, %8 : vector<2x10xf32>
    %c0_8 = arith.constant 0 : index
    %c0_9 = arith.constant 0 : index
    %10 = vector.load %arg3[%c0_8, %c0_9] : memref<2x10xf32, #tpu.memory_space<vmem>>, vector<2x10xf32>
    tpu.vector_store %arg3[%c0_8, %c0_9], %9 {strides = array<i32>} : memref<2x10xf32, #tpu.memory_space<vmem>>, vector<2x10xf32>,
    return
  }
}

</mosaic_0001>

<llo_original>
// kernel: resnet_forward.12
$region0: #{resnet_forward.12}
  #allocation0 [shape = 'u32[]', space=smem, size = 0x4, offset = 0x4, fixed_abs, tag = 'smem constant byte address 0x4 - core index']
  #allocation1 [shape = 'u32[144,128]{1,0:T(1,128)}', space=vmem, size = 0x12000, scoped, tag = 'internal scratch']
  #allocation2 [shape = 'f32[256,128]{1,0:T(8,128)}', space=vmem, size = 0x20000, scoped, tag = 'scratch operand']
  %s0 = inlined_call_operand.vmem [shape: bf16[512,128], index: 0, kind: input, shape index: {}]
  %s1 = inlined_call_operand.vmem [shape: bf16[128,128], index: 1, kind: input, shape index: {}]
  %s2 = inlined_call_operand.vmem [shape: f32[1,128], index: 2, kind: input, shape index: {}]
  %s3 = inlined_call_operand.vmem [shape: f32[1,128], index: 3, kind: input, shape index: {}]
  %s4 = inlined_call_operand.vmem [shape: bf16[512,128], index: 4, kind: output, shape index: {}]
  %s5 = sld [smem:[#allocation0]]
  $region57: #{resnet_forward.12} parent=0
    _
  %s7 = ssub.s32 1, %s5
  %s8 = scalar_select 0, %s7, %s5
  loop: start=0, step=1, limit=4
  $region2: #{resnet_forward.12} parent=0 // loop_pre_header
    _
  $region3: #{resnet_forward.12} parent=0 // loop_header
    %s10 = sphi 0, %s14
    %p11 = scmp.ge.s32.totalorder %s10, 4
    %s17 = sphi 0, %s36
    %s18 = sphi 0, %s32
    %s19 = sphi 0, %s28
    %s20 = sphi 0, %s17
    %s21 = sphi 0, %s18
    %s22 = sphi 0, %s19
    %s23 = sphi 0, %s20
    %s24 = sphi 0, %s21
    %s25 = sphi 0, %s22
    %s41 = sphi 0, %s43
    %s44 = sphi 0, %s41
    %s45 = sphi 0, %s44
    %s61 = sphi 0, %s45
    %s69 = sphi 0, %s71
    %s72 = sphi 0, %s69
    %s73 = sphi 0, %s72
    %s89 = sphi 0, %s73
    %s95 = sphi 0, %s97
    %s98 = sphi 0, %s95
    %s99 = sphi 0, %s98
    %s115 = sphi 0, %s99
    %s121 = sphi 0, %s123
    %s124 = sphi 0, %s121
    %s125 = sphi 0, %s124
    %s141 = sphi 0, %s125
    %s149 = sphi 0, %s151
    %s152 = sphi 0, %s149
    %s153 = sphi 0, %s152
    %s169 = sphi 0, %s153
  $region4: #{resnet_forward.12} parent=0 // loop_header_branch
    %13 = sbr.rel (%p11) target = $region8
  $region5: #{resnet_forward.12} parent=0 // loop_body
    %s15 = ssub.s32 %s10, 1
    %s16 = ssub.s32 %s10, 2
    %s26 = sadd.s32 1, %s19
    %p27 = scmp.ge.s32.totalorder %s26, 1
    %s28 = scalar_select %p27, 0, %s26
    %s29 = sadd.s32 1, %s18
    %s30 = scalar_select %p27, %s29, %s18
    %p31 = scmp.ge.s32.totalorder %s30, 1
    %s32 = scalar_select %p31, 0, %s30
    %s33 = sadd.s32 1, %s17
    %s34 = scalar_select %p31, %s33, %s17
    %p35 = scmp.ge.s32.totalorder %s34, 2
    %s36 = scalar_select %p35, 0, %s34
    %s37 = ssub.s32 %s17, %s36
    %s38 = ssub.s32 %s19, %s28
    %s39 = sor.u32 %s37, %s38
    %p40 = scmp.eq.s32.totalorder %s39, 0
    %s42 = sadd.s32 %s41, 1
    %s43 = scalar_select %p40, %s41, %s42
    %p46 = pneg %p40
    %p47 = scmp.eq.s32.totalorder %s10, 1
    %p48 = por %p46, %p47
    %p49 = scmp.ne.s32.totalorder %s41, %s44
    %p50 = scmp.eq.s32.totalorder %s10, 0
    %p51 = por %p49, %p50
    %p52 = scmp.ne.s32.totalorder %s41, %s44
    %p53 = scmp.eq.s32.totalorder %s15, 1
    %p54 = por %p52, %p53
    %p55 = scmp.ne.s32.totalorder %s44, %s45
    %p56 = scmp.eq.s32.totalorder %s15, 0
    %p57 = por %p55, %p56
    %p58 = scmp.ne.s32.totalorder %s44, %s45
    %p59 = scmp.eq.s32.totalorder %s16, 1
    %p60 = por %p58, %p59
    %p62 = scmp.ne.s32.totalorder %s45, %s61
    %p63 = scmp.eq.s32.totalorder %s16, 0
    %p64 = por %p62, %p63
    %s65 = ssub.s32 %s19, %s28
    %s66 = ssub.s32 %s18, %s32
    %s67 = sor.u32 %s65, %s66
    %p68 = scmp.eq.s32.totalorder %s67, 0
    %s70 = sadd.s32 %s69, 1
    %s71 = scalar_select %p68, %s69, %s70
    %p74 = pneg %p68
    %p75 = scmp.eq.s32.totalorder %s10, 1
    %p76 = por %p74, %p75
    %p77 = scmp.ne.s32.totalorder %s69, %s72
    %p78 = scmp.eq.s32.totalorder %s10, 0
    %p79 = por %p77, %p78
    %p80 = scmp.ne.s32.totalorder %s69, %s72
    %p81 = scmp.eq.s32.totalorder %s15, 1
    %p82 = por %p80, %p81
    %p83 = scmp.ne.s32.totalorder %s72, %s73
    %p84 = scmp.eq.s32.totalorder %s15, 0
    %p85 = por %p83, %p84
    %p86 = scmp.ne.s32.totalorder %s72, %s73
    %p87 = scmp.eq.s32.totalorder %s16, 1
    %p88 = por %p86, %p87
    %p90 = scmp.ne.s32.totalorder %s73, %s89
    %p91 = scmp.eq.s32.totalorder %s16, 0
    %p92 = por %p90, %p91
    %s93 = ssub.s32 %s18, %s32
    %p94 = scmp.eq.s32.totalorder %s93, 0
    %s96 = sadd.s32 %s95, 1
    %s97 = scalar_select %p94, %s95, %s96
    %p100 = pneg %p94
    %p101 = scmp.eq.s32.totalorder %s10, 1
    %p102 = por %p100, %p101
    %p103 = scmp.ne.s32.totalorder %s95, %s98
    %p104 = scmp.eq.s32.totalorder %s10, 0
    %p105 = por %p103, %p104
    %p106 = scmp.ne.s32.totalorder %s95, %s98
    %p107 = scmp.eq.s32.totalorder %s15, 1
    %p108 = por %p106, %p107
    %p109 = scmp.ne.s32.totalorder %s98, %s99
    %p110 = scmp.eq.s32.totalorder %s15, 0
    %p111 = por %p109, %p110
    %p112 = scmp.ne.s32.totalorder %s98, %s99
    %p113 = scmp.eq.s32.totalorder %s16, 1
    %p114 = por %p112, %p113
    %p116 = scmp.ne.s32.totalorder %s99, %s115
    %p117 = scmp.eq.s32.totalorder %s16, 0
    %p118 = por %p116, %p117
    %s119 = ssub.s32 %s18, %s32
    %p120 = scmp.eq.s32.totalorder %s119, 0
    %s122 = sadd.s32 %s121, 1
    %s123 = scalar_select %p120, %s121, %s122
    %p126 = pneg %p120
    %p127 = scmp.eq.s32.totalorder %s10, 1
    %p128 = por %p126, %p127
    %p129 = scmp.ne.s32.totalorder %s121, %s124
    %p130 = scmp.eq.s32.totalorder %s10, 0
    %p131 = por %p129, %p130
    %p132 = scmp.ne.s32.totalorder %s121, %s124
    %p133 = scmp.eq.s32.totalorder %s15, 1
    %p134 = por %p132, %p133
    %p135 = scmp.ne.s32.totalorder %s124, %s125
    %p136 = scmp.eq.s32.totalorder %s15, 0
    %p137 = por %p135, %p136
    %p138 = scmp.ne.s32.totalorder %s124, %s125
    %p139 = scmp.eq.s32.totalorder %s16, 1
    %p140 = por %p138, %p139
    %p142 = scmp.ne.s32.totalorder %s125, %s141
    %p143 = scmp.eq.s32.totalorder %s16, 0
    %p144 = por %p142, %p143
    %s145 = ssub.s32 %s17, %s36
    %s146 = ssub.s32 %s18, %s32
    %s147 = sor.u32 %s145, %s146
    %p148 = scmp.eq.s32.totalorder %s147, 0
    %s150 = sadd.s32 %s149, 1
    %s151 = scalar_select %p148, %s149, %s150
    %p154 = pneg %p148
    %p155 = scmp.eq.s32.totalorder %s10, 1
    %p156 = por %p154, %p155
    %p157 = scmp.ne.s32.totalorder %s149, %s152
    %p158 = scmp.eq.s32.totalorder %s10, 0
    %p159 = por %p157, %p158
    %p160 = scmp.ne.s32.totalorder %s149, %s152
    %p161 = scmp.eq.s32.totalorder %s15, 1
    %p162 = por %p160, %p161
    %p163 = scmp.ne.s32.totalorder %s152, %s153
    %p164 = scmp.eq.s32.totalorder %s15, 0
    %p165 = por %p163, %p164
    %p166 = scmp.ne.s32.totalorder %s152, %s153
    %p167 = scmp.eq.s32.totalorder %s16, 1
    %p168 = por %p166, %p167
    %p170 = scmp.ne.s32.totalorder %s153, %s169
    %p171 = scmp.eq.s32.totalorder %s16, 0
    %p172 = por %p170, %p171
    %p173 = scmp.le.s32.totalorder 1, %s10
    %p174 = scmp.lt.s32.totalorder %s10, 3
    %p175 = pnand %p173, %p174
    %p176 = pneg %p175
    // Predicated region
    $region9: #{resnet_forward.12} parent=5 // pred_check
      _
    $region10: #{resnet_forward.12} parent=5 // pred_check_branch
      %178 = sbr.rel (%p175) target = $region12
    $region11: #{resnet_forward.12} parent=5 // pred_region
      %s179 = ssub.s32 %s10, 1
      // Predicated region
      $region13: #{resnet_forward.12} parent=11 // pred_check
        %p180 = pneg %p85
      $region14: #{resnet_forward.12} parent=11 // pred_check_branch
        %182 = sbr.rel (%p180) target = $region16
      $region15: #{resnet_forward.12} parent=11 // pred_region
        %s183 = smul.u32 16, %s22
        %p184 = scmp.lt.s32.totalorder %s183, 15
        %s185 = scalar_select %p184, %s183, 15
        %p186 = scmp.lt.s32.totalorder %s21, 0
        %s187 = scalar_select %p186, %s21, 0
        %s188 = sadd.s32 %s187, %s185
        %s189 = smul.addr %s188, 4
        %s190 = scalar_lea.vmem %s1, %s189
        %s191 = smul.u32 16, %s22
      $region16: #{resnet_forward.12} parent=11 // pred_fallthru
        _
      // Predicated region
      $region17: #{resnet_forward.12} parent=11 // pred_check
        %p192 = pneg %p111
      $region18: #{resnet_forward.12} parent=11 // pred_check_branch
        %194 = sbr.rel (%p192) target = $region20
      $region19: #{resnet_forward.12} parent=11 // pred_region
        %p195 = scmp.lt.s32.totalorder %s21, 0
        %s196 = scalar_select %p195, %s21, 0
        %s197 = scalar_lea.vmem %s2, %s196
      $region20: #{resnet_forward.12} parent=11 // pred_fallthru
        _
      // Predicated region
      $region21: #{resnet_forward.12} parent=11 // pred_check
        %p198 = pneg %p137
      $region22: #{resnet_forward.12} parent=11 // pred_check_branch
        %200 = sbr.rel (%p198) target = $region24
      $region23: #{resnet_forward.12} parent=11 // pred_region
        %p201 = scmp.lt.s32.totalorder %s21, 0
        %s202 = scalar_select %p201, %s21, 0
        %s203 = scalar_lea.vmem %s3, %s202
      $region24: #{resnet_forward.12} parent=11 // pred_fallthru
        _
    $region12: #{resnet_forward.12} parent=5 // pred_fallthru
      _
    %p204 = scmp.lt.s32.totalorder %s10, 2
    // Predicated region
    $region25: #{resnet_forward.12} parent=5 // pred_check
      %p205 = pneg %p204
    $region26: #{resnet_forward.12} parent=5 // pred_check_branch
      %207 = sbr.rel (%p205) target = $region28
    $region27: #{resnet_forward.12} parent=5 // pred_region
      // Predicated region
      $region29: #{resnet_forward.12} parent=27 // pred_check
        %p208 = pneg %p51
      $region30: #{resnet_forward.12} parent=27 // pred_check_branch
        %210 = sbr.rel (%p208) target = $region32
      $region31: #{resnet_forward.12} parent=27 // pred_region
        %s211 = smul.u32 32, %s17
        %p212 = scmp.lt.s32.totalorder %s211, 63
        %s213 = scalar_select %p212, %s211, 63
        %p214 = scmp.lt.s32.totalorder %s19, 0
        %s215 = scalar_select %p214, %s19, 0
        %s216 = sadd.s32 %s215, %s213
        %s217 = smul.addr %s216, 4
        %s218 = scalar_lea.vmem %s0, %s217
        %s219 = smul.u32 32, %s17
      $region32: #{resnet_forward.12} parent=27 // pred_fallthru
        _
    $region28: #{resnet_forward.12} parent=5 // pred_fallthru
      _
    %p220 = scmp.le.s32.totalorder 1, %s10
    %p221 = scmp.lt.s32.totalorder %s10, 3
    %p222 = pnand %p220, %p221
    %p223 = pneg %p222
    // Predicated region
    $region33: #{resnet_forward.12} parent=5 // pred_check
      _
    $region34: #{resnet_forward.12} parent=5 // pred_check_branch
      %225 = sbr.rel (%p222) target = $region36
    $region35: #{resnet_forward.12} parent=5 // pred_region
      %s226 = ssub.s32 %s10, 1
      %s227 = smul.u32 32, %s20
      %p228 = scmp.lt.s32.totalorder %s227, 63
      %s229 = scalar_select %p228, %s227, 63
      %p230 = scmp.lt.s32.totalorder %s22, 0
      %s231 = scalar_select %p230, %s22, 0
      %s232 = sadd.s32 %s231, %s229
      %s233 = smul.addr %s232, 4
      %s234 = scalar_lea.vmem %s0, %s233
      %p235 = pneg %p57
      %p236 = pneg %p54
      %s237 = smul.u32 16, %s22
      %p238 = scmp.lt.s32.totalorder %s237, 15
      %s239 = scalar_select %p238, %s237, 15
      %p240 = scmp.lt.s32.totalorder %s21, 0
      %s241 = scalar_select %p240, %s21, 0
      %s242 = sadd.s32 %s241, %s239
      %s243 = smul.addr %s242, 4
      %s244 = scalar_lea.vmem %s1, %s243
      %p245 = pneg %p85
      %p246 = pneg %p82
      %p247 = scmp.lt.s32.totalorder %s21, 0
      %s248 = scalar_select %p247, %s21, 0
      %s249 = scalar_lea.vmem %s2, %s248
      %p250 = pneg %p111
      %p251 = pneg %p108
      %p252 = scmp.lt.s32.totalorder %s21, 0
      %s253 = scalar_select %p252, %s21, 0
      %s254 = scalar_lea.vmem %s3, %s253
      %p255 = pneg %p137
      %p256 = pneg %p134
      %p257 = pneg %p165
      %p258 = pneg %p162
      %s259 = smul.u32 32, %s20
      %p260 = scmp.lt.s32.totalorder %s259, 63
      %s261 = scalar_select %p260, %s259, 63
      %p262 = scmp.lt.s32.totalorder %s21, 0
      %s263 = scalar_select %p262, %s21, 0
      %s264 = sadd.s32 %s263, %s261
      %s265 = smul.addr %s264, 4
      %s266 = scalar_lea.vmem %s4, %s265
      %s267 = smul.u32 32, %s20
      %p268 = scmp.lt.s32.totalorder %s267, 63
      %s269 = scalar_select %p268, %s267, 63
      %p270 = scmp.lt.s32.totalorder %s22, 0
      %s271 = scalar_select %p270, %s22, 0
      %s272 = sadd.s32 %s271, %s269
      %s273 = smul.addr %s272, 4
      %s274 = scalar_lea.vmem %s0, %s273
      %s275 = smul.u32 32, %s20
      %s276 = smul.u32 16, %s22
      %p277 = scmp.lt.s32.totalorder %s276, 15
      %s278 = scalar_select %p277, %s276, 15
      %p279 = scmp.lt.s32.totalorder %s21, 0
      %s280 = scalar_select %p279, %s21, 0
      %s281 = sadd.s32 %s280, %s278
      %s282 = smul.addr %s281, 4
      %s283 = scalar_lea.vmem %s1, %s282
      %s284 = smul.u32 16, %s22
      %p285 = scmp.lt.s32.totalorder %s21, 0
      %s286 = scalar_select %p285, %s21, 0
      %s287 = scalar_lea.vmem %s2, %s286
      %p288 = scmp.lt.s32.totalorder %s21, 0
      %s289 = scalar_select %p288, %s21, 0
      %s290 = scalar_lea.vmem %s3, %s289
      %s291 = smul.u32 32, %s20
      %p292 = scmp.lt.s32.totalorder %s291, 63
      %s293 = scalar_select %p292, %s291, 63
      %p294 = scmp.lt.s32.totalorder %s21, 0
      %s295 = scalar_select %p294, %s21, 0
      %s296 = sadd.s32 %s295, %s293
      %s297 = smul.addr %s296, 4
      %s298 = scalar_lea.vmem %s4, %s297
      %s299 = smul.u32 32, %s20
      %p301 = scmp.eq.s32.totalorder %s22, 0
      // Predicated region
      $region37: #{resnet_forward.12} parent=35 // pred_check
        %p302 = pneg %p301
      $region38: #{resnet_forward.12} parent=35 // pred_check_branch
        %304 = sbr.rel (%p302) target = $region40
      $region39: #{resnet_forward.12} parent=35 // pred_region
        %305 = vst [vmem:[#allocation2] sm:$0xff] 0.0
        %306 = vst [vmem:[#allocation2 + $0x8] sm:$0xff] 0.0
        %307 = vst [vmem:[#allocation2 + $0x10] sm:$0xff] 0.0
        %308 = vst [vmem:[#allocation2 + $0x18] sm:$0xff] 0.0
        %309 = vst [vmem:[#allocation2 + $0x20] sm:$0xff] 0.0
        %310 = vst [vmem:[#allocation2 + $0x28] sm:$0xff] 0.0
        %311 = vst [vmem:[#allocation2 + $0x30] sm:$0xff] 0.0
        %312 = vst [vmem:[#allocation2 + $0x38] sm:$0xff] 0.0
        %313 = vst [vmem:[#allocation2 + $0x40] sm:$0xff] 0.0
        %314 = vst [vmem:[#allocation2 + $0x48] sm:$0xff] 0.0
        %315 = vst [vmem:[#allocation2 + $0x50] sm:$0xff] 0.0
        %316 = vst [vmem:[#allocation2 + $0x58] sm:$0xff] 0.0
        %317 = vst [vmem:[#allocation2 + $0x60] sm:$0xff] 0.0
        %318 = vst [vmem:[#allocation2 + $0x68] sm:$0xff] 0.0
        %319 = vst [vmem:[#allocation2 + $0x70] sm:$0xff] 0.0
        %320 = vst [vmem:[#allocation2 + $0x78] sm:$0xff] 0.0
        %321 = vst [vmem:[#allocation2 + $0x80] sm:$0xff] 0.0
        %322 = vst [vmem:[#allocation2 + $0x88] sm:$0xff] 0.0
        %323 = vst [vmem:[#allocation2 + $0x90] sm:$0xff] 0.0
        %324 = vst [vmem:[#allocation2 + $0x98] sm:$0xff] 0.0
        %325 = vst [vmem:[#allocation2 + $0xa0] sm:$0xff] 0.0
        %326 = vst [vmem:[#allocation2 + $0xa8] sm:$0xff] 0.0
        %327 = vst [vmem:[#allocation2 + $0xb0] sm:$0xff] 0.0
        %328 = vst [vmem:[#allocation2 + $0xb8] sm:$0xff] 0.0
        %329 = vst [vmem:[#allocation2 + $0xc0] sm:$0xff] 0.0
        %330 = vst [vmem:[#allocation2 + $0xc8] sm:$0xff] 0.0
        %331 = vst [vmem:[#allocation2 + $0xd0] sm:$0xff] 0.0
        %332 = vst [vmem:[#allocation2 + $0xd8] sm:$0xff] 0.0
        %333 = vst [vmem:[#allocation2 + $0xe0] sm:$0xff] 0.0
        %334 = vst [vmem:[#allocation2 + $0xe8] sm:$0xff] 0.0
        %335 = vst [vmem:[#allocation2 + $0xf0] sm:$0xff] 0.0
        %336 = vst [vmem:[#allocation2 + $0xf8] sm:$0xff] 0.0
      $region40: #{resnet_forward.12} parent=35 // pred_fallthru
        _
      %v337 = vld [vmem:[#allocation2] sm:$0xff]
      %v338 = vld [vmem:[#allocation2 + $0x8] sm:$0xff]
      %v339 = vld [vmem:[#allocation2 + $0x10] sm:$0xff]
      %v340 = vld [vmem:[#allocation2 + $0x18] sm:$0xff]
      %v341 = vld [vmem:[#allocation2 + $0x20] sm:$0xff]
      %v342 = vld [vmem:[#allocation2 + $0x28] sm:$0xff]
      %v343 = vld [vmem:[#allocation2 + $0x30] sm:$0xff]
      %v344 = vld [vmem:[#allocation2 + $0x38] sm:$0xff]
      %v345 = vld [vmem:[#allocation2 + $0x40] sm:$0xff]
      %v346 = vld [vmem:[#allocation2 + $0x48] sm:$0xff]
      %v347 = vld [vmem:[#allocation2 + $0x50] sm:$0xff]
      %v348 = vld [vmem:[#allocation2 + $0x58] sm:$0xff]
      %v349 = vld [vmem:[#allocation2 + $0x60] sm:$0xff]
      %v350 = vld [vmem:[#allocation2 + $0x68] sm:$0xff]
      %v351 = vld [vmem:[#allocation2 + $0x70] sm:$0xff]
      %v352 = vld [vmem:[#allocation2 + $0x78] sm:$0xff]
      %v353 = vld [vmem:[#allocation2 + $0x80] sm:$0xff]
      %v354 = vld [vmem:[#allocation2 + $0x88] sm:$0xff]
      %v355 = vld [vmem:[#allocation2 + $0x90] sm:$0xff]
      %v356 = vld [vmem:[#allocation2 + $0x98] sm:$0xff]
      %v357 = vld [vmem:[#allocation2 + $0xa0] sm:$0xff]
      %v358 = vld [vmem:[#allocation2 + $0xa8] sm:$0xff]
      %v359 = vld [vmem:[#allocation2 + $0xb0] sm:$0xff]
      %v360 = vld [vmem:[#allocation2 + $0xb8] sm:$0xff]
      %v361 = vld [vmem:[#allocation2 + $0xc0] sm:$0xff]
      %v362 = vld [vmem:[#allocation2 + $0xc8] sm:$0xff]
      %v363 = vld [vmem:[#allocation2 + $0xd0] sm:$0xff]
      %v364 = vld [vmem:[#allocation2 + $0xd8] sm:$0xff]
      %v365 = vld [vmem:[#allocation2 + $0xe0] sm:$0xff]
      %v366 = vld [vmem:[#allocation2 + $0xe8] sm:$0xff]
      %v367 = vld [vmem:[#allocation2 + $0xf0] sm:$0xff]
      %v368 = vld [vmem:[#allocation2 + $0xf8] sm:$0xff]
      %v369 = vld [vmem:[%s274] sm:$0xf]
      %v370 = vld [vmem:[%s274 + $0x4] sm:$0xf]
      %v371 = vld [vmem:[%s274 + $0x8] sm:$0xf]
      %v372 = vld [vmem:[%s274 + $0xc] sm:$0xf]
      %v373 = vld [vmem:[%s274 + $0x10] sm:$0xf]
      %v374 = vld [vmem:[%s274 + $0x14] sm:$0xf]
      %v375 = vld [vmem:[%s274 + $0x18] sm:$0xf]
      %v376 = vld [vmem:[%s274 + $0x1c] sm:$0xf]
      %v377 = vld [vmem:[%s274 + $0x20] sm:$0xf]
      %v378 = vld [vmem:[%s274 + $0x24] sm:$0xf]
      %v379 = vld [vmem:[%s274 + $0x28] sm:$0xf]
      %v380 = vld [vmem:[%s274 + $0x2c] sm:$0xf]
      %v381 = vld [vmem:[%s274 + $0x30] sm:$0xf]
      %v382 = vld [vmem:[%s274 + $0x34] sm:$0xf]
      %v383 = vld [vmem:[%s274 + $0x38] sm:$0xf]
      %v384 = vld [vmem:[%s274 + $0x3c] sm:$0xf]
      %v385 = vld [vmem:[%s274 + $0x40] sm:$0xf]
      %v386 = vld [vmem:[%s274 + $0x44] sm:$0xf]
      %v387 = vld [vmem:[%s274 + $0x48] sm:$0xf]
      %v388 = vld [vmem:[%s274 + $0x4c] sm:$0xf]
      %v389 = vld [vmem:[%s274 + $0x50] sm:$0xf]
      %v390 = vld [vmem:[%s274 + $0x54] sm:$0xf]
      %v391 = vld [vmem:[%s274 + $0x58] sm:$0xf]
      %v392 = vld [vmem:[%s274 + $0x5c] sm:$0xf]
      %v393 = vld [vmem:[%s274 + $0x60] sm:$0xf]
      %v394 = vld [vmem:[%s274 + $0x64] sm:$0xf]
      %v395 = vld [vmem:[%s274 + $0x68] sm:$0xf]
      %v396 = vld [vmem:[%s274 + $0x6c] sm:$0xf]
      %v397 = vld [vmem:[%s274 + $0x70] sm:$0xf]
      %v398 = vld [vmem:[%s274 + $0x74] sm:$0xf]
      %v399 = vld [vmem:[%s274 + $0x78] sm:$0xf]
      %v400 = vld [vmem:[%s274 + $0x7c] sm:$0xf]
      %v401 = vld [vmem:[%s283] sm:$0xf]
      %v402 = vld [vmem:[%s283 + $0x4] sm:$0xf]
      %v403 = vld [vmem:[%s283 + $0x8] sm:$0xf]
      %v404 = vld [vmem:[%s283 + $0xc] sm:$0xf]
      %v405 = vld [vmem:[%s283 + $0x10] sm:$0xf]
      %v406 = vld [vmem:[%s283 + $0x14] sm:$0xf]
      %v407 = vld [vmem:[%s283 + $0x18] sm:$0xf]
      %v408 = vld [vmem:[%s283 + $0x1c] sm:$0xf]
      %v409 = vld [vmem:[%s283 + $0x20] sm:$0xf]
      %v410 = vld [vmem:[%s283 + $0x24] sm:$0xf]
      %v411 = vld [vmem:[%s283 + $0x28] sm:$0xf]
      %v412 = vld [vmem:[%s283 + $0x2c] sm:$0xf]
      %v413 = vld [vmem:[%s283 + $0x30] sm:$0xf]
      %v414 = vld [vmem:[%s283 + $0x34] sm:$0xf]
      %v415 = vld [vmem:[%s283 + $0x38] sm:$0xf]
      %v416 = vld [vmem:[%s283 + $0x3c] sm:$0xf]
      %v449 = vunpack.c.l.b16 %v369
      %v450 = vunpack.c.l.b16 %v370
      %v451 = vunpack.c.l.b16 %v371
      %v452 = vunpack.c.l.b16 %v372
      %v453 = vunpack.c.l.b16 %v373
      %v454 = vunpack.c.l.b16 %v374
      %v455 = vunpack.c.l.b16 %v375
      %v456 = vunpack.c.l.b16 %v376
      %v457 = vunpack.c.l.b16 %v377
      %v458 = vunpack.c.l.b16 %v378
      %v459 = vunpack.c.l.b16 %v379
      %v460 = vunpack.c.l.b16 %v380
      %v461 = vunpack.c.l.b16 %v381
      %v462 = vunpack.c.l.b16 %v382
      %v463 = vunpack.c.l.b16 %v383
      %v464 = vunpack.c.l.b16 %v384
      %v465 = vunpack.c.l.b16 %v385
      %v466 = vunpack.c.l.b16 %v386
      %v467 = vunpack.c.l.b16 %v387
      %v468 = vunpack.c.l.b16 %v388
      %v469 = vunpack.c.l.b16 %v389
      %v470 = vunpack.c.l.b16 %v390
      %v471 = vunpack.c.l.b16 %v391
      %v472 = vunpack.c.l.b16 %v392
      %v473 = vunpack.c.l.b16 %v393
      %v474 = vunpack.c.l.b16 %v394
      %v475 = vunpack.c.l.b16 %v395
      %v476 = vunpack.c.l.b16 %v396
      %v477 = vunpack.c.l.b16 %v397
      %v478 = vunpack.c.l.b16 %v398
      %v479 = vunpack.c.l.b16 %v399
      %v480 = vunpack.c.l.b16 %v400
      %v481 = vpack.c.b16 %v450, %v449
      %v482 = vpack.c.b16 %v452, %v451
      %v483 = vpack.c.b16 %v454, %v453
      %v484 = vpack.c.b16 %v456, %v455
      %v485 = vpack.c.b16 %v458, %v457
      %v486 = vpack.c.b16 %v460, %v459
      %v487 = vpack.c.b16 %v462, %v461
      %v488 = vpack.c.b16 %v464, %v463
      %v489 = vpack.c.b16 %v466, %v465
      %v490 = vpack.c.b16 %v468, %v467
      %v491 = vpack.c.b16 %v470, %v469
      %v492 = vpack.c.b16 %v472, %v471
      %v493 = vpack.c.b16 %v474, %v473
      %v494 = vpack.c.b16 %v476, %v475
      %v495 = vpack.c.b16 %v478, %v477
      %v496 = vpack.c.b16 %v480, %v479
      %v529 = vunpack.c.l.b16 %v401
      %v530 = vunpack.c.l.b16 %v402
      %v531 = vunpack.c.l.b16 %v403
      %v532 = vunpack.c.l.b16 %v404
      %v533 = vunpack.c.l.b16 %v405
      %v534 = vunpack.c.l.b16 %v406
      %v535 = vunpack.c.l.b16 %v407
      %v536 = vunpack.c.l.b16 %v408
      %v537 = vunpack.c.l.b16 %v409
      %v538 = vunpack.c.l.b16 %v410
      %v539 = vunpack.c.l.b16 %v411
      %v540 = vunpack.c.l.b16 %v412
      %v541 = vunpack.c.l.b16 %v413
      %v542 = vunpack.c.l.b16 %v414
      %v543 = vunpack.c.l.b16 %v415
      %v544 = vunpack.c.l.b16 %v416
      %v545 = vpack.c.b16 %v530, %v529
      %v546 = vpack.c.b16 %v532, %v531
      %v547 = vpack.c.b16 %v534, %v533
      %v548 = vpack.c.b16 %v536, %v535
      %v549 = vpack.c.b16 %v538, %v537
      %v550 = vpack.c.b16 %v540, %v539
      %v551 = vpack.c.b16 %v542, %v541
      %v552 = vpack.c.b16 %v544, %v543
      %561 = vmatprep.subr.bf16.mxu0 0
      %562 = vmatpush1.bf16.msra.mxu0 %v552
      %563 = vmatprep.subr.bf16.mxu0 0
      %564 = vmatpush1.bf16.msra.mxu0 %v551
      %565 = vmatprep.subr.bf16.mxu0 0
      %566 = vmatpush1.bf16.msra.mxu0 %v550
      %567 = vmatprep.subr.bf16.mxu0 0
      %568 = vmatpush1.bf16.msra.mxu0 %v549
      %569 = vmatprep.subr.bf16.mxu0 0
      %570 = vmatpush1.bf16.msra.mxu0 %v548
      %571 = vmatprep.subr.bf16.mxu0 0
      %572 = vmatpush1.bf16.msra.mxu0 %v547
      %573 = vmatprep.subr.bf16.mxu0 0
      %574 = vmatpush1.bf16.msra.mxu0 %v546
      %575 = vmatprep.subr.bf16.mxu0 0
      %576 = vmatpush1.bf16.msra.mxu0 %v545
      %577 = vmatprep.subr.bf16.mxu0 0
      %578 = vmatpush2.bf16.msra.mxu0 0
      %579 = vmatprep.subr.bf16.mxu0 0
      %580 = vmatpush2.bf16.msra.mxu0 0
      %581 = vmatprep.subr.bf16.mxu0 0
      %582 = vmatpush2.bf16.msra.mxu0 0
      %583 = vmatprep.subr.bf16.mxu0 0
      %584 = vmatpush2.bf16.msra.mxu0 0
      %585 = vmatprep.subr.bf16.mxu0 0
      %586 = vmatpush2.bf16.msra.mxu0 0
      %587 = vmatprep.subr.bf16.mxu0 0
      %588 = vmatpush2.bf16.msra.mxu0 0
      %589 = vmatprep.subr.bf16.mxu0 0
      %590 = vmatpush2.bf16.msra.mxu0 0
      %591 = vmatprep.subr.bf16.mxu0 0
      %592 = vmatpush2.bf16.msra.mxu0 0
      %593 = vmatprep.mubr.bf16.mxu0 0
      %594 = vmatmul.mubr.bf16.gmra.mxu0 %v481
      %v595 = vpop.f32.mrf.mxu0
      %v596 = vadd.f32 0.0, %v595
      %v597 = vpop.f32.mrf.mxu0
      %v598 = vpop.f32.mrf.mxu0
      %v599 = vadd.f32 0.0, %v598
      %v600 = vpop.f32.mrf.mxu0
      %601 = vmatprep.mubr.bf16.mxu0 0
      %602 = vmatmul.mubr.bf16.gmra.mxu0 %v482
      %v603 = vpop.f32.mrf.mxu0
      %v604 = vadd.f32 0.0, %v603
      %v605 = vpop.f32.mrf.mxu0
      %v606 = vpop.f32.mrf.mxu0
      %v607 = vadd.f32 0.0, %v606
      %v608 = vpop.f32.mrf.mxu0
      %609 = vmatprep.mubr.bf16.mxu0 0
      %610 = vmatmul.mubr.bf16.gmra.mxu0 %v483
      %v611 = vpop.f32.mrf.mxu0
      %v612 = vadd.f32 0.0, %v611
      %v613 = vpop.f32.mrf.mxu0
      %v614 = vpop.f32.mrf.mxu0
      %v615 = vadd.f32 0.0, %v614
      %v616 = vpop.f32.mrf.mxu0
      %617 = vmatprep.mubr.bf16.mxu0 0
      %618 = vmatmul.mubr.bf16.gmra.mxu0 %v484
      %v619 = vpop.f32.mrf.mxu0
      %v620 = vadd.f32 0.0, %v619
      %v621 = vpop.f32.mrf.mxu0
      %v622 = vpop.f32.mrf.mxu0
      %v623 = vadd.f32 0.0, %v622
      %v624 = vpop.f32.mrf.mxu0
      %625 = vmatprep.mubr.bf16.mxu0 0
      %626 = vmatmul.mubr.bf16.gmra.mxu0 %v485
      %v627 = vpop.f32.mrf.mxu0
      %v628 = vadd.f32 0.0, %v627
      %v629 = vpop.f32.mrf.mxu0
      %v630 = vpop.f32.mrf.mxu0
      %v631 = vadd.f32 0.0, %v630
      %v632 = vpop.f32.mrf.mxu0
      %633 = vmatprep.mubr.bf16.mxu0 0
      %634 = vmatmul.mubr.bf16.gmra.mxu0 %v486
      %v635 = vpop.f32.mrf.mxu0
      %v636 = vadd.f32 0.0, %v635
      %v637 = vpop.f32.mrf.mxu0
      %v638 = vpop.f32.mrf.mxu0
      %v639 = vadd.f32 0.0, %v638
      %v640 = vpop.f32.mrf.mxu0
      %641 = vmatprep.mubr.bf16.mxu0 0
      %642 = vmatmul.mubr.bf16.gmra.mxu0 %v487
      %v643 = vpop.f32.mrf.mxu0
      %v644 = vadd.f32 0.0, %v643
      %v645 = vpop.f32.mrf.mxu0
      %v646 = vpop.f32.mrf.mxu0
      %v647 = vadd.f32 0.0, %v646
      %v648 = vpop.f32.mrf.mxu0
      %649 = vmatprep.mubr.bf16.mxu0 0
      %650 = vmatmul.mubr.bf16.gmra.mxu0 %v488
      %v651 = vpop.f32.mrf.mxu0
      %v652 = vadd.f32 0.0, %v651
      %v653 = vpop.f32.mrf.mxu0
      %v654 = vpop.f32.mrf.mxu0
      %v655 = vadd.f32 0.0, %v654
      %v656 = vpop.f32.mrf.mxu0
      %657 = vmatprep.mubr.bf16.mxu0 0
      %658 = vmatmul.mubr.bf16.gmra.mxu0 %v489
      %v659 = vpop.f32.mrf.mxu0
      %v660 = vadd.f32 0.0, %v659
      %v661 = vpop.f32.mrf.mxu0
      %v662 = vpop.f32.mrf.mxu0
      %v663 = vadd.f32 0.0, %v662
      %v664 = vpop.f32.mrf.mxu0
      %665 = vmatprep.mubr.bf16.mxu0 0
      %666 = vmatmul.mubr.bf16.gmra.mxu0 %v490
      %v667 = vpop.f32.mrf.mxu0
      %v668 = vadd.f32 0.0, %v667
      %v669 = vpop.f32.mrf.mxu0
      %v670 = vpop.f32.mrf.mxu0
      %v671 = vadd.f32 0.0, %v670
      %v672 = vpop.f32.mrf.mxu0
      %673 = vmatprep.mubr.bf16.mxu0 0
      %674 = vmatmul.mubr.bf16.gmra.mxu0 %v491
      %v675 = vpop.f32.mrf.mxu0
      %v676 = vadd.f32 0.0, %v675
      %v677 = vpop.f32.mrf.mxu0
      %v678 = vpop.f32.mrf.mxu0
      %v679 = vadd.f32 0.0, %v678
      %v680 = vpop.f32.mrf.mxu0
      %681 = vmatprep.mubr.bf16.mxu0 0
      %682 = vmatmul.mubr.bf16.gmra.mxu0 %v492
      %v683 = vpop.f32.mrf.mxu0
      %v684 = vadd.f32 0.0, %v683
      %v685 = vpop.f32.mrf.mxu0
      %v686 = vpop.f32.mrf.mxu0
      %v687 = vadd.f32 0.0, %v686
      %v688 = vpop.f32.mrf.mxu0
      %689 = vmatprep.mubr.bf16.mxu0 0
      %690 = vmatmul.mubr.bf16.gmra.mxu0 %v493
      %v691 = vpop.f32.mrf.mxu0
      %v692 = vadd.f32 0.0, %v691
      %v693 = vpop.f32.mrf.mxu0
      %v694 = vpop.f32.mrf.mxu0
      %v695 = vadd.f32 0.0, %v694
      %v696 = vpop.f32.mrf.mxu0
      %697 = vmatprep.mubr.bf16.mxu0 0
      %698 = vmatmul.mubr.bf16.gmra.mxu0 %v494
      %v699 = vpop.f32.mrf.mxu0
      %v700 = vadd.f32 0.0, %v699
      %v701 = vpop.f32.mrf.mxu0
      %v702 = vpop.f32.mrf.mxu0
      %v703 = vadd.f32 0.0, %v702
      %v704 = vpop.f32.mrf.mxu0
      %705 = vmatprep.mubr.bf16.mxu0 0
      %706 = vmatmul.mubr.bf16.gmra.mxu0 %v495
      %v707 = vpop.f32.mrf.mxu0
      %v708 = vadd.f32 0.0, %v707
      %v709 = vpop.f32.mrf.mxu0
      %v710 = vpop.f32.mrf.mxu0
      %v711 = vadd.f32 0.0, %v710
      %v712 = vpop.f32.mrf.mxu0
      %713 = vmatprep.mubr.bf16.mxu0 0
      %714 = vmatmul.mubr.bf16.gmra.mxu0 %v496
      %v715 = vpop.f32.mrf.mxu0
      %v716 = vadd.f32 0.0, %v715
      %v717 = vpop.f32.mrf.mxu0
      %v718 = vpop.f32.mrf.mxu0
      %v719 = vadd.f32 0.0, %v718
      %v720 = vpop.f32.mrf.mxu0
      %721 = vdwg.mxu0
      %v722 = vadd.f32 %v337, %v596
      %v723 = vadd.f32 %v338, %v599
      %v724 = vadd.f32 %v339, %v604
      %v725 = vadd.f32 %v340, %v607
      %v726 = vadd.f32 %v341, %v612
      %v727 = vadd.f32 %v342, %v615
      %v728 = vadd.f32 %v343, %v620
      %v729 = vadd.f32 %v344, %v623
      %v730 = vadd.f32 %v345, %v628
      %v731 = vadd.f32 %v346, %v631
      %v732 = vadd.f32 %v347, %v636
      %v733 = vadd.f32 %v348, %v639
      %v734 = vadd.f32 %v349, %v644
      %v735 = vadd.f32 %v350, %v647
      %v736 = vadd.f32 %v351, %v652
      %v737 = vadd.f32 %v352, %v655
      %v738 = vadd.f32 %v353, %v660
      %v739 = vadd.f32 %v354, %v663
      %v740 = vadd.f32 %v355, %v668
      %v741 = vadd.f32 %v356, %v671
      %v742 = vadd.f32 %v357, %v676
      %v743 = vadd.f32 %v358, %v679
      %v744 = vadd.f32 %v359, %v684
      %v745 = vadd.f32 %v360, %v687
      %v746 = vadd.f32 %v361, %v692
      %v747 = vadd.f32 %v362, %v695
      %v748 = vadd.f32 %v363, %v700
      %v749 = vadd.f32 %v364, %v703
      %v750 = vadd.f32 %v365, %v708
      %v751 = vadd.f32 %v366, %v711
      %v752 = vadd.f32 %v367, %v716
      %v753 = vadd.f32 %v368, %v719
      %754 = vst [vmem:[#allocation2] sm:$0xff] %v722
      %755 = vst [vmem:[#allocation2 + $0x8] sm:$0xff] %v723
      %756 = vst [vmem:[#allocation2 + $0x10] sm:$0xff] %v724
      %757 = vst [vmem:[#allocation2 + $0x18] sm:$0xff] %v725
      %758 = vst [vmem:[#allocation2 + $0x20] sm:$0xff] %v726
      %759 = vst [vmem:[#allocation2 + $0x28] sm:$0xff] %v727
      %760 = vst [vmem:[#allocation2 + $0x30] sm:$0xff] %v728
      %761 = vst [vmem:[#allocation2 + $0x38] sm:$0xff] %v729
      %762 = vst [vmem:[#allocation2 + $0x40] sm:$0xff] %v730
      %763 = vst [vmem:[#allocation2 + $0x48] sm:$0xff] %v731
      %764 = vst [vmem:[#allocation2 + $0x50] sm:$0xff] %v732
      %765 = vst [vmem:[#allocation2 + $0x58] sm:$0xff] %v733
      %766 = vst [vmem:[#allocation2 + $0x60] sm:$0xff] %v734
      %767 = vst [vmem:[#allocation2 + $0x68] sm:$0xff] %v735
      %768 = vst [vmem:[#allocation2 + $0x70] sm:$0xff] %v736
      %769 = vst [vmem:[#allocation2 + $0x78] sm:$0xff] %v737
      %770 = vst [vmem:[#allocation2 + $0x80] sm:$0xff] %v738
      %771 = vst [vmem:[#allocation2 + $0x88] sm:$0xff] %v739
      %772 = vst [vmem:[#allocation2 + $0x90] sm:$0xff] %v740
      %773 = vst [vmem:[#allocation2 + $0x98] sm:$0xff] %v741
      %774 = vst [vmem:[#allocation2 + $0xa0] sm:$0xff] %v742
      %775 = vst [vmem:[#allocation2 + $0xa8] sm:$0xff] %v743
      %776 = vst [vmem:[#allocation2 + $0xb0] sm:$0xff] %v744
      %777 = vst [vmem:[#allocation2 + $0xb8] sm:$0xff] %v745
      %778 = vst [vmem:[#allocation2 + $0xc0] sm:$0xff] %v746
      %779 = vst [vmem:[#allocation2 + $0xc8] sm:$0xff] %v747
      %780 = vst [vmem:[#allocation2 + $0xd0] sm:$0xff] %v748
      %781 = vst [vmem:[#allocation2 + $0xd8] sm:$0xff] %v749
      %782 = vst [vmem:[#allocation2 + $0xe0] sm:$0xff] %v750
      %783 = vst [vmem:[#allocation2 + $0xe8] sm:$0xff] %v751
      %784 = vst [vmem:[#allocation2 + $0xf0] sm:$0xff] %v752
      %785 = vst [vmem:[#allocation2 + $0xf8] sm:$0xff] %v753
      // Predicated region
      $region41: #{resnet_forward.12} parent=35 // pred_check
        %p786 = pneg %p301
      $region42: #{resnet_forward.12} parent=35 // pred_check_branch
        %788 = sbr.rel (%p786) target = $region44
      $region43: #{resnet_forward.12} parent=35 // pred_region
        %v789 = vld [vmem:[#allocation2] sm:$0xff]
        %v790 = vld [vmem:[#allocation2 + $0x8] sm:$0xff]
        %v791 = vld [vmem:[#allocation2 + $0x10] sm:$0xff]
        %v792 = vld [vmem:[#allocation2 + $0x18] sm:$0xff]
        %v793 = vld [vmem:[#allocation2 + $0x20] sm:$0xff]
        %v794 = vld [vmem:[#allocation2 + $0x28] sm:$0xff]
        %v795 = vld [vmem:[#allocation2 + $0x30] sm:$0xff]
        %v796 = vld [vmem:[#allocation2 + $0x38] sm:$0xff]
        %v797 = vld [vmem:[#allocation2 + $0x40] sm:$0xff]
        %v798 = vld [vmem:[#allocation2 + $0x48] sm:$0xff]
        %v799 = vld [vmem:[#allocation2 + $0x50] sm:$0xff]
        %v800 = vld [vmem:[#allocation2 + $0x58] sm:$0xff]
        %v801 = vld [vmem:[#allocation2 + $0x60] sm:$0xff]
        %v802 = vld [vmem:[#allocation2 + $0x68] sm:$0xff]
        %v803 = vld [vmem:[#allocation2 + $0x70] sm:$0xff]
        %v804 = vld [vmem:[#allocation2 + $0x78] sm:$0xff]
        %v805 = vld [vmem:[#allocation2 + $0x80] sm:$0xff]
        %v806 = vld [vmem:[#allocation2 + $0x88] sm:$0xff]
        %v807 = vld [vmem:[#allocation2 + $0x90] sm:$0xff]
        %v808 = vld [vmem:[#allocation2 + $0x98] sm:$0xff]
        %v809 = vld [vmem:[#allocation2 + $0xa0] sm:$0xff]
        %v810 = vld [vmem:[#allocation2 + $0xa8] sm:$0xff]
        %v811 = vld [vmem:[#allocation2 + $0xb0] sm:$0xff]
        %v812 = vld [vmem:[#allocation2 + $0xb8] sm:$0xff]
        %v813 = vld [vmem:[#allocation2 + $0xc0] sm:$0xff]
        %v814 = vld [vmem:[#allocation2 + $0xc8] sm:$0xff]
        %v815 = vld [vmem:[#allocation2 + $0xd0] sm:$0xff]
        %v816 = vld [vmem:[#allocation2 + $0xd8] sm:$0xff]
        %v817 = vld [vmem:[#allocation2 + $0xe0] sm:$0xff]
        %v818 = vld [vmem:[#allocation2 + $0xe8] sm:$0xff]
        %v819 = vld [vmem:[#allocation2 + $0xf0] sm:$0xff]
        %v820 = vld [vmem:[#allocation2 + $0xf8] sm:$0xff]
        %v821 = vld [vmem:[%s287] sm:$0x1]
        %v823 = vlaneseq
        %v824 = vshrl.u32 %v823, 7
        %v825 = vsub.s32 0, %v824
        %v826 = vrot.slane %v821, %v825
        %v828 = vmul.f32 %v789, %v826
        %v829 = vmul.f32 %v790, %v826
        %v830 = vmul.f32 %v791, %v826
        %v831 = vmul.f32 %v792, %v826
        %v832 = vmul.f32 %v793, %v826
        %v833 = vmul.f32 %v794, %v826
        %v834 = vmul.f32 %v795, %v826
        %v835 = vmul.f32 %v796, %v826
        %v836 = vmul.f32 %v797, %v826
        %v837 = vmul.f32 %v798, %v826
        %v838 = vmul.f32 %v799, %v826
        %v839 = vmul.f32 %v800, %v826
        %v840 = vmul.f32 %v801, %v826
        %v841 = vmul.f32 %v802, %v826
        %v842 = vmul.f32 %v803, %v826
        %v843 = vmul.f32 %v804, %v826
        %v844 = vmul.f32 %v805, %v826
        %v845 = vmul.f32 %v806, %v826
        %v846 = vmul.f32 %v807, %v826
        %v847 = vmul.f32 %v808, %v826
        %v848 = vmul.f32 %v809, %v826
        %v849 = vmul.f32 %v810, %v826
        %v850 = vmul.f32 %v811, %v826
        %v851 = vmul.f32 %v812, %v826
        %v852 = vmul.f32 %v813, %v826
        %v853 = vmul.f32 %v814, %v826
        %v854 = vmul.f32 %v815, %v826
        %v855 = vmul.f32 %v816, %v826
        %v856 = vmul.f32 %v817, %v826
        %v857 = vmul.f32 %v818, %v826
        %v858 = vmul.f32 %v819, %v826
        %v859 = vmul.f32 %v820, %v826
        %v860 = vld [vmem:[%s290] sm:$0x1]
        %v862 = vlaneseq
        %v863 = vshrl.u32 %v862, 7
        %v864 = vsub.s32 0, %v863
        %v865 = vrot.slane %v860, %v864
        %v867 = vadd.f32 %v828, %v865
        %v868 = vadd.f32 %v829, %v865
        %v869 = vadd.f32 %v830, %v865
        %v870 = vadd.f32 %v831, %v865
        %v871 = vadd.f32 %v832, %v865
        %v872 = vadd.f32 %v833, %v865
        %v873 = vadd.f32 %v834, %v865
        %v874 = vadd.f32 %v835, %v865
        %v875 = vadd.f32 %v836, %v865
        %v876 = vadd.f32 %v837, %v865
        %v877 = vadd.f32 %v838, %v865
        %v878 = vadd.f32 %v839, %v865
        %v879 = vadd.f32 %v840, %v865
        %v880 = vadd.f32 %v841, %v865
        %v881 = vadd.f32 %v842, %v865
        %v882 = vadd.f32 %v843, %v865
        %v883 = vadd.f32 %v844, %v865
        %v884 = vadd.f32 %v845, %v865
        %v885 = vadd.f32 %v846, %v865
        %v886 = vadd.f32 %v847, %v865
        %v887 = vadd.f32 %v848, %v865
        %v888 = vadd.f32 %v849, %v865
        %v889 = vadd.f32 %v850, %v865
        %v890 = vadd.f32 %v851, %v865
        %v891 = vadd.f32 %v852, %v865
        %v892 = vadd.f32 %v853, %v865
        %v893 = vadd.f32 %v854, %v865
        %v894 = vadd.f32 %v855, %v865
        %v895 = vadd.f32 %v856, %v865
        %v896 = vadd.f32 %v857, %v865
        %v897 = vadd.f32 %v858, %v865
        %v898 = vadd.f32 %v859, %v865
        %v899 = vmax.f32 %v867, 0.0
        %v900 = vmax.f32 %v868, 0.0
        %v901 = vmax.f32 %v869, 0.0
        %v902 = vmax.f32 %v870, 0.0
        %v903 = vmax.f32 %v871, 0.0
        %v904 = vmax.f32 %v872, 0.0
        %v905 = vmax.f32 %v873, 0.0
        %v906 = vmax.f32 %v874, 0.0
        %v907 = vmax.f32 %v875, 0.0
        %v908 = vmax.f32 %v876, 0.0
        %v909 = vmax.f32 %v877, 0.0
        %v910 = vmax.f32 %v878, 0.0
        %v911 = vmax.f32 %v879, 0.0
        %v912 = vmax.f32 %v880, 0.0
        %v913 = vmax.f32 %v881, 0.0
        %v914 = vmax.f32 %v882, 0.0
        %v915 = vmax.f32 %v883, 0.0
        %v916 = vmax.f32 %v884, 0.0
        %v917 = vmax.f32 %v885, 0.0
        %v918 = vmax.f32 %v886, 0.0
        %v919 = vmax.f32 %v887, 0.0
        %v920 = vmax.f32 %v888, 0.0
        %v921 = vmax.f32 %v889, 0.0
        %v922 = vmax.f32 %v890, 0.0
        %v923 = vmax.f32 %v891, 0.0
        %v924 = vmax.f32 %v892, 0.0
        %v925 = vmax.f32 %v893, 0.0
        %v926 = vmax.f32 %v894, 0.0
        %v927 = vmax.f32 %v895, 0.0
        %v928 = vmax.f32 %v896, 0.0
        %v929 = vmax.f32 %v897, 0.0
        %v930 = vmax.f32 %v898, 0.0
        %v931 = vpack.c.bf16 %v900, %v899
        %v932 = vpack.c.bf16 %v902, %v901
        %v933 = vpack.c.bf16 %v904, %v903
        %v934 = vpack.c.bf16 %v906, %v905
        %v935 = vpack.c.bf16 %v908, %v907
        %v936 = vpack.c.bf16 %v910, %v909
        %v937 = vpack.c.bf16 %v912, %v911
        %v938 = vpack.c.bf16 %v914, %v913
        %v939 = vpack.c.bf16 %v916, %v915
        %v940 = vpack.c.bf16 %v918, %v917
        %v941 = vpack.c.bf16 %v920, %v919
        %v942 = vpack.c.bf16 %v922, %v921
        %v943 = vpack.c.bf16 %v924, %v923
        %v944 = vpack.c.bf16 %v926, %v925
        %v945 = vpack.c.bf16 %v928, %v927
        %v946 = vpack.c.bf16 %v930, %v929
        %v963 = vunpack.c.l.b16 %v931
        %v964 = vunpack.c.h.b16 %v931
        %v965 = vunpack.c.l.b16 %v932
        %v966 = vunpack.c.h.b16 %v932
        %v967 = vunpack.c.l.b16 %v933
        %v968 = vunpack.c.h.b16 %v933
        %v969 = vunpack.c.l.b16 %v934
        %v970 = vunpack.c.h.b16 %v934
        %v971 = vunpack.c.l.b16 %v935
        %v972 = vunpack.c.h.b16 %v935
        %v973 = vunpack.c.l.b16 %v936
        %v974 = vunpack.c.h.b16 %v936
        %v975 = vunpack.c.l.b16 %v937
        %v976 = vunpack.c.h.b16 %v937
        %v977 = vunpack.c.l.b16 %v938
        %v978 = vunpack.c.h.b16 %v938
        %v979 = vunpack.c.l.b16 %v939
        %v980 = vunpack.c.h.b16 %v939
        %v981 = vunpack.c.l.b16 %v940
        %v982 = vunpack.c.h.b16 %v940
        %v983 = vunpack.c.l.b16 %v941
        %v984 = vunpack.c.h.b16 %v941
        %v985 = vunpack.c.l.b16 %v942
        %v986 = vunpack.c.h.b16 %v942
        %v987 = vunpack.c.l.b16 %v943
        %v988 = vunpack.c.h.b16 %v943
        %v989 = vunpack.c.l.b16 %v944
        %v990 = vunpack.c.h.b16 %v944
        %v991 = vunpack.c.l.b16 %v945
        %v992 = vunpack.c.h.b16 %v945
        %v993 = vunpack.c.l.b16 %v946
        %v994 = vunpack.c.h.b16 %v946
        %v995 = vpack.c.b16 %v963, %v963
        %v996 = vpack.c.b16 %v964, %v964
        %v997 = vpack.c.b16 %v965, %v965
        %v998 = vpack.c.b16 %v966, %v966
        %v999 = vpack.c.b16 %v967, %v967
        %v1000 = vpack.c.b16 %v968, %v968
        %v1001 = vpack.c.b16 %v969, %v969
        %v1002 = vpack.c.b16 %v970, %v970
        %v1003 = vpack.c.b16 %v971, %v971
        %v1004 = vpack.c.b16 %v972, %v972
        %v1005 = vpack.c.b16 %v973, %v973
        %v1006 = vpack.c.b16 %v974, %v974
        %v1007 = vpack.c.b16 %v975, %v975
        %v1008 = vpack.c.b16 %v976, %v976
        %v1009 = vpack.c.b16 %v977, %v977
        %v1010 = vpack.c.b16 %v978, %v978
        %v1011 = vpack.c.b16 %v979, %v979
        %v1012 = vpack.c.b16 %v980, %v980
        %v1013 = vpack.c.b16 %v981, %v981
        %v1014 = vpack.c.b16 %v982, %v982
        %v1015 = vpack.c.b16 %v983, %v983
        %v1016 = vpack.c.b16 %v984, %v984
        %v1017 = vpack.c.b16 %v985, %v985
        %v1018 = vpack.c.b16 %v986, %v986
        %v1019 = vpack.c.b16 %v987, %v987
        %v1020 = vpack.c.b16 %v988, %v988
        %v1021 = vpack.c.b16 %v989, %v989
        %v1022 = vpack.c.b16 %v990, %v990
        %v1023 = vpack.c.b16 %v991, %v991
        %v1024 = vpack.c.b16 %v992, %v992
        %v1025 = vpack.c.b16 %v993, %v993
        %v1026 = vpack.c.b16 %v994, %v994
        %1059 = vst [vmem:[%s298] sm:$0xf] %v995
        %1060 = vst [vmem:[%s298 + $0x4] sm:$0xf] %v996
        %1061 = vst [vmem:[%s298 + $0x8] sm:$0xf] %v997
        %1062 = vst [vmem:[%s298 + $0xc] sm:$0xf] %v998
        %1063 = vst [vmem:[%s298 + $0x10] sm:$0xf] %v999
        %1064 = vst [vmem:[%s298 + $0x14] sm:$0xf] %v1000
        %1065 = vst [vmem:[%s298 + $0x18] sm:$0xf] %v1001
        %1066 = vst [vmem:[%s298 + $0x1c] sm:$0xf] %v1002
        %1067 = vst [vmem:[%s298 + $0x20] sm:$0xf] %v1003
        %1068 = vst [vmem:[%s298 + $0x24] sm:$0xf] %v1004
        %1069 = vst [vmem:[%s298 + $0x28] sm:$0xf] %v1005
        %1070 = vst [vmem:[%s298 + $0x2c] sm:$0xf] %v1006
        %1071 = vst [vmem:[%s298 + $0x30] sm:$0xf] %v1007
        %1072 = vst [vmem:[%s298 + $0x34] sm:$0xf] %v1008
        %1073 = vst [vmem:[%s298 + $0x38] sm:$0xf] %v1009
        %1074 = vst [vmem:[%s298 + $0x3c] sm:$0xf] %v1010
        %1075 = vst [vmem:[%s298 + $0x40] sm:$0xf] %v1011
        %1076 = vst [vmem:[%s298 + $0x44] sm:$0xf] %v1012
        %1077 = vst [vmem:[%s298 + $0x48] sm:$0xf] %v1013
        %1078 = vst [vmem:[%s298 + $0x4c] sm:$0xf] %v1014
        %1079 = vst [vmem:[%s298 + $0x50] sm:$0xf] %v1015
        %1080 = vst [vmem:[%s298 + $0x54] sm:$0xf] %v1016
        %1081 = vst [vmem:[%s298 + $0x58] sm:$0xf] %v1017
        %1082 = vst [vmem:[%s298 + $0x5c] sm:$0xf] %v1018
        %1083 = vst [vmem:[%s298 + $0x60] sm:$0xf] %v1019
        %1084 = vst [vmem:[%s298 + $0x64] sm:$0xf] %v1020
        %1085 = vst [vmem:[%s298 + $0x68] sm:$0xf] %v1021
        %1086 = vst [vmem:[%s298 + $0x6c] sm:$0xf] %v1022
        %1087 = vst [vmem:[%s298 + $0x70] sm:$0xf] %v1023
        %1088 = vst [vmem:[%s298 + $0x74] sm:$0xf] %v1024
        %1089 = vst [vmem:[%s298 + $0x78] sm:$0xf] %v1025
        %1090 = vst [vmem:[%s298 + $0x7c] sm:$0xf] %v1026
      $region44: #{resnet_forward.12} parent=35 // pred_fallthru
        _
      %s1091 = smul.u32 32, %s20
      %p1092 = scmp.lt.s32.totalorder %s1091, 63
      %s1093 = scalar_select %p1092, %s1091, 63
      %p1094 = scmp.lt.s32.totalorder %s21, 0
      %s1095 = scalar_select %p1094, %s21, 0
      %s1096 = sadd.s32 %s1095, %s1093
      %s1097 = smul.addr %s1096, 4
      %s1098 = scalar_lea.vmem %s4, %s1097
      // Predicated region
      $region45: #{resnet_forward.12} parent=35 // pred_check
        %p1099 = pneg %p162
      $region46: #{resnet_forward.12} parent=35 // pred_check_branch
        %1101 = sbr.rel (%p1099) target = $region48
      $region47: #{resnet_forward.12} parent=35 // pred_region
        %s1102 = smul.u32 32, %s20
      $region48: #{resnet_forward.12} parent=35 // pred_fallthru
        _
    $region36: #{resnet_forward.12} parent=5 // pred_fallthru
      _
    %p1103 = scmp.le.s32.totalorder 2, %s10
    // Predicated region
    $region49: #{resnet_forward.12} parent=5 // pred_check
      %p1104 = pneg %p1103
    $region50: #{resnet_forward.12} parent=5 // pred_check_branch
      %1106 = sbr.rel (%p1104) target = $region52
    $region51: #{resnet_forward.12} parent=5 // pred_region
      %s1107 = ssub.s32 %s10, 2
      // Predicated region
      $region53: #{resnet_forward.12} parent=51 // pred_check
        %p1108 = pneg %p168
      $region54: #{resnet_forward.12} parent=51 // pred_check_branch
        %1110 = sbr.rel (%p1108) target = $region56
      $region55: #{resnet_forward.12} parent=51 // pred_region
        %s1111 = smul.u32 32, %s23
        %p1112 = scmp.lt.s32.totalorder %s1111, 63
        %s1113 = scalar_select %p1112, %s1111, 63
        %p1114 = scmp.lt.s32.totalorder %s24, 0
        %s1115 = scalar_select %p1114, %s24, 0
        %s1116 = sadd.s32 %s1115, %s1113
        %s1117 = smul.addr %s1116, 4
        %s1118 = scalar_lea.vmem %s4, %s1117
      $region56: #{resnet_forward.12} parent=51 // pred_fallthru
        _
    $region52: #{resnet_forward.12} parent=5 // pred_fallthru
      _
  $region6: #{resnet_forward.12} parent=0 // loop_footer
    %s14 = sadd.s32 1, %s10
  $region7: #{resnet_forward.12} parent=0 // loop_footer_branch
    %9 = sbr.rel target = $region3
  $region8: #{resnet_forward.12} parent=0 // loop_exit
    _

// kernel: resnet_forward.13
$region0: #{resnet_forward.13}
  #allocation0 [shape = 'u32[]', space=smem, size = 0x4, offset = 0x4, fixed_abs, tag = 'smem constant byte address 0x4 - core index']
  #allocation1 [shape = 'u32[144,128]{1,0:T(1,128)}', space=vmem, size = 0x12000, scoped, tag = 'internal scratch']
  %s0 = inlined_call_operand.vmem [shape: bf16[9,128,128], index: 0, kind: input, shape index: {}]
  %s1 = inlined_call_operand.vmem [shape: bf16[128,128], index: 1, kind: output, shape index: {}]
  %s2 = sld [smem:[#allocation0]]
  $region14: #{resnet_forward.13} parent=0
    _
  %s4 = ssub.s32 1, %s2
  %s5 = scalar_select 0, %s4, %s2
  // Predicated region
  $region2: #{resnet_forward.13} parent=0 // pred_check
    _
  $region3: #{resnet_forward.13} parent=0 // pred_check_branch
    %7 = sbr.rel (0) target = $region5
  $region4: #{resnet_forward.13} parent=0 // pred_region
    _
  $region5: #{resnet_forward.13} parent=0 // pred_fallthru
    _
  %v9 = vld [vmem:[%s0] sm:$0xf]
  %v10 = vld [vmem:[%s0 + $0x4] sm:$0xf]
  %v11 = vld [vmem:[%s0 + $0x8] sm:$0xf]
  %v12 = vld [vmem:[%s0 + $0xc] sm:$0xf]
  %v13 = vld [vmem:[%s0 + $0x10] sm:$0xf]
  %v14 = vld [vmem:[%s0 + $0x14] sm:$0xf]
  %v15 = vld [vmem:[%s0 + $0x18] sm:$0xf]
  %v16 = vld [vmem:[%s0 + $0x1c] sm:$0xf]
  %v17 = vld [vmem:[%s0 + $0x20] sm:$0xf]
  %v18 = vld [vmem:[%s0 + $0x24] sm:$0xf]
  %v19 = vld [vmem:[%s0 + $0x28] sm:$0xf]
  %v20 = vld [vmem:[%s0 + $0x2c] sm:$0xf]
  %v21 = vld [vmem:[%s0 + $0x30] sm:$0xf]
  %v22 = vld [vmem:[%s0 + $0x34] sm:$0xf]
  %v23 = vld [vmem:[%s0 + $0x38] sm:$0xf]
  %v24 = vld [vmem:[%s0 + $0x3c] sm:$0xf]
  %v25 = vld [vmem:[%s0 + $0x40] sm:$0xf]
  %v26 = vld [vmem:[%s0 + $0x44] sm:$0xf]
  %v27 = vld [vmem:[%s0 + $0x48] sm:$0xf]
  %v28 = vld [vmem:[%s0 + $0x4c] sm:$0xf]
  %v29 = vld [vmem:[%s0 + $0x50] sm:$0xf]
  %v30 = vld [vmem:[%s0 + $0x54] sm:$0xf]
  %v31 = vld [vmem:[%s0 + $0x58] sm:$0xf]
  %v32 = vld [vmem:[%s0 + $0x5c] sm:$0xf]
  %v33 = vld [vmem:[%s0 + $0x60] sm:$0xf]
  %v34 = vld [vmem:[%s0 + $0x64] sm:$0xf]
  %v35 = vld [vmem:[%s0 + $0x68] sm:$0xf]
  %v36 = vld [vmem:[%s0 + $0x6c] sm:$0xf]
  %v37 = vld [vmem:[%s0 + $0x70] sm:$0xf]
  %v38 = vld [vmem:[%s0 + $0x74] sm:$0xf]
  %v39 = vld [vmem:[%s0 + $0x78] sm:$0xf]
  %v40 = vld [vmem:[%s0 + $0x7c] sm:$0xf]
  %v41 = vld [vmem:[%s0 + $0x80] sm:$0xf]
  %v42 = vld [vmem:[%s0 + $0x84] sm:$0xf]
  %v43 = vld [vmem:[%s0 + $0x88] sm:$0xf]
  %v44 = vld [vmem:[%s0 + $0x8c] sm:$0xf]
  %v45 = vld [vmem:[%s0 + $0x90] sm:$0xf]
  %v46 = vld [vmem:[%s0 + $0x94] sm:$0xf]
  %v47 = vld [vmem:[%s0 + $0x98] sm:$0xf]
  %v48 = vld [vmem:[%s0 + $0x9c] sm:$0xf]
  %v49 = vld [vmem:[%s0 + $0xa0] sm:$0xf]
  %v50 = vld [vmem:[%s0 + $0xa4] sm:$0xf]
  %v51 = vld [vmem:[%s0 + $0xa8] sm:$0xf]
  %v52 = vld [vmem:[%s0 + $0xac] sm:$0xf]
  %v53 = vld [vmem:[%s0 + $0xb0] sm:$0xf]
  %v54 = vld [vmem:[%s0 + $0xb4] sm:$0xf]
  %v55 = vld [vmem:[%s0 + $0xb8] sm:$0xf]
  %v56 = vld [vmem:[%s0 + $0xbc] sm:$0xf]
  %v57 = vld [vmem:[%s0 + $0xc0] sm:$0xf]
  %v58 = vld [vmem:[%s0 + $0xc4] sm:$0xf]
  %v59 = vld [vmem:[%s0 + $0xc8] sm:$0xf]
  %v60 = vld [vmem:[%s0 + $0xcc] sm:$0xf]
  %v61 = vld [vmem:[%s0 + $0xd0] sm:$0xf]
  %v62 = vld [vmem:[%s0 + $0xd4] sm:$0xf]
  %v63 = vld [vmem:[%s0 + $0xd8] sm:$0xf]
  %v64 = vld [vmem:[%s0 + $0xdc] sm:$0xf]
  %v65 = vld [vmem:[%s0 + $0xe0] sm:$0xf]
  %v66 = vld [vmem:[%s0 + $0xe4] sm:$0xf]
  %v67 = vld [vmem:[%s0 + $0xe8] sm:$0xf]
  %v68 = vld [vmem:[%s0 + $0xec] sm:$0xf]
  %v69 = vld [vmem:[%s0 + $0xf0] sm:$0xf]
  %v70 = vld [vmem:[%s0 + $0xf4] sm:$0xf]
  %v71 = vld [vmem:[%s0 + $0xf8] sm:$0xf]
  %v72 = vld [vmem:[%s0 + $0xfc] sm:$0xf]
  %v73 = vld [vmem:[%s0 + $0x100] sm:$0xf]
  %v74 = vld [vmem:[%s0 + $0x104] sm:$0xf]
  %v75 = vld [vmem:[%s0 + $0x108] sm:$0xf]
  %v76 = vld [vmem:[%s0 + $0x10c] sm:$0xf]
  %v77 = vld [vmem:[%s0 + $0x110] sm:$0xf]
  %v78 = vld [vmem:[%s0 + $0x114] sm:$0xf]
  %v79 = vld [vmem:[%s0 + $0x118] sm:$0xf]
  %v80 = vld [vmem:[%s0 + $0x11c] sm:$0xf]
  %v81 = vld [vmem:[%s0 + $0x120] sm:$0xf]
  %v82 = vld [vmem:[%s0 + $0x124] sm:$0xf]
  %v83 = vld [vmem:[%s0 + $0x128] sm:$0xf]
  %v84 = vld [vmem:[%s0 + $0x12c] sm:$0xf]
  %v85 = vld [vmem:[%s0 + $0x130] sm:$0xf]
  %v86 = vld [vmem:[%s0 + $0x134] sm:$0xf]
  %v87 = vld [vmem:[%s0 + $0x138] sm:$0xf]
  %v88 = vld [vmem:[%s0 + $0x13c] sm:$0xf]
  %v89 = vld [vmem:[%s0 + $0x140] sm:$0xf]
  %v90 = vld [vmem:[%s0 + $0x144] sm:$0xf]
  %v91 = vld [vmem:[%s0 + $0x148] sm:$0xf]
  %v92 = vld [vmem:[%s0 + $0x14c] sm:$0xf]
  %v93 = vld [vmem:[%s0 + $0x150] sm:$0xf]
  %v94 = vld [vmem:[%s0 + $0x154] sm:$0xf]
  %v95 = vld [vmem:[%s0 + $0x158] sm:$0xf]
  %v96 = vld [vmem:[%s0 + $0x15c] sm:$0xf]
  %v97 = vld [vmem:[%s0 + $0x160] sm:$0xf]
  %v98 = vld [vmem:[%s0 + $0x164] sm:$0xf]
  %v99 = vld [vmem:[%s0 + $0x168] sm:$0xf]
  %v100 = vld [vmem:[%s0 + $0x16c] sm:$0xf]
  %v101 = vld [vmem:[%s0 + $0x170] sm:$0xf]
  %v102 = vld [vmem:[%s0 + $0x174] sm:$0xf]
  %v103 = vld [vmem:[%s0 + $0x178] sm:$0xf]
  %v104 = vld [vmem:[%s0 + $0x17c] sm:$0xf]
  %v105 = vld [vmem:[%s0 + $0x180] sm:$0xf]
  %v106 = vld [vmem:[%s0 + $0x184] sm:$0xf]
  %v107 = vld [vmem:[%s0 + $0x188] sm:$0xf]
  %v108 = vld [vmem:[%s0 + $0x18c] sm:$0xf]
  %v109 = vld [vmem:[%s0 + $0x190] sm:$0xf]
  %v110 = vld [vmem:[%s0 + $0x194] sm:$0xf]
  %v111 = vld [vmem:[%s0 + $0x198] sm:$0xf]
  %v112 = vld [vmem:[%s0 + $0x19c] sm:$0xf]
  %v113 = vld [vmem:[%s0 + $0x1a0] sm:$0xf]
  %v114 = vld [vmem:[%s0 + $0x1a4] sm:$0xf]
  %v115 = vld [vmem:[%s0 + $0x1a8] sm:$0xf]
  %v116 = vld [vmem:[%s0 + $0x1ac] sm:$0xf]
  %v117 = vld [vmem:[%s0 + $0x1b0] sm:$0xf]
  %v118 = vld [vmem:[%s0 + $0x1b4] sm:$0xf]
  %v119 = vld [vmem:[%s0 + $0x1b8] sm:$0xf]
  %v120 = vld [vmem:[%s0 + $0x1bc] sm:$0xf]
  %v121 = vld [vmem:[%s0 + $0x1c0] sm:$0xf]
  %v122 = vld [vmem:[%s0 + $0x1c4] sm:$0xf]
  %v123 = vld [vmem:[%s0 + $0x1c8] sm:$0xf]
  %v124 = vld [vmem:[%s0 + $0x1cc] sm:$0xf]
  %v125 = vld [vmem:[%s0 + $0x1d0] sm:$0xf]
  %v126 = vld [vmem:[%s0 + $0x1d4] sm:$0xf]
  %v127 = vld [vmem:[%s0 + $0x1d8] sm:$0xf]
  %v128 = vld [vmem:[%s0 + $0x1dc] sm:$0xf]
  %v129 = vld [vmem:[%s0 + $0x1e0] sm:$0xf]
  %v130 = vld [vmem:[%s0 + $0x1e4] sm:$0xf]
  %v131 = vld [vmem:[%s0 + $0x1e8] sm:$0xf]
  %v132 = vld [vmem:[%s0 + $0x1ec] sm:$0xf]
  %v133 = vld [vmem:[%s0 + $0x1f0] sm:$0xf]
  %v134 = vld [vmem:[%s0 + $0x1f4] sm:$0xf]
  %v135 = vld [vmem:[%s0 + $0x1f8] sm:$0xf]
  %v136 = vld [vmem:[%s0 + $0x1fc] sm:$0xf]
  %v137 = vld [vmem:[%s0 + $0x200] sm:$0xf]
  %v138 = vld [vmem:[%s0 + $0x204] sm:$0xf]
  %v139 = vld [vmem:[%s0 + $0x208] sm:$0xf]
  %v140 = vld [vmem:[%s0 + $0x20c] sm:$0xf]
  %v141 = vld [vmem:[%s0 + $0x210] sm:$0xf]
  %v142 = vld [vmem:[%s0 + $0x214] sm:$0xf]
  %v143 = vld [vmem:[%s0 + $0x218] sm:$0xf]
  %v144 = vld [vmem:[%s0 + $0x21c] sm:$0xf]
  %v145 = vld [vmem:[%s0 + $0x220] sm:$0xf]
  %v146 = vld [vmem:[%s0 + $0x224] sm:$0xf]
  %v147 = vld [vmem:[%s0 + $0x228] sm:$0xf]
  %v148 = vld [vmem:[%s0 + $0x22c] sm:$0xf]
  %v149 = vld [vmem:[%s0 + $0x230] sm:$0xf]
  %v150 = vld [vmem:[%s0 + $0x234] sm:$0xf]
  %v151 = vld [vmem:[%s0 + $0x238] sm:$0xf]
  %v152 = vld [vmem:[%s0 + $0x23c] sm:$0xf]
  %vm153 = vcmask 1043456
  %v156 = vsel %vm153, %v9, 4286644096
  %v159 = vsel %vm153, %v25, 4286644096
  %v161 = vmax.bf16 %v156, %v159
  %v163 = vsel %vm153, %v41, 4286644096
  %v165 = vmax.bf16 %v161, %v163
  %v167 = vsel %vm153, %v57, 4286644096
  %v169 = vmax.bf16 %v165, %v167
  %v171 = vsel %vm153, %v73, 4286644096
  %v173 = vmax.bf16 %v169, %v171
  %v175 = vsel %vm153, %v89, 4286644096
  %v177 = vmax.bf16 %v173, %v175
  %v179 = vsel %vm153, %v105, 4286644096
  %v181 = vmax.bf16 %v177, %v179
  %v183 = vsel %vm153, %v121, 4286644096
  %v185 = vmax.bf16 %v181, %v183
  %v187 = vsel %vm153, %v137, 4286644096
  %v189 = vmax.bf16 %v185, %v187
  %v191 = vsel %vm153, %v10, 4286644096
  %v194 = vsel %vm153, %v26, 4286644096
  %v196 = vmax.bf16 %v191, %v194
  %v198 = vsel %vm153, %v42, 4286644096
  %v200 = vmax.bf16 %v196, %v198
  %v202 = vsel %vm153, %v58, 4286644096
  %v204 = vmax.bf16 %v200, %v202
  %v206 = vsel %vm153, %v74, 4286644096
  %v208 = vmax.bf16 %v204, %v206
  %v210 = vsel %vm153, %v90, 4286644096
  %v212 = vmax.bf16 %v208, %v210
  %v214 = vsel %vm153, %v106, 4286644096
  %v216 = vmax.bf16 %v212, %v214
  %v218 = vsel %vm153, %v122, 4286644096
  %v220 = vmax.bf16 %v216, %v218
  %v222 = vsel %vm153, %v138, 4286644096
  %v224 = vmax.bf16 %v220, %v222
  %v226 = vsel %vm153, %v11, 4286644096
  %v229 = vsel %vm153, %v27, 4286644096
  %v231 = vmax.bf16 %v226, %v229
  %v233 = vsel %vm153, %v43, 4286644096
  %v235 = vmax.bf16 %v231, %v233
  %v237 = vsel %vm153, %v59, 4286644096
  %v239 = vmax.bf16 %v235, %v237
  %v241 = vsel %vm153, %v75, 4286644096
  %v243 = vmax.bf16 %v239, %v241
  %v245 = vsel %vm153, %v91, 4286644096
  %v247 = vmax.bf16 %v243, %v245
  %v249 = vsel %vm153, %v107, 4286644096
  %v251 = vmax.bf16 %v247, %v249
  %v253 = vsel %vm153, %v123, 4286644096
  %v255 = vmax.bf16 %v251, %v253
  %v257 = vsel %vm153, %v139, 4286644096
  %v259 = vmax.bf16 %v255, %v257
  %v261 = vsel %vm153, %v12, 4286644096
  %v264 = vsel %vm153, %v28, 4286644096
  %v266 = vmax.bf16 %v261, %v264
  %v268 = vsel %vm153, %v44, 4286644096
  %v270 = vmax.bf16 %v266, %v268
  %v272 = vsel %vm153, %v60, 4286644096
  %v274 = vmax.bf16 %v270, %v272
  %v276 = vsel %vm153, %v76, 4286644096
  %v278 = vmax.bf16 %v274, %v276
  %v280 = vsel %vm153, %v92, 4286644096
  %v282 = vmax.bf16 %v278, %v280
  %v284 = vsel %vm153, %v108, 4286644096
  %v286 = vmax.bf16 %v282, %v284
  %v288 = vsel %vm153, %v124, 4286644096
  %v290 = vmax.bf16 %v286, %v288
  %v292 = vsel %vm153, %v140, 4286644096
  %v294 = vmax.bf16 %v290, %v292
  %v296 = vsel %vm153, %v13, 4286644096
  %v299 = vsel %vm153, %v29, 4286644096
  %v301 = vmax.bf16 %v296, %v299
  %v303 = vsel %vm153, %v45, 4286644096
  %v305 = vmax.bf16 %v301, %v303
  %v307 = vsel %vm153, %v61, 4286644096
  %v309 = vmax.bf16 %v305, %v307
  %v311 = vsel %vm153, %v77, 4286644096
  %v313 = vmax.bf16 %v309, %v311
  %v315 = vsel %vm153, %v93, 4286644096
  %v317 = vmax.bf16 %v313, %v315
  %v319 = vsel %vm153, %v109, 4286644096
  %v321 = vmax.bf16 %v317, %v319
  %v323 = vsel %vm153, %v125, 4286644096
  %v325 = vmax.bf16 %v321, %v323
  %v327 = vsel %vm153, %v141, 4286644096
  %v329 = vmax.bf16 %v325, %v327
  %v331 = vsel %vm153, %v14, 4286644096
  %v334 = vsel %vm153, %v30, 4286644096
  %v336 = vmax.bf16 %v331, %v334
  %v338 = vsel %vm153, %v46, 4286644096
  %v340 = vmax.bf16 %v336, %v338
  %v342 = vsel %vm153, %v62, 4286644096
  %v344 = vmax.bf16 %v340, %v342
  %v346 = vsel %vm153, %v78, 4286644096
  %v348 = vmax.bf16 %v344, %v346
  %v350 = vsel %vm153, %v94, 4286644096
  %v352 = vmax.bf16 %v348, %v350
  %v354 = vsel %vm153, %v110, 4286644096
  %v356 = vmax.bf16 %v352, %v354
  %v358 = vsel %vm153, %v126, 4286644096
  %v360 = vmax.bf16 %v356, %v358
  %v362 = vsel %vm153, %v142, 4286644096
  %v364 = vmax.bf16 %v360, %v362
  %v366 = vsel %vm153, %v15, 4286644096
  %v369 = vsel %vm153, %v31, 4286644096
  %v371 = vmax.bf16 %v366, %v369
  %v373 = vsel %vm153, %v47, 4286644096
  %v375 = vmax.bf16 %v371, %v373
  %v377 = vsel %vm153, %v63, 4286644096
  %v379 = vmax.bf16 %v375, %v377
  %v381 = vsel %vm153, %v79, 4286644096
  %v383 = vmax.bf16 %v379, %v381
  %v385 = vsel %vm153, %v95, 4286644096
  %v387 = vmax.bf16 %v383, %v385
  %v389 = vsel %vm153, %v111, 4286644096
  %v391 = vmax.bf16 %v387, %v389
  %v393 = vsel %vm153, %v127, 4286644096
  %v395 = vmax.bf16 %v391, %v393
  %v397 = vsel %vm153, %v143, 4286644096
  %v399 = vmax.bf16 %v395, %v397
  %v401 = vsel %vm153, %v16, 4286644096
  %v404 = vsel %vm153, %v32, 4286644096
  %v406 = vmax.bf16 %v401, %v404
  %v408 = vsel %vm153, %v48, 4286644096
  %v410 = vmax.bf16 %v406, %v408
  %v412 = vsel %vm153, %v64, 4286644096
  %v414 = vmax.bf16 %v410, %v412
  %v416 = vsel %vm153, %v80, 4286644096
  %v418 = vmax.bf16 %v414, %v416
  %v420 = vsel %vm153, %v96, 4286644096
  %v422 = vmax.bf16 %v418, %v420
  %v424 = vsel %vm153, %v112, 4286644096
  %v426 = vmax.bf16 %v422, %v424
  %v428 = vsel %vm153, %v128, 4286644096
  %v430 = vmax.bf16 %v426, %v428
  %v432 = vsel %vm153, %v144, 4286644096
  %v434 = vmax.bf16 %v430, %v432
  %v436 = vsel %vm153, %v17, 4286644096
  %v439 = vsel %vm153, %v33, 4286644096
  %v441 = vmax.bf16 %v436, %v439
  %v443 = vsel %vm153, %v49, 4286644096
  %v445 = vmax.bf16 %v441, %v443
  %v447 = vsel %vm153, %v65, 4286644096
  %v449 = vmax.bf16 %v445, %v447
  %v451 = vsel %vm153, %v81, 4286644096
  %v453 = vmax.bf16 %v449, %v451
  %v455 = vsel %vm153, %v97, 4286644096
  %v457 = vmax.bf16 %v453, %v455
  %v459 = vsel %vm153, %v113, 4286644096
  %v461 = vmax.bf16 %v457, %v459
  %v463 = vsel %vm153, %v129, 4286644096
  %v465 = vmax.bf16 %v461, %v463
  %v467 = vsel %vm153, %v145, 4286644096
  %v469 = vmax.bf16 %v465, %v467
  %v471 = vsel %vm153, %v18, 4286644096
  %v474 = vsel %vm153, %v34, 4286644096
  %v476 = vmax.bf16 %v471, %v474
  %v478 = vsel %vm153, %v50, 4286644096
  %v480 = vmax.bf16 %v476, %v478
  %v482 = vsel %vm153, %v66, 4286644096
  %v484 = vmax.bf16 %v480, %v482
  %v486 = vsel %vm153, %v82, 4286644096
  %v488 = vmax.bf16 %v484, %v486
  %v490 = vsel %vm153, %v98, 4286644096
  %v492 = vmax.bf16 %v488, %v490
  %v494 = vsel %vm153, %v114, 4286644096
  %v496 = vmax.bf16 %v492, %v494
  %v498 = vsel %vm153, %v130, 4286644096
  %v500 = vmax.bf16 %v496, %v498
  %v502 = vsel %vm153, %v146, 4286644096
  %v504 = vmax.bf16 %v500, %v502
  %v506 = vsel %vm153, %v19, 4286644096
  %v509 = vsel %vm153, %v35, 4286644096
  %v511 = vmax.bf16 %v506, %v509
  %v513 = vsel %vm153, %v51, 4286644096
  %v515 = vmax.bf16 %v511, %v513
  %v517 = vsel %vm153, %v67, 4286644096
  %v519 = vmax.bf16 %v515, %v517
  %v521 = vsel %vm153, %v83, 4286644096
  %v523 = vmax.bf16 %v519, %v521
  %v525 = vsel %vm153, %v99, 4286644096
  %v527 = vmax.bf16 %v523, %v525
  %v529 = vsel %vm153, %v115, 4286644096
  %v531 = vmax.bf16 %v527, %v529
  %v533 = vsel %vm153, %v131, 4286644096
  %v535 = vmax.bf16 %v531, %v533
  %v537 = vsel %vm153, %v147, 4286644096
  %v539 = vmax.bf16 %v535, %v537
  %v541 = vsel %vm153, %v20, 4286644096
  %v544 = vsel %vm153, %v36, 4286644096
  %v546 = vmax.bf16 %v541, %v544
  %v548 = vsel %vm153, %v52, 4286644096
  %v550 = vmax.bf16 %v546, %v548
  %v552 = vsel %vm153, %v68, 4286644096
  %v554 = vmax.bf16 %v550, %v552
  %v556 = vsel %vm153, %v84, 4286644096
  %v558 = vmax.bf16 %v554, %v556
  %v560 = vsel %vm153, %v100, 4286644096
  %v562 = vmax.bf16 %v558, %v560
  %v564 = vsel %vm153, %v116, 4286644096
  %v566 = vmax.bf16 %v562, %v564
  %v568 = vsel %vm153, %v132, 4286644096
  %v570 = vmax.bf16 %v566, %v568
  %v572 = vsel %vm153, %v148, 4286644096
  %v574 = vmax.bf16 %v570, %v572
  %v576 = vsel %vm153, %v21, 4286644096
  %v579 = vsel %vm153, %v37, 4286644096
  %v581 = vmax.bf16 %v576, %v579
  %v583 = vsel %vm153, %v53, 4286644096
  %v585 = vmax.bf16 %v581, %v583
  %v587 = vsel %vm153, %v69, 4286644096
  %v589 = vmax.bf16 %v585, %v587
  %v591 = vsel %vm153, %v85, 4286644096
  %v593 = vmax.bf16 %v589, %v591
  %v595 = vsel %vm153, %v101, 4286644096
  %v597 = vmax.bf16 %v593, %v595
  %v599 = vsel %vm153, %v117, 4286644096
  %v601 = vmax.bf16 %v597, %v599
  %v603 = vsel %vm153, %v133, 4286644096
  %v605 = vmax.bf16 %v601, %v603
  %v607 = vsel %vm153, %v149, 4286644096
  %v609 = vmax.bf16 %v605, %v607
  %v611 = vsel %vm153, %v22, 4286644096
  %v614 = vsel %vm153, %v38, 4286644096
  %v616 = vmax.bf16 %v611, %v614
  %v618 = vsel %vm153, %v54, 4286644096
  %v620 = vmax.bf16 %v616, %v618
  %v622 = vsel %vm153, %v70, 4286644096
  %v624 = vmax.bf16 %v620, %v622
  %v626 = vsel %vm153, %v86, 4286644096
  %v628 = vmax.bf16 %v624, %v626
  %v630 = vsel %vm153, %v102, 4286644096
  %v632 = vmax.bf16 %v628, %v630
  %v634 = vsel %vm153, %v118, 4286644096
  %v636 = vmax.bf16 %v632, %v634
  %v638 = vsel %vm153, %v134, 4286644096
  %v640 = vmax.bf16 %v636, %v638
  %v642 = vsel %vm153, %v150, 4286644096
  %v644 = vmax.bf16 %v640, %v642
  %v646 = vsel %vm153, %v23, 4286644096
  %v649 = vsel %vm153, %v39, 4286644096
  %v651 = vmax.bf16 %v646, %v649
  %v653 = vsel %vm153, %v55, 4286644096
  %v655 = vmax.bf16 %v651, %v653
  %v657 = vsel %vm153, %v71, 4286644096
  %v659 = vmax.bf16 %v655, %v657
  %v661 = vsel %vm153, %v87, 4286644096
  %v663 = vmax.bf16 %v659, %v661
  %v665 = vsel %vm153, %v103, 4286644096
  %v667 = vmax.bf16 %v663, %v665
  %v669 = vsel %vm153, %v119, 4286644096
  %v671 = vmax.bf16 %v667, %v669
  %v673 = vsel %vm153, %v135, 4286644096
  %v675 = vmax.bf16 %v671, %v673
  %v677 = vsel %vm153, %v151, 4286644096
  %v679 = vmax.bf16 %v675, %v677
  %v681 = vsel %vm153, %v24, 4286644096
  %v684 = vsel %vm153, %v40, 4286644096
  %v686 = vmax.bf16 %v681, %v684
  %v688 = vsel %vm153, %v56, 4286644096
  %v690 = vmax.bf16 %v686, %v688
  %v692 = vsel %vm153, %v72, 4286644096
  %v694 = vmax.bf16 %v690, %v692
  %v696 = vsel %vm153, %v88, 4286644096
  %v698 = vmax.bf16 %v694, %v696
  %v700 = vsel %vm153, %v104, 4286644096
  %v702 = vmax.bf16 %v698, %v700
  %v704 = vsel %vm153, %v120, 4286644096
  %v706 = vmax.bf16 %v702, %v704
  %v708 = vsel %vm153, %v136, 4286644096
  %v710 = vmax.bf16 %v706, %v708
  %v712 = vsel %vm153, %v152, 4286644096
  %v714 = vmax.bf16 %v710, %v712
  %715 = vst [vmem:[%s1] sm:$0xf] %v189
  %716 = vst [vmem:[%s1 + $0x4] sm:$0xf] %v224
  %717 = vst [vmem:[%s1 + $0x8] sm:$0xf] %v259
  %718 = vst [vmem:[%s1 + $0xc] sm:$0xf] %v294
  %719 = vst [vmem:[%s1 + $0x10] sm:$0xf] %v329
  %720 = vst [vmem:[%s1 + $0x14] sm:$0xf] %v364
  %721 = vst [vmem:[%s1 + $0x18] sm:$0xf] %v399
  %722 = vst [vmem:[%s1 + $0x1c] sm:$0xf] %v434
  %723 = vst [vmem:[%s1 + $0x20] sm:$0xf] %v469
  %724 = vst [vmem:[%s1 + $0x24] sm:$0xf] %v504
  %725 = vst [vmem:[%s1 + $0x28] sm:$0xf] %v539
  %726 = vst [vmem:[%s1 + $0x2c] sm:$0xf] %v574
  %727 = vst [vmem:[%s1 + $0x30] sm:$0xf] %v609
  %728 = vst [vmem:[%s1 + $0x34] sm:$0xf] %v644
  %729 = vst [vmem:[%s1 + $0x38] sm:$0xf] %v679
  %730 = vst [vmem:[%s1 + $0x3c] sm:$0xf] %v714
  // Predicated region
  $region6: #{resnet_forward.13} parent=0 // pred_check
    _
  $region7: #{resnet_forward.13} parent=0 // pred_check_branch
    %732 = sbr.rel (0) target = $region9
  $region8: #{resnet_forward.13} parent=0 // pred_region
    _
  $region9: #{resnet_forward.13} parent=0 // pred_fallthru
    _
  // Predicated region
  $region10: #{resnet_forward.13} parent=0 // pred_check
    _
  $region11: #{resnet_forward.13} parent=0 // pred_check_branch
    %734 = sbr.rel (0) target = $region13
  $region12: #{resnet_forward.13} parent=0 // pred_region
    _
  $region13: #{resnet_forward.13} parent=0 // pred_fallthru
    _

// kernel: resnet_forward.14
$region0: #{resnet_forward.14}
  #allocation0 [shape = 'u32[]', space=smem, size = 0x4, offset = 0x4, fixed_abs, tag = 'smem constant byte address 0x4 - core index']
  #allocation1 [shape = 'u32[144,128]{1,0:T(1,128)}', space=vmem, size = 0x12000, scoped, tag = 'internal scratch']
  #allocation2 [shape = 'f32[128,128]{1,0:T(8,128)}', space=vmem, size = 0x10000, scoped, tag = 'scratch operand']
  %s0 = inlined_call_operand.vmem [shape: bf16[128,128], index: 0, kind: input, shape index: {}]
  %s1 = inlined_call_operand.vmem [shape: bf16[128,128], index: 1, kind: input, shape index: {}]
  %s2 = inlined_call_operand.vmem [shape: f32[1,128], index: 2, kind: input, shape index: {}]
  %s3 = inlined_call_operand.vmem [shape: f32[1,128], index: 3, kind: input, shape index: {}]
  %s4 = inlined_call_operand.vmem [shape: bf16[128,128], index: 4, kind: output, shape index: {}]
  %s5 = sld [smem:[#allocation0]]
  $region34: #{resnet_forward.14} parent=0
    _
  %s7 = ssub.s32 1, %s5
  %s8 = scalar_select 0, %s7, %s5
  // Predicated region
  $region2: #{resnet_forward.14} parent=0 // pred_check
    _
  $region3: #{resnet_forward.14} parent=0 // pred_check_branch
    %10 = sbr.rel (0) target = $region5
  $region4: #{resnet_forward.14} parent=0 // pred_region
    _
  $region5: #{resnet_forward.14} parent=0 // pred_fallthru
    _
  // Predicated region
  $region6: #{resnet_forward.14} parent=0 // pred_check
    _
  $region7: #{resnet_forward.14} parent=0 // pred_check_branch
    %12 = sbr.rel (0) target = $region9
  $region8: #{resnet_forward.14} parent=0 // pred_region
    _
  $region9: #{resnet_forward.14} parent=0 // pred_fallthru
    _
  // Predicated region
  $region10: #{resnet_forward.14} parent=0 // pred_check
    _
  $region11: #{resnet_forward.14} parent=0 // pred_check_branch
    %14 = sbr.rel (0) target = $region13
  $region12: #{resnet_forward.14} parent=0 // pred_region
    _
  $region13: #{resnet_forward.14} parent=0 // pred_fallthru
    _
  // Predicated region
  $region14: #{resnet_forward.14} parent=0 // pred_check
    _
  $region15: #{resnet_forward.14} parent=0 // pred_check_branch
    %16 = sbr.rel (0) target = $region17
  $region16: #{resnet_forward.14} parent=0 // pred_region
    _
  $region17: #{resnet_forward.14} parent=0 // pred_fallthru
    _
  %p18 = scmp.eq.s32.totalorder 0, 0
  // Predicated region
  $region18: #{resnet_forward.14} parent=0 // pred_check
    %p19 = pneg %p18
  $region19: #{resnet_forward.14} parent=0 // pred_check_branch
    %21 = sbr.rel (%p19) target = $region21
  $region20: #{resnet_forward.14} parent=0 // pred_region
    %22 = vst [vmem:[#allocation2] sm:$0xff] 0.0
    %23 = vst [vmem:[#allocation2 + $0x8] sm:$0xff] 0.0
    %24 = vst [vmem:[#allocation2 + $0x10] sm:$0xff] 0.0
    %25 = vst [vmem:[#allocation2 + $0x18] sm:$0xff] 0.0
    %26 = vst [vmem:[#allocation2 + $0x20] sm:$0xff] 0.0
    %27 = vst [vmem:[#allocation2 + $0x28] sm:$0xff] 0.0
    %28 = vst [vmem:[#allocation2 + $0x30] sm:$0xff] 0.0
    %29 = vst [vmem:[#allocation2 + $0x38] sm:$0xff] 0.0
    %30 = vst [vmem:[#allocation2 + $0x40] sm:$0xff] 0.0
    %31 = vst [vmem:[#allocation2 + $0x48] sm:$0xff] 0.0
    %32 = vst [vmem:[#allocation2 + $0x50] sm:$0xff] 0.0
    %33 = vst [vmem:[#allocation2 + $0x58] sm:$0xff] 0.0
    %34 = vst [vmem:[#allocation2 + $0x60] sm:$0xff] 0.0
    %35 = vst [vmem:[#allocation2 + $0x68] sm:$0xff] 0.0
    %36 = vst [vmem:[#allocation2 + $0x70] sm:$0xff] 0.0
    %37 = vst [vmem:[#allocation2 + $0x78] sm:$0xff] 0.0
  $region21: #{resnet_forward.14} parent=0 // pred_fallthru
    _
  %v38 = vld [vmem:[#allocation2] sm:$0xff]
  %v39 = vld [vmem:[#allocation2 + $0x8] sm:$0xff]
  %v40 = vld [vmem:[#allocation2 + $0x10] sm:$0xff]
  %v41 = vld [vmem:[#allocation2 + $0x18] sm:$0xff]
  %v42 = vld [vmem:[#allocation2 + $0x20] sm:$0xff]
  %v43 = vld [vmem:[#allocation2 + $0x28] sm:$0xff]
  %v44 = vld [vmem:[#allocation2 + $0x30] sm:$0xff]
  %v45 = vld [vmem:[#allocation2 + $0x38] sm:$0xff]
  %v46 = vld [vmem:[#allocation2 + $0x40] sm:$0xff]
  %v47 = vld [vmem:[#allocation2 + $0x48] sm:$0xff]
  %v48 = vld [vmem:[#allocation2 + $0x50] sm:$0xff]
  %v49 = vld [vmem:[#allocation2 + $0x58] sm:$0xff]
  %v50 = vld [vmem:[#allocation2 + $0x60] sm:$0xff]
  %v51 = vld [vmem:[#allocation2 + $0x68] sm:$0xff]
  %v52 = vld [vmem:[#allocation2 + $0x70] sm:$0xff]
  %v53 = vld [vmem:[#allocation2 + $0x78] sm:$0xff]
  %v54 = vld [vmem:[%s0] sm:$0xf]
  %v55 = vld [vmem:[%s0 + $0x4] sm:$0xf]
  %v56 = vld [vmem:[%s0 + $0x8] sm:$0xf]
  %v57 = vld [vmem:[%s0 + $0xc] sm:$0xf]
  %v58 = vld [vmem:[%s0 + $0x10] sm:$0xf]
  %v59 = vld [vmem:[%s0 + $0x14] sm:$0xf]
  %v60 = vld [vmem:[%s0 + $0x18] sm:$0xf]
  %v61 = vld [vmem:[%s0 + $0x1c] sm:$0xf]
  %v62 = vld [vmem:[%s0 + $0x20] sm:$0xf]
  %v63 = vld [vmem:[%s0 + $0x24] sm:$0xf]
  %v64 = vld [vmem:[%s0 + $0x28] sm:$0xf]
  %v65 = vld [vmem:[%s0 + $0x2c] sm:$0xf]
  %v66 = vld [vmem:[%s0 + $0x30] sm:$0xf]
  %v67 = vld [vmem:[%s0 + $0x34] sm:$0xf]
  %v68 = vld [vmem:[%s0 + $0x38] sm:$0xf]
  %v69 = vld [vmem:[%s0 + $0x3c] sm:$0xf]
  %v70 = vld [vmem:[%s1] sm:$0xf]
  %v71 = vld [vmem:[%s1 + $0x4] sm:$0xf]
  %v72 = vld [vmem:[%s1 + $0x8] sm:$0xf]
  %v73 = vld [vmem:[%s1 + $0xc] sm:$0xf]
  %v74 = vld [vmem:[%s1 + $0x10] sm:$0xf]
  %v75 = vld [vmem:[%s1 + $0x14] sm:$0xf]
  %v76 = vld [vmem:[%s1 + $0x18] sm:$0xf]
  %v77 = vld [vmem:[%s1 + $0x1c] sm:$0xf]
  %v78 = vld [vmem:[%s1 + $0x20] sm:$0xf]
  %v79 = vld [vmem:[%s1 + $0x24] sm:$0xf]
  %v80 = vld [vmem:[%s1 + $0x28] sm:$0xf]
  %v81 = vld [vmem:[%s1 + $0x2c] sm:$0xf]
  %v82 = vld [vmem:[%s1 + $0x30] sm:$0xf]
  %v83 = vld [vmem:[%s1 + $0x34] sm:$0xf]
  %v84 = vld [vmem:[%s1 + $0x38] sm:$0xf]
  %v85 = vld [vmem:[%s1 + $0x3c] sm:$0xf]
  %v102 = vunpack.c.l.b16 %v54
  %v103 = vunpack.c.l.b16 %v55
  %v104 = vunpack.c.l.b16 %v56
  %v105 = vunpack.c.l.b16 %v57
  %v106 = vunpack.c.l.b16 %v58
  %v107 = vunpack.c.l.b16 %v59
  %v108 = vunpack.c.l.b16 %v60
  %v109 = vunpack.c.l.b16 %v61
  %v110 = vunpack.c.l.b16 %v62
  %v111 = vunpack.c.l.b16 %v63
  %v112 = vunpack.c.l.b16 %v64
  %v113 = vunpack.c.l.b16 %v65
  %v114 = vunpack.c.l.b16 %v66
  %v115 = vunpack.c.l.b16 %v67
  %v116 = vunpack.c.l.b16 %v68
  %v117 = vunpack.c.l.b16 %v69
  %v118 = vpack.c.b16 %v103, %v102
  %v119 = vpack.c.b16 %v105, %v104
  %v120 = vpack.c.b16 %v107, %v106
  %v121 = vpack.c.b16 %v109, %v108
  %v122 = vpack.c.b16 %v111, %v110
  %v123 = vpack.c.b16 %v113, %v112
  %v124 = vpack.c.b16 %v115, %v114
  %v125 = vpack.c.b16 %v117, %v116
  %v150 = vunpack.c.l.b16 %v70
  %v151 = vunpack.c.l.b16 %v71
  %v152 = vunpack.c.l.b16 %v72
  %v153 = vunpack.c.l.b16 %v73
  %v154 = vunpack.c.l.b16 %v74
  %v155 = vunpack.c.l.b16 %v75
  %v156 = vunpack.c.l.b16 %v76
  %v157 = vunpack.c.l.b16 %v77
  %v158 = vunpack.c.l.b16 %v78
  %v159 = vunpack.c.l.b16 %v79
  %v160 = vunpack.c.l.b16 %v80
  %v161 = vunpack.c.l.b16 %v81
  %v162 = vunpack.c.l.b16 %v82
  %v163 = vunpack.c.l.b16 %v83
  %v164 = vunpack.c.l.b16 %v84
  %v165 = vunpack.c.l.b16 %v85
  %v166 = vpack.c.b16 %v151, %v150
  %v167 = vpack.c.b16 %v153, %v152
  %v168 = vpack.c.b16 %v155, %v154
  %v169 = vpack.c.b16 %v157, %v156
  %v170 = vpack.c.b16 %v159, %v158
  %v171 = vpack.c.b16 %v161, %v160
  %v172 = vpack.c.b16 %v163, %v162
  %v173 = vpack.c.b16 %v165, %v164
  %182 = vmatprep.subr.bf16.mxu0 0
  %183 = vmatpush1.bf16.msra.mxu0 %v173
  %184 = vmatprep.subr.bf16.mxu0 0
  %185 = vmatpush1.bf16.msra.mxu0 %v172
  %186 = vmatprep.subr.bf16.mxu0 0
  %187 = vmatpush1.bf16.msra.mxu0 %v171
  %188 = vmatprep.subr.bf16.mxu0 0
  %189 = vmatpush1.bf16.msra.mxu0 %v170
  %190 = vmatprep.subr.bf16.mxu0 0
  %191 = vmatpush1.bf16.msra.mxu0 %v169
  %192 = vmatprep.subr.bf16.mxu0 0
  %193 = vmatpush1.bf16.msra.mxu0 %v168
  %194 = vmatprep.subr.bf16.mxu0 0
  %195 = vmatpush1.bf16.msra.mxu0 %v167
  %196 = vmatprep.subr.bf16.mxu0 0
  %197 = vmatpush1.bf16.msra.mxu0 %v166
  %198 = vmatprep.subr.bf16.mxu0 0
  %199 = vmatpush2.bf16.msra.mxu0 0
  %200 = vmatprep.subr.bf16.mxu0 0
  %201 = vmatpush2.bf16.msra.mxu0 0
  %202 = vmatprep.subr.bf16.mxu0 0
  %203 = vmatpush2.bf16.msra.mxu0 0
  %204 = vmatprep.subr.bf16.mxu0 0
  %205 = vmatpush2.bf16.msra.mxu0 0
  %206 = vmatprep.subr.bf16.mxu0 0
  %207 = vmatpush2.bf16.msra.mxu0 0
  %208 = vmatprep.subr.bf16.mxu0 0
  %209 = vmatpush2.bf16.msra.mxu0 0
  %210 = vmatprep.subr.bf16.mxu0 0
  %211 = vmatpush2.bf16.msra.mxu0 0
  %212 = vmatprep.subr.bf16.mxu0 0
  %213 = vmatpush2.bf16.msra.mxu0 0
  %214 = vmatprep.mubr.bf16.mxu0 0
  %215 = vmatmul.mubr.bf16.gmra.mxu0 %v118
  %v216 = vpop.f32.mrf.mxu0
  %v217 = vadd.f32 0.0, %v216
  %v218 = vpop.f32.mrf.mxu0
  %v219 = vpop.f32.mrf.mxu0
  %v220 = vadd.f32 0.0, %v219
  %v221 = vpop.f32.mrf.mxu0
  %222 = vmatprep.mubr.bf16.mxu0 0
  %223 = vmatmul.mubr.bf16.gmra.mxu0 %v119
  %v224 = vpop.f32.mrf.mxu0
  %v225 = vadd.f32 0.0, %v224
  %v226 = vpop.f32.mrf.mxu0
  %v227 = vpop.f32.mrf.mxu0
  %v228 = vadd.f32 0.0, %v227
  %v229 = vpop.f32.mrf.mxu0
  %230 = vmatprep.mubr.bf16.mxu0 0
  %231 = vmatmul.mubr.bf16.gmra.mxu0 %v120
  %v232 = vpop.f32.mrf.mxu0
  %v233 = vadd.f32 0.0, %v232
  %v234 = vpop.f32.mrf.mxu0
  %v235 = vpop.f32.mrf.mxu0
  %v236 = vadd.f32 0.0, %v235
  %v237 = vpop.f32.mrf.mxu0
  %238 = vmatprep.mubr.bf16.mxu0 0
  %239 = vmatmul.mubr.bf16.gmra.mxu0 %v121
  %v240 = vpop.f32.mrf.mxu0
  %v241 = vadd.f32 0.0, %v240
  %v242 = vpop.f32.mrf.mxu0
  %v243 = vpop.f32.mrf.mxu0
  %v244 = vadd.f32 0.0, %v243
  %v245 = vpop.f32.mrf.mxu0
  %246 = vmatprep.mubr.bf16.mxu0 0
  %247 = vmatmul.mubr.bf16.gmra.mxu0 %v122
  %v248 = vpop.f32.mrf.mxu0
  %v249 = vadd.f32 0.0, %v248
  %v250 = vpop.f32.mrf.mxu0
  %v251 = vpop.f32.mrf.mxu0
  %v252 = vadd.f32 0.0, %v251
  %v253 = vpop.f32.mrf.mxu0
  %254 = vmatprep.mubr.bf16.mxu0 0
  %255 = vmatmul.mubr.bf16.gmra.mxu0 %v123
  %v256 = vpop.f32.mrf.mxu0
  %v257 = vadd.f32 0.0, %v256
  %v258 = vpop.f32.mrf.mxu0
  %v259 = vpop.f32.mrf.mxu0
  %v260 = vadd.f32 0.0, %v259
  %v261 = vpop.f32.mrf.mxu0
  %262 = vmatprep.mubr.bf16.mxu0 0
  %263 = vmatmul.mubr.bf16.gmra.mxu0 %v124
  %v264 = vpop.f32.mrf.mxu0
  %v265 = vadd.f32 0.0, %v264
  %v266 = vpop.f32.mrf.mxu0
  %v267 = vpop.f32.mrf.mxu0
  %v268 = vadd.f32 0.0, %v267
  %v269 = vpop.f32.mrf.mxu0
  %270 = vmatprep.mubr.bf16.mxu0 0
  %271 = vmatmul.mubr.bf16.gmra.mxu0 %v125
  %v272 = vpop.f32.mrf.mxu0
  %v273 = vadd.f32 0.0, %v272
  %v274 = vpop.f32.mrf.mxu0
  %v275 = vpop.f32.mrf.mxu0
  %v276 = vadd.f32 0.0, %v275
  %v277 = vpop.f32.mrf.mxu0
  %278 = vdwg.mxu0
  %v279 = vadd.f32 %v38, %v217
  %v280 = vadd.f32 %v39, %v220
  %v281 = vadd.f32 %v40, %v225
  %v282 = vadd.f32 %v41, %v228
  %v283 = vadd.f32 %v42, %v233
  %v284 = vadd.f32 %v43, %v236
  %v285 = vadd.f32 %v44, %v241
  %v286 = vadd.f32 %v45, %v244
  %v287 = vadd.f32 %v46, %v249
  %v288 = vadd.f32 %v47, %v252
  %v289 = vadd.f32 %v48, %v257
  %v290 = vadd.f32 %v49, %v260
  %v291 = vadd.f32 %v50, %v265
  %v292 = vadd.f32 %v51, %v268
  %v293 = vadd.f32 %v52, %v273
  %v294 = vadd.f32 %v53, %v276
  %295 = vst [vmem:[#allocation2] sm:$0xff] %v279
  %296 = vst [vmem:[#allocation2 + $0x8] sm:$0xff] %v280
  %297 = vst [vmem:[#allocation2 + $0x10] sm:$0xff] %v281
  %298 = vst [vmem:[#allocation2 + $0x18] sm:$0xff] %v282
  %299 = vst [vmem:[#allocation2 + $0x20] sm:$0xff] %v283
  %300 = vst [vmem:[#allocation2 + $0x28] sm:$0xff] %v284
  %301 = vst [vmem:[#allocation2 + $0x30] sm:$0xff] %v285
  %302 = vst [vmem:[#allocation2 + $0x38] sm:$0xff] %v286
  %303 = vst [vmem:[#allocation2 + $0x40] sm:$0xff] %v287
  %304 = vst [vmem:[#allocation2 + $0x48] sm:$0xff] %v288
  %305 = vst [vmem:[#allocation2 + $0x50] sm:$0xff] %v289
  %306 = vst [vmem:[#allocation2 + $0x58] sm:$0xff] %v290
  %307 = vst [vmem:[#allocation2 + $0x60] sm:$0xff] %v291
  %308 = vst [vmem:[#allocation2 + $0x68] sm:$0xff] %v292
  %309 = vst [vmem:[#allocation2 + $0x70] sm:$0xff] %v293
  %310 = vst [vmem:[#allocation2 + $0x78] sm:$0xff] %v294
  // Predicated region
  $region22: #{resnet_forward.14} parent=0 // pred_check
    %p311 = pneg %p18
  $region23: #{resnet_forward.14} parent=0 // pred_check_branch
    %313 = sbr.rel (%p311) target = $region25
  $region24: #{resnet_forward.14} parent=0 // pred_region
    %v314 = vld [vmem:[#allocation2] sm:$0xff]
    %v315 = vld [vmem:[#allocation2 + $0x8] sm:$0xff]
    %v316 = vld [vmem:[#allocation2 + $0x10] sm:$0xff]
    %v317 = vld [vmem:[#allocation2 + $0x18] sm:$0xff]
    %v318 = vld [vmem:[#allocation2 + $0x20] sm:$0xff]
    %v319 = vld [vmem:[#allocation2 + $0x28] sm:$0xff]
    %v320 = vld [vmem:[#allocation2 + $0x30] sm:$0xff]
    %v321 = vld [vmem:[#allocation2 + $0x38] sm:$0xff]
    %v322 = vld [vmem:[#allocation2 + $0x40] sm:$0xff]
    %v323 = vld [vmem:[#allocation2 + $0x48] sm:$0xff]
    %v324 = vld [vmem:[#allocation2 + $0x50] sm:$0xff]
    %v325 = vld [vmem:[#allocation2 + $0x58] sm:$0xff]
    %v326 = vld [vmem:[#allocation2 + $0x60] sm:$0xff]
    %v327 = vld [vmem:[#allocation2 + $0x68] sm:$0xff]
    %v328 = vld [vmem:[#allocation2 + $0x70] sm:$0xff]
    %v329 = vld [vmem:[#allocation2 + $0x78] sm:$0xff]
    %v330 = vld [vmem:[%s2] sm:$0x1]
    %v332 = vlaneseq
    %v333 = vshrl.u32 %v332, 7
    %v334 = vsub.s32 0, %v333
    %v335 = vrot.slane %v330, %v334
    %v337 = vmul.f32 %v314, %v335
    %v338 = vmul.f32 %v315, %v335
    %v339 = vmul.f32 %v316, %v335
    %v340 = vmul.f32 %v317, %v335
    %v341 = vmul.f32 %v318, %v335
    %v342 = vmul.f32 %v319, %v335
    %v343 = vmul.f32 %v320, %v335
    %v344 = vmul.f32 %v321, %v335
    %v345 = vmul.f32 %v322, %v335
    %v346 = vmul.f32 %v323, %v335
    %v347 = vmul.f32 %v324, %v335
    %v348 = vmul.f32 %v325, %v335
    %v349 = vmul.f32 %v326, %v335
    %v350 = vmul.f32 %v327, %v335
    %v351 = vmul.f32 %v328, %v335
    %v352 = vmul.f32 %v329, %v335
    %v353 = vld [vmem:[%s3] sm:$0x1]
    %v355 = vlaneseq
    %v356 = vshrl.u32 %v355, 7
    %v357 = vsub.s32 0, %v356
    %v358 = vrot.slane %v353, %v357
    %v360 = vadd.f32 %v337, %v358
    %v361 = vadd.f32 %v338, %v358
    %v362 = vadd.f32 %v339, %v358
    %v363 = vadd.f32 %v340, %v358
    %v364 = vadd.f32 %v341, %v358
    %v365 = vadd.f32 %v342, %v358
    %v366 = vadd.f32 %v343, %v358
    %v367 = vadd.f32 %v344, %v358
    %v368 = vadd.f32 %v345, %v358
    %v369 = vadd.f32 %v346, %v358
    %v370 = vadd.f32 %v347, %v358
    %v371 = vadd.f32 %v348, %v358
    %v372 = vadd.f32 %v349, %v358
    %v373 = vadd.f32 %v350, %v358
    %v374 = vadd.f32 %v351, %v358
    %v375 = vadd.f32 %v352, %v358
    %v376 = vpack.c.bf16 %v361, %v360
    %v377 = vpack.c.bf16 %v363, %v362
    %v378 = vpack.c.bf16 %v365, %v364
    %v379 = vpack.c.bf16 %v367, %v366
    %v380 = vpack.c.bf16 %v369, %v368
    %v381 = vpack.c.bf16 %v371, %v370
    %v382 = vpack.c.bf16 %v373, %v372
    %v383 = vpack.c.bf16 %v375, %v374
    %v392 = vunpack.c.l.b16 %v376
    %v393 = vunpack.c.h.b16 %v376
    %v394 = vunpack.c.l.b16 %v377
    %v395 = vunpack.c.h.b16 %v377
    %v396 = vunpack.c.l.b16 %v378
    %v397 = vunpack.c.h.b16 %v378
    %v398 = vunpack.c.l.b16 %v379
    %v399 = vunpack.c.h.b16 %v379
    %v400 = vunpack.c.l.b16 %v380
    %v401 = vunpack.c.h.b16 %v380
    %v402 = vunpack.c.l.b16 %v381
    %v403 = vunpack.c.h.b16 %v381
    %v404 = vunpack.c.l.b16 %v382
    %v405 = vunpack.c.h.b16 %v382
    %v406 = vunpack.c.l.b16 %v383
    %v407 = vunpack.c.h.b16 %v383
    %v408 = vpack.c.b16 %v392, %v392
    %v409 = vpack.c.b16 %v393, %v393
    %v410 = vpack.c.b16 %v394, %v394
    %v411 = vpack.c.b16 %v395, %v395
    %v412 = vpack.c.b16 %v396, %v396
    %v413 = vpack.c.b16 %v397, %v397
    %v414 = vpack.c.b16 %v398, %v398
    %v415 = vpack.c.b16 %v399, %v399
    %v416 = vpack.c.b16 %v400, %v400
    %v417 = vpack.c.b16 %v401, %v401
    %v418 = vpack.c.b16 %v402, %v402
    %v419 = vpack.c.b16 %v403, %v403
    %v420 = vpack.c.b16 %v404, %v404
    %v421 = vpack.c.b16 %v405, %v405
    %v422 = vpack.c.b16 %v406, %v406
    %v423 = vpack.c.b16 %v407, %v407
    %440 = vst [vmem:[%s4] sm:$0xf] %v408
    %441 = vst [vmem:[%s4 + $0x4] sm:$0xf] %v409
    %442 = vst [vmem:[%s4 + $0x8] sm:$0xf] %v410
    %443 = vst [vmem:[%s4 + $0xc] sm:$0xf] %v411
    %444 = vst [vmem:[%s4 + $0x10] sm:$0xf] %v412
    %445 = vst [vmem:[%s4 + $0x14] sm:$0xf] %v413
    %446 = vst [vmem:[%s4 + $0x18] sm:$0xf] %v414
    %447 = vst [vmem:[%s4 + $0x1c] sm:$0xf] %v415
    %448 = vst [vmem:[%s4 + $0x20] sm:$0xf] %v416
    %449 = vst [vmem:[%s4 + $0x24] sm:$0xf] %v417
    %450 = vst [vmem:[%s4 + $0x28] sm:$0xf] %v418
    %451 = vst [vmem:[%s4 + $0x2c] sm:$0xf] %v419
    %452 = vst [vmem:[%s4 + $0x30] sm:$0xf] %v420
    %453 = vst [vmem:[%s4 + $0x34] sm:$0xf] %v421
    %454 = vst [vmem:[%s4 + $0x38] sm:$0xf] %v422
    %455 = vst [vmem:[%s4 + $0x3c] sm:$0xf] %v423
  $region25: #{resnet_forward.14} parent=0 // pred_fallthru
    _
  // Predicated region
  $region26: #{resnet_forward.14} parent=0 // pred_check
    _
  $region27: #{resnet_forward.14} parent=0 // pred_check_branch
    %457 = sbr.rel (0) target = $region29
  $region28: #{resnet_forward.14} parent=0 // pred_region
    _
  $region29: #{resnet_forward.14} parent=0 // pred_fallthru
    _
  // Predicated region
  $region30: #{resnet_forward.14} parent=0 // pred_check
    _
  $region31: #{resnet_forward.14} parent=0 // pred_check_branch
    %459 = sbr.rel (0) target = $region33
  $region32: #{resnet_forward.14} parent=0 // pred_region
    _
  $region33: #{resnet_forward.14} parent=0 // pred_fallthru
    _

// kernel: resnet_forward.15
$region0: #{resnet_forward.15}
  #allocation0 [shape = 'u32[]', space=smem, size = 0x4, offset = 0x4, fixed_abs, tag = 'smem constant byte address 0x4 - core index']
  #allocation1 [shape = 'u32[144,128]{1,0:T(1,128)}', space=vmem, size = 0x12000, scoped, tag = 'internal scratch']
  #allocation2 [shape = 'f32[128,128]{1,0:T(8,128)}', space=vmem, size = 0x10000, scoped, tag = 'scratch operand']
  %s0 = inlined_call_operand.vmem [shape: bf16[128,1536], index: 0, kind: input, shape index: {}]
  %s1 = inlined_call_operand.vmem [shape: bf16[1536,128], index: 1, kind: input, shape index: {}]
  %s2 = inlined_call_operand.vmem [shape: f32[1,128], index: 2, kind: input, shape index: {}]
  %s3 = inlined_call_operand.vmem [shape: f32[1,128], index: 3, kind: input, shape index: {}]
  %s4 = inlined_call_operand.vmem [shape: bf16[128,128], index: 4, kind: output, shape index: {}]
  %s5 = sld [smem:[#allocation0]]
  $region80: #{resnet_forward.15} parent=0
    _
  %s7 = ssub.s32 1, %s5
  %s8 = scalar_select 0, %s7, %s5
  $region1: #{resnet_forward.15} parent=0
    #allocation3 [shape = 'u8[262144]{0}', space=vmem, size = 0x40000, scoped, tag = 'input window, operand 0']
    loop: start=0, step=1, limit=5
    $region2: #{resnet_forward.15} parent=1 // loop_pre_header
      _
    $region3: #{resnet_forward.15} parent=1 // loop_header
      %s10 = sphi 0, %s14
      %p11 = scmp.ge.s32.totalorder %s10, 5
      %s17 = sphi 0, %s36
      %s18 = sphi 0, %s32
      %s19 = sphi 0, %s28
      %s20 = sphi 0, %s17
      %s21 = sphi 0, %s18
      %s22 = sphi 0, %s19
      %s23 = sphi 0, %s20
      %s24 = sphi 0, %s21
      %s25 = sphi 0, %s22
      %s41 = sphi 0, %s43
      %s44 = sphi 0, %s41
      %s45 = sphi 0, %s44
      %s61 = sphi 0, %s45
      %s69 = sphi 0, %s71
      %s72 = sphi 0, %s69
      %s73 = sphi 0, %s72
      %s89 = sphi 0, %s73
      %s95 = sphi 0, %s97
      %s98 = sphi 0, %s95
      %s99 = sphi 0, %s98
      %s115 = sphi 0, %s99
      %s121 = sphi 0, %s123
      %s124 = sphi 0, %s121
      %s125 = sphi 0, %s124
      %s141 = sphi 0, %s125
      %s149 = sphi 0, %s151
      %s152 = sphi 0, %s149
      %s153 = sphi 0, %s152
      %s169 = sphi 0, %s153
    $region4: #{resnet_forward.15} parent=1 // loop_header_branch
      %13 = sbr.rel (%p11) target = $region8
    $region5: #{resnet_forward.15} parent=1 // loop_body
      %s15 = ssub.s32 %s10, 1
      %s16 = ssub.s32 %s10, 2
      %s26 = sadd.s32 1, %s19
      %p27 = scmp.ge.s32.totalorder %s26, 3
      %s28 = scalar_select %p27, 0, %s26
      %s29 = sadd.s32 1, %s18
      %s30 = scalar_select %p27, %s29, %s18
      %p31 = scmp.ge.s32.totalorder %s30, 1
      %s32 = scalar_select %p31, 0, %s30
      %s33 = sadd.s32 1, %s17
      %s34 = scalar_select %p31, %s33, %s17
      %p35 = scmp.ge.s32.totalorder %s34, 1
      %s36 = scalar_select %p35, 0, %s34
      %s37 = ssub.s32 %s17, %s36
      %s38 = ssub.s32 %s19, %s28
      %s39 = sor.u32 %s37, %s38
      %p40 = scmp.eq.s32.totalorder %s39, 0
      %s42 = sadd.s32 %s41, 1
      %s43 = scalar_select %p40, %s41, %s42
      %p46 = pneg %p40
      %p47 = scmp.eq.s32.totalorder %s10, 2
      %p48 = por %p46, %p47
      %p49 = scmp.ne.s32.totalorder %s41, %s44
      %p50 = scmp.eq.s32.totalorder %s10, 0
      %p51 = por %p49, %p50
      %p52 = scmp.ne.s32.totalorder %s41, %s44
      %p53 = scmp.eq.s32.totalorder %s15, 2
      %p54 = por %p52, %p53
      %p55 = scmp.ne.s32.totalorder %s44, %s45
      %p56 = scmp.eq.s32.totalorder %s15, 0
      %p57 = por %p55, %p56
      %p58 = scmp.ne.s32.totalorder %s44, %s45
      %p59 = scmp.eq.s32.totalorder %s16, 2
      %p60 = por %p58, %p59
      %p62 = scmp.ne.s32.totalorder %s45, %s61
      %p63 = scmp.eq.s32.totalorder %s16, 0
      %p64 = por %p62, %p63
      %s65 = ssub.s32 %s19, %s28
      %s66 = ssub.s32 %s18, %s32
      %s67 = sor.u32 %s65, %s66
      %p68 = scmp.eq.s32.totalorder %s67, 0
      %s70 = sadd.s32 %s69, 1
      %s71 = scalar_select %p68, %s69, %s70
      %p74 = pneg %p68
      %p75 = scmp.eq.s32.totalorder %s10, 2
      %p76 = por %p74, %p75
      %p77 = scmp.ne.s32.totalorder %s69, %s72
      %p78 = scmp.eq.s32.totalorder %s10, 0
      %p79 = por %p77, %p78
      %p80 = scmp.ne.s32.totalorder %s69, %s72
      %p81 = scmp.eq.s32.totalorder %s15, 2
      %p82 = por %p80, %p81
      %p83 = scmp.ne.s32.totalorder %s72, %s73
      %p84 = scmp.eq.s32.totalorder %s15, 0
      %p85 = por %p83, %p84
      %p86 = scmp.ne.s32.totalorder %s72, %s73
      %p87 = scmp.eq.s32.totalorder %s16, 2
      %p88 = por %p86, %p87
      %p90 = scmp.ne.s32.totalorder %s73, %s89
      %p91 = scmp.eq.s32.totalorder %s16, 0
      %p92 = por %p90, %p91
      %s93 = ssub.s32 %s18, %s32
      %p94 = scmp.eq.s32.totalorder %s93, 0
      %s96 = sadd.s32 %s95, 1
      %s97 = scalar_select %p94, %s95, %s96
      %p100 = pneg %p94
      %p101 = scmp.eq.s32.totalorder %s10, 2
      %p102 = por %p100, %p101
      %p103 = scmp.ne.s32.totalorder %s95, %s98
      %p104 = scmp.eq.s32.totalorder %s10, 0
      %p105 = por %p103, %p104
      %p106 = scmp.ne.s32.totalorder %s95, %s98
      %p107 = scmp.eq.s32.totalorder %s15, 2
      %p108 = por %p106, %p107
      %p109 = scmp.ne.s32.totalorder %s98, %s99
      %p110 = scmp.eq.s32.totalorder %s15, 0
      %p111 = por %p109, %p110
      %p112 = scmp.ne.s32.totalorder %s98, %s99
      %p113 = scmp.eq.s32.totalorder %s16, 2
      %p114 = por %p112, %p113
      %p116 = scmp.ne.s32.totalorder %s99, %s115
      %p117 = scmp.eq.s32.totalorder %s16, 0
      %p118 = por %p116, %p117
      %s119 = ssub.s32 %s18, %s32
      %p120 = scmp.eq.s32.totalorder %s119, 0
      %s122 = sadd.s32 %s121, 1
      %s123 = scalar_select %p120, %s121, %s122
      %p126 = pneg %p120
      %p127 = scmp.eq.s32.totalorder %s10, 2
      %p128 = por %p126, %p127
      %p129 = scmp.ne.s32.totalorder %s121, %s124
      %p130 = scmp.eq.s32.totalorder %s10, 0
      %p131 = por %p129, %p130
      %p132 = scmp.ne.s32.totalorder %s121, %s124
      %p133 = scmp.eq.s32.totalorder %s15, 2
      %p134 = por %p132, %p133
      %p135 = scmp.ne.s32.totalorder %s124, %s125
      %p136 = scmp.eq.s32.totalorder %s15, 0
      %p137 = por %p135, %p136
      %p138 = scmp.ne.s32.totalorder %s124, %s125
      %p139 = scmp.eq.s32.totalorder %s16, 2
      %p140 = por %p138, %p139
      %p142 = scmp.ne.s32.totalorder %s125, %s141
      %p143 = scmp.eq.s32.totalorder %s16, 0
      %p144 = por %p142, %p143
      %s145 = ssub.s32 %s17, %s36
      %s146 = ssub.s32 %s18, %s32
      %s147 = sor.u32 %s145, %s146
      %p148 = scmp.eq.s32.totalorder %s147, 0
      %s150 = sadd.s32 %s149, 1
      %s151 = scalar_select %p148, %s149, %s150
      %p154 = pneg %p148
      %p155 = scmp.eq.s32.totalorder %s10, 2
      %p156 = por %p154, %p155
      %p157 = scmp.ne.s32.totalorder %s149, %s152
      %p158 = scmp.eq.s32.totalorder %s10, 0
      %p159 = por %p157, %p158
      %p160 = scmp.ne.s32.totalorder %s149, %s152
      %p161 = scmp.eq.s32.totalorder %s15, 2
      %p162 = por %p160, %p161
      %p163 = scmp.ne.s32.totalorder %s152, %s153
      %p164 = scmp.eq.s32.totalorder %s15, 0
      %p165 = por %p163, %p164
      %p166 = scmp.ne.s32.totalorder %s152, %s153
      %p167 = scmp.eq.s32.totalorder %s16, 2
      %p168 = por %p166, %p167
      %p170 = scmp.ne.s32.totalorder %s153, %s169
      %p171 = scmp.eq.s32.totalorder %s16, 0
      %p172 = por %p170, %p171
      %p173 = scmp.le.s32.totalorder 1, %s10
      %p174 = scmp.lt.s32.totalorder %s10, 4
      %p175 = pnand %p173, %p174
      %p176 = pneg %p175
      // Predicated region
      $region9: #{resnet_forward.15} parent=5 // pred_check
        _
      $region10: #{resnet_forward.15} parent=5 // pred_check_branch
        %178 = sbr.rel (%p175) target = $region12
      $region11: #{resnet_forward.15} parent=5 // pred_region
        %s179 = ssub.s32 %s10, 1
        // Predicated region
        $region13: #{resnet_forward.15} parent=11 // pred_check
          %p180 = pneg %p111
        $region14: #{resnet_forward.15} parent=11 // pred_check_branch
          %182 = sbr.rel (%p180) target = $region16
        $region15: #{resnet_forward.15} parent=11 // pred_region
          %p183 = scmp.lt.s32.totalorder %s21, 0
          %s184 = scalar_select %p183, %s21, 0
          %s185 = scalar_lea.vmem %s2, %s184
        $region16: #{resnet_forward.15} parent=11 // pred_fallthru
          _
        // Predicated region
        $region17: #{resnet_forward.15} parent=11 // pred_check
          %p186 = pneg %p137
        $region18: #{resnet_forward.15} parent=11 // pred_check_branch
          %188 = sbr.rel (%p186) target = $region20
        $region19: #{resnet_forward.15} parent=11 // pred_region
          %p189 = scmp.lt.s32.totalorder %s21, 0
          %s190 = scalar_select %p189, %s21, 0
          %s191 = scalar_lea.vmem %s3, %s190
        $region20: #{resnet_forward.15} parent=11 // pred_fallthru
          _
      $region12: #{resnet_forward.15} parent=5 // pred_fallthru
        _
      %p192 = scmp.lt.s32.totalorder %s10, 3
      // Predicated region
      $region21: #{resnet_forward.15} parent=5 // pred_check
        %p193 = pneg %p192
      $region22: #{resnet_forward.15} parent=5 // pred_check_branch
        %195 = sbr.rel (%p193) target = $region24
      $region23: #{resnet_forward.15} parent=5 // pred_region
        // Predicated region
        $region25: #{resnet_forward.15} parent=23 // pred_check
          %p196 = pneg %p51
        $region26: #{resnet_forward.15} parent=23 // pred_check_branch
          %198 = sbr.rel (%p196) target = $region28
        $region27: #{resnet_forward.15} parent=23 // pred_region
          %s199 = sand.u32 %s41, 1
          %s200 = sand.u32 %s41, 1
          %s201 = smul.addr %s200, 256
          %s202 = scalar_lea.vmem [#allocation3], %s201
          %s203 = smul.u32 16, %s17
          %s204 = smul.u32 4, %s19
          %s205 = smul.addr %s203, 12
          %s206 = sadd.s32 %s204, %s205
          %s207 = smul.addr %s206, 4
          %s208 = scalar_lea.vmem %s0, %s207
          // Predicated region
          $region29: #{resnet_forward.15} parent=27 // pred_check
            _
          $region30: #{resnet_forward.15} parent=27 // pred_check_branch
            %210 = sbr.rel (0) target = $region32
          $region31: #{resnet_forward.15} parent=27 // pred_region
            // Predicated region
            $region33: #{resnet_forward.15} parent=31 // pred_check
              _
            $region34: #{resnet_forward.15} parent=31 // pred_check_branch
              %212 = sbr.rel (0) target = $region36
            $region35: #{resnet_forward.15} parent=31 // pred_region
              loop: start=0, step=1, limit=1
              $region37: #{resnet_forward.15} parent=35 // loop_pre_header
                _
              $region38: #{resnet_forward.15} parent=35 // loop_header
                %s214 = sphi 0, %s218
                %p215 = scmp.ge.s32.totalorder %s214, 1
                %s219 = sphi %s208, %s208
                %s220 = sphi %s202, %s202
              $region39: #{resnet_forward.15} parent=35 // loop_header_branch
                %217 = sbr.rel (%p215) target = $region43
              $region40: #{resnet_forward.15} parent=35 // loop_body
                %v221 = vld [vmem:[%s219] sm:$0xff]
                %222 = vst [vmem:[%s220] sm:$0xff] %v221
                %v223 = vld [vmem:[%s219 + $0x8] sm:$0xff]
                %224 = vst [vmem:[%s220 + $0x8] sm:$0xff] %v223
                %v225 = vld [vmem:[%s219 + $0x30] sm:$0xff]
                %226 = vst [vmem:[%s220 + $0x10] sm:$0xff] %v225
                %v227 = vld [vmem:[%s219 + $0x38] sm:$0xff]
                %228 = vst [vmem:[%s220 + $0x18] sm:$0xff] %v227
                %v229 = vld [vmem:[%s219 + $0x60] sm:$0xff]
                %230 = vst [vmem:[%s220 + $0x20] sm:$0xff] %v229
                %v231 = vld [vmem:[%s219 + $0x68] sm:$0xff]
                %232 = vst [vmem:[%s220 + $0x28] sm:$0xff] %v231
                %v233 = vld [vmem:[%s219 + $0x90] sm:$0xff]
                %234 = vst [vmem:[%s220 + $0x30] sm:$0xff] %v233
                %v235 = vld [vmem:[%s219 + $0x98] sm:$0xff]
                %236 = vst [vmem:[%s220 + $0x38] sm:$0xff] %v235
                %v237 = vld [vmem:[%s219 + $0xc0] sm:$0xff]
                %238 = vst [vmem:[%s220 + $0x40] sm:$0xff] %v237
                %v239 = vld [vmem:[%s219 + $0xc8] sm:$0xff]
                %240 = vst [vmem:[%s220 + $0x48] sm:$0xff] %v239
                %v241 = vld [vmem:[%s219 + $0xf0] sm:$0xff]
                %242 = vst [vmem:[%s220 + $0x50] sm:$0xff] %v241
                %v243 = vld [vmem:[%s219 + $0xf8] sm:$0xff]
                %244 = vst [vmem:[%s220 + $0x58] sm:$0xff] %v243
                %v245 = vld [vmem:[%s219 + $0x120] sm:$0xff]
                %246 = vst [vmem:[%s220 + $0x60] sm:$0xff] %v245
                %v247 = vld [vmem:[%s219 + $0x128] sm:$0xff]
                %248 = vst [vmem:[%s220 + $0x68] sm:$0xff] %v247
                %v249 = vld [vmem:[%s219 + $0x150] sm:$0xff]
                %250 = vst [vmem:[%s220 + $0x70] sm:$0xff] %v249
                %v251 = vld [vmem:[%s219 + $0x158] sm:$0xff]
                %252 = vst [vmem:[%s220 + $0x78] sm:$0xff] %v251
                %v253 = vld [vmem:[%s219 + $0x180] sm:$0xff]
                %254 = vst [vmem:[%s220 + $0x80] sm:$0xff] %v253
                %v255 = vld [vmem:[%s219 + $0x188] sm:$0xff]
                %256 = vst [vmem:[%s220 + $0x88] sm:$0xff] %v255
                %v257 = vld [vmem:[%s219 + $0x1b0] sm:$0xff]
                %258 = vst [vmem:[%s220 + $0x90] sm:$0xff] %v257
                %v259 = vld [vmem:[%s219 + $0x1b8] sm:$0xff]
                %260 = vst [vmem:[%s220 + $0x98] sm:$0xff] %v259
                %v261 = vld [vmem:[%s219 + $0x1e0] sm:$0xff]
                %262 = vst [vmem:[%s220 + $0xa0] sm:$0xff] %v261
                %v263 = vld [vmem:[%s219 + $0x1e8] sm:$0xff]
                %264 = vst [vmem:[%s220 + $0xa8] sm:$0xff] %v263
                %v265 = vld [vmem:[%s219 + $0x210] sm:$0xff]
                %266 = vst [vmem:[%s220 + $0xb0] sm:$0xff] %v265
                %v267 = vld [vmem:[%s219 + $0x218] sm:$0xff]
                %268 = vst [vmem:[%s220 + $0xb8] sm:$0xff] %v267
                %v269 = vld [vmem:[%s219 + $0x240] sm:$0xff]
                %270 = vst [vmem:[%s220 + $0xc0] sm:$0xff] %v269
                %v271 = vld [vmem:[%s219 + $0x248] sm:$0xff]
                %272 = vst [vmem:[%s220 + $0xc8] sm:$0xff] %v271
                %v273 = vld [vmem:[%s219 + $0x270] sm:$0xff]
                %274 = vst [vmem:[%s220 + $0xd0] sm:$0xff] %v273
                %v275 = vld [vmem:[%s219 + $0x278] sm:$0xff]
                %276 = vst [vmem:[%s220 + $0xd8] sm:$0xff] %v275
                %v277 = vld [vmem:[%s219 + $0x2a0] sm:$0xff]
                %278 = vst [vmem:[%s220 + $0xe0] sm:$0xff] %v277
                %v279 = vld [vmem:[%s219 + $0x2a8] sm:$0xff]
                %280 = vst [vmem:[%s220 + $0xe8] sm:$0xff] %v279
                %v281 = vld [vmem:[%s219 + $0x2d0] sm:$0xff]
                %282 = vst [vmem:[%s220 + $0xf0] sm:$0xff] %v281
                %v283 = vld [vmem:[%s219 + $0x2d8] sm:$0xff]
                %284 = vst [vmem:[%s220 + $0xf8] sm:$0xff] %v283
              $region41: #{resnet_forward.15} parent=35 // loop_footer
                %s218 = sadd.s32 1, %s214
              $region42: #{resnet_forward.15} parent=35 // loop_footer_branch
                %213 = sbr.rel target = $region38
              $region43: #{resnet_forward.15} parent=35 // loop_exit
                _
            $region36: #{resnet_forward.15} parent=31 // pred_fallthru
              _
            // Predicated region
            $region44: #{resnet_forward.15} parent=31 // pred_check
              _
            $region45: #{resnet_forward.15} parent=31 // pred_check_branch
              %286 = sbr.rel target = $region47
            $region46: #{resnet_forward.15} parent=31 // pred_region
              _
            $region47: #{resnet_forward.15} parent=31 // pred_fallthru
              _
          $region32: #{resnet_forward.15} parent=27 // pred_fallthru
            _
          %287 = vnop
        $region28: #{resnet_forward.15} parent=23 // pred_fallthru
          _
        // Predicated region
        $region48: #{resnet_forward.15} parent=23 // pred_check
          %p288 = pneg %p79
        $region49: #{resnet_forward.15} parent=23 // pred_check_branch
          %290 = sbr.rel (%p288) target = $region51
        $region50: #{resnet_forward.15} parent=23 // pred_region
          %s291 = smul.u32 64, %s19
          %p292 = scmp.lt.s32.totalorder %s291, 191
          %s293 = scalar_select %p292, %s291, 191
          %p294 = scmp.lt.s32.totalorder %s18, 0
          %s295 = scalar_select %p294, %s18, 0
          %s296 = sadd.s32 %s295, %s293
          %s297 = smul.addr %s296, 4
          %s298 = scalar_lea.vmem %s1, %s297
          %s299 = smul.u32 64, %s19
        $region51: #{resnet_forward.15} parent=23 // pred_fallthru
          _
      $region24: #{resnet_forward.15} parent=5 // pred_fallthru
        _
      %p300 = scmp.le.s32.totalorder 1, %s10
      %p301 = scmp.lt.s32.totalorder %s10, 4
      %p302 = pnand %p300, %p301
      %p303 = pneg %p302
      // Predicated region
      $region52: #{resnet_forward.15} parent=5 // pred_check
        _
      $region53: #{resnet_forward.15} parent=5 // pred_check_branch
        %305 = sbr.rel (%p302) target = $region55
      $region54: #{resnet_forward.15} parent=5 // pred_region
        %s306 = ssub.s32 %s10, 1
        %s307 = sand.u32 %s44, 1
        %s308 = sand.u32 %s44, 1
        %s309 = smul.addr %s308, 256
        %s310 = scalar_lea.vmem [#allocation3], %s309
        // Predicated region
        $region56: #{resnet_forward.15} parent=54 // pred_check
          %p311 = pneg %p57
        $region57: #{resnet_forward.15} parent=54 // pred_check_branch
          %313 = sbr.rel (%p311) target = $region59
        $region58: #{resnet_forward.15} parent=54 // pred_region
          _
        $region59: #{resnet_forward.15} parent=54 // pred_fallthru
          _
        %s314 = sand.u32 %s44, 1
        %s315 = sand.u32 %s44, 1
        %s316 = smul.addr %s315, 256
        %s317 = scalar_lea.vmem [#allocation3], %s316
        %p318 = pneg %p57
        %p319 = pneg %p54
        %s320 = smul.u32 64, %s22
        %p321 = scmp.lt.s32.totalorder %s320, 191
        %s322 = scalar_select %p321, %s320, 191
        %p323 = scmp.lt.s32.totalorder %s21, 0
        %s324 = scalar_select %p323, %s21, 0
        %s325 = sadd.s32 %s324, %s322
        %s326 = smul.addr %s325, 4
        %s327 = scalar_lea.vmem %s1, %s326
        %p328 = pneg %p85
        %p329 = pneg %p82
        %p330 = scmp.lt.s32.totalorder %s21, 0
        %s331 = scalar_select %p330, %s21, 0
        %s332 = scalar_lea.vmem %s2, %s331
        %p333 = pneg %p111
        %p334 = pneg %p108
        %p335 = scmp.lt.s32.totalorder %s21, 0
        %s336 = scalar_select %p335, %s21, 0
        %s337 = scalar_lea.vmem %s3, %s336
        %p338 = pneg %p137
        %p339 = pneg %p134
        %p340 = pneg %p165
        %p341 = pneg %p162
        %s342 = smul.u32 16, %s20
        %p343 = scmp.lt.s32.totalorder %s342, 15
        %s344 = scalar_select %p343, %s342, 15
        %p345 = scmp.lt.s32.totalorder %s21, 0
        %s346 = scalar_select %p345, %s21, 0
        %s347 = sadd.s32 %s346, %s344
        %s348 = smul.addr %s347, 4
        %s349 = scalar_lea.vmem %s4, %s348
        %s350 = smul.u32 16, %s20
        %s351 = smul.u32 4, %s22
        %s352 = smul.u32 64, %s22
        %p353 = scmp.lt.s32.totalorder %s352, 191
        %s354 = scalar_select %p353, %s352, 191
        %p355 = scmp.lt.s32.totalorder %s21, 0
        %s356 = scalar_select %p355, %s21, 0
        %s357 = sadd.s32 %s356, %s354
        %s358 = smul.addr %s357, 4
        %s359 = scalar_lea.vmem %s1, %s358
        %s360 = smul.u32 64, %s22
        %p361 = scmp.lt.s32.totalorder %s21, 0
        %s362 = scalar_select %p361, %s21, 0
        %s363 = scalar_lea.vmem %s2, %s362
        %p364 = scmp.lt.s32.totalorder %s21, 0
        %s365 = scalar_select %p364, %s21, 0
        %s366 = scalar_lea.vmem %s3, %s365
        %s367 = smul.u32 16, %s20
        %p368 = scmp.lt.s32.totalorder %s367, 15
        %s369 = scalar_select %p368, %s367, 15
        %p370 = scmp.lt.s32.totalorder %s21, 0
        %s371 = scalar_select %p370, %s21, 0
        %s372 = sadd.s32 %s371, %s369
        %s373 = smul.addr %s372, 4
        %s374 = scalar_lea.vmem %s4, %s373
        %s375 = smul.u32 16, %s20
        %p377 = scmp.eq.s32.totalorder %s22, 0
        // Predicated region
        $region60: #{resnet_forward.15} parent=54 // pred_check
          %p378 = pneg %p377
        $region61: #{resnet_forward.15} parent=54 // pred_check_branch
          %380 = sbr.rel (%p378) target = $region63
        $region62: #{resnet_forward.15} parent=54 // pred_region
          %381 = vst [vmem:[#allocation2] sm:$0xff] 0.0
          %382 = vst [vmem:[#allocation2 + $0x8] sm:$0xff] 0.0
          %383 = vst [vmem:[#allocation2 + $0x10] sm:$0xff] 0.0
          %384 = vst [vmem:[#allocation2 + $0x18] sm:$0xff] 0.0
          %385 = vst [vmem:[#allocation2 + $0x20] sm:$0xff] 0.0
          %386 = vst [vmem:[#allocation2 + $0x28] sm:$0xff] 0.0
          %387 = vst [vmem:[#allocation2 + $0x30] sm:$0xff] 0.0
          %388 = vst [vmem:[#allocation2 + $0x38] sm:$0xff] 0.0
          %389 = vst [vmem:[#allocation2 + $0x40] sm:$0xff] 0.0
          %390 = vst [vmem:[#allocation2 + $0x48] sm:$0xff] 0.0
          %391 = vst [vmem:[#allocation2 + $0x50] sm:$0xff] 0.0
          %392 = vst [vmem:[#allocation2 + $0x58] sm:$0xff] 0.0
          %393 = vst [vmem:[#allocation2 + $0x60] sm:$0xff] 0.0
          %394 = vst [vmem:[#allocation2 + $0x68] sm:$0xff] 0.0
          %395 = vst [vmem:[#allocation2 + $0x70] sm:$0xff] 0.0
          %396 = vst [vmem:[#allocation2 + $0x78] sm:$0xff] 0.0
        $region63: #{resnet_forward.15} parent=54 // pred_fallthru
          _
        %v397 = vld [vmem:[#allocation2] sm:$0xff]
        %v398 = vld [vmem:[#allocation2 + $0x8] sm:$0xff]
        %v399 = vld [vmem:[#allocation2 + $0x10] sm:$0xff]
        %v400 = vld [vmem:[#allocation2 + $0x18] sm:$0xff]
        %v401 = vld [vmem:[#allocation2 + $0x20] sm:$0xff]
        %v402 = vld [vmem:[#allocation2 + $0x28] sm:$0xff]
        %v403 = vld [vmem:[#allocation2 + $0x30] sm:$0xff]
        %v404 = vld [vmem:[#allocation2 + $0x38] sm:$0xff]
        %v405 = vld [vmem:[#allocation2 + $0x40] sm:$0xff]
        %v406 = vld [vmem:[#allocation2 + $0x48] sm:$0xff]
        %v407 = vld [vmem:[#allocation2 + $0x50] sm:$0xff]
        %v408 = vld [vmem:[#allocation2 + $0x58] sm:$0xff]
        %v409 = vld [vmem:[#allocation2 + $0x60] sm:$0xff]
        %v410 = vld [vmem:[#allocation2 + $0x68] sm:$0xff]
        %v411 = vld [vmem:[#allocation2 + $0x70] sm:$0xff]
        %v412 = vld [vmem:[#allocation2 + $0x78] sm:$0xff]
        %v413 = vld [vmem:[%s310] sm:$0xff]
        %v414 = vld [vmem:[%s310 + $0x8] sm:$0xff]
        %v415 = vld [vmem:[%s310 + $0x10] sm:$0xff]
        %v416 = vld [vmem:[%s310 + $0x18] sm:$0xff]
        %v417 = vld [vmem:[%s310 + $0x20] sm:$0xff]
        %v418 = vld [vmem:[%s310 + $0x28] sm:$0xff]
        %v419 = vld [vmem:[%s310 + $0x30] sm:$0xff]
        %v420 = vld [vmem:[%s310 + $0x38] sm:$0xff]
        %v421 = vld [vmem:[%s310 + $0x40] sm:$0xff]
        %v422 = vld [vmem:[%s310 + $0x48] sm:$0xff]
        %v423 = vld [vmem:[%s310 + $0x50] sm:$0xff]
        %v424 = vld [vmem:[%s310 + $0x58] sm:$0xff]
        %v425 = vld [vmem:[%s310 + $0x60] sm:$0xff]
        %v426 = vld [vmem:[%s310 + $0x68] sm:$0xff]
        %v427 = vld [vmem:[%s310 + $0x70] sm:$0xff]
        %v428 = vld [vmem:[%s310 + $0x78] sm:$0xff]
        %v429 = vld [vmem:[%s310 + $0x80] sm:$0xff]
        %v430 = vld [vmem:[%s310 + $0x88] sm:$0xff]
        %v431 = vld [vmem:[%s310 + $0x90] sm:$0xff]
        %v432 = vld [vmem:[%s310 + $0x98] sm:$0xff]
        %v433 = vld [vmem:[%s310 + $0xa0] sm:$0xff]
        %v434 = vld [vmem:[%s310 + $0xa8] sm:$0xff]
        %v435 = vld [vmem:[%s310 + $0xb0] sm:$0xff]
        %v436 = vld [vmem:[%s310 + $0xb8] sm:$0xff]
        %v437 = vld [vmem:[%s310 + $0xc0] sm:$0xff]
        %v438 = vld [vmem:[%s310 + $0xc8] sm:$0xff]
        %v439 = vld [vmem:[%s310 + $0xd0] sm:$0xff]
        %v440 = vld [vmem:[%s310 + $0xd8] sm:$0xff]
        %v441 = vld [vmem:[%s310 + $0xe0] sm:$0xff]
        %v442 = vld [vmem:[%s310 + $0xe8] sm:$0xff]
        %v443 = vld [vmem:[%s310 + $0xf0] sm:$0xff]
        %v444 = vld [vmem:[%s310 + $0xf8] sm:$0xff]
        %v445 = vld [vmem:[%s359] sm:$0xf]
        %v446 = vld [vmem:[%s359 + $0x4] sm:$0xf]
        %v447 = vld [vmem:[%s359 + $0x8] sm:$0xf]
        %v448 = vld [vmem:[%s359 + $0xc] sm:$0xf]
        %v449 = vld [vmem:[%s359 + $0x10] sm:$0xf]
        %v450 = vld [vmem:[%s359 + $0x14] sm:$0xf]
        %v451 = vld [vmem:[%s359 + $0x18] sm:$0xf]
        %v452 = vld [vmem:[%s359 + $0x1c] sm:$0xf]
        %v453 = vld [vmem:[%s359 + $0x20] sm:$0xf]
        %v454 = vld [vmem:[%s359 + $0x24] sm:$0xf]
        %v455 = vld [vmem:[%s359 + $0x28] sm:$0xf]
        %v456 = vld [vmem:[%s359 + $0x2c] sm:$0xf]
        %v457 = vld [vmem:[%s359 + $0x30] sm:$0xf]
        %v458 = vld [vmem:[%s359 + $0x34] sm:$0xf]
        %v459 = vld [vmem:[%s359 + $0x38] sm:$0xf]
        %v460 = vld [vmem:[%s359 + $0x3c] sm:$0xf]
        %v461 = vld [vmem:[%s359 + $0x40] sm:$0xf]
        %v462 = vld [vmem:[%s359 + $0x44] sm:$0xf]
        %v463 = vld [vmem:[%s359 + $0x48] sm:$0xf]
        %v464 = vld [vmem:[%s359 + $0x4c] sm:$0xf]
        %v465 = vld [vmem:[%s359 + $0x50] sm:$0xf]
        %v466 = vld [vmem:[%s359 + $0x54] sm:$0xf]
        %v467 = vld [vmem:[%s359 + $0x58] sm:$0xf]
        %v468 = vld [vmem:[%s359 + $0x5c] sm:$0xf]
        %v469 = vld [vmem:[%s359 + $0x60] sm:$0xf]
        %v470 = vld [vmem:[%s359 + $0x64] sm:$0xf]
        %v471 = vld [vmem:[%s359 + $0x68] sm:$0xf]
        %v472 = vld [vmem:[%s359 + $0x6c] sm:$0xf]
        %v473 = vld [vmem:[%s359 + $0x70] sm:$0xf]
        %v474 = vld [vmem:[%s359 + $0x74] sm:$0xf]
        %v475 = vld [vmem:[%s359 + $0x78] sm:$0xf]
        %v476 = vld [vmem:[%s359 + $0x7c] sm:$0xf]
        %v477 = vld [vmem:[%s359 + $0x80] sm:$0xf]
        %v478 = vld [vmem:[%s359 + $0x84] sm:$0xf]
        %v479 = vld [vmem:[%s359 + $0x88] sm:$0xf]
        %v480 = vld [vmem:[%s359 + $0x8c] sm:$0xf]
        %v481 = vld [vmem:[%s359 + $0x90] sm:$0xf]
        %v482 = vld [vmem:[%s359 + $0x94] sm:$0xf]
        %v483 = vld [vmem:[%s359 + $0x98] sm:$0xf]
        %v484 = vld [vmem:[%s359 + $0x9c] sm:$0xf]
        %v485 = vld [vmem:[%s359 + $0xa0] sm:$0xf]
        %v486 = vld [vmem:[%s359 + $0xa4] sm:$0xf]
        %v487 = vld [vmem:[%s359 + $0xa8] sm:$0xf]
        %v488 = vld [vmem:[%s359 + $0xac] sm:$0xf]
        %v489 = vld [vmem:[%s359 + $0xb0] sm:$0xf]
        %v490 = vld [vmem:[%s359 + $0xb4] sm:$0xf]
        %v491 = vld [vmem:[%s359 + $0xb8] sm:$0xf]
        %v492 = vld [vmem:[%s359 + $0xbc] sm:$0xf]
        %v493 = vld [vmem:[%s359 + $0xc0] sm:$0xf]
        %v494 = vld [vmem:[%s359 + $0xc4] sm:$0xf]
        %v495 = vld [vmem:[%s359 + $0xc8] sm:$0xf]
        %v496 = vld [vmem:[%s359 + $0xcc] sm:$0xf]
        %v497 = vld [vmem:[%s359 + $0xd0] sm:$0xf]
        %v498 = vld [vmem:[%s359 + $0xd4] sm:$0xf]
        %v499 = vld [vmem:[%s359 + $0xd8] sm:$0xf]
        %v500 = vld [vmem:[%s359 + $0xdc] sm:$0xf]
        %v501 = vld [vmem:[%s359 + $0xe0] sm:$0xf]
        %v502 = vld [vmem:[%s359 + $0xe4] sm:$0xf]
        %v503 = vld [vmem:[%s359 + $0xe8] sm:$0xf]
        %v504 = vld [vmem:[%s359 + $0xec] sm:$0xf]
        %v505 = vld [vmem:[%s359 + $0xf0] sm:$0xf]
        %v506 = vld [vmem:[%s359 + $0xf4] sm:$0xf]
        %v507 = vld [vmem:[%s359 + $0xf8] sm:$0xf]
        %v508 = vld [vmem:[%s359 + $0xfc] sm:$0xf]
        %v541 = vunpack.c.l.b16 %v413
        %v542 = vunpack.c.h.b16 %v413
        %v543 = vunpack.c.l.b16 %v414
        %v544 = vunpack.c.h.b16 %v414
        %v545 = vunpack.c.l.b16 %v415
        %v546 = vunpack.c.h.b16 %v415
        %v547 = vunpack.c.l.b16 %v416
        %v548 = vunpack.c.h.b16 %v416
        %v549 = vunpack.c.l.b16 %v417
        %v550 = vunpack.c.h.b16 %v417
        %v551 = vunpack.c.l.b16 %v418
        %v552 = vunpack.c.h.b16 %v418
        %v553 = vunpack.c.l.b16 %v419
        %v554 = vunpack.c.h.b16 %v419
        %v555 = vunpack.c.l.b16 %v420
        %v556 = vunpack.c.h.b16 %v420
        %v557 = vunpack.c.l.b16 %v421
        %v558 = vunpack.c.h.b16 %v421
        %v559 = vunpack.c.l.b16 %v422
        %v560 = vunpack.c.h.b16 %v422
        %v561 = vunpack.c.l.b16 %v423
        %v562 = vunpack.c.h.b16 %v423
        %v563 = vunpack.c.l.b16 %v424
        %v564 = vunpack.c.h.b16 %v424
        %v565 = vunpack.c.l.b16 %v425
        %v566 = vunpack.c.h.b16 %v425
        %v567 = vunpack.c.l.b16 %v426
        %v568 = vunpack.c.h.b16 %v426
        %v569 = vunpack.c.l.b16 %v427
        %v570 = vunpack.c.h.b16 %v427
        %v571 = vunpack.c.l.b16 %v428
        %v572 = vunpack.c.h.b16 %v428
        %v573 = vunpack.c.l.b16 %v429
        %v574 = vunpack.c.h.b16 %v429
        %v575 = vunpack.c.l.b16 %v430
        %v576 = vunpack.c.h.b16 %v430
        %v577 = vunpack.c.l.b16 %v431
        %v578 = vunpack.c.h.b16 %v431
        %v579 = vunpack.c.l.b16 %v432
        %v580 = vunpack.c.h.b16 %v432
        %v581 = vunpack.c.l.b16 %v433
        %v582 = vunpack.c.h.b16 %v433
        %v583 = vunpack.c.l.b16 %v434
        %v584 = vunpack.c.h.b16 %v434
        %v585 = vunpack.c.l.b16 %v435
        %v586 = vunpack.c.h.b16 %v435
        %v587 = vunpack.c.l.b16 %v436
        %v588 = vunpack.c.h.b16 %v436
        %v589 = vunpack.c.l.b16 %v437
        %v590 = vunpack.c.h.b16 %v437
        %v591 = vunpack.c.l.b16 %v438
        %v592 = vunpack.c.h.b16 %v438
        %v593 = vunpack.c.l.b16 %v439
        %v594 = vunpack.c.h.b16 %v439
        %v595 = vunpack.c.l.b16 %v440
        %v596 = vunpack.c.h.b16 %v440
        %v597 = vunpack.c.l.b16 %v441
        %v598 = vunpack.c.h.b16 %v441
        %v599 = vunpack.c.l.b16 %v442
        %v600 = vunpack.c.h.b16 %v442
        %v601 = vunpack.c.l.b16 %v443
        %v602 = vunpack.c.h.b16 %v443
        %v603 = vunpack.c.l.b16 %v444
        %v604 = vunpack.c.h.b16 %v444
        %v605 = vpack.c.b16 %v545, %v541
        %v606 = vpack.c.b16 %v546, %v542
        %v607 = vpack.c.b16 %v547, %v543
        %v608 = vpack.c.b16 %v548, %v544
        %v609 = vpack.c.b16 %v553, %v549
        %v610 = vpack.c.b16 %v554, %v550
        %v611 = vpack.c.b16 %v555, %v551
        %v612 = vpack.c.b16 %v556, %v552
        %v613 = vpack.c.b16 %v561, %v557
        %v614 = vpack.c.b16 %v562, %v558
        %v615 = vpack.c.b16 %v563, %v559
        %v616 = vpack.c.b16 %v564, %v560
        %v617 = vpack.c.b16 %v569, %v565
        %v618 = vpack.c.b16 %v570, %v566
        %v619 = vpack.c.b16 %v571, %v567
        %v620 = vpack.c.b16 %v572, %v568
        %v621 = vpack.c.b16 %v577, %v573
        %v622 = vpack.c.b16 %v578, %v574
        %v623 = vpack.c.b16 %v579, %v575
        %v624 = vpack.c.b16 %v580, %v576
        %v625 = vpack.c.b16 %v585, %v581
        %v626 = vpack.c.b16 %v586, %v582
        %v627 = vpack.c.b16 %v587, %v583
        %v628 = vpack.c.b16 %v588, %v584
        %v629 = vpack.c.b16 %v593, %v589
        %v630 = vpack.c.b16 %v594, %v590
        %v631 = vpack.c.b16 %v595, %v591
        %v632 = vpack.c.b16 %v596, %v592
        %v633 = vpack.c.b16 %v601, %v597
        %v634 = vpack.c.b16 %v602, %v598
        %v635 = vpack.c.b16 %v603, %v599
        %v636 = vpack.c.b16 %v604, %v600
        %v733 = vunpack.c.l.b16 %v445
        %v734 = vunpack.c.l.b16 %v446
        %v735 = vunpack.c.l.b16 %v447
        %v736 = vunpack.c.l.b16 %v448
        %v737 = vunpack.c.l.b16 %v449
        %v738 = vunpack.c.l.b16 %v450
        %v739 = vunpack.c.l.b16 %v451
        %v740 = vunpack.c.l.b16 %v452
        %v741 = vunpack.c.l.b16 %v453
        %v742 = vunpack.c.l.b16 %v454
        %v743 = vunpack.c.l.b16 %v455
        %v744 = vunpack.c.l.b16 %v456
        %v745 = vunpack.c.l.b16 %v457
        %v746 = vunpack.c.l.b16 %v458
        %v747 = vunpack.c.l.b16 %v459
        %v748 = vunpack.c.l.b16 %v460
        %v749 = vunpack.c.l.b16 %v461
        %v750 = vunpack.c.l.b16 %v462
        %v751 = vunpack.c.l.b16 %v463
        %v752 = vunpack.c.l.b16 %v464
        %v753 = vunpack.c.l.b16 %v465
        %v754 = vunpack.c.l.b16 %v466
        %v755 = vunpack.c.l.b16 %v467
        %v756 = vunpack.c.l.b16 %v468
        %v757 = vunpack.c.l.b16 %v469
        %v758 = vunpack.c.l.b16 %v470
        %v759 = vunpack.c.l.b16 %v471
        %v760 = vunpack.c.l.b16 %v472
        %v761 = vunpack.c.l.b16 %v473
        %v762 = vunpack.c.l.b16 %v474
        %v763 = vunpack.c.l.b16 %v475
        %v764 = vunpack.c.l.b16 %v476
        %v765 = vunpack.c.l.b16 %v477
        %v766 = vunpack.c.l.b16 %v478
        %v767 = vunpack.c.l.b16 %v479
        %v768 = vunpack.c.l.b16 %v480
        %v769 = vunpack.c.l.b16 %v481
        %v770 = vunpack.c.l.b16 %v482
        %v771 = vunpack.c.l.b16 %v483
        %v772 = vunpack.c.l.b16 %v484
        %v773 = vunpack.c.l.b16 %v485
        %v774 = vunpack.c.l.b16 %v486
        %v775 = vunpack.c.l.b16 %v487
        %v776 = vunpack.c.l.b16 %v488
        %v777 = vunpack.c.l.b16 %v489
        %v778 = vunpack.c.l.b16 %v490
        %v779 = vunpack.c.l.b16 %v491
        %v780 = vunpack.c.l.b16 %v492
        %v781 = vunpack.c.l.b16 %v493
        %v782 = vunpack.c.l.b16 %v494
        %v783 = vunpack.c.l.b16 %v495
        %v784 = vunpack.c.l.b16 %v496
        %v785 = vunpack.c.l.b16 %v497
        %v786 = vunpack.c.l.b16 %v498
        %v787 = vunpack.c.l.b16 %v499
        %v788 = vunpack.c.l.b16 %v500
        %v789 = vunpack.c.l.b16 %v501
        %v790 = vunpack.c.l.b16 %v502
        %v791 = vunpack.c.l.b16 %v503
        %v792 = vunpack.c.l.b16 %v504
        %v793 = vunpack.c.l.b16 %v505
        %v794 = vunpack.c.l.b16 %v506
        %v795 = vunpack.c.l.b16 %v507
        %v796 = vunpack.c.l.b16 %v508
        %v797 = vpack.c.b16 %v734, %v733
        %v798 = vpack.c.b16 %v736, %v735
        %v799 = vpack.c.b16 %v738, %v737
        %v800 = vpack.c.b16 %v740, %v739
        %v801 = vpack.c.b16 %v742, %v741
        %v802 = vpack.c.b16 %v744, %v743
        %v803 = vpack.c.b16 %v746, %v745
        %v804 = vpack.c.b16 %v748, %v747
        %v805 = vpack.c.b16 %v750, %v749
        %v806 = vpack.c.b16 %v752, %v751
        %v807 = vpack.c.b16 %v754, %v753
        %v808 = vpack.c.b16 %v756, %v755
        %v809 = vpack.c.b16 %v758, %v757
        %v810 = vpack.c.b16 %v760, %v759
        %v811 = vpack.c.b16 %v762, %v761
        %v812 = vpack.c.b16 %v764, %v763
        %v813 = vpack.c.b16 %v766, %v765
        %v814 = vpack.c.b16 %v768, %v767
        %v815 = vpack.c.b16 %v770, %v769
        %v816 = vpack.c.b16 %v772, %v771
        %v817 = vpack.c.b16 %v774, %v773
        %v818 = vpack.c.b16 %v776, %v775
        %v819 = vpack.c.b16 %v778, %v777
        %v820 = vpack.c.b16 %v780, %v779
        %v821 = vpack.c.b16 %v782, %v781
        %v822 = vpack.c.b16 %v784, %v783
        %v823 = vpack.c.b16 %v786, %v785
        %v824 = vpack.c.b16 %v788, %v787
        %v825 = vpack.c.b16 %v790, %v789
        %v826 = vpack.c.b16 %v792, %v791
        %v827 = vpack.c.b16 %v794, %v793
        %v828 = vpack.c.b16 %v796, %v795
        %861 = vmatprep.subr.bf16.mxu0 0
        %862 = vmatpush1.bf16.msra.mxu0 %v804
        %863 = vmatprep.subr.bf16.mxu0 0
        %864 = vmatpush1.bf16.msra.mxu0 %v803
        %865 = vmatprep.subr.bf16.mxu0 0
        %866 = vmatpush1.bf16.msra.mxu0 %v802
        %867 = vmatprep.subr.bf16.mxu0 0
        %868 = vmatpush1.bf16.msra.mxu0 %v801
        %869 = vmatprep.subr.bf16.mxu0 0
        %870 = vmatpush1.bf16.msra.mxu0 %v800
        %871 = vmatprep.subr.bf16.mxu0 0
        %872 = vmatpush1.bf16.msra.mxu0 %v799
        %873 = vmatprep.subr.bf16.mxu0 0
        %874 = vmatpush1.bf16.msra.mxu0 %v798
        %875 = vmatprep.subr.bf16.mxu0 0
        %876 = vmatpush1.bf16.msra.mxu0 %v797
        %877 = vmatprep.subr.bf16.mxu0 0
        %878 = vmatpush2.bf16.msra.mxu0 %v812
        %879 = vmatprep.subr.bf16.mxu0 0
        %880 = vmatpush2.bf16.msra.mxu0 %v811
        %881 = vmatprep.subr.bf16.mxu0 0
        %882 = vmatpush2.bf16.msra.mxu0 %v810
        %883 = vmatprep.subr.bf16.mxu0 0
        %884 = vmatpush2.bf16.msra.mxu0 %v809
        %885 = vmatprep.subr.bf16.mxu0 0
        %886 = vmatpush2.bf16.msra.mxu0 %v808
        %887 = vmatprep.subr.bf16.mxu0 0
        %888 = vmatpush2.bf16.msra.mxu0 %v807
        %889 = vmatprep.subr.bf16.mxu0 0
        %890 = vmatpush2.bf16.msra.mxu0 %v806
        %891 = vmatprep.subr.bf16.mxu0 0
        %892 = vmatpush2.bf16.msra.mxu0 %v805
        %893 = vmatprep.mubr.bf16.mxu0 %v606
        %894 = vmatmul.mubr.bf16.gmra.mxu0 %v605
        %v895 = vpop.f32.mrf.mxu0
        %v896 = vadd.f32 0.0, %v895
        %v897 = vpop.f32.mrf.mxu0
        %v898 = vpop.f32.mrf.mxu0
        %v899 = vadd.f32 0.0, %v898
        %v900 = vpop.f32.mrf.mxu0
        %901 = vmatprep.mubr.bf16.mxu0 %v610
        %902 = vmatmul.mubr.bf16.gmra.mxu0 %v609
        %v903 = vpop.f32.mrf.mxu0
        %v904 = vadd.f32 0.0, %v903
        %v905 = vpop.f32.mrf.mxu0
        %v906 = vpop.f32.mrf.mxu0
        %v907 = vadd.f32 0.0, %v906
        %v908 = vpop.f32.mrf.mxu0
        %909 = vmatprep.mubr.bf16.mxu0 %v614
        %910 = vmatmul.mubr.bf16.gmra.mxu0 %v613
        %v911 = vpop.f32.mrf.mxu0
        %v912 = vadd.f32 0.0, %v911
        %v913 = vpop.f32.mrf.mxu0
        %v914 = vpop.f32.mrf.mxu0
        %v915 = vadd.f32 0.0, %v914
        %v916 = vpop.f32.mrf.mxu0
        %917 = vmatprep.mubr.bf16.mxu0 %v618
        %918 = vmatmul.mubr.bf16.gmra.mxu0 %v617
        %v919 = vpop.f32.mrf.mxu0
        %v920 = vadd.f32 0.0, %v919
        %v921 = vpop.f32.mrf.mxu0
        %v922 = vpop.f32.mrf.mxu0
        %v923 = vadd.f32 0.0, %v922
        %v924 = vpop.f32.mrf.mxu0
        %925 = vmatprep.mubr.bf16.mxu0 %v622
        %926 = vmatmul.mubr.bf16.gmra.mxu0 %v621
        %v927 = vpop.f32.mrf.mxu0
        %v928 = vadd.f32 0.0, %v927
        %v929 = vpop.f32.mrf.mxu0
        %v930 = vpop.f32.mrf.mxu0
        %v931 = vadd.f32 0.0, %v930
        %v932 = vpop.f32.mrf.mxu0
        %933 = vmatprep.mubr.bf16.mxu0 %v626
        %934 = vmatmul.mubr.bf16.gmra.mxu0 %v625
        %v935 = vpop.f32.mrf.mxu0
        %v936 = vadd.f32 0.0, %v935
        %v937 = vpop.f32.mrf.mxu0
        %v938 = vpop.f32.mrf.mxu0
        %v939 = vadd.f32 0.0, %v938
        %v940 = vpop.f32.mrf.mxu0
        %941 = vmatprep.mubr.bf16.mxu0 %v630
        %942 = vmatmul.mubr.bf16.gmra.mxu0 %v629
        %v943 = vpop.f32.mrf.mxu0
        %v944 = vadd.f32 0.0, %v943
        %v945 = vpop.f32.mrf.mxu0
        %v946 = vpop.f32.mrf.mxu0
        %v947 = vadd.f32 0.0, %v946
        %v948 = vpop.f32.mrf.mxu0
        %949 = vmatprep.mubr.bf16.mxu0 %v634
        %950 = vmatmul.mubr.bf16.gmra.mxu0 %v633
        %v951 = vpop.f32.mrf.mxu0
        %v952 = vadd.f32 0.0, %v951
        %v953 = vpop.f32.mrf.mxu0
        %v954 = vpop.f32.mrf.mxu0
        %v955 = vadd.f32 0.0, %v954
        %v956 = vpop.f32.mrf.mxu0
        %957 = vdwg.mxu0
        %958 = vmatprep.subr.bf16.mxu0 0
        %959 = vmatpush1.bf16.msra.mxu0 %v820
        %960 = vmatprep.subr.bf16.mxu0 0
        %961 = vmatpush1.bf16.msra.mxu0 %v819
        %962 = vmatprep.subr.bf16.mxu0 0
        %963 = vmatpush1.bf16.msra.mxu0 %v818
        %964 = vmatprep.subr.bf16.mxu0 0
        %965 = vmatpush1.bf16.msra.mxu0 %v817
        %966 = vmatprep.subr.bf16.mxu0 0
        %967 = vmatpush1.bf16.msra.mxu0 %v816
        %968 = vmatprep.subr.bf16.mxu0 0
        %969 = vmatpush1.bf16.msra.mxu0 %v815
        %970 = vmatprep.subr.bf16.mxu0 0
        %971 = vmatpush1.bf16.msra.mxu0 %v814
        %972 = vmatprep.subr.bf16.mxu0 0
        %973 = vmatpush1.bf16.msra.mxu0 %v813
        %974 = vmatprep.subr.bf16.mxu0 0
        %975 = vmatpush2.bf16.msra.mxu0 %v828
        %976 = vmatprep.subr.bf16.mxu0 0
        %977 = vmatpush2.bf16.msra.mxu0 %v827
        %978 = vmatprep.subr.bf16.mxu0 0
        %979 = vmatpush2.bf16.msra.mxu0 %v826
        %980 = vmatprep.subr.bf16.mxu0 0
        %981 = vmatpush2.bf16.msra.mxu0 %v825
        %982 = vmatprep.subr.bf16.mxu0 0
        %983 = vmatpush2.bf16.msra.mxu0 %v824
        %984 = vmatprep.subr.bf16.mxu0 0
        %985 = vmatpush2.bf16.msra.mxu0 %v823
        %986 = vmatprep.subr.bf16.mxu0 0
        %987 = vmatpush2.bf16.msra.mxu0 %v822
        %988 = vmatprep.subr.bf16.mxu0 0
        %989 = vmatpush2.bf16.msra.mxu0 %v821
        %990 = vmatprep.mubr.bf16.mxu0 %v608
        %991 = vmatmul.mubr.bf16.gmra.mxu0 %v607
        %v992 = vpop.f32.mrf.mxu0
        %v993 = vadd.f32 %v896, %v992
        %v994 = vpop.f32.mrf.mxu0
        %v995 = vpop.f32.mrf.mxu0
        %v996 = vadd.f32 %v899, %v995
        %v997 = vpop.f32.mrf.mxu0
        %998 = vmatprep.mubr.bf16.mxu0 %v612
        %999 = vmatmul.mubr.bf16.gmra.mxu0 %v611
        %v1000 = vpop.f32.mrf.mxu0
        %v1001 = vadd.f32 %v904, %v1000
        %v1002 = vpop.f32.mrf.mxu0
        %v1003 = vpop.f32.mrf.mxu0
        %v1004 = vadd.f32 %v907, %v1003
        %v1005 = vpop.f32.mrf.mxu0
        %1006 = vmatprep.mubr.bf16.mxu0 %v616
        %1007 = vmatmul.mubr.bf16.gmra.mxu0 %v615
        %v1008 = vpop.f32.mrf.mxu0
        %v1009 = vadd.f32 %v912, %v1008
        %v1010 = vpop.f32.mrf.mxu0
        %v1011 = vpop.f32.mrf.mxu0
        %v1012 = vadd.f32 %v915, %v1011
        %v1013 = vpop.f32.mrf.mxu0
        %1014 = vmatprep.mubr.bf16.mxu0 %v620
        %1015 = vmatmul.mubr.bf16.gmra.mxu0 %v619
        %v1016 = vpop.f32.mrf.mxu0
        %v1017 = vadd.f32 %v920, %v1016
        %v1018 = vpop.f32.mrf.mxu0
        %v1019 = vpop.f32.mrf.mxu0
        %v1020 = vadd.f32 %v923, %v1019
        %v1021 = vpop.f32.mrf.mxu0
        %1022 = vmatprep.mubr.bf16.mxu0 %v624
        %1023 = vmatmul.mubr.bf16.gmra.mxu0 %v623
        %v1024 = vpop.f32.mrf.mxu0
        %v1025 = vadd.f32 %v928, %v1024
        %v1026 = vpop.f32.mrf.mxu0
        %v1027 = vpop.f32.mrf.mxu0
        %v1028 = vadd.f32 %v931, %v1027
        %v1029 = vpop.f32.mrf.mxu0
        %1030 = vmatprep.mubr.bf16.mxu0 %v628
        %1031 = vmatmul.mubr.bf16.gmra.mxu0 %v627
        %v1032 = vpop.f32.mrf.mxu0
        %v1033 = vadd.f32 %v936, %v1032
        %v1034 = vpop.f32.mrf.mxu0
        %v1035 = vpop.f32.mrf.mxu0
        %v1036 = vadd.f32 %v939, %v1035
        %v1037 = vpop.f32.mrf.mxu0
        %1038 = vmatprep.mubr.bf16.mxu0 %v632
        %1039 = vmatmul.mubr.bf16.gmra.mxu0 %v631
        %v1040 = vpop.f32.mrf.mxu0
        %v1041 = vadd.f32 %v944, %v1040
        %v1042 = vpop.f32.mrf.mxu0
        %v1043 = vpop.f32.mrf.mxu0
        %v1044 = vadd.f32 %v947, %v1043
        %v1045 = vpop.f32.mrf.mxu0
        %1046 = vmatprep.mubr.bf16.mxu0 %v636
        %1047 = vmatmul.mubr.bf16.gmra.mxu0 %v635
        %v1048 = vpop.f32.mrf.mxu0
        %v1049 = vadd.f32 %v952, %v1048
        %v1050 = vpop.f32.mrf.mxu0
        %v1051 = vpop.f32.mrf.mxu0
        %v1052 = vadd.f32 %v955, %v1051
        %v1053 = vpop.f32.mrf.mxu0
        %1054 = vdwg.mxu0
        %v1055 = vadd.f32 %v397, %v993
        %v1056 = vadd.f32 %v398, %v996
        %v1057 = vadd.f32 %v399, %v1001
        %v1058 = vadd.f32 %v400, %v1004
        %v1059 = vadd.f32 %v401, %v1009
        %v1060 = vadd.f32 %v402, %v1012
        %v1061 = vadd.f32 %v403, %v1017
        %v1062 = vadd.f32 %v404, %v1020
        %v1063 = vadd.f32 %v405, %v1025
        %v1064 = vadd.f32 %v406, %v1028
        %v1065 = vadd.f32 %v407, %v1033
        %v1066 = vadd.f32 %v408, %v1036
        %v1067 = vadd.f32 %v409, %v1041
        %v1068 = vadd.f32 %v410, %v1044
        %v1069 = vadd.f32 %v411, %v1049
        %v1070 = vadd.f32 %v412, %v1052
        %1071 = vst [vmem:[#allocation2] sm:$0xff] %v1055
        %1072 = vst [vmem:[#allocation2 + $0x8] sm:$0xff] %v1056
        %1073 = vst [vmem:[#allocation2 + $0x10] sm:$0xff] %v1057
        %1074 = vst [vmem:[#allocation2 + $0x18] sm:$0xff] %v1058
        %1075 = vst [vmem:[#allocation2 + $0x20] sm:$0xff] %v1059
        %1076 = vst [vmem:[#allocation2 + $0x28] sm:$0xff] %v1060
        %1077 = vst [vmem:[#allocation2 + $0x30] sm:$0xff] %v1061
        %1078 = vst [vmem:[#allocation2 + $0x38] sm:$0xff] %v1062
        %1079 = vst [vmem:[#allocation2 + $0x40] sm:$0xff] %v1063
        %1080 = vst [vmem:[#allocation2 + $0x48] sm:$0xff] %v1064
        %1081 = vst [vmem:[#allocation2 + $0x50] sm:$0xff] %v1065
        %1082 = vst [vmem:[#allocation2 + $0x58] sm:$0xff] %v1066
        %1083 = vst [vmem:[#allocation2 + $0x60] sm:$0xff] %v1067
        %1084 = vst [vmem:[#allocation2 + $0x68] sm:$0xff] %v1068
        %1085 = vst [vmem:[#allocation2 + $0x70] sm:$0xff] %v1069
        %1086 = vst [vmem:[#allocation2 + $0x78] sm:$0xff] %v1070
        %p1087 = scmp.eq.s32.totalorder %s22, 2
        // Predicated region
        $region64: #{resnet_forward.15} parent=54 // pred_check
          %p1088 = pneg %p1087
        $region65: #{resnet_forward.15} parent=54 // pred_check_branch
          %1090 = sbr.rel (%p1088) target = $region67
        $region66: #{resnet_forward.15} parent=54 // pred_region
          %v1091 = vld [vmem:[#allocation2] sm:$0xff]
          %v1092 = vld [vmem:[#allocation2 + $0x8] sm:$0xff]
          %v1093 = vld [vmem:[#allocation2 + $0x10] sm:$0xff]
          %v1094 = vld [vmem:[#allocation2 + $0x18] sm:$0xff]
          %v1095 = vld [vmem:[#allocation2 + $0x20] sm:$0xff]
          %v1096 = vld [vmem:[#allocation2 + $0x28] sm:$0xff]
          %v1097 = vld [vmem:[#allocation2 + $0x30] sm:$0xff]
          %v1098 = vld [vmem:[#allocation2 + $0x38] sm:$0xff]
          %v1099 = vld [vmem:[#allocation2 + $0x40] sm:$0xff]
          %v1100 = vld [vmem:[#allocation2 + $0x48] sm:$0xff]
          %v1101 = vld [vmem:[#allocation2 + $0x50] sm:$0xff]
          %v1102 = vld [vmem:[#allocation2 + $0x58] sm:$0xff]
          %v1103 = vld [vmem:[#allocation2 + $0x60] sm:$0xff]
          %v1104 = vld [vmem:[#allocation2 + $0x68] sm:$0xff]
          %v1105 = vld [vmem:[#allocation2 + $0x70] sm:$0xff]
          %v1106 = vld [vmem:[#allocation2 + $0x78] sm:$0xff]
          %v1107 = vld [vmem:[%s363] sm:$0x1]
          %v1109 = vlaneseq
          %v1110 = vshrl.u32 %v1109, 7
          %v1111 = vsub.s32 0, %v1110
          %v1112 = vrot.slane %v1107, %v1111
          %v1114 = vmul.f32 %v1091, %v1112
          %v1115 = vmul.f32 %v1092, %v1112
          %v1116 = vmul.f32 %v1093, %v1112
          %v1117 = vmul.f32 %v1094, %v1112
          %v1118 = vmul.f32 %v1095, %v1112
          %v1119 = vmul.f32 %v1096, %v1112
          %v1120 = vmul.f32 %v1097, %v1112
          %v1121 = vmul.f32 %v1098, %v1112
          %v1122 = vmul.f32 %v1099, %v1112
          %v1123 = vmul.f32 %v1100, %v1112
          %v1124 = vmul.f32 %v1101, %v1112
          %v1125 = vmul.f32 %v1102, %v1112
          %v1126 = vmul.f32 %v1103, %v1112
          %v1127 = vmul.f32 %v1104, %v1112
          %v1128 = vmul.f32 %v1105, %v1112
          %v1129 = vmul.f32 %v1106, %v1112
          %v1130 = vld [vmem:[%s366] sm:$0x1]
          %v1132 = vlaneseq
          %v1133 = vshrl.u32 %v1132, 7
          %v1134 = vsub.s32 0, %v1133
          %v1135 = vrot.slane %v1130, %v1134
          %v1137 = vadd.f32 %v1114, %v1135
          %v1138 = vadd.f32 %v1115, %v1135
          %v1139 = vadd.f32 %v1116, %v1135
          %v1140 = vadd.f32 %v1117, %v1135
          %v1141 = vadd.f32 %v1118, %v1135
          %v1142 = vadd.f32 %v1119, %v1135
          %v1143 = vadd.f32 %v1120, %v1135
          %v1144 = vadd.f32 %v1121, %v1135
          %v1145 = vadd.f32 %v1122, %v1135
          %v1146 = vadd.f32 %v1123, %v1135
          %v1147 = vadd.f32 %v1124, %v1135
          %v1148 = vadd.f32 %v1125, %v1135
          %v1149 = vadd.f32 %v1126, %v1135
          %v1150 = vadd.f32 %v1127, %v1135
          %v1151 = vadd.f32 %v1128, %v1135
          %v1152 = vadd.f32 %v1129, %v1135
          %v1153 = vmax.f32 %v1137, 0.0
          %v1154 = vmax.f32 %v1138, 0.0
          %v1155 = vmax.f32 %v1139, 0.0
          %v1156 = vmax.f32 %v1140, 0.0
          %v1157 = vmax.f32 %v1141, 0.0
          %v1158 = vmax.f32 %v1142, 0.0
          %v1159 = vmax.f32 %v1143, 0.0
          %v1160 = vmax.f32 %v1144, 0.0
          %v1161 = vmax.f32 %v1145, 0.0
          %v1162 = vmax.f32 %v1146, 0.0
          %v1163 = vmax.f32 %v1147, 0.0
          %v1164 = vmax.f32 %v1148, 0.0
          %v1165 = vmax.f32 %v1149, 0.0
          %v1166 = vmax.f32 %v1150, 0.0
          %v1167 = vmax.f32 %v1151, 0.0
          %v1168 = vmax.f32 %v1152, 0.0
          %v1169 = vpack.c.bf16 %v1154, %v1153
          %v1170 = vpack.c.bf16 %v1156, %v1155
          %v1171 = vpack.c.bf16 %v1158, %v1157
          %v1172 = vpack.c.bf16 %v1160, %v1159
          %v1173 = vpack.c.bf16 %v1162, %v1161
          %v1174 = vpack.c.bf16 %v1164, %v1163
          %v1175 = vpack.c.bf16 %v1166, %v1165
          %v1176 = vpack.c.bf16 %v1168, %v1167
          %v1185 = vunpack.c.l.b16 %v1169
          %v1186 = vunpack.c.h.b16 %v1169
          %v1187 = vunpack.c.l.b16 %v1170
          %v1188 = vunpack.c.h.b16 %v1170
          %v1189 = vunpack.c.l.b16 %v1171
          %v1190 = vunpack.c.h.b16 %v1171
          %v1191 = vunpack.c.l.b16 %v1172
          %v1192 = vunpack.c.h.b16 %v1172
          %v1193 = vunpack.c.l.b16 %v1173
          %v1194 = vunpack.c.h.b16 %v1173
          %v1195 = vunpack.c.l.b16 %v1174
          %v1196 = vunpack.c.h.b16 %v1174
          %v1197 = vunpack.c.l.b16 %v1175
          %v1198 = vunpack.c.h.b16 %v1175
          %v1199 = vunpack.c.l.b16 %v1176
          %v1200 = vunpack.c.h.b16 %v1176
          %v1201 = vpack.c.b16 %v1185, %v1185
          %v1202 = vpack.c.b16 %v1186, %v1186
          %v1203 = vpack.c.b16 %v1187, %v1187
          %v1204 = vpack.c.b16 %v1188, %v1188
          %v1205 = vpack.c.b16 %v1189, %v1189
          %v1206 = vpack.c.b16 %v1190, %v1190
          %v1207 = vpack.c.b16 %v1191, %v1191
          %v1208 = vpack.c.b16 %v1192, %v1192
          %v1209 = vpack.c.b16 %v1193, %v1193
          %v1210 = vpack.c.b16 %v1194, %v1194
          %v1211 = vpack.c.b16 %v1195, %v1195
          %v1212 = vpack.c.b16 %v1196, %v1196
          %v1213 = vpack.c.b16 %v1197, %v1197
          %v1214 = vpack.c.b16 %v1198, %v1198
          %v1215 = vpack.c.b16 %v1199, %v1199
          %v1216 = vpack.c.b16 %v1200, %v1200
          %1233 = vst [vmem:[%s374] sm:$0xf] %v1201
          %1234 = vst [vmem:[%s374 + $0x4] sm:$0xf] %v1202
          %1235 = vst [vmem:[%s374 + $0x8] sm:$0xf] %v1203
          %1236 = vst [vmem:[%s374 + $0xc] sm:$0xf] %v1204
          %1237 = vst [vmem:[%s374 + $0x10] sm:$0xf] %v1205
          %1238 = vst [vmem:[%s374 + $0x14] sm:$0xf] %v1206
          %1239 = vst [vmem:[%s374 + $0x18] sm:$0xf] %v1207
          %1240 = vst [vmem:[%s374 + $0x1c] sm:$0xf] %v1208
          %1241 = vst [vmem:[%s374 + $0x20] sm:$0xf] %v1209
          %1242 = vst [vmem:[%s374 + $0x24] sm:$0xf] %v1210
          %1243 = vst [vmem:[%s374 + $0x28] sm:$0xf] %v1211
          %1244 = vst [vmem:[%s374 + $0x2c] sm:$0xf] %v1212
          %1245 = vst [vmem:[%s374 + $0x30] sm:$0xf] %v1213
          %1246 = vst [vmem:[%s374 + $0x34] sm:$0xf] %v1214
          %1247 = vst [vmem:[%s374 + $0x38] sm:$0xf] %v1215
          %1248 = vst [vmem:[%s374 + $0x3c] sm:$0xf] %v1216
        $region67: #{resnet_forward.15} parent=54 // pred_fallthru
          _
        %s1249 = smul.u32 16, %s20
        %p1250 = scmp.lt.s32.totalorder %s1249, 15
        %s1251 = scalar_select %p1250, %s1249, 15
        %p1252 = scmp.lt.s32.totalorder %s21, 0
        %s1253 = scalar_select %p1252, %s21, 0
        %s1254 = sadd.s32 %s1253, %s1251
        %s1255 = smul.addr %s1254, 4
        %s1256 = scalar_lea.vmem %s4, %s1255
        // Predicated region
        $region68: #{resnet_forward.15} parent=54 // pred_check
          %p1257 = pneg %p162
        $region69: #{resnet_forward.15} parent=54 // pred_check_branch
          %1259 = sbr.rel (%p1257) target = $region71
        $region70: #{resnet_forward.15} parent=54 // pred_region
          %s1260 = smul.u32 16, %s20
        $region71: #{resnet_forward.15} parent=54 // pred_fallthru
          _
        // Predicated region
        $region72: #{resnet_forward.15} parent=54 // pred_check
          %p1261 = pneg %p162
        $region73: #{resnet_forward.15} parent=54 // pred_check_branch
          %1263 = sbr.rel (%p1261) target = $region75
        $region74: #{resnet_forward.15} parent=54 // pred_region
          %s1264 = smul.u32 16, %s20
          %p1265 = scmp.lt.s32.totalorder %s1264, 15
          %s1266 = scalar_select %p1265, %s1264, 15
          %p1267 = scmp.lt.s32.totalorder %s21, 0
          %s1268 = scalar_select %p1267, %s21, 0
          %s1269 = sadd.s32 %s1268, %s1266
          %s1270 = smul.addr %s1269, 4
          %s1271 = scalar_lea.vmem %s4, %s1270
        $region75: #{resnet_forward.15} parent=54 // pred_fallthru
          _
      $region55: #{resnet_forward.15} parent=5 // pred_fallthru
        _
      %p1272 = scmp.le.s32.totalorder 2, %s10
      // Predicated region
      $region76: #{resnet_forward.15} parent=5 // pred_check
        %p1273 = pneg %p1272
      $region77: #{resnet_forward.15} parent=5 // pred_check_branch
        %1275 = sbr.rel (%p1273) target = $region79
      $region78: #{resnet_forward.15} parent=5 // pred_region
        %s1276 = ssub.s32 %s10, 2
      $region79: #{resnet_forward.15} parent=5 // pred_fallthru
        _
    $region6: #{resnet_forward.15} parent=1 // loop_footer
      %s14 = sadd.s32 1, %s10
    $region7: #{resnet_forward.15} parent=1 // loop_footer_branch
      %9 = sbr.rel target = $region3
    $region8: #{resnet_forward.15} parent=1 // loop_exit
      _

// kernel: resnet_forward.16
$region0: #{resnet_forward.16}
  #allocation0 [shape = 'u32[]', space=smem, size = 0x4, offset = 0x4, fixed_abs, tag = 'smem constant byte address 0x4 - core index']
  #allocation1 [shape = 'u32[144,128]{1,0:T(1,128)}', space=vmem, size = 0x12000, scoped, tag = 'internal scratch']
  #allocation2 [shape = 'f32[128,128]{1,0:T(8,128)}', space=vmem, size = 0x10000, scoped, tag = 'scratch operand']
  %s0 = inlined_call_operand.vmem [shape: bf16[128,1536], index: 0, kind: input, shape index: {}]
  %s1 = inlined_call_operand.vmem [shape: bf16[1536,128], index: 1, kind: input, shape index: {}]
  %s2 = inlined_call_operand.vmem [shape: f32[1,128], index: 2, kind: input, shape index: {}]
  %s3 = inlined_call_operand.vmem [shape: f32[1,128], index: 3, kind: input, shape index: {}]
  %s4 = inlined_call_operand.vmem [shape: bf16[128,128], index: 4, kind: input, shape index: {}]
  %s5 = inlined_call_operand.vmem [shape: bf16[128,128], index: 5, kind: output, shape index: {}]
  %s6 = sld [smem:[#allocation0]]
  $region84: #{resnet_forward.16} parent=0
    _
  %s8 = ssub.s32 1, %s6
  %s9 = scalar_select 0, %s8, %s6
  $region1: #{resnet_forward.16} parent=0
    #allocation3 [shape = 'u8[262144]{0}', space=vmem, size = 0x40000, scoped, tag = 'input window, operand 0']
    loop: start=0, step=1, limit=5
    $region2: #{resnet_forward.16} parent=1 // loop_pre_header
      _
    $region3: #{resnet_forward.16} parent=1 // loop_header
      %s11 = sphi 0, %s15
      %p12 = scmp.ge.s32.totalorder %s11, 5
      %s18 = sphi 0, %s37
      %s19 = sphi 0, %s33
      %s20 = sphi 0, %s29
      %s21 = sphi 0, %s18
      %s22 = sphi 0, %s19
      %s23 = sphi 0, %s20
      %s24 = sphi 0, %s21
      %s25 = sphi 0, %s22
      %s26 = sphi 0, %s23
      %s42 = sphi 0, %s44
      %s45 = sphi 0, %s42
      %s46 = sphi 0, %s45
      %s62 = sphi 0, %s46
      %s70 = sphi 0, %s72
      %s73 = sphi 0, %s70
      %s74 = sphi 0, %s73
      %s90 = sphi 0, %s74
      %s96 = sphi 0, %s98
      %s99 = sphi 0, %s96
      %s100 = sphi 0, %s99
      %s116 = sphi 0, %s100
      %s122 = sphi 0, %s124
      %s125 = sphi 0, %s122
      %s126 = sphi 0, %s125
      %s142 = sphi 0, %s126
      %s150 = sphi 0, %s152
      %s153 = sphi 0, %s150
      %s154 = sphi 0, %s153
      %s170 = sphi 0, %s154
      %s178 = sphi 0, %s180
      %s181 = sphi 0, %s178
      %s182 = sphi 0, %s181
      %s198 = sphi 0, %s182
    $region4: #{resnet_forward.16} parent=1 // loop_header_branch
      %14 = sbr.rel (%p12) target = $region8
    $region5: #{resnet_forward.16} parent=1 // loop_body
      %s16 = ssub.s32 %s11, 1
      %s17 = ssub.s32 %s11, 2
      %s27 = sadd.s32 1, %s20
      %p28 = scmp.ge.s32.totalorder %s27, 3
      %s29 = scalar_select %p28, 0, %s27
      %s30 = sadd.s32 1, %s19
      %s31 = scalar_select %p28, %s30, %s19
      %p32 = scmp.ge.s32.totalorder %s31, 1
      %s33 = scalar_select %p32, 0, %s31
      %s34 = sadd.s32 1, %s18
      %s35 = scalar_select %p32, %s34, %s18
      %p36 = scmp.ge.s32.totalorder %s35, 1
      %s37 = scalar_select %p36, 0, %s35
      %s38 = ssub.s32 %s18, %s37
      %s39 = ssub.s32 %s20, %s29
      %s40 = sor.u32 %s38, %s39
      %p41 = scmp.eq.s32.totalorder %s40, 0
      %s43 = sadd.s32 %s42, 1
      %s44 = scalar_select %p41, %s42, %s43
      %p47 = pneg %p41
      %p48 = scmp.eq.s32.totalorder %s11, 2
      %p49 = por %p47, %p48
      %p50 = scmp.ne.s32.totalorder %s42, %s45
      %p51 = scmp.eq.s32.totalorder %s11, 0
      %p52 = por %p50, %p51
      %p53 = scmp.ne.s32.totalorder %s42, %s45
      %p54 = scmp.eq.s32.totalorder %s16, 2
      %p55 = por %p53, %p54
      %p56 = scmp.ne.s32.totalorder %s45, %s46
      %p57 = scmp.eq.s32.totalorder %s16, 0
      %p58 = por %p56, %p57
      %p59 = scmp.ne.s32.totalorder %s45, %s46
      %p60 = scmp.eq.s32.totalorder %s17, 2
      %p61 = por %p59, %p60
      %p63 = scmp.ne.s32.totalorder %s46, %s62
      %p64 = scmp.eq.s32.totalorder %s17, 0
      %p65 = por %p63, %p64
      %s66 = ssub.s32 %s20, %s29
      %s67 = ssub.s32 %s19, %s33
      %s68 = sor.u32 %s66, %s67
      %p69 = scmp.eq.s32.totalorder %s68, 0
      %s71 = sadd.s32 %s70, 1
      %s72 = scalar_select %p69, %s70, %s71
      %p75 = pneg %p69
      %p76 = scmp.eq.s32.totalorder %s11, 2
      %p77 = por %p75, %p76
      %p78 = scmp.ne.s32.totalorder %s70, %s73
      %p79 = scmp.eq.s32.totalorder %s11, 0
      %p80 = por %p78, %p79
      %p81 = scmp.ne.s32.totalorder %s70, %s73
      %p82 = scmp.eq.s32.totalorder %s16, 2
      %p83 = por %p81, %p82
      %p84 = scmp.ne.s32.totalorder %s73, %s74
      %p85 = scmp.eq.s32.totalorder %s16, 0
      %p86 = por %p84, %p85
      %p87 = scmp.ne.s32.totalorder %s73, %s74
      %p88 = scmp.eq.s32.totalorder %s17, 2
      %p89 = por %p87, %p88
      %p91 = scmp.ne.s32.totalorder %s74, %s90
      %p92 = scmp.eq.s32.totalorder %s17, 0
      %p93 = por %p91, %p92
      %s94 = ssub.s32 %s19, %s33
      %p95 = scmp.eq.s32.totalorder %s94, 0
      %s97 = sadd.s32 %s96, 1
      %s98 = scalar_select %p95, %s96, %s97
      %p101 = pneg %p95
      %p102 = scmp.eq.s32.totalorder %s11, 2
      %p103 = por %p101, %p102
      %p104 = scmp.ne.s32.totalorder %s96, %s99
      %p105 = scmp.eq.s32.totalorder %s11, 0
      %p106 = por %p104, %p105
      %p107 = scmp.ne.s32.totalorder %s96, %s99
      %p108 = scmp.eq.s32.totalorder %s16, 2
      %p109 = por %p107, %p108
      %p110 = scmp.ne.s32.totalorder %s99, %s100
      %p111 = scmp.eq.s32.totalorder %s16, 0
      %p112 = por %p110, %p111
      %p113 = scmp.ne.s32.totalorder %s99, %s100
      %p114 = scmp.eq.s32.totalorder %s17, 2
      %p115 = por %p113, %p114
      %p117 = scmp.ne.s32.totalorder %s100, %s116
      %p118 = scmp.eq.s32.totalorder %s17, 0
      %p119 = por %p117, %p118
      %s120 = ssub.s32 %s19, %s33
      %p121 = scmp.eq.s32.totalorder %s120, 0
      %s123 = sadd.s32 %s122, 1
      %s124 = scalar_select %p121, %s122, %s123
      %p127 = pneg %p121
      %p128 = scmp.eq.s32.totalorder %s11, 2
      %p129 = por %p127, %p128
      %p130 = scmp.ne.s32.totalorder %s122, %s125
      %p131 = scmp.eq.s32.totalorder %s11, 0
      %p132 = por %p130, %p131
      %p133 = scmp.ne.s32.totalorder %s122, %s125
      %p134 = scmp.eq.s32.totalorder %s16, 2
      %p135 = por %p133, %p134
      %p136 = scmp.ne.s32.totalorder %s125, %s126
      %p137 = scmp.eq.s32.totalorder %s16, 0
      %p138 = por %p136, %p137
      %p139 = scmp.ne.s32.totalorder %s125, %s126
      %p140 = scmp.eq.s32.totalorder %s17, 2
      %p141 = por %p139, %p140
      %p143 = scmp.ne.s32.totalorder %s126, %s142
      %p144 = scmp.eq.s32.totalorder %s17, 0
      %p145 = por %p143, %p144
      %s146 = ssub.s32 %s18, %s37
      %s147 = ssub.s32 %s19, %s33
      %s148 = sor.u32 %s146, %s147
      %p149 = scmp.eq.s32.totalorder %s148, 0
      %s151 = sadd.s32 %s150, 1
      %s152 = scalar_select %p149, %s150, %s151
      %p155 = pneg %p149
      %p156 = scmp.eq.s32.totalorder %s11, 2
      %p157 = por %p155, %p156
      %p158 = scmp.ne.s32.totalorder %s150, %s153
      %p159 = scmp.eq.s32.totalorder %s11, 0
      %p160 = por %p158, %p159
      %p161 = scmp.ne.s32.totalorder %s150, %s153
      %p162 = scmp.eq.s32.totalorder %s16, 2
      %p163 = por %p161, %p162
      %p164 = scmp.ne.s32.totalorder %s153, %s154
      %p165 = scmp.eq.s32.totalorder %s16, 0
      %p166 = por %p164, %p165
      %p167 = scmp.ne.s32.totalorder %s153, %s154
      %p168 = scmp.eq.s32.totalorder %s17, 2
      %p169 = por %p167, %p168
      %p171 = scmp.ne.s32.totalorder %s154, %s170
      %p172 = scmp.eq.s32.totalorder %s17, 0
      %p173 = por %p171, %p172
      %s174 = ssub.s32 %s18, %s37
      %s175 = ssub.s32 %s19, %s33
      %s176 = sor.u32 %s174, %s175
      %p177 = scmp.eq.s32.totalorder %s176, 0
      %s179 = sadd.s32 %s178, 1
      %s180 = scalar_select %p177, %s178, %s179
      %p183 = pneg %p177
      %p184 = scmp.eq.s32.totalorder %s11, 2
      %p185 = por %p183, %p184
      %p186 = scmp.ne.s32.totalorder %s178, %s181
      %p187 = scmp.eq.s32.totalorder %s11, 0
      %p188 = por %p186, %p187
      %p189 = scmp.ne.s32.totalorder %s178, %s181
      %p190 = scmp.eq.s32.totalorder %s16, 2
      %p191 = por %p189, %p190
      %p192 = scmp.ne.s32.totalorder %s181, %s182
      %p193 = scmp.eq.s32.totalorder %s16, 0
      %p194 = por %p192, %p193
      %p195 = scmp.ne.s32.totalorder %s181, %s182
      %p196 = scmp.eq.s32.totalorder %s17, 2
      %p197 = por %p195, %p196
      %p199 = scmp.ne.s32.totalorder %s182, %s198
      %p200 = scmp.eq.s32.totalorder %s17, 0
      %p201 = por %p199, %p200
      %p202 = scmp.le.s32.totalorder 1, %s11
      %p203 = scmp.lt.s32.totalorder %s11, 4
      %p204 = pnand %p202, %p203
      %p205 = pneg %p204
      // Predicated region
      $region9: #{resnet_forward.16} parent=5 // pred_check
        _
      $region10: #{resnet_forward.16} parent=5 // pred_check_branch
        %207 = sbr.rel (%p204) target = $region12
      $region11: #{resnet_forward.16} parent=5 // pred_region
        %s208 = ssub.s32 %s11, 1
        // Predicated region
        $region13: #{resnet_forward.16} parent=11 // pred_check
          %p209 = pneg %p112
        $region14: #{resnet_forward.16} parent=11 // pred_check_branch
          %211 = sbr.rel (%p209) target = $region16
        $region15: #{resnet_forward.16} parent=11 // pred_region
          %p212 = scmp.lt.s32.totalorder %s22, 0
          %s213 = scalar_select %p212, %s22, 0
          %s214 = scalar_lea.vmem %s2, %s213
        $region16: #{resnet_forward.16} parent=11 // pred_fallthru
          _
        // Predicated region
        $region17: #{resnet_forward.16} parent=11 // pred_check
          %p215 = pneg %p138
        $region18: #{resnet_forward.16} parent=11 // pred_check_branch
          %217 = sbr.rel (%p215) target = $region20
        $region19: #{resnet_forward.16} parent=11 // pred_region
          %p218 = scmp.lt.s32.totalorder %s22, 0
          %s219 = scalar_select %p218, %s22, 0
          %s220 = scalar_lea.vmem %s3, %s219
        $region20: #{resnet_forward.16} parent=11 // pred_fallthru
          _
        // Predicated region
        $region21: #{resnet_forward.16} parent=11 // pred_check
          %p221 = pneg %p166
        $region22: #{resnet_forward.16} parent=11 // pred_check_branch
          %223 = sbr.rel (%p221) target = $region24
        $region23: #{resnet_forward.16} parent=11 // pred_region
          %s224 = smul.u32 16, %s21
          %p225 = scmp.lt.s32.totalorder %s224, 15
          %s226 = scalar_select %p225, %s224, 15
          %p227 = scmp.lt.s32.totalorder %s22, 0
          %s228 = scalar_select %p227, %s22, 0
          %s229 = sadd.s32 %s228, %s226
          %s230 = smul.addr %s229, 4
          %s231 = scalar_lea.vmem %s4, %s230
          %s232 = smul.u32 16, %s21
        $region24: #{resnet_forward.16} parent=11 // pred_fallthru
          _
      $region12: #{resnet_forward.16} parent=5 // pred_fallthru
        _
      %p233 = scmp.lt.s32.totalorder %s11, 3
      // Predicated region
      $region25: #{resnet_forward.16} parent=5 // pred_check
        %p234 = pneg %p233
      $region26: #{resnet_forward.16} parent=5 // pred_check_branch
        %236 = sbr.rel (%p234) target = $region28
      $region27: #{resnet_forward.16} parent=5 // pred_region
        // Predicated region
        $region29: #{resnet_forward.16} parent=27 // pred_check
          %p237 = pneg %p52
        $region30: #{resnet_forward.16} parent=27 // pred_check_branch
          %239 = sbr.rel (%p237) target = $region32
        $region31: #{resnet_forward.16} parent=27 // pred_region
          %s240 = sand.u32 %s42, 1
          %s241 = sand.u32 %s42, 1
          %s242 = smul.addr %s241, 256
          %s243 = scalar_lea.vmem [#allocation3], %s242
          %s244 = smul.u32 16, %s18
          %s245 = smul.u32 4, %s20
          %s246 = smul.addr %s244, 12
          %s247 = sadd.s32 %s245, %s246
          %s248 = smul.addr %s247, 4
          %s249 = scalar_lea.vmem %s0, %s248
          // Predicated region
          $region33: #{resnet_forward.16} parent=31 // pred_check
            _
          $region34: #{resnet_forward.16} parent=31 // pred_check_branch
            %251 = sbr.rel (0) target = $region36
          $region35: #{resnet_forward.16} parent=31 // pred_region
            // Predicated region
            $region37: #{resnet_forward.16} parent=35 // pred_check
              _
            $region38: #{resnet_forward.16} parent=35 // pred_check_branch
              %253 = sbr.rel (0) target = $region40
            $region39: #{resnet_forward.16} parent=35 // pred_region
              loop: start=0, step=1, limit=1
              $region41: #{resnet_forward.16} parent=39 // loop_pre_header
                _
              $region42: #{resnet_forward.16} parent=39 // loop_header
                %s255 = sphi 0, %s259
                %p256 = scmp.ge.s32.totalorder %s255, 1
                %s260 = sphi %s249, %s249
                %s261 = sphi %s243, %s243
              $region43: #{resnet_forward.16} parent=39 // loop_header_branch
                %258 = sbr.rel (%p256) target = $region47
              $region44: #{resnet_forward.16} parent=39 // loop_body
                %v262 = vld [vmem:[%s260] sm:$0xff]
                %263 = vst [vmem:[%s261] sm:$0xff] %v262
                %v264 = vld [vmem:[%s260 + $0x8] sm:$0xff]
                %265 = vst [vmem:[%s261 + $0x8] sm:$0xff] %v264
                %v266 = vld [vmem:[%s260 + $0x30] sm:$0xff]
                %267 = vst [vmem:[%s261 + $0x10] sm:$0xff] %v266
                %v268 = vld [vmem:[%s260 + $0x38] sm:$0xff]
                %269 = vst [vmem:[%s261 + $0x18] sm:$0xff] %v268
                %v270 = vld [vmem:[%s260 + $0x60] sm:$0xff]
                %271 = vst [vmem:[%s261 + $0x20] sm:$0xff] %v270
                %v272 = vld [vmem:[%s260 + $0x68] sm:$0xff]
                %273 = vst [vmem:[%s261 + $0x28] sm:$0xff] %v272
                %v274 = vld [vmem:[%s260 + $0x90] sm:$0xff]
                %275 = vst [vmem:[%s261 + $0x30] sm:$0xff] %v274
                %v276 = vld [vmem:[%s260 + $0x98] sm:$0xff]
                %277 = vst [vmem:[%s261 + $0x38] sm:$0xff] %v276
                %v278 = vld [vmem:[%s260 + $0xc0] sm:$0xff]
                %279 = vst [vmem:[%s261 + $0x40] sm:$0xff] %v278
                %v280 = vld [vmem:[%s260 + $0xc8] sm:$0xff]
                %281 = vst [vmem:[%s261 + $0x48] sm:$0xff] %v280
                %v282 = vld [vmem:[%s260 + $0xf0] sm:$0xff]
                %283 = vst [vmem:[%s261 + $0x50] sm:$0xff] %v282
                %v284 = vld [vmem:[%s260 + $0xf8] sm:$0xff]
                %285 = vst [vmem:[%s261 + $0x58] sm:$0xff] %v284
                %v286 = vld [vmem:[%s260 + $0x120] sm:$0xff]
                %287 = vst [vmem:[%s261 + $0x60] sm:$0xff] %v286
                %v288 = vld [vmem:[%s260 + $0x128] sm:$0xff]
                %289 = vst [vmem:[%s261 + $0x68] sm:$0xff] %v288
                %v290 = vld [vmem:[%s260 + $0x150] sm:$0xff]
                %291 = vst [vmem:[%s261 + $0x70] sm:$0xff] %v290
                %v292 = vld [vmem:[%s260 + $0x158] sm:$0xff]
                %293 = vst [vmem:[%s261 + $0x78] sm:$0xff] %v292
                %v294 = vld [vmem:[%s260 + $0x180] sm:$0xff]
                %295 = vst [vmem:[%s261 + $0x80] sm:$0xff] %v294
                %v296 = vld [vmem:[%s260 + $0x188] sm:$0xff]
                %297 = vst [vmem:[%s261 + $0x88] sm:$0xff] %v296
                %v298 = vld [vmem:[%s260 + $0x1b0] sm:$0xff]
                %299 = vst [vmem:[%s261 + $0x90] sm:$0xff] %v298
                %v300 = vld [vmem:[%s260 + $0x1b8] sm:$0xff]
                %301 = vst [vmem:[%s261 + $0x98] sm:$0xff] %v300
                %v302 = vld [vmem:[%s260 + $0x1e0] sm:$0xff]
                %303 = vst [vmem:[%s261 + $0xa0] sm:$0xff] %v302
                %v304 = vld [vmem:[%s260 + $0x1e8] sm:$0xff]
                %305 = vst [vmem:[%s261 + $0xa8] sm:$0xff] %v304
                %v306 = vld [vmem:[%s260 + $0x210] sm:$0xff]
                %307 = vst [vmem:[%s261 + $0xb0] sm:$0xff] %v306
                %v308 = vld [vmem:[%s260 + $0x218] sm:$0xff]
                %309 = vst [vmem:[%s261 + $0xb8] sm:$0xff] %v308
                %v310 = vld [vmem:[%s260 + $0x240] sm:$0xff]
                %311 = vst [vmem:[%s261 + $0xc0] sm:$0xff] %v310
                %v312 = vld [vmem:[%s260 + $0x248] sm:$0xff]
                %313 = vst [vmem:[%s261 + $0xc8] sm:$0xff] %v312
                %v314 = vld [vmem:[%s260 + $0x270] sm:$0xff]
                %315 = vst [vmem:[%s261 + $0xd0] sm:$0xff] %v314
                %v316 = vld [vmem:[%s260 + $0x278] sm:$0xff]
                %317 = vst [vmem:[%s261 + $0xd8] sm:$0xff] %v316
                %v318 = vld [vmem:[%s260 + $0x2a0] sm:$0xff]
                %319 = vst [vmem:[%s261 + $0xe0] sm:$0xff] %v318
                %v320 = vld [vmem:[%s260 + $0x2a8] sm:$0xff]
                %321 = vst [vmem:[%s261 + $0xe8] sm:$0xff] %v320
                %v322 = vld [vmem:[%s260 + $0x2d0] sm:$0xff]
                %323 = vst [vmem:[%s261 + $0xf0] sm:$0xff] %v322
                %v324 = vld [vmem:[%s260 + $0x2d8] sm:$0xff]
                %325 = vst [vmem:[%s261 + $0xf8] sm:$0xff] %v324
              $region45: #{resnet_forward.16} parent=39 // loop_footer
                %s259 = sadd.s32 1, %s255
              $region46: #{resnet_forward.16} parent=39 // loop_footer_branch
                %254 = sbr.rel target = $region42
              $region47: #{resnet_forward.16} parent=39 // loop_exit
                _
            $region40: #{resnet_forward.16} parent=35 // pred_fallthru
              _
            // Predicated region
            $region48: #{resnet_forward.16} parent=35 // pred_check
              _
            $region49: #{resnet_forward.16} parent=35 // pred_check_branch
              %327 = sbr.rel target = $region51
            $region50: #{resnet_forward.16} parent=35 // pred_region
              _
            $region51: #{resnet_forward.16} parent=35 // pred_fallthru
              _
          $region36: #{resnet_forward.16} parent=31 // pred_fallthru
            _
          %328 = vnop
        $region32: #{resnet_forward.16} parent=27 // pred_fallthru
          _
        // Predicated region
        $region52: #{resnet_forward.16} parent=27 // pred_check
          %p329 = pneg %p80
        $region53: #{resnet_forward.16} parent=27 // pred_check_branch
          %331 = sbr.rel (%p329) target = $region55
        $region54: #{resnet_forward.16} parent=27 // pred_region
          %s332 = smul.u32 64, %s20
          %p333 = scmp.lt.s32.totalorder %s332, 191
          %s334 = scalar_select %p333, %s332, 191
          %p335 = scmp.lt.s32.totalorder %s19, 0
          %s336 = scalar_select %p335, %s19, 0
          %s337 = sadd.s32 %s336, %s334
          %s338 = smul.addr %s337, 4
          %s339 = scalar_lea.vmem %s1, %s338
          %s340 = smul.u32 64, %s20
        $region55: #{resnet_forward.16} parent=27 // pred_fallthru
          _
      $region28: #{resnet_forward.16} parent=5 // pred_fallthru
        _
      %p341 = scmp.le.s32.totalorder 1, %s11
      %p342 = scmp.lt.s32.totalorder %s11, 4
      %p343 = pnand %p341, %p342
      %p344 = pneg %p343
      // Predicated region
      $region56: #{resnet_forward.16} parent=5 // pred_check
        _
      $region57: #{resnet_forward.16} parent=5 // pred_check_branch
        %346 = sbr.rel (%p343) target = $region59
      $region58: #{resnet_forward.16} parent=5 // pred_region
        %s347 = ssub.s32 %s11, 1
        %s348 = sand.u32 %s45, 1
        %s349 = sand.u32 %s45, 1
        %s350 = smul.addr %s349, 256
        %s351 = scalar_lea.vmem [#allocation3], %s350
        // Predicated region
        $region60: #{resnet_forward.16} parent=58 // pred_check
          %p352 = pneg %p58
        $region61: #{resnet_forward.16} parent=58 // pred_check_branch
          %354 = sbr.rel (%p352) target = $region63
        $region62: #{resnet_forward.16} parent=58 // pred_region
          _
        $region63: #{resnet_forward.16} parent=58 // pred_fallthru
          _
        %s355 = sand.u32 %s45, 1
        %s356 = sand.u32 %s45, 1
        %s357 = smul.addr %s356, 256
        %s358 = scalar_lea.vmem [#allocation3], %s357
        %p359 = pneg %p58
        %p360 = pneg %p55
        %s361 = smul.u32 64, %s23
        %p362 = scmp.lt.s32.totalorder %s361, 191
        %s363 = scalar_select %p362, %s361, 191
        %p364 = scmp.lt.s32.totalorder %s22, 0
        %s365 = scalar_select %p364, %s22, 0
        %s366 = sadd.s32 %s365, %s363
        %s367 = smul.addr %s366, 4
        %s368 = scalar_lea.vmem %s1, %s367
        %p369 = pneg %p86
        %p370 = pneg %p83
        %p371 = scmp.lt.s32.totalorder %s22, 0
        %s372 = scalar_select %p371, %s22, 0
        %s373 = scalar_lea.vmem %s2, %s372
        %p374 = pneg %p112
        %p375 = pneg %p109
        %p376 = scmp.lt.s32.totalorder %s22, 0
        %s377 = scalar_select %p376, %s22, 0
        %s378 = scalar_lea.vmem %s3, %s377
        %p379 = pneg %p138
        %p380 = pneg %p135
        %s381 = smul.u32 16, %s21
        %p382 = scmp.lt.s32.totalorder %s381, 15
        %s383 = scalar_select %p382, %s381, 15
        %p384 = scmp.lt.s32.totalorder %s22, 0
        %s385 = scalar_select %p384, %s22, 0
        %s386 = sadd.s32 %s385, %s383
        %s387 = smul.addr %s386, 4
        %s388 = scalar_lea.vmem %s4, %s387
        %p389 = pneg %p166
        %p390 = pneg %p163
        %p391 = pneg %p194
        %p392 = pneg %p191
        %s393 = smul.u32 16, %s21
        %p394 = scmp.lt.s32.totalorder %s393, 15
        %s395 = scalar_select %p394, %s393, 15
        %p396 = scmp.lt.s32.totalorder %s22, 0
        %s397 = scalar_select %p396, %s22, 0
        %s398 = sadd.s32 %s397, %s395
        %s399 = smul.addr %s398, 4
        %s400 = scalar_lea.vmem %s5, %s399
        %s401 = smul.u32 16, %s21
        %s402 = smul.u32 4, %s23
        %s403 = smul.u32 64, %s23
        %p404 = scmp.lt.s32.totalorder %s403, 191
        %s405 = scalar_select %p404, %s403, 191
        %p406 = scmp.lt.s32.totalorder %s22, 0
        %s407 = scalar_select %p406, %s22, 0
        %s408 = sadd.s32 %s407, %s405
        %s409 = smul.addr %s408, 4
        %s410 = scalar_lea.vmem %s1, %s409
        %s411 = smul.u32 64, %s23
        %p412 = scmp.lt.s32.totalorder %s22, 0
        %s413 = scalar_select %p412, %s22, 0
        %s414 = scalar_lea.vmem %s2, %s413
        %p415 = scmp.lt.s32.totalorder %s22, 0
        %s416 = scalar_select %p415, %s22, 0
        %s417 = scalar_lea.vmem %s3, %s416
        %s418 = smul.u32 16, %s21
        %p419 = scmp.lt.s32.totalorder %s418, 15
        %s420 = scalar_select %p419, %s418, 15
        %p421 = scmp.lt.s32.totalorder %s22, 0
        %s422 = scalar_select %p421, %s22, 0
        %s423 = sadd.s32 %s422, %s420
        %s424 = smul.addr %s423, 4
        %s425 = scalar_lea.vmem %s4, %s424
        %s426 = smul.u32 16, %s21
        %s427 = smul.u32 16, %s21
        %p428 = scmp.lt.s32.totalorder %s427, 15
        %s429 = scalar_select %p428, %s427, 15
        %p430 = scmp.lt.s32.totalorder %s22, 0
        %s431 = scalar_select %p430, %s22, 0
        %s432 = sadd.s32 %s431, %s429
        %s433 = smul.addr %s432, 4
        %s434 = scalar_lea.vmem %s5, %s433
        %s435 = smul.u32 16, %s21
        %p437 = scmp.eq.s32.totalorder %s23, 0
        // Predicated region
        $region64: #{resnet_forward.16} parent=58 // pred_check
          %p438 = pneg %p437
        $region65: #{resnet_forward.16} parent=58 // pred_check_branch
          %440 = sbr.rel (%p438) target = $region67
        $region66: #{resnet_forward.16} parent=58 // pred_region
          %441 = vst [vmem:[#allocation2] sm:$0xff] 0.0
          %442 = vst [vmem:[#allocation2 + $0x8] sm:$0xff] 0.0
          %443 = vst [vmem:[#allocation2 + $0x10] sm:$0xff] 0.0
          %444 = vst [vmem:[#allocation2 + $0x18] sm:$0xff] 0.0
          %445 = vst [vmem:[#allocation2 + $0x20] sm:$0xff] 0.0
          %446 = vst [vmem:[#allocation2 + $0x28] sm:$0xff] 0.0
          %447 = vst [vmem:[#allocation2 + $0x30] sm:$0xff] 0.0
          %448 = vst [vmem:[#allocation2 + $0x38] sm:$0xff] 0.0
          %449 = vst [vmem:[#allocation2 + $0x40] sm:$0xff] 0.0
          %450 = vst [vmem:[#allocation2 + $0x48] sm:$0xff] 0.0
          %451 = vst [vmem:[#allocation2 + $0x50] sm:$0xff] 0.0
          %452 = vst [vmem:[#allocation2 + $0x58] sm:$0xff] 0.0
          %453 = vst [vmem:[#allocation2 + $0x60] sm:$0xff] 0.0
          %454 = vst [vmem:[#allocation2 + $0x68] sm:$0xff] 0.0
          %455 = vst [vmem:[#allocation2 + $0x70] sm:$0xff] 0.0
          %456 = vst [vmem:[#allocation2 + $0x78] sm:$0xff] 0.0
        $region67: #{resnet_forward.16} parent=58 // pred_fallthru
          _
        %v457 = vld [vmem:[#allocation2] sm:$0xff]
        %v458 = vld [vmem:[#allocation2 + $0x8] sm:$0xff]
        %v459 = vld [vmem:[#allocation2 + $0x10] sm:$0xff]
        %v460 = vld [vmem:[#allocation2 + $0x18] sm:$0xff]
        %v461 = vld [vmem:[#allocation2 + $0x20] sm:$0xff]
        %v462 = vld [vmem:[#allocation2 + $0x28] sm:$0xff]
        %v463 = vld [vmem:[#allocation2 + $0x30] sm:$0xff]
        %v464 = vld [vmem:[#allocation2 + $0x38] sm:$0xff]
        %v465 = vld [vmem:[#allocation2 + $0x40] sm:$0xff]
        %v466 = vld [vmem:[#allocation2 + $0x48] sm:$0xff]
        %v467 = vld [vmem:[#allocation2 + $0x50] sm:$0xff]
        %v468 = vld [vmem:[#allocation2 + $0x58] sm:$0xff]
        %v469 = vld [vmem:[#allocation2 + $0x60] sm:$0xff]
        %v470 = vld [vmem:[#allocation2 + $0x68] sm:$0xff]
        %v471 = vld [vmem:[#allocation2 + $0x70] sm:$0xff]
        %v472 = vld [vmem:[#allocation2 + $0x78] sm:$0xff]
        %v473 = vld [vmem:[%s351] sm:$0xff]
        %v474 = vld [vmem:[%s351 + $0x8] sm:$0xff]
        %v475 = vld [vmem:[%s351 + $0x10] sm:$0xff]
        %v476 = vld [vmem:[%s351 + $0x18] sm:$0xff]
        %v477 = vld [vmem:[%s351 + $0x20] sm:$0xff]
        %v478 = vld [vmem:[%s351 + $0x28] sm:$0xff]
        %v479 = vld [vmem:[%s351 + $0x30] sm:$0xff]
        %v480 = vld [vmem:[%s351 + $0x38] sm:$0xff]
        %v481 = vld [vmem:[%s351 + $0x40] sm:$0xff]
        %v482 = vld [vmem:[%s351 + $0x48] sm:$0xff]
        %v483 = vld [vmem:[%s351 + $0x50] sm:$0xff]
        %v484 = vld [vmem:[%s351 + $0x58] sm:$0xff]
        %v485 = vld [vmem:[%s351 + $0x60] sm:$0xff]
        %v486 = vld [vmem:[%s351 + $0x68] sm:$0xff]
        %v487 = vld [vmem:[%s351 + $0x70] sm:$0xff]
        %v488 = vld [vmem:[%s351 + $0x78] sm:$0xff]
        %v489 = vld [vmem:[%s351 + $0x80] sm:$0xff]
        %v490 = vld [vmem:[%s351 + $0x88] sm:$0xff]
        %v491 = vld [vmem:[%s351 + $0x90] sm:$0xff]
        %v492 = vld [vmem:[%s351 + $0x98] sm:$0xff]
        %v493 = vld [vmem:[%s351 + $0xa0] sm:$0xff]
        %v494 = vld [vmem:[%s351 + $0xa8] sm:$0xff]
        %v495 = vld [vmem:[%s351 + $0xb0] sm:$0xff]
        %v496 = vld [vmem:[%s351 + $0xb8] sm:$0xff]
        %v497 = vld [vmem:[%s351 + $0xc0] sm:$0xff]
        %v498 = vld [vmem:[%s351 + $0xc8] sm:$0xff]
        %v499 = vld [vmem:[%s351 + $0xd0] sm:$0xff]
        %v500 = vld [vmem:[%s351 + $0xd8] sm:$0xff]
        %v501 = vld [vmem:[%s351 + $0xe0] sm:$0xff]
        %v502 = vld [vmem:[%s351 + $0xe8] sm:$0xff]
        %v503 = vld [vmem:[%s351 + $0xf0] sm:$0xff]
        %v504 = vld [vmem:[%s351 + $0xf8] sm:$0xff]
        %v505 = vld [vmem:[%s410] sm:$0xf]
        %v506 = vld [vmem:[%s410 + $0x4] sm:$0xf]
        %v507 = vld [vmem:[%s410 + $0x8] sm:$0xf]
        %v508 = vld [vmem:[%s410 + $0xc] sm:$0xf]
        %v509 = vld [vmem:[%s410 + $0x10] sm:$0xf]
        %v510 = vld [vmem:[%s410 + $0x14] sm:$0xf]
        %v511 = vld [vmem:[%s410 + $0x18] sm:$0xf]
        %v512 = vld [vmem:[%s410 + $0x1c] sm:$0xf]
        %v513 = vld [vmem:[%s410 + $0x20] sm:$0xf]
        %v514 = vld [vmem:[%s410 + $0x24] sm:$0xf]
        %v515 = vld [vmem:[%s410 + $0x28] sm:$0xf]
        %v516 = vld [vmem:[%s410 + $0x2c] sm:$0xf]
        %v517 = vld [vmem:[%s410 + $0x30] sm:$0xf]
        %v518 = vld [vmem:[%s410 + $0x34] sm:$0xf]
        %v519 = vld [vmem:[%s410 + $0x38] sm:$0xf]
        %v520 = vld [vmem:[%s410 + $0x3c] sm:$0xf]
        %v521 = vld [vmem:[%s410 + $0x40] sm:$0xf]
        %v522 = vld [vmem:[%s410 + $0x44] sm:$0xf]
        %v523 = vld [vmem:[%s410 + $0x48] sm:$0xf]
        %v524 = vld [vmem:[%s410 + $0x4c] sm:$0xf]
        %v525 = vld [vmem:[%s410 + $0x50] sm:$0xf]
        %v526 = vld [vmem:[%s410 + $0x54] sm:$0xf]
        %v527 = vld [vmem:[%s410 + $0x58] sm:$0xf]
        %v528 = vld [vmem:[%s410 + $0x5c] sm:$0xf]
        %v529 = vld [vmem:[%s410 + $0x60] sm:$0xf]
        %v530 = vld [vmem:[%s410 + $0x64] sm:$0xf]
        %v531 = vld [vmem:[%s410 + $0x68] sm:$0xf]
        %v532 = vld [vmem:[%s410 + $0x6c] sm:$0xf]
        %v533 = vld [vmem:[%s410 + $0x70] sm:$0xf]
        %v534 = vld [vmem:[%s410 + $0x74] sm:$0xf]
        %v535 = vld [vmem:[%s410 + $0x78] sm:$0xf]
        %v536 = vld [vmem:[%s410 + $0x7c] sm:$0xf]
        %v537 = vld [vmem:[%s410 + $0x80] sm:$0xf]
        %v538 = vld [vmem:[%s410 + $0x84] sm:$0xf]
        %v539 = vld [vmem:[%s410 + $0x88] sm:$0xf]
        %v540 = vld [vmem:[%s410 + $0x8c] sm:$0xf]
        %v541 = vld [vmem:[%s410 + $0x90] sm:$0xf]
        %v542 = vld [vmem:[%s410 + $0x94] sm:$0xf]
        %v543 = vld [vmem:[%s410 + $0x98] sm:$0xf]
        %v544 = vld [vmem:[%s410 + $0x9c] sm:$0xf]
        %v545 = vld [vmem:[%s410 + $0xa0] sm:$0xf]
        %v546 = vld [vmem:[%s410 + $0xa4] sm:$0xf]
        %v547 = vld [vmem:[%s410 + $0xa8] sm:$0xf]
        %v548 = vld [vmem:[%s410 + $0xac] sm:$0xf]
        %v549 = vld [vmem:[%s410 + $0xb0] sm:$0xf]
        %v550 = vld [vmem:[%s410 + $0xb4] sm:$0xf]
        %v551 = vld [vmem:[%s410 + $0xb8] sm:$0xf]
        %v552 = vld [vmem:[%s410 + $0xbc] sm:$0xf]
        %v553 = vld [vmem:[%s410 + $0xc0] sm:$0xf]
        %v554 = vld [vmem:[%s410 + $0xc4] sm:$0xf]
        %v555 = vld [vmem:[%s410 + $0xc8] sm:$0xf]
        %v556 = vld [vmem:[%s410 + $0xcc] sm:$0xf]
        %v557 = vld [vmem:[%s410 + $0xd0] sm:$0xf]
        %v558 = vld [vmem:[%s410 + $0xd4] sm:$0xf]
        %v559 = vld [vmem:[%s410 + $0xd8] sm:$0xf]
        %v560 = vld [vmem:[%s410 + $0xdc] sm:$0xf]
        %v561 = vld [vmem:[%s410 + $0xe0] sm:$0xf]
        %v562 = vld [vmem:[%s410 + $0xe4] sm:$0xf]
        %v563 = vld [vmem:[%s410 + $0xe8] sm:$0xf]
        %v564 = vld [vmem:[%s410 + $0xec] sm:$0xf]
        %v565 = vld [vmem:[%s410 + $0xf0] sm:$0xf]
        %v566 = vld [vmem:[%s410 + $0xf4] sm:$0xf]
        %v567 = vld [vmem:[%s410 + $0xf8] sm:$0xf]
        %v568 = vld [vmem:[%s410 + $0xfc] sm:$0xf]
        %v601 = vunpack.c.l.b16 %v473
        %v602 = vunpack.c.h.b16 %v473
        %v603 = vunpack.c.l.b16 %v474
        %v604 = vunpack.c.h.b16 %v474
        %v605 = vunpack.c.l.b16 %v475
        %v606 = vunpack.c.h.b16 %v475
        %v607 = vunpack.c.l.b16 %v476
        %v608 = vunpack.c.h.b16 %v476
        %v609 = vunpack.c.l.b16 %v477
        %v610 = vunpack.c.h.b16 %v477
        %v611 = vunpack.c.l.b16 %v478
        %v612 = vunpack.c.h.b16 %v478
        %v613 = vunpack.c.l.b16 %v479
        %v614 = vunpack.c.h.b16 %v479
        %v615 = vunpack.c.l.b16 %v480
        %v616 = vunpack.c.h.b16 %v480
        %v617 = vunpack.c.l.b16 %v481
        %v618 = vunpack.c.h.b16 %v481
        %v619 = vunpack.c.l.b16 %v482
        %v620 = vunpack.c.h.b16 %v482
        %v621 = vunpack.c.l.b16 %v483
        %v622 = vunpack.c.h.b16 %v483
        %v623 = vunpack.c.l.b16 %v484
        %v624 = vunpack.c.h.b16 %v484
        %v625 = vunpack.c.l.b16 %v485
        %v626 = vunpack.c.h.b16 %v485
        %v627 = vunpack.c.l.b16 %v486
        %v628 = vunpack.c.h.b16 %v486
        %v629 = vunpack.c.l.b16 %v487
        %v630 = vunpack.c.h.b16 %v487
        %v631 = vunpack.c.l.b16 %v488
        %v632 = vunpack.c.h.b16 %v488
        %v633 = vunpack.c.l.b16 %v489
        %v634 = vunpack.c.h.b16 %v489
        %v635 = vunpack.c.l.b16 %v490
        %v636 = vunpack.c.h.b16 %v490
        %v637 = vunpack.c.l.b16 %v491
        %v638 = vunpack.c.h.b16 %v491
        %v639 = vunpack.c.l.b16 %v492
        %v640 = vunpack.c.h.b16 %v492
        %v641 = vunpack.c.l.b16 %v493
        %v642 = vunpack.c.h.b16 %v493
        %v643 = vunpack.c.l.b16 %v494
        %v644 = vunpack.c.h.b16 %v494
        %v645 = vunpack.c.l.b16 %v495
        %v646 = vunpack.c.h.b16 %v495
        %v647 = vunpack.c.l.b16 %v496
        %v648 = vunpack.c.h.b16 %v496
        %v649 = vunpack.c.l.b16 %v497
        %v650 = vunpack.c.h.b16 %v497
        %v651 = vunpack.c.l.b16 %v498
        %v652 = vunpack.c.h.b16 %v498
        %v653 = vunpack.c.l.b16 %v499
        %v654 = vunpack.c.h.b16 %v499
        %v655 = vunpack.c.l.b16 %v500
        %v656 = vunpack.c.h.b16 %v500
        %v657 = vunpack.c.l.b16 %v501
        %v658 = vunpack.c.h.b16 %v501
        %v659 = vunpack.c.l.b16 %v502
        %v660 = vunpack.c.h.b16 %v502
        %v661 = vunpack.c.l.b16 %v503
        %v662 = vunpack.c.h.b16 %v503
        %v663 = vunpack.c.l.b16 %v504
        %v664 = vunpack.c.h.b16 %v504
        %v665 = vpack.c.b16 %v605, %v601
        %v666 = vpack.c.b16 %v606, %v602
        %v667 = vpack.c.b16 %v607, %v603
        %v668 = vpack.c.b16 %v608, %v604
        %v669 = vpack.c.b16 %v613, %v609
        %v670 = vpack.c.b16 %v614, %v610
        %v671 = vpack.c.b16 %v615, %v611
        %v672 = vpack.c.b16 %v616, %v612
        %v673 = vpack.c.b16 %v621, %v617
        %v674 = vpack.c.b16 %v622, %v618
        %v675 = vpack.c.b16 %v623, %v619
        %v676 = vpack.c.b16 %v624, %v620
        %v677 = vpack.c.b16 %v629, %v625
        %v678 = vpack.c.b16 %v630, %v626
        %v679 = vpack.c.b16 %v631, %v627
        %v680 = vpack.c.b16 %v632, %v628
        %v681 = vpack.c.b16 %v637, %v633
        %v682 = vpack.c.b16 %v638, %v634
        %v683 = vpack.c.b16 %v639, %v635
        %v684 = vpack.c.b16 %v640, %v636
        %v685 = vpack.c.b16 %v645, %v641
        %v686 = vpack.c.b16 %v646, %v642
        %v687 = vpack.c.b16 %v647, %v643
        %v688 = vpack.c.b16 %v648, %v644
        %v689 = vpack.c.b16 %v653, %v649
        %v690 = vpack.c.b16 %v654, %v650
        %v691 = vpack.c.b16 %v655, %v651
        %v692 = vpack.c.b16 %v656, %v652
        %v693 = vpack.c.b16 %v661, %v657
        %v694 = vpack.c.b16 %v662, %v658
        %v695 = vpack.c.b16 %v663, %v659
        %v696 = vpack.c.b16 %v664, %v660
        %v793 = vunpack.c.l.b16 %v505
        %v794 = vunpack.c.l.b16 %v506
        %v795 = vunpack.c.l.b16 %v507
        %v796 = vunpack.c.l.b16 %v508
        %v797 = vunpack.c.l.b16 %v509
        %v798 = vunpack.c.l.b16 %v510
        %v799 = vunpack.c.l.b16 %v511
        %v800 = vunpack.c.l.b16 %v512
        %v801 = vunpack.c.l.b16 %v513
        %v802 = vunpack.c.l.b16 %v514
        %v803 = vunpack.c.l.b16 %v515
        %v804 = vunpack.c.l.b16 %v516
        %v805 = vunpack.c.l.b16 %v517
        %v806 = vunpack.c.l.b16 %v518
        %v807 = vunpack.c.l.b16 %v519
        %v808 = vunpack.c.l.b16 %v520
        %v809 = vunpack.c.l.b16 %v521
        %v810 = vunpack.c.l.b16 %v522
        %v811 = vunpack.c.l.b16 %v523
        %v812 = vunpack.c.l.b16 %v524
        %v813 = vunpack.c.l.b16 %v525
        %v814 = vunpack.c.l.b16 %v526
        %v815 = vunpack.c.l.b16 %v527
        %v816 = vunpack.c.l.b16 %v528
        %v817 = vunpack.c.l.b16 %v529
        %v818 = vunpack.c.l.b16 %v530
        %v819 = vunpack.c.l.b16 %v531
        %v820 = vunpack.c.l.b16 %v532
        %v821 = vunpack.c.l.b16 %v533
        %v822 = vunpack.c.l.b16 %v534
        %v823 = vunpack.c.l.b16 %v535
        %v824 = vunpack.c.l.b16 %v536
        %v825 = vunpack.c.l.b16 %v537
        %v826 = vunpack.c.l.b16 %v538
        %v827 = vunpack.c.l.b16 %v539
        %v828 = vunpack.c.l.b16 %v540
        %v829 = vunpack.c.l.b16 %v541
        %v830 = vunpack.c.l.b16 %v542
        %v831 = vunpack.c.l.b16 %v543
        %v832 = vunpack.c.l.b16 %v544
        %v833 = vunpack.c.l.b16 %v545
        %v834 = vunpack.c.l.b16 %v546
        %v835 = vunpack.c.l.b16 %v547
        %v836 = vunpack.c.l.b16 %v548
        %v837 = vunpack.c.l.b16 %v549
        %v838 = vunpack.c.l.b16 %v550
        %v839 = vunpack.c.l.b16 %v551
        %v840 = vunpack.c.l.b16 %v552
        %v841 = vunpack.c.l.b16 %v553
        %v842 = vunpack.c.l.b16 %v554
        %v843 = vunpack.c.l.b16 %v555
        %v844 = vunpack.c.l.b16 %v556
        %v845 = vunpack.c.l.b16 %v557
        %v846 = vunpack.c.l.b16 %v558
        %v847 = vunpack.c.l.b16 %v559
        %v848 = vunpack.c.l.b16 %v560
        %v849 = vunpack.c.l.b16 %v561
        %v850 = vunpack.c.l.b16 %v562
        %v851 = vunpack.c.l.b16 %v563
        %v852 = vunpack.c.l.b16 %v564
        %v853 = vunpack.c.l.b16 %v565
        %v854 = vunpack.c.l.b16 %v566
        %v855 = vunpack.c.l.b16 %v567
        %v856 = vunpack.c.l.b16 %v568
        %v857 = vpack.c.b16 %v794, %v793
        %v858 = vpack.c.b16 %v796, %v795
        %v859 = vpack.c.b16 %v798, %v797
        %v860 = vpack.c.b16 %v800, %v799
        %v861 = vpack.c.b16 %v802, %v801
        %v862 = vpack.c.b16 %v804, %v803
        %v863 = vpack.c.b16 %v806, %v805
        %v864 = vpack.c.b16 %v808, %v807
        %v865 = vpack.c.b16 %v810, %v809
        %v866 = vpack.c.b16 %v812, %v811
        %v867 = vpack.c.b16 %v814, %v813
        %v868 = vpack.c.b16 %v816, %v815
        %v869 = vpack.c.b16 %v818, %v817
        %v870 = vpack.c.b16 %v820, %v819
        %v871 = vpack.c.b16 %v822, %v821
        %v872 = vpack.c.b16 %v824, %v823
        %v873 = vpack.c.b16 %v826, %v825
        %v874 = vpack.c.b16 %v828, %v827
        %v875 = vpack.c.b16 %v830, %v829
        %v876 = vpack.c.b16 %v832, %v831
        %v877 = vpack.c.b16 %v834, %v833
        %v878 = vpack.c.b16 %v836, %v835
        %v879 = vpack.c.b16 %v838, %v837
        %v880 = vpack.c.b16 %v840, %v839
        %v881 = vpack.c.b16 %v842, %v841
        %v882 = vpack.c.b16 %v844, %v843
        %v883 = vpack.c.b16 %v846, %v845
        %v884 = vpack.c.b16 %v848, %v847
        %v885 = vpack.c.b16 %v850, %v849
        %v886 = vpack.c.b16 %v852, %v851
        %v887 = vpack.c.b16 %v854, %v853
        %v888 = vpack.c.b16 %v856, %v855
        %921 = vmatprep.subr.bf16.mxu0 0
        %922 = vmatpush1.bf16.msra.mxu0 %v864
        %923 = vmatprep.subr.bf16.mxu0 0
        %924 = vmatpush1.bf16.msra.mxu0 %v863
        %925 = vmatprep.subr.bf16.mxu0 0
        %926 = vmatpush1.bf16.msra.mxu0 %v862
        %927 = vmatprep.subr.bf16.mxu0 0
        %928 = vmatpush1.bf16.msra.mxu0 %v861
        %929 = vmatprep.subr.bf16.mxu0 0
        %930 = vmatpush1.bf16.msra.mxu0 %v860
        %931 = vmatprep.subr.bf16.mxu0 0
        %932 = vmatpush1.bf16.msra.mxu0 %v859
        %933 = vmatprep.subr.bf16.mxu0 0
        %934 = vmatpush1.bf16.msra.mxu0 %v858
        %935 = vmatprep.subr.bf16.mxu0 0
        %936 = vmatpush1.bf16.msra.mxu0 %v857
        %937 = vmatprep.subr.bf16.mxu0 0
        %938 = vmatpush2.bf16.msra.mxu0 %v872
        %939 = vmatprep.subr.bf16.mxu0 0
        %940 = vmatpush2.bf16.msra.mxu0 %v871
        %941 = vmatprep.subr.bf16.mxu0 0
        %942 = vmatpush2.bf16.msra.mxu0 %v870
        %943 = vmatprep.subr.bf16.mxu0 0
        %944 = vmatpush2.bf16.msra.mxu0 %v869
        %945 = vmatprep.subr.bf16.mxu0 0
        %946 = vmatpush2.bf16.msra.mxu0 %v868
        %947 = vmatprep.subr.bf16.mxu0 0
        %948 = vmatpush2.bf16.msra.mxu0 %v867
        %949 = vmatprep.subr.bf16.mxu0 0
        %950 = vmatpush2.bf16.msra.mxu0 %v866
        %951 = vmatprep.subr.bf16.mxu0 0
        %952 = vmatpush2.bf16.msra.mxu0 %v865
        %953 = vmatprep.mubr.bf16.mxu0 %v666
        %954 = vmatmul.mubr.bf16.gmra.mxu0 %v665
        %v955 = vpop.f32.mrf.mxu0
        %v956 = vadd.f32 0.0, %v955
        %v957 = vpop.f32.mrf.mxu0
        %v958 = vpop.f32.mrf.mxu0
        %v959 = vadd.f32 0.0, %v958
        %v960 = vpop.f32.mrf.mxu0
        %961 = vmatprep.mubr.bf16.mxu0 %v670
        %962 = vmatmul.mubr.bf16.gmra.mxu0 %v669
        %v963 = vpop.f32.mrf.mxu0
        %v964 = vadd.f32 0.0, %v963
        %v965 = vpop.f32.mrf.mxu0
        %v966 = vpop.f32.mrf.mxu0
        %v967 = vadd.f32 0.0, %v966
        %v968 = vpop.f32.mrf.mxu0
        %969 = vmatprep.mubr.bf16.mxu0 %v674
        %970 = vmatmul.mubr.bf16.gmra.mxu0 %v673
        %v971 = vpop.f32.mrf.mxu0
        %v972 = vadd.f32 0.0, %v971
        %v973 = vpop.f32.mrf.mxu0
        %v974 = vpop.f32.mrf.mxu0
        %v975 = vadd.f32 0.0, %v974
        %v976 = vpop.f32.mrf.mxu0
        %977 = vmatprep.mubr.bf16.mxu0 %v678
        %978 = vmatmul.mubr.bf16.gmra.mxu0 %v677
        %v979 = vpop.f32.mrf.mxu0
        %v980 = vadd.f32 0.0, %v979
        %v981 = vpop.f32.mrf.mxu0
        %v982 = vpop.f32.mrf.mxu0
        %v983 = vadd.f32 0.0, %v982
        %v984 = vpop.f32.mrf.mxu0
        %985 = vmatprep.mubr.bf16.mxu0 %v682
        %986 = vmatmul.mubr.bf16.gmra.mxu0 %v681
        %v987 = vpop.f32.mrf.mxu0
        %v988 = vadd.f32 0.0, %v987
        %v989 = vpop.f32.mrf.mxu0
        %v990 = vpop.f32.mrf.mxu0
        %v991 = vadd.f32 0.0, %v990
        %v992 = vpop.f32.mrf.mxu0
        %993 = vmatprep.mubr.bf16.mxu0 %v686
        %994 = vmatmul.mubr.bf16.gmra.mxu0 %v685
        %v995 = vpop.f32.mrf.mxu0
        %v996 = vadd.f32 0.0, %v995
        %v997 = vpop.f32.mrf.mxu0
        %v998 = vpop.f32.mrf.mxu0
        %v999 = vadd.f32 0.0, %v998
        %v1000 = vpop.f32.mrf.mxu0
        %1001 = vmatprep.mubr.bf16.mxu0 %v690
        %1002 = vmatmul.mubr.bf16.gmra.mxu0 %v689
        %v1003 = vpop.f32.mrf.mxu0
        %v1004 = vadd.f32 0.0, %v1003
        %v1005 = vpop.f32.mrf.mxu0
        %v1006 = vpop.f32.mrf.mxu0
        %v1007 = vadd.f32 0.0, %v1006
        %v1008 = vpop.f32.mrf.mxu0
        %1009 = vmatprep.mubr.bf16.mxu0 %v694
        %1010 = vmatmul.mubr.bf16.gmra.mxu0 %v693
        %v1011 = vpop.f32.mrf.mxu0
        %v1012 = vadd.f32 0.0, %v1011
        %v1013 = vpop.f32.mrf.mxu0
        %v1014 = vpop.f32.mrf.mxu0
        %v1015 = vadd.f32 0.0, %v1014
        %v1016 = vpop.f32.mrf.mxu0
        %1017 = vdwg.mxu0
        %1018 = vmatprep.subr.bf16.mxu0 0
        %1019 = vmatpush1.bf16.msra.mxu0 %v880
        %1020 = vmatprep.subr.bf16.mxu0 0
        %1021 = vmatpush1.bf16.msra.mxu0 %v879
        %1022 = vmatprep.subr.bf16.mxu0 0
        %1023 = vmatpush1.bf16.msra.mxu0 %v878
        %1024 = vmatprep.subr.bf16.mxu0 0
        %1025 = vmatpush1.bf16.msra.mxu0 %v877
        %1026 = vmatprep.subr.bf16.mxu0 0
        %1027 = vmatpush1.bf16.msra.mxu0 %v876
        %1028 = vmatprep.subr.bf16.mxu0 0
        %1029 = vmatpush1.bf16.msra.mxu0 %v875
        %1030 = vmatprep.subr.bf16.mxu0 0
        %1031 = vmatpush1.bf16.msra.mxu0 %v874
        %1032 = vmatprep.subr.bf16.mxu0 0
        %1033 = vmatpush1.bf16.msra.mxu0 %v873
        %1034 = vmatprep.subr.bf16.mxu0 0
        %1035 = vmatpush2.bf16.msra.mxu0 %v888
        %1036 = vmatprep.subr.bf16.mxu0 0
        %1037 = vmatpush2.bf16.msra.mxu0 %v887
        %1038 = vmatprep.subr.bf16.mxu0 0
        %1039 = vmatpush2.bf16.msra.mxu0 %v886
        %1040 = vmatprep.subr.bf16.mxu0 0
        %1041 = vmatpush2.bf16.msra.mxu0 %v885
        %1042 = vmatprep.subr.bf16.mxu0 0
        %1043 = vmatpush2.bf16.msra.mxu0 %v884
        %1044 = vmatprep.subr.bf16.mxu0 0
        %1045 = vmatpush2.bf16.msra.mxu0 %v883
        %1046 = vmatprep.subr.bf16.mxu0 0
        %1047 = vmatpush2.bf16.msra.mxu0 %v882
        %1048 = vmatprep.subr.bf16.mxu0 0
        %1049 = vmatpush2.bf16.msra.mxu0 %v881
        %1050 = vmatprep.mubr.bf16.mxu0 %v668
        %1051 = vmatmul.mubr.bf16.gmra.mxu0 %v667
        %v1052 = vpop.f32.mrf.mxu0
        %v1053 = vadd.f32 %v956, %v1052
        %v1054 = vpop.f32.mrf.mxu0
        %v1055 = vpop.f32.mrf.mxu0
        %v1056 = vadd.f32 %v959, %v1055
        %v1057 = vpop.f32.mrf.mxu0
        %1058 = vmatprep.mubr.bf16.mxu0 %v672
        %1059 = vmatmul.mubr.bf16.gmra.mxu0 %v671
        %v1060 = vpop.f32.mrf.mxu0
        %v1061 = vadd.f32 %v964, %v1060
        %v1062 = vpop.f32.mrf.mxu0
        %v1063 = vpop.f32.mrf.mxu0
        %v1064 = vadd.f32 %v967, %v1063
        %v1065 = vpop.f32.mrf.mxu0
        %1066 = vmatprep.mubr.bf16.mxu0 %v676
        %1067 = vmatmul.mubr.bf16.gmra.mxu0 %v675
        %v1068 = vpop.f32.mrf.mxu0
        %v1069 = vadd.f32 %v972, %v1068
        %v1070 = vpop.f32.mrf.mxu0
        %v1071 = vpop.f32.mrf.mxu0
        %v1072 = vadd.f32 %v975, %v1071
        %v1073 = vpop.f32.mrf.mxu0
        %1074 = vmatprep.mubr.bf16.mxu0 %v680
        %1075 = vmatmul.mubr.bf16.gmra.mxu0 %v679
        %v1076 = vpop.f32.mrf.mxu0
        %v1077 = vadd.f32 %v980, %v1076
        %v1078 = vpop.f32.mrf.mxu0
        %v1079 = vpop.f32.mrf.mxu0
        %v1080 = vadd.f32 %v983, %v1079
        %v1081 = vpop.f32.mrf.mxu0
        %1082 = vmatprep.mubr.bf16.mxu0 %v684
        %1083 = vmatmul.mubr.bf16.gmra.mxu0 %v683
        %v1084 = vpop.f32.mrf.mxu0
        %v1085 = vadd.f32 %v988, %v1084
        %v1086 = vpop.f32.mrf.mxu0
        %v1087 = vpop.f32.mrf.mxu0
        %v1088 = vadd.f32 %v991, %v1087
        %v1089 = vpop.f32.mrf.mxu0
        %1090 = vmatprep.mubr.bf16.mxu0 %v688
        %1091 = vmatmul.mubr.bf16.gmra.mxu0 %v687
        %v1092 = vpop.f32.mrf.mxu0
        %v1093 = vadd.f32 %v996, %v1092
        %v1094 = vpop.f32.mrf.mxu0
        %v1095 = vpop.f32.mrf.mxu0
        %v1096 = vadd.f32 %v999, %v1095
        %v1097 = vpop.f32.mrf.mxu0
        %1098 = vmatprep.mubr.bf16.mxu0 %v692
        %1099 = vmatmul.mubr.bf16.gmra.mxu0 %v691
        %v1100 = vpop.f32.mrf.mxu0
        %v1101 = vadd.f32 %v1004, %v1100
        %v1102 = vpop.f32.mrf.mxu0
        %v1103 = vpop.f32.mrf.mxu0
        %v1104 = vadd.f32 %v1007, %v1103
        %v1105 = vpop.f32.mrf.mxu0
        %1106 = vmatprep.mubr.bf16.mxu0 %v696
        %1107 = vmatmul.mubr.bf16.gmra.mxu0 %v695
        %v1108 = vpop.f32.mrf.mxu0
        %v1109 = vadd.f32 %v1012, %v1108
        %v1110 = vpop.f32.mrf.mxu0
        %v1111 = vpop.f32.mrf.mxu0
        %v1112 = vadd.f32 %v1015, %v1111
        %v1113 = vpop.f32.mrf.mxu0
        %1114 = vdwg.mxu0
        %v1115 = vadd.f32 %v457, %v1053
        %v1116 = vadd.f32 %v458, %v1056
        %v1117 = vadd.f32 %v459, %v1061
        %v1118 = vadd.f32 %v460, %v1064
        %v1119 = vadd.f32 %v461, %v1069
        %v1120 = vadd.f32 %v462, %v1072
        %v1121 = vadd.f32 %v463, %v1077
        %v1122 = vadd.f32 %v464, %v1080
        %v1123 = vadd.f32 %v465, %v1085
        %v1124 = vadd.f32 %v466, %v1088
        %v1125 = vadd.f32 %v467, %v1093
        %v1126 = vadd.f32 %v468, %v1096
        %v1127 = vadd.f32 %v469, %v1101
        %v1128 = vadd.f32 %v470, %v1104
        %v1129 = vadd.f32 %v471, %v1109
        %v1130 = vadd.f32 %v472, %v1112
        %1131 = vst [vmem:[#allocation2] sm:$0xff] %v1115
        %1132 = vst [vmem:[#allocation2 + $0x8] sm:$0xff] %v1116
        %1133 = vst [vmem:[#allocation2 + $0x10] sm:$0xff] %v1117
        %1134 = vst [vmem:[#allocation2 + $0x18] sm:$0xff] %v1118
        %1135 = vst [vmem:[#allocation2 + $0x20] sm:$0xff] %v1119
        %1136 = vst [vmem:[#allocation2 + $0x28] sm:$0xff] %v1120
        %1137 = vst [vmem:[#allocation2 + $0x30] sm:$0xff] %v1121
        %1138 = vst [vmem:[#allocation2 + $0x38] sm:$0xff] %v1122
        %1139 = vst [vmem:[#allocation2 + $0x40] sm:$0xff] %v1123
        %1140 = vst [vmem:[#allocation2 + $0x48] sm:$0xff] %v1124
        %1141 = vst [vmem:[#allocation2 + $0x50] sm:$0xff] %v1125
        %1142 = vst [vmem:[#allocation2 + $0x58] sm:$0xff] %v1126
        %1143 = vst [vmem:[#allocation2 + $0x60] sm:$0xff] %v1127
        %1144 = vst [vmem:[#allocation2 + $0x68] sm:$0xff] %v1128
        %1145 = vst [vmem:[#allocation2 + $0x70] sm:$0xff] %v1129
        %1146 = vst [vmem:[#allocation2 + $0x78] sm:$0xff] %v1130
        %p1147 = scmp.eq.s32.totalorder %s23, 2
        // Predicated region
        $region68: #{resnet_forward.16} parent=58 // pred_check
          %p1148 = pneg %p1147
        $region69: #{resnet_forward.16} parent=58 // pred_check_branch
          %1150 = sbr.rel (%p1148) target = $region71
        $region70: #{resnet_forward.16} parent=58 // pred_region
          %v1151 = vld [vmem:[#allocation2] sm:$0xff]
          %v1152 = vld [vmem:[#allocation2 + $0x8] sm:$0xff]
          %v1153 = vld [vmem:[#allocation2 + $0x10] sm:$0xff]
          %v1154 = vld [vmem:[#allocation2 + $0x18] sm:$0xff]
          %v1155 = vld [vmem:[#allocation2 + $0x20] sm:$0xff]
          %v1156 = vld [vmem:[#allocation2 + $0x28] sm:$0xff]
          %v1157 = vld [vmem:[#allocation2 + $0x30] sm:$0xff]
          %v1158 = vld [vmem:[#allocation2 + $0x38] sm:$0xff]
          %v1159 = vld [vmem:[#allocation2 + $0x40] sm:$0xff]
          %v1160 = vld [vmem:[#allocation2 + $0x48] sm:$0xff]
          %v1161 = vld [vmem:[#allocation2 + $0x50] sm:$0xff]
          %v1162 = vld [vmem:[#allocation2 + $0x58] sm:$0xff]
          %v1163 = vld [vmem:[#allocation2 + $0x60] sm:$0xff]
          %v1164 = vld [vmem:[#allocation2 + $0x68] sm:$0xff]
          %v1165 = vld [vmem:[#allocation2 + $0x70] sm:$0xff]
          %v1166 = vld [vmem:[#allocation2 + $0x78] sm:$0xff]
          %v1167 = vld [vmem:[%s414] sm:$0x1]
          %v1169 = vlaneseq
          %v1170 = vshrl.u32 %v1169, 7
          %v1171 = vsub.s32 0, %v1170
          %v1172 = vrot.slane %v1167, %v1171
          %v1174 = vmul.f32 %v1151, %v1172
          %v1175 = vmul.f32 %v1152, %v1172
          %v1176 = vmul.f32 %v1153, %v1172
          %v1177 = vmul.f32 %v1154, %v1172
          %v1178 = vmul.f32 %v1155, %v1172
          %v1179 = vmul.f32 %v1156, %v1172
          %v1180 = vmul.f32 %v1157, %v1172
          %v1181 = vmul.f32 %v1158, %v1172
          %v1182 = vmul.f32 %v1159, %v1172
          %v1183 = vmul.f32 %v1160, %v1172
          %v1184 = vmul.f32 %v1161, %v1172
          %v1185 = vmul.f32 %v1162, %v1172
          %v1186 = vmul.f32 %v1163, %v1172
          %v1187 = vmul.f32 %v1164, %v1172
          %v1188 = vmul.f32 %v1165, %v1172
          %v1189 = vmul.f32 %v1166, %v1172
          %v1190 = vld [vmem:[%s417] sm:$0x1]
          %v1192 = vlaneseq
          %v1193 = vshrl.u32 %v1192, 7
          %v1194 = vsub.s32 0, %v1193
          %v1195 = vrot.slane %v1190, %v1194
          %v1197 = vadd.f32 %v1174, %v1195
          %v1198 = vadd.f32 %v1175, %v1195
          %v1199 = vadd.f32 %v1176, %v1195
          %v1200 = vadd.f32 %v1177, %v1195
          %v1201 = vadd.f32 %v1178, %v1195
          %v1202 = vadd.f32 %v1179, %v1195
          %v1203 = vadd.f32 %v1180, %v1195
          %v1204 = vadd.f32 %v1181, %v1195
          %v1205 = vadd.f32 %v1182, %v1195
          %v1206 = vadd.f32 %v1183, %v1195
          %v1207 = vadd.f32 %v1184, %v1195
          %v1208 = vadd.f32 %v1185, %v1195
          %v1209 = vadd.f32 %v1186, %v1195
          %v1210 = vadd.f32 %v1187, %v1195
          %v1211 = vadd.f32 %v1188, %v1195
          %v1212 = vadd.f32 %v1189, %v1195
          %v1213 = vld [vmem:[%s425] sm:$0xf]
          %v1214 = vld [vmem:[%s425 + $0x4] sm:$0xf]
          %v1215 = vld [vmem:[%s425 + $0x8] sm:$0xf]
          %v1216 = vld [vmem:[%s425 + $0xc] sm:$0xf]
          %v1217 = vld [vmem:[%s425 + $0x10] sm:$0xf]
          %v1218 = vld [vmem:[%s425 + $0x14] sm:$0xf]
          %v1219 = vld [vmem:[%s425 + $0x18] sm:$0xf]
          %v1220 = vld [vmem:[%s425 + $0x1c] sm:$0xf]
          %v1221 = vld [vmem:[%s425 + $0x20] sm:$0xf]
          %v1222 = vld [vmem:[%s425 + $0x24] sm:$0xf]
          %v1223 = vld [vmem:[%s425 + $0x28] sm:$0xf]
          %v1224 = vld [vmem:[%s425 + $0x2c] sm:$0xf]
          %v1225 = vld [vmem:[%s425 + $0x30] sm:$0xf]
          %v1226 = vld [vmem:[%s425 + $0x34] sm:$0xf]
          %v1227 = vld [vmem:[%s425 + $0x38] sm:$0xf]
          %v1228 = vld [vmem:[%s425 + $0x3c] sm:$0xf]
          %v1229 = vunpack.c.l.bf16 %v1213
          %v1230 = vunpack.c.l.bf16 %v1214
          %v1231 = vunpack.c.l.bf16 %v1215
          %v1232 = vunpack.c.l.bf16 %v1216
          %v1233 = vunpack.c.l.bf16 %v1217
          %v1234 = vunpack.c.l.bf16 %v1218
          %v1235 = vunpack.c.l.bf16 %v1219
          %v1236 = vunpack.c.l.bf16 %v1220
          %v1237 = vunpack.c.l.bf16 %v1221
          %v1238 = vunpack.c.l.bf16 %v1222
          %v1239 = vunpack.c.l.bf16 %v1223
          %v1240 = vunpack.c.l.bf16 %v1224
          %v1241 = vunpack.c.l.bf16 %v1225
          %v1242 = vunpack.c.l.bf16 %v1226
          %v1243 = vunpack.c.l.bf16 %v1227
          %v1244 = vunpack.c.l.bf16 %v1228
          %v1245 = vadd.f32 %v1197, %v1229
          %v1246 = vadd.f32 %v1198, %v1230
          %v1247 = vadd.f32 %v1199, %v1231
          %v1248 = vadd.f32 %v1200, %v1232
          %v1249 = vadd.f32 %v1201, %v1233
          %v1250 = vadd.f32 %v1202, %v1234
          %v1251 = vadd.f32 %v1203, %v1235
          %v1252 = vadd.f32 %v1204, %v1236
          %v1253 = vadd.f32 %v1205, %v1237
          %v1254 = vadd.f32 %v1206, %v1238
          %v1255 = vadd.f32 %v1207, %v1239
          %v1256 = vadd.f32 %v1208, %v1240
          %v1257 = vadd.f32 %v1209, %v1241
          %v1258 = vadd.f32 %v1210, %v1242
          %v1259 = vadd.f32 %v1211, %v1243
          %v1260 = vadd.f32 %v1212, %v1244
          %v1261 = vmax.f32 %v1245, 0.0
          %v1262 = vmax.f32 %v1246, 0.0
          %v1263 = vmax.f32 %v1247, 0.0
          %v1264 = vmax.f32 %v1248, 0.0
          %v1265 = vmax.f32 %v1249, 0.0
          %v1266 = vmax.f32 %v1250, 0.0
          %v1267 = vmax.f32 %v1251, 0.0
          %v1268 = vmax.f32 %v1252, 0.0
          %v1269 = vmax.f32 %v1253, 0.0
          %v1270 = vmax.f32 %v1254, 0.0
          %v1271 = vmax.f32 %v1255, 0.0
          %v1272 = vmax.f32 %v1256, 0.0
          %v1273 = vmax.f32 %v1257, 0.0
          %v1274 = vmax.f32 %v1258, 0.0
          %v1275 = vmax.f32 %v1259, 0.0
          %v1276 = vmax.f32 %v1260, 0.0
          %v1277 = vpack.c.bf16 %v1262, %v1261
          %v1278 = vpack.c.bf16 %v1264, %v1263
          %v1279 = vpack.c.bf16 %v1266, %v1265
          %v1280 = vpack.c.bf16 %v1268, %v1267
          %v1281 = vpack.c.bf16 %v1270, %v1269
          %v1282 = vpack.c.bf16 %v1272, %v1271
          %v1283 = vpack.c.bf16 %v1274, %v1273
          %v1284 = vpack.c.bf16 %v1276, %v1275
          %v1293 = vunpack.c.l.b16 %v1277
          %v1294 = vunpack.c.h.b16 %v1277
          %v1295 = vunpack.c.l.b16 %v1278
          %v1296 = vunpack.c.h.b16 %v1278
          %v1297 = vunpack.c.l.b16 %v1279
          %v1298 = vunpack.c.h.b16 %v1279
          %v1299 = vunpack.c.l.b16 %v1280
          %v1300 = vunpack.c.h.b16 %v1280
          %v1301 = vunpack.c.l.b16 %v1281
          %v1302 = vunpack.c.h.b16 %v1281
          %v1303 = vunpack.c.l.b16 %v1282
          %v1304 = vunpack.c.h.b16 %v1282
          %v1305 = vunpack.c.l.b16 %v1283
          %v1306 = vunpack.c.h.b16 %v1283
          %v1307 = vunpack.c.l.b16 %v1284
          %v1308 = vunpack.c.h.b16 %v1284
          %v1309 = vpack.c.b16 %v1293, %v1293
          %v1310 = vpack.c.b16 %v1294, %v1294
          %v1311 = vpack.c.b16 %v1295, %v1295
          %v1312 = vpack.c.b16 %v1296, %v1296
          %v1313 = vpack.c.b16 %v1297, %v1297
          %v1314 = vpack.c.b16 %v1298, %v1298
          %v1315 = vpack.c.b16 %v1299, %v1299
          %v1316 = vpack.c.b16 %v1300, %v1300
          %v1317 = vpack.c.b16 %v1301, %v1301
          %v1318 = vpack.c.b16 %v1302, %v1302
          %v1319 = vpack.c.b16 %v1303, %v1303
          %v1320 = vpack.c.b16 %v1304, %v1304
          %v1321 = vpack.c.b16 %v1305, %v1305
          %v1322 = vpack.c.b16 %v1306, %v1306
          %v1323 = vpack.c.b16 %v1307, %v1307
          %v1324 = vpack.c.b16 %v1308, %v1308
          %1341 = vst [vmem:[%s434] sm:$0xf] %v1309
          %1342 = vst [vmem:[%s434 + $0x4] sm:$0xf] %v1310
          %1343 = vst [vmem:[%s434 + $0x8] sm:$0xf] %v1311
          %1344 = vst [vmem:[%s434 + $0xc] sm:$0xf] %v1312
          %1345 = vst [vmem:[%s434 + $0x10] sm:$0xf] %v1313
          %1346 = vst [vmem:[%s434 + $0x14] sm:$0xf] %v1314
          %1347 = vst [vmem:[%s434 + $0x18] sm:$0xf] %v1315
          %1348 = vst [vmem:[%s434 + $0x1c] sm:$0xf] %v1316
          %1349 = vst [vmem:[%s434 + $0x20] sm:$0xf] %v1317
          %1350 = vst [vmem:[%s434 + $0x24] sm:$0xf] %v1318
          %1351 = vst [vmem:[%s434 + $0x28] sm:$0xf] %v1319
          %1352 = vst [vmem:[%s434 + $0x2c] sm:$0xf] %v1320
          %1353 = vst [vmem:[%s434 + $0x30] sm:$0xf] %v1321
          %1354 = vst [vmem:[%s434 + $0x34] sm:$0xf] %v1322
          %1355 = vst [vmem:[%s434 + $0x38] sm:$0xf] %v1323
          %1356 = vst [vmem:[%s434 + $0x3c] sm:$0xf] %v1324
        $region71: #{resnet_forward.16} parent=58 // pred_fallthru
          _
        %s1357 = smul.u32 16, %s21
        %p1358 = scmp.lt.s32.totalorder %s1357, 15
        %s1359 = scalar_select %p1358, %s1357, 15
        %p1360 = scmp.lt.s32.totalorder %s22, 0
        %s1361 = scalar_select %p1360, %s22, 0
        %s1362 = sadd.s32 %s1361, %s1359
        %s1363 = smul.addr %s1362, 4
        %s1364 = scalar_lea.vmem %s5, %s1363
        // Predicated region
        $region72: #{resnet_forward.16} parent=58 // pred_check
          %p1365 = pneg %p191
        $region73: #{resnet_forward.16} parent=58 // pred_check_branch
          %1367 = sbr.rel (%p1365) target = $region75
        $region74: #{resnet_forward.16} parent=58 // pred_region
          %s1368 = smul.u32 16, %s21
        $region75: #{resnet_forward.16} parent=58 // pred_fallthru
          _
        // Predicated region
        $region76: #{resnet_forward.16} parent=58 // pred_check
          %p1369 = pneg %p191
        $region77: #{resnet_forward.16} parent=58 // pred_check_branch
          %1371 = sbr.rel (%p1369) target = $region79
        $region78: #{resnet_forward.16} parent=58 // pred_region
          %s1372 = smul.u32 16, %s21
          %p1373 = scmp.lt.s32.totalorder %s1372, 15
          %s1374 = scalar_select %p1373, %s1372, 15
          %p1375 = scmp.lt.s32.totalorder %s22, 0
          %s1376 = scalar_select %p1375, %s22, 0
          %s1377 = sadd.s32 %s1376, %s1374
          %s1378 = smul.addr %s1377, 4
          %s1379 = scalar_lea.vmem %s5, %s1378
        $region79: #{resnet_forward.16} parent=58 // pred_fallthru
          _
      $region59: #{resnet_forward.16} parent=5 // pred_fallthru
        _
      %p1380 = scmp.le.s32.totalorder 2, %s11
      // Predicated region
      $region80: #{resnet_forward.16} parent=5 // pred_check
        %p1381 = pneg %p1380
      $region81: #{resnet_forward.16} parent=5 // pred_check_branch
        %1383 = sbr.rel (%p1381) target = $region83
      $region82: #{resnet_forward.16} parent=5 // pred_region
        %s1384 = ssub.s32 %s11, 2
      $region83: #{resnet_forward.16} parent=5 // pred_fallthru
        _
    $region6: #{resnet_forward.16} parent=1 // loop_footer
      %s15 = sadd.s32 1, %s11
    $region7: #{resnet_forward.16} parent=1 // loop_footer_branch
      %10 = sbr.rel target = $region3
    $region8: #{resnet_forward.16} parent=1 // loop_exit
      _

// kernel: resnet_forward.18
$region0: #{resnet_forward.18}
  #allocation0 [shape = 'u32[]', space=smem, size = 0x4, offset = 0x4, fixed_abs, tag = 'smem constant byte address 0x4 - core index']
  #allocation1 [shape = 'u32[144,128]{1,0:T(1,128)}', space=vmem, size = 0x12000, scoped, tag = 'internal scratch']
  #allocation2 [shape = 'f32[32,128]{1,0:T(8,128)}', space=vmem, size = 0x4000, scoped, tag = 'scratch operand']
  %s0 = inlined_call_operand.vmem [shape: bf16[32,1536], index: 0, kind: input, shape index: {}]
  %s1 = inlined_call_operand.vmem [shape: bf16[1536,128], index: 1, kind: input, shape index: {}]
  %s2 = inlined_call_operand.vmem [shape: f32[1,128], index: 2, kind: input, shape index: {}]
  %s3 = inlined_call_operand.vmem [shape: f32[1,128], index: 3, kind: input, shape index: {}]
  %s4 = inlined_call_operand.vmem [shape: bf16[32,128], index: 4, kind: output, shape index: {}]
  %s5 = sld [smem:[#allocation0]]
  $region80: #{resnet_forward.18} parent=0
    _
  %s7 = ssub.s32 1, %s5
  %s8 = scalar_select 0, %s7, %s5
  $region1: #{resnet_forward.18} parent=0
    #allocation3 [shape = 'u8[65536]{0}', space=vmem, size = 0x10000, scoped, tag = 'input window, operand 0']
    loop: start=0, step=1, limit=5
    $region2: #{resnet_forward.18} parent=1 // loop_pre_header
      _
    $region3: #{resnet_forward.18} parent=1 // loop_header
      %s10 = sphi 0, %s14
      %p11 = scmp.ge.s32.totalorder %s10, 5
      %s17 = sphi 0, %s36
      %s18 = sphi 0, %s32
      %s19 = sphi 0, %s28
      %s20 = sphi 0, %s17
      %s21 = sphi 0, %s18
      %s22 = sphi 0, %s19
      %s23 = sphi 0, %s20
      %s24 = sphi 0, %s21
      %s25 = sphi 0, %s22
      %s41 = sphi 0, %s43
      %s44 = sphi 0, %s41
      %s45 = sphi 0, %s44
      %s61 = sphi 0, %s45
      %s69 = sphi 0, %s71
      %s72 = sphi 0, %s69
      %s73 = sphi 0, %s72
      %s89 = sphi 0, %s73
      %s95 = sphi 0, %s97
      %s98 = sphi 0, %s95
      %s99 = sphi 0, %s98
      %s115 = sphi 0, %s99
      %s121 = sphi 0, %s123
      %s124 = sphi 0, %s121
      %s125 = sphi 0, %s124
      %s141 = sphi 0, %s125
      %s149 = sphi 0, %s151
      %s152 = sphi 0, %s149
      %s153 = sphi 0, %s152
      %s169 = sphi 0, %s153
    $region4: #{resnet_forward.18} parent=1 // loop_header_branch
      %13 = sbr.rel (%p11) target = $region8
    $region5: #{resnet_forward.18} parent=1 // loop_body
      %s15 = ssub.s32 %s10, 1
      %s16 = ssub.s32 %s10, 2
      %s26 = sadd.s32 1, %s19
      %p27 = scmp.ge.s32.totalorder %s26, 3
      %s28 = scalar_select %p27, 0, %s26
      %s29 = sadd.s32 1, %s18
      %s30 = scalar_select %p27, %s29, %s18
      %p31 = scmp.ge.s32.totalorder %s30, 1
      %s32 = scalar_select %p31, 0, %s30
      %s33 = sadd.s32 1, %s17
      %s34 = scalar_select %p31, %s33, %s17
      %p35 = scmp.ge.s32.totalorder %s34, 1
      %s36 = scalar_select %p35, 0, %s34
      %s37 = ssub.s32 %s17, %s36
      %s38 = ssub.s32 %s19, %s28
      %s39 = sor.u32 %s37, %s38
      %p40 = scmp.eq.s32.totalorder %s39, 0
      %s42 = sadd.s32 %s41, 1
      %s43 = scalar_select %p40, %s41, %s42
      %p46 = pneg %p40
      %p47 = scmp.eq.s32.totalorder %s10, 2
      %p48 = por %p46, %p47
      %p49 = scmp.ne.s32.totalorder %s41, %s44
      %p50 = scmp.eq.s32.totalorder %s10, 0
      %p51 = por %p49, %p50
      %p52 = scmp.ne.s32.totalorder %s41, %s44
      %p53 = scmp.eq.s32.totalorder %s15, 2
      %p54 = por %p52, %p53
      %p55 = scmp.ne.s32.totalorder %s44, %s45
      %p56 = scmp.eq.s32.totalorder %s15, 0
      %p57 = por %p55, %p56
      %p58 = scmp.ne.s32.totalorder %s44, %s45
      %p59 = scmp.eq.s32.totalorder %s16, 2
      %p60 = por %p58, %p59
      %p62 = scmp.ne.s32.totalorder %s45, %s61
      %p63 = scmp.eq.s32.totalorder %s16, 0
      %p64 = por %p62, %p63
      %s65 = ssub.s32 %s19, %s28
      %s66 = ssub.s32 %s18, %s32
      %s67 = sor.u32 %s65, %s66
      %p68 = scmp.eq.s32.totalorder %s67, 0
      %s70 = sadd.s32 %s69, 1
      %s71 = scalar_select %p68, %s69, %s70
      %p74 = pneg %p68
      %p75 = scmp.eq.s32.totalorder %s10, 2
      %p76 = por %p74, %p75
      %p77 = scmp.ne.s32.totalorder %s69, %s72
      %p78 = scmp.eq.s32.totalorder %s10, 0
      %p79 = por %p77, %p78
      %p80 = scmp.ne.s32.totalorder %s69, %s72
      %p81 = scmp.eq.s32.totalorder %s15, 2
      %p82 = por %p80, %p81
      %p83 = scmp.ne.s32.totalorder %s72, %s73
      %p84 = scmp.eq.s32.totalorder %s15, 0
      %p85 = por %p83, %p84
      %p86 = scmp.ne.s32.totalorder %s72, %s73
      %p87 = scmp.eq.s32.totalorder %s16, 2
      %p88 = por %p86, %p87
      %p90 = scmp.ne.s32.totalorder %s73, %s89
      %p91 = scmp.eq.s32.totalorder %s16, 0
      %p92 = por %p90, %p91
      %s93 = ssub.s32 %s18, %s32
      %p94 = scmp.eq.s32.totalorder %s93, 0
      %s96 = sadd.s32 %s95, 1
      %s97 = scalar_select %p94, %s95, %s96
      %p100 = pneg %p94
      %p101 = scmp.eq.s32.totalorder %s10, 2
      %p102 = por %p100, %p101
      %p103 = scmp.ne.s32.totalorder %s95, %s98
      %p104 = scmp.eq.s32.totalorder %s10, 0
      %p105 = por %p103, %p104
      %p106 = scmp.ne.s32.totalorder %s95, %s98
      %p107 = scmp.eq.s32.totalorder %s15, 2
      %p108 = por %p106, %p107
      %p109 = scmp.ne.s32.totalorder %s98, %s99
      %p110 = scmp.eq.s32.totalorder %s15, 0
      %p111 = por %p109, %p110
      %p112 = scmp.ne.s32.totalorder %s98, %s99
      %p113 = scmp.eq.s32.totalorder %s16, 2
      %p114 = por %p112, %p113
      %p116 = scmp.ne.s32.totalorder %s99, %s115
      %p117 = scmp.eq.s32.totalorder %s16, 0
      %p118 = por %p116, %p117
      %s119 = ssub.s32 %s18, %s32
      %p120 = scmp.eq.s32.totalorder %s119, 0
      %s122 = sadd.s32 %s121, 1
      %s123 = scalar_select %p120, %s121, %s122
      %p126 = pneg %p120
      %p127 = scmp.eq.s32.totalorder %s10, 2
      %p128 = por %p126, %p127
      %p129 = scmp.ne.s32.totalorder %s121, %s124
      %p130 = scmp.eq.s32.totalorder %s10, 0
      %p131 = por %p129, %p130
      %p132 = scmp.ne.s32.totalorder %s121, %s124
      %p133 = scmp.eq.s32.totalorder %s15, 2
      %p134 = por %p132, %p133
      %p135 = scmp.ne.s32.totalorder %s124, %s125
      %p136 = scmp.eq.s32.totalorder %s15, 0
      %p137 = por %p135, %p136
      %p138 = scmp.ne.s32.totalorder %s124, %s125
      %p139 = scmp.eq.s32.totalorder %s16, 2
      %p140 = por %p138, %p139
      %p142 = scmp.ne.s32.totalorder %s125, %s141
      %p143 = scmp.eq.s32.totalorder %s16, 0
      %p144 = por %p142, %p143
      %s145 = ssub.s32 %s17, %s36
      %s146 = ssub.s32 %s18, %s32
      %s147 = sor.u32 %s145, %s146
      %p148 = scmp.eq.s32.totalorder %s147, 0
      %s150 = sadd.s32 %s149, 1
      %s151 = scalar_select %p148, %s149, %s150
      %p154 = pneg %p148
      %p155 = scmp.eq.s32.totalorder %s10, 2
      %p156 = por %p154, %p155
      %p157 = scmp.ne.s32.totalorder %s149, %s152
      %p158 = scmp.eq.s32.totalorder %s10, 0
      %p159 = por %p157, %p158
      %p160 = scmp.ne.s32.totalorder %s149, %s152
      %p161 = scmp.eq.s32.totalorder %s15, 2
      %p162 = por %p160, %p161
      %p163 = scmp.ne.s32.totalorder %s152, %s153
      %p164 = scmp.eq.s32.totalorder %s15, 0
      %p165 = por %p163, %p164
      %p166 = scmp.ne.s32.totalorder %s152, %s153
      %p167 = scmp.eq.s32.totalorder %s16, 2
      %p168 = por %p166, %p167
      %p170 = scmp.ne.s32.totalorder %s153, %s169
      %p171 = scmp.eq.s32.totalorder %s16, 0
      %p172 = por %p170, %p171
      %p173 = scmp.le.s32.totalorder 1, %s10
      %p174 = scmp.lt.s32.totalorder %s10, 4
      %p175 = pnand %p173, %p174
      %p176 = pneg %p175
      // Predicated region
      $region9: #{resnet_forward.18} parent=5 // pred_check
        _
      $region10: #{resnet_forward.18} parent=5 // pred_check_branch
        %178 = sbr.rel (%p175) target = $region12
      $region11: #{resnet_forward.18} parent=5 // pred_region
        %s179 = ssub.s32 %s10, 1
        // Predicated region
        $region13: #{resnet_forward.18} parent=11 // pred_check
          %p180 = pneg %p111
        $region14: #{resnet_forward.18} parent=11 // pred_check_branch
          %182 = sbr.rel (%p180) target = $region16
        $region15: #{resnet_forward.18} parent=11 // pred_region
          %p183 = scmp.lt.s32.totalorder %s21, 0
          %s184 = scalar_select %p183, %s21, 0
          %s185 = scalar_lea.vmem %s2, %s184
        $region16: #{resnet_forward.18} parent=11 // pred_fallthru
          _
        // Predicated region
        $region17: #{resnet_forward.18} parent=11 // pred_check
          %p186 = pneg %p137
        $region18: #{resnet_forward.18} parent=11 // pred_check_branch
          %188 = sbr.rel (%p186) target = $region20
        $region19: #{resnet_forward.18} parent=11 // pred_region
          %p189 = scmp.lt.s32.totalorder %s21, 0
          %s190 = scalar_select %p189, %s21, 0
          %s191 = scalar_lea.vmem %s3, %s190
        $region20: #{resnet_forward.18} parent=11 // pred_fallthru
          _
      $region12: #{resnet_forward.18} parent=5 // pred_fallthru
        _
      %p192 = scmp.lt.s32.totalorder %s10, 3
      // Predicated region
      $region21: #{resnet_forward.18} parent=5 // pred_check
        %p193 = pneg %p192
      $region22: #{resnet_forward.18} parent=5 // pred_check_branch
        %195 = sbr.rel (%p193) target = $region24
      $region23: #{resnet_forward.18} parent=5 // pred_region
        // Predicated region
        $region25: #{resnet_forward.18} parent=23 // pred_check
          %p196 = pneg %p51
        $region26: #{resnet_forward.18} parent=23 // pred_check_branch
          %198 = sbr.rel (%p196) target = $region28
        $region27: #{resnet_forward.18} parent=23 // pred_region
          %s199 = sand.u32 %s41, 1
          %s200 = sand.u32 %s41, 1
          %s201 = smul.addr %s200, 64
          %s202 = scalar_lea.vmem [#allocation3], %s201
          %s203 = smul.u32 4, %s17
          %s204 = smul.u32 4, %s19
          %s205 = smul.addr %s203, 12
          %s206 = sadd.s32 %s204, %s205
          %s207 = smul.addr %s206, 4
          %s208 = scalar_lea.vmem %s0, %s207
          // Predicated region
          $region29: #{resnet_forward.18} parent=27 // pred_check
            _
          $region30: #{resnet_forward.18} parent=27 // pred_check_branch
            %210 = sbr.rel (0) target = $region32
          $region31: #{resnet_forward.18} parent=27 // pred_region
            // Predicated region
            $region33: #{resnet_forward.18} parent=31 // pred_check
              _
            $region34: #{resnet_forward.18} parent=31 // pred_check_branch
              %212 = sbr.rel (0) target = $region36
            $region35: #{resnet_forward.18} parent=31 // pred_region
              loop: start=0, step=1, limit=1
              $region37: #{resnet_forward.18} parent=35 // loop_pre_header
                _
              $region38: #{resnet_forward.18} parent=35 // loop_header
                %s214 = sphi 0, %s218
                %p215 = scmp.ge.s32.totalorder %s214, 1
                %s219 = sphi %s208, %s208
                %s220 = sphi %s202, %s202
              $region39: #{resnet_forward.18} parent=35 // loop_header_branch
                %217 = sbr.rel (%p215) target = $region43
              $region40: #{resnet_forward.18} parent=35 // loop_body
                %v221 = vld [vmem:[%s219] sm:$0xff]
                %222 = vst [vmem:[%s220] sm:$0xff] %v221
                %v223 = vld [vmem:[%s219 + $0x8] sm:$0xff]
                %224 = vst [vmem:[%s220 + $0x8] sm:$0xff] %v223
                %v225 = vld [vmem:[%s219 + $0x30] sm:$0xff]
                %226 = vst [vmem:[%s220 + $0x10] sm:$0xff] %v225
                %v227 = vld [vmem:[%s219 + $0x38] sm:$0xff]
                %228 = vst [vmem:[%s220 + $0x18] sm:$0xff] %v227
                %v229 = vld [vmem:[%s219 + $0x60] sm:$0xff]
                %230 = vst [vmem:[%s220 + $0x20] sm:$0xff] %v229
                %v231 = vld [vmem:[%s219 + $0x68] sm:$0xff]
                %232 = vst [vmem:[%s220 + $0x28] sm:$0xff] %v231
                %v233 = vld [vmem:[%s219 + $0x90] sm:$0xff]
                %234 = vst [vmem:[%s220 + $0x30] sm:$0xff] %v233
                %v235 = vld [vmem:[%s219 + $0x98] sm:$0xff]
                %236 = vst [vmem:[%s220 + $0x38] sm:$0xff] %v235
              $region41: #{resnet_forward.18} parent=35 // loop_footer
                %s218 = sadd.s32 1, %s214
              $region42: #{resnet_forward.18} parent=35 // loop_footer_branch
                %213 = sbr.rel target = $region38
              $region43: #{resnet_forward.18} parent=35 // loop_exit
                _
            $region36: #{resnet_forward.18} parent=31 // pred_fallthru
              _
            // Predicated region
            $region44: #{resnet_forward.18} parent=31 // pred_check
              _
            $region45: #{resnet_forward.18} parent=31 // pred_check_branch
              %238 = sbr.rel target = $region47
            $region46: #{resnet_forward.18} parent=31 // pred_region
              _
            $region47: #{resnet_forward.18} parent=31 // pred_fallthru
              _
          $region32: #{resnet_forward.18} parent=27 // pred_fallthru
            _
          %239 = vnop
        $region28: #{resnet_forward.18} parent=23 // pred_fallthru
          _
        // Predicated region
        $region48: #{resnet_forward.18} parent=23 // pred_check
          %p240 = pneg %p79
        $region49: #{resnet_forward.18} parent=23 // pred_check_branch
          %242 = sbr.rel (%p240) target = $region51
        $region50: #{resnet_forward.18} parent=23 // pred_region
          %s243 = smul.u32 64, %s19
          %p244 = scmp.lt.s32.totalorder %s243, 191
          %s245 = scalar_select %p244, %s243, 191
          %p246 = scmp.lt.s32.totalorder %s18, 0
          %s247 = scalar_select %p246, %s18, 0
          %s248 = sadd.s32 %s247, %s245
          %s249 = smul.addr %s248, 4
          %s250 = scalar_lea.vmem %s1, %s249
          %s251 = smul.u32 64, %s19
        $region51: #{resnet_forward.18} parent=23 // pred_fallthru
          _
      $region24: #{resnet_forward.18} parent=5 // pred_fallthru
        _
      %p252 = scmp.le.s32.totalorder 1, %s10
      %p253 = scmp.lt.s32.totalorder %s10, 4
      %p254 = pnand %p252, %p253
      %p255 = pneg %p254
      // Predicated region
      $region52: #{resnet_forward.18} parent=5 // pred_check
        _
      $region53: #{resnet_forward.18} parent=5 // pred_check_branch
        %257 = sbr.rel (%p254) target = $region55
      $region54: #{resnet_forward.18} parent=5 // pred_region
        %s258 = ssub.s32 %s10, 1
        %s259 = sand.u32 %s44, 1
        %s260 = sand.u32 %s44, 1
        %s261 = smul.addr %s260, 64
        %s262 = scalar_lea.vmem [#allocation3], %s261
        // Predicated region
        $region56: #{resnet_forward.18} parent=54 // pred_check
          %p263 = pneg %p57
        $region57: #{resnet_forward.18} parent=54 // pred_check_branch
          %265 = sbr.rel (%p263) target = $region59
        $region58: #{resnet_forward.18} parent=54 // pred_region
          _
        $region59: #{resnet_forward.18} parent=54 // pred_fallthru
          _
        %s266 = sand.u32 %s44, 1
        %s267 = sand.u32 %s44, 1
        %s268 = smul.addr %s267, 64
        %s269 = scalar_lea.vmem [#allocation3], %s268
        %p270 = pneg %p57
        %p271 = pneg %p54
        %s272 = smul.u32 64, %s22
        %p273 = scmp.lt.s32.totalorder %s272, 191
        %s274 = scalar_select %p273, %s272, 191
        %p275 = scmp.lt.s32.totalorder %s21, 0
        %s276 = scalar_select %p275, %s21, 0
        %s277 = sadd.s32 %s276, %s274
        %s278 = smul.addr %s277, 4
        %s279 = scalar_lea.vmem %s1, %s278
        %p280 = pneg %p85
        %p281 = pneg %p82
        %p282 = scmp.lt.s32.totalorder %s21, 0
        %s283 = scalar_select %p282, %s21, 0
        %s284 = scalar_lea.vmem %s2, %s283
        %p285 = pneg %p111
        %p286 = pneg %p108
        %p287 = scmp.lt.s32.totalorder %s21, 0
        %s288 = scalar_select %p287, %s21, 0
        %s289 = scalar_lea.vmem %s3, %s288
        %p290 = pneg %p137
        %p291 = pneg %p134
        %p292 = pneg %p165
        %p293 = pneg %p162
        %s294 = smul.u32 4, %s20
        %p295 = scmp.lt.s32.totalorder %s294, 3
        %s296 = scalar_select %p295, %s294, 3
        %p297 = scmp.lt.s32.totalorder %s21, 0
        %s298 = scalar_select %p297, %s21, 0
        %s299 = sadd.s32 %s298, %s296
        %s300 = smul.addr %s299, 4
        %s301 = scalar_lea.vmem %s4, %s300
        %s302 = smul.u32 4, %s20
        %s303 = smul.u32 4, %s22
        %s304 = smul.u32 64, %s22
        %p305 = scmp.lt.s32.totalorder %s304, 191
        %s306 = scalar_select %p305, %s304, 191
        %p307 = scmp.lt.s32.totalorder %s21, 0
        %s308 = scalar_select %p307, %s21, 0
        %s309 = sadd.s32 %s308, %s306
        %s310 = smul.addr %s309, 4
        %s311 = scalar_lea.vmem %s1, %s310
        %s312 = smul.u32 64, %s22
        %p313 = scmp.lt.s32.totalorder %s21, 0
        %s314 = scalar_select %p313, %s21, 0
        %s315 = scalar_lea.vmem %s2, %s314
        %p316 = scmp.lt.s32.totalorder %s21, 0
        %s317 = scalar_select %p316, %s21, 0
        %s318 = scalar_lea.vmem %s3, %s317
        %s319 = smul.u32 4, %s20
        %p320 = scmp.lt.s32.totalorder %s319, 3
        %s321 = scalar_select %p320, %s319, 3
        %p322 = scmp.lt.s32.totalorder %s21, 0
        %s323 = scalar_select %p322, %s21, 0
        %s324 = sadd.s32 %s323, %s321
        %s325 = smul.addr %s324, 4
        %s326 = scalar_lea.vmem %s4, %s325
        %s327 = smul.u32 4, %s20
        %p329 = scmp.eq.s32.totalorder %s22, 0
        // Predicated region
        $region60: #{resnet_forward.18} parent=54 // pred_check
          %p330 = pneg %p329
        $region61: #{resnet_forward.18} parent=54 // pred_check_branch
          %332 = sbr.rel (%p330) target = $region63
        $region62: #{resnet_forward.18} parent=54 // pred_region
          %333 = vst [vmem:[#allocation2] sm:$0xff] 0.0
          %334 = vst [vmem:[#allocation2 + $0x8] sm:$0xff] 0.0
          %335 = vst [vmem:[#allocation2 + $0x10] sm:$0xff] 0.0
          %336 = vst [vmem:[#allocation2 + $0x18] sm:$0xff] 0.0
        $region63: #{resnet_forward.18} parent=54 // pred_fallthru
          _
        %v337 = vld [vmem:[#allocation2] sm:$0xff]
        %v338 = vld [vmem:[#allocation2 + $0x8] sm:$0xff]
        %v339 = vld [vmem:[#allocation2 + $0x10] sm:$0xff]
        %v340 = vld [vmem:[#allocation2 + $0x18] sm:$0xff]
        %v341 = vld [vmem:[%s262] sm:$0xff]
        %v342 = vld [vmem:[%s262 + $0x8] sm:$0xff]
        %v343 = vld [vmem:[%s262 + $0x10] sm:$0xff]
        %v344 = vld [vmem:[%s262 + $0x18] sm:$0xff]
        %v345 = vld [vmem:[%s262 + $0x20] sm:$0xff]
        %v346 = vld [vmem:[%s262 + $0x28] sm:$0xff]
        %v347 = vld [vmem:[%s262 + $0x30] sm:$0xff]
        %v348 = vld [vmem:[%s262 + $0x38] sm:$0xff]
        %v349 = vld [vmem:[%s311] sm:$0xf]
        %v350 = vld [vmem:[%s311 + $0x4] sm:$0xf]
        %v351 = vld [vmem:[%s311 + $0x8] sm:$0xf]
        %v352 = vld [vmem:[%s311 + $0xc] sm:$0xf]
        %v353 = vld [vmem:[%s311 + $0x10] sm:$0xf]
        %v354 = vld [vmem:[%s311 + $0x14] sm:$0xf]
        %v355 = vld [vmem:[%s311 + $0x18] sm:$0xf]
        %v356 = vld [vmem:[%s311 + $0x1c] sm:$0xf]
        %v357 = vld [vmem:[%s311 + $0x20] sm:$0xf]
        %v358 = vld [vmem:[%s311 + $0x24] sm:$0xf]
        %v359 = vld [vmem:[%s311 + $0x28] sm:$0xf]
        %v360 = vld [vmem:[%s311 + $0x2c] sm:$0xf]
        %v361 = vld [vmem:[%s311 + $0x30] sm:$0xf]
        %v362 = vld [vmem:[%s311 + $0x34] sm:$0xf]
        %v363 = vld [vmem:[%s311 + $0x38] sm:$0xf]
        %v364 = vld [vmem:[%s311 + $0x3c] sm:$0xf]
        %v365 = vld [vmem:[%s311 + $0x40] sm:$0xf]
        %v366 = vld [vmem:[%s311 + $0x44] sm:$0xf]
        %v367 = vld [vmem:[%s311 + $0x48] sm:$0xf]
        %v368 = vld [vmem:[%s311 + $0x4c] sm:$0xf]
        %v369 = vld [vmem:[%s311 + $0x50] sm:$0xf]
        %v370 = vld [vmem:[%s311 + $0x54] sm:$0xf]
        %v371 = vld [vmem:[%s311 + $0x58] sm:$0xf]
        %v372 = vld [vmem:[%s311 + $0x5c] sm:$0xf]
        %v373 = vld [vmem:[%s311 + $0x60] sm:$0xf]
        %v374 = vld [vmem:[%s311 + $0x64] sm:$0xf]
        %v375 = vld [vmem:[%s311 + $0x68] sm:$0xf]
        %v376 = vld [vmem:[%s311 + $0x6c] sm:$0xf]
        %v377 = vld [vmem:[%s311 + $0x70] sm:$0xf]
        %v378 = vld [vmem:[%s311 + $0x74] sm:$0xf]
        %v379 = vld [vmem:[%s311 + $0x78] sm:$0xf]
        %v380 = vld [vmem:[%s311 + $0x7c] sm:$0xf]
        %v381 = vld [vmem:[%s311 + $0x80] sm:$0xf]
        %v382 = vld [vmem:[%s311 + $0x84] sm:$0xf]
        %v383 = vld [vmem:[%s311 + $0x88] sm:$0xf]
        %v384 = vld [vmem:[%s311 + $0x8c] sm:$0xf]
        %v385 = vld [vmem:[%s311 + $0x90] sm:$0xf]
        %v386 = vld [vmem:[%s311 + $0x94] sm:$0xf]
        %v387 = vld [vmem:[%s311 + $0x98] sm:$0xf]
        %v388 = vld [vmem:[%s311 + $0x9c] sm:$0xf]
        %v389 = vld [vmem:[%s311 + $0xa0] sm:$0xf]
        %v390 = vld [vmem:[%s311 + $0xa4] sm:$0xf]
        %v391 = vld [vmem:[%s311 + $0xa8] sm:$0xf]
        %v392 = vld [vmem:[%s311 + $0xac] sm:$0xf]
        %v393 = vld [vmem:[%s311 + $0xb0] sm:$0xf]
        %v394 = vld [vmem:[%s311 + $0xb4] sm:$0xf]
        %v395 = vld [vmem:[%s311 + $0xb8] sm:$0xf]
        %v396 = vld [vmem:[%s311 + $0xbc] sm:$0xf]
        %v397 = vld [vmem:[%s311 + $0xc0] sm:$0xf]
        %v398 = vld [vmem:[%s311 + $0xc4] sm:$0xf]
        %v399 = vld [vmem:[%s311 + $0xc8] sm:$0xf]
        %v400 = vld [vmem:[%s311 + $0xcc] sm:$0xf]
        %v401 = vld [vmem:[%s311 + $0xd0] sm:$0xf]
        %v402 = vld [vmem:[%s311 + $0xd4] sm:$0xf]
        %v403 = vld [vmem:[%s311 + $0xd8] sm:$0xf]
        %v404 = vld [vmem:[%s311 + $0xdc] sm:$0xf]
        %v405 = vld [vmem:[%s311 + $0xe0] sm:$0xf]
        %v406 = vld [vmem:[%s311 + $0xe4] sm:$0xf]
        %v407 = vld [vmem:[%s311 + $0xe8] sm:$0xf]
        %v408 = vld [vmem:[%s311 + $0xec] sm:$0xf]
        %v409 = vld [vmem:[%s311 + $0xf0] sm:$0xf]
        %v410 = vld [vmem:[%s311 + $0xf4] sm:$0xf]
        %v411 = vld [vmem:[%s311 + $0xf8] sm:$0xf]
        %v412 = vld [vmem:[%s311 + $0xfc] sm:$0xf]
        %v421 = vunpack.c.l.b16 %v341
        %v422 = vunpack.c.h.b16 %v341
        %v423 = vunpack.c.l.b16 %v342
        %v424 = vunpack.c.h.b16 %v342
        %v425 = vunpack.c.l.b16 %v343
        %v426 = vunpack.c.h.b16 %v343
        %v427 = vunpack.c.l.b16 %v344
        %v428 = vunpack.c.h.b16 %v344
        %v429 = vunpack.c.l.b16 %v345
        %v430 = vunpack.c.h.b16 %v345
        %v431 = vunpack.c.l.b16 %v346
        %v432 = vunpack.c.h.b16 %v346
        %v433 = vunpack.c.l.b16 %v347
        %v434 = vunpack.c.h.b16 %v347
        %v435 = vunpack.c.l.b16 %v348
        %v436 = vunpack.c.h.b16 %v348
        %v437 = vpack.c.b16 %v425, %v421
        %v438 = vpack.c.b16 %v426, %v422
        %v439 = vpack.c.b16 %v427, %v423
        %v440 = vpack.c.b16 %v428, %v424
        %v441 = vpack.c.b16 %v433, %v429
        %v442 = vpack.c.b16 %v434, %v430
        %v443 = vpack.c.b16 %v435, %v431
        %v444 = vpack.c.b16 %v436, %v432
        %v517 = vunpack.c.l.b16 %v349
        %v518 = vunpack.c.l.b16 %v350
        %v519 = vunpack.c.l.b16 %v351
        %v520 = vunpack.c.l.b16 %v352
        %v521 = vunpack.c.l.b16 %v353
        %v522 = vunpack.c.l.b16 %v354
        %v523 = vunpack.c.l.b16 %v355
        %v524 = vunpack.c.l.b16 %v356
        %v525 = vunpack.c.l.b16 %v357
        %v526 = vunpack.c.l.b16 %v358
        %v527 = vunpack.c.l.b16 %v359
        %v528 = vunpack.c.l.b16 %v360
        %v529 = vunpack.c.l.b16 %v361
        %v530 = vunpack.c.l.b16 %v362
        %v531 = vunpack.c.l.b16 %v363
        %v532 = vunpack.c.l.b16 %v364
        %v533 = vunpack.c.l.b16 %v365
        %v534 = vunpack.c.l.b16 %v366
        %v535 = vunpack.c.l.b16 %v367
        %v536 = vunpack.c.l.b16 %v368
        %v537 = vunpack.c.l.b16 %v369
        %v538 = vunpack.c.l.b16 %v370
        %v539 = vunpack.c.l.b16 %v371
        %v540 = vunpack.c.l.b16 %v372
        %v541 = vunpack.c.l.b16 %v373
        %v542 = vunpack.c.l.b16 %v374
        %v543 = vunpack.c.l.b16 %v375
        %v544 = vunpack.c.l.b16 %v376
        %v545 = vunpack.c.l.b16 %v377
        %v546 = vunpack.c.l.b16 %v378
        %v547 = vunpack.c.l.b16 %v379
        %v548 = vunpack.c.l.b16 %v380
        %v549 = vunpack.c.l.b16 %v381
        %v550 = vunpack.c.l.b16 %v382
        %v551 = vunpack.c.l.b16 %v383
        %v552 = vunpack.c.l.b16 %v384
        %v553 = vunpack.c.l.b16 %v385
        %v554 = vunpack.c.l.b16 %v386
        %v555 = vunpack.c.l.b16 %v387
        %v556 = vunpack.c.l.b16 %v388
        %v557 = vunpack.c.l.b16 %v389
        %v558 = vunpack.c.l.b16 %v390
        %v559 = vunpack.c.l.b16 %v391
        %v560 = vunpack.c.l.b16 %v392
        %v561 = vunpack.c.l.b16 %v393
        %v562 = vunpack.c.l.b16 %v394
        %v563 = vunpack.c.l.b16 %v395
        %v564 = vunpack.c.l.b16 %v396
        %v565 = vunpack.c.l.b16 %v397
        %v566 = vunpack.c.l.b16 %v398
        %v567 = vunpack.c.l.b16 %v399
        %v568 = vunpack.c.l.b16 %v400
        %v569 = vunpack.c.l.b16 %v401
        %v570 = vunpack.c.l.b16 %v402
        %v571 = vunpack.c.l.b16 %v403
        %v572 = vunpack.c.l.b16 %v404
        %v573 = vunpack.c.l.b16 %v405
        %v574 = vunpack.c.l.b16 %v406
        %v575 = vunpack.c.l.b16 %v407
        %v576 = vunpack.c.l.b16 %v408
        %v577 = vunpack.c.l.b16 %v409
        %v578 = vunpack.c.l.b16 %v410
        %v579 = vunpack.c.l.b16 %v411
        %v580 = vunpack.c.l.b16 %v412
        %v581 = vpack.c.b16 %v518, %v517
        %v582 = vpack.c.b16 %v520, %v519
        %v583 = vpack.c.b16 %v522, %v521
        %v584 = vpack.c.b16 %v524, %v523
        %v585 = vpack.c.b16 %v526, %v525
        %v586 = vpack.c.b16 %v528, %v527
        %v587 = vpack.c.b16 %v530, %v529
        %v588 = vpack.c.b16 %v532, %v531
        %v589 = vpack.c.b16 %v534, %v533
        %v590 = vpack.c.b16 %v536, %v535
        %v591 = vpack.c.b16 %v538, %v537
        %v592 = vpack.c.b16 %v540, %v539
        %v593 = vpack.c.b16 %v542, %v541
        %v594 = vpack.c.b16 %v544, %v543
        %v595 = vpack.c.b16 %v546, %v545
        %v596 = vpack.c.b16 %v548, %v547
        %v597 = vpack.c.b16 %v550, %v549
        %v598 = vpack.c.b16 %v552, %v551
        %v599 = vpack.c.b16 %v554, %v553
        %v600 = vpack.c.b16 %v556, %v555
        %v601 = vpack.c.b16 %v558, %v557
        %v602 = vpack.c.b16 %v560, %v559
        %v603 = vpack.c.b16 %v562, %v561
        %v604 = vpack.c.b16 %v564, %v563
        %v605 = vpack.c.b16 %v566, %v565
        %v606 = vpack.c.b16 %v568, %v567
        %v607 = vpack.c.b16 %v570, %v569
        %v608 = vpack.c.b16 %v572, %v571
        %v609 = vpack.c.b16 %v574, %v573
        %v610 = vpack.c.b16 %v576, %v575
        %v611 = vpack.c.b16 %v578, %v577
        %v612 = vpack.c.b16 %v580, %v579
        %645 = vmatprep.subr.bf16.mxu0 0
        %646 = vmatpush1.bf16.msra.mxu0 %v588
        %647 = vmatprep.subr.bf16.mxu0 0
        %648 = vmatpush1.bf16.msra.mxu0 %v587
        %649 = vmatprep.subr.bf16.mxu0 0
        %650 = vmatpush1.bf16.msra.mxu0 %v586
        %651 = vmatprep.subr.bf16.mxu0 0
        %652 = vmatpush1.bf16.msra.mxu0 %v585
        %653 = vmatprep.subr.bf16.mxu0 0
        %654 = vmatpush1.bf16.msra.mxu0 %v584
        %655 = vmatprep.subr.bf16.mxu0 0
        %656 = vmatpush1.bf16.msra.mxu0 %v583
        %657 = vmatprep.subr.bf16.mxu0 0
        %658 = vmatpush1.bf16.msra.mxu0 %v582
        %659 = vmatprep.subr.bf16.mxu0 0
        %660 = vmatpush1.bf16.msra.mxu0 %v581
        %661 = vmatprep.subr.bf16.mxu0 0
        %662 = vmatpush2.bf16.msra.mxu0 %v596
        %663 = vmatprep.subr.bf16.mxu0 0
        %664 = vmatpush2.bf16.msra.mxu0 %v595
        %665 = vmatprep.subr.bf16.mxu0 0
        %666 = vmatpush2.bf16.msra.mxu0 %v594
        %667 = vmatprep.subr.bf16.mxu0 0
        %668 = vmatpush2.bf16.msra.mxu0 %v593
        %669 = vmatprep.subr.bf16.mxu0 0
        %670 = vmatpush2.bf16.msra.mxu0 %v592
        %671 = vmatprep.subr.bf16.mxu0 0
        %672 = vmatpush2.bf16.msra.mxu0 %v591
        %673 = vmatprep.subr.bf16.mxu0 0
        %674 = vmatpush2.bf16.msra.mxu0 %v590
        %675 = vmatprep.subr.bf16.mxu0 0
        %676 = vmatpush2.bf16.msra.mxu0 %v589
        %677 = vmatprep.mubr.bf16.mxu0 %v438
        %678 = vmatmul.mubr.bf16.gmra.mxu0 %v437
        %v679 = vpop.f32.mrf.mxu0
        %v680 = vadd.f32 0.0, %v679
        %v681 = vpop.f32.mrf.mxu0
        %v682 = vpop.f32.mrf.mxu0
        %v683 = vadd.f32 0.0, %v682
        %v684 = vpop.f32.mrf.mxu0
        %685 = vmatprep.mubr.bf16.mxu0 %v442
        %686 = vmatmul.mubr.bf16.gmra.mxu0 %v441
        %v687 = vpop.f32.mrf.mxu0
        %v688 = vadd.f32 0.0, %v687
        %v689 = vpop.f32.mrf.mxu0
        %v690 = vpop.f32.mrf.mxu0
        %v691 = vadd.f32 0.0, %v690
        %v692 = vpop.f32.mrf.mxu0
        %693 = vdwg.mxu0
        %694 = vmatprep.subr.bf16.mxu0 0
        %695 = vmatpush1.bf16.msra.mxu0 %v604
        %696 = vmatprep.subr.bf16.mxu0 0
        %697 = vmatpush1.bf16.msra.mxu0 %v603
        %698 = vmatprep.subr.bf16.mxu0 0
        %699 = vmatpush1.bf16.msra.mxu0 %v602
        %700 = vmatprep.subr.bf16.mxu0 0
        %701 = vmatpush1.bf16.msra.mxu0 %v601
        %702 = vmatprep.subr.bf16.mxu0 0
        %703 = vmatpush1.bf16.msra.mxu0 %v600
        %704 = vmatprep.subr.bf16.mxu0 0
        %705 = vmatpush1.bf16.msra.mxu0 %v599
        %706 = vmatprep.subr.bf16.mxu0 0
        %707 = vmatpush1.bf16.msra.mxu0 %v598
        %708 = vmatprep.subr.bf16.mxu0 0
        %709 = vmatpush1.bf16.msra.mxu0 %v597
        %710 = vmatprep.subr.bf16.mxu0 0
        %711 = vmatpush2.bf16.msra.mxu0 %v612
        %712 = vmatprep.subr.bf16.mxu0 0
        %713 = vmatpush2.bf16.msra.mxu0 %v611
        %714 = vmatprep.subr.bf16.mxu0 0
        %715 = vmatpush2.bf16.msra.mxu0 %v610
        %716 = vmatprep.subr.bf16.mxu0 0
        %717 = vmatpush2.bf16.msra.mxu0 %v609
        %718 = vmatprep.subr.bf16.mxu0 0
        %719 = vmatpush2.bf16.msra.mxu0 %v608
        %720 = vmatprep.subr.bf16.mxu0 0
        %721 = vmatpush2.bf16.msra.mxu0 %v607
        %722 = vmatprep.subr.bf16.mxu0 0
        %723 = vmatpush2.bf16.msra.mxu0 %v606
        %724 = vmatprep.subr.bf16.mxu0 0
        %725 = vmatpush2.bf16.msra.mxu0 %v605
        %726 = vmatprep.mubr.bf16.mxu0 %v440
        %727 = vmatmul.mubr.bf16.gmra.mxu0 %v439
        %v728 = vpop.f32.mrf.mxu0
        %v729 = vadd.f32 %v680, %v728
        %v730 = vpop.f32.mrf.mxu0
        %v731 = vpop.f32.mrf.mxu0
        %v732 = vadd.f32 %v683, %v731
        %v733 = vpop.f32.mrf.mxu0
        %734 = vmatprep.mubr.bf16.mxu0 %v444
        %735 = vmatmul.mubr.bf16.gmra.mxu0 %v443
        %v736 = vpop.f32.mrf.mxu0
        %v737 = vadd.f32 %v688, %v736
        %v738 = vpop.f32.mrf.mxu0
        %v739 = vpop.f32.mrf.mxu0
        %v740 = vadd.f32 %v691, %v739
        %v741 = vpop.f32.mrf.mxu0
        %742 = vdwg.mxu0
        %v743 = vadd.f32 %v337, %v729
        %v744 = vadd.f32 %v338, %v732
        %v745 = vadd.f32 %v339, %v737
        %v746 = vadd.f32 %v340, %v740
        %747 = vst [vmem:[#allocation2] sm:$0xff] %v743
        %748 = vst [vmem:[#allocation2 + $0x8] sm:$0xff] %v744
        %749 = vst [vmem:[#allocation2 + $0x10] sm:$0xff] %v745
        %750 = vst [vmem:[#allocation2 + $0x18] sm:$0xff] %v746
        %p751 = scmp.eq.s32.totalorder %s22, 2
        // Predicated region
        $region64: #{resnet_forward.18} parent=54 // pred_check
          %p752 = pneg %p751
        $region65: #{resnet_forward.18} parent=54 // pred_check_branch
          %754 = sbr.rel (%p752) target = $region67
        $region66: #{resnet_forward.18} parent=54 // pred_region
          %v755 = vld [vmem:[#allocation2] sm:$0xff]
          %v756 = vld [vmem:[#allocation2 + $0x8] sm:$0xff]
          %v757 = vld [vmem:[#allocation2 + $0x10] sm:$0xff]
          %v758 = vld [vmem:[#allocation2 + $0x18] sm:$0xff]
          %v759 = vld [vmem:[%s315] sm:$0x1]
          %v761 = vlaneseq
          %v762 = vshrl.u32 %v761, 7
          %v763 = vsub.s32 0, %v762
          %v764 = vrot.slane %v759, %v763
          %v766 = vmul.f32 %v755, %v764
          %v767 = vmul.f32 %v756, %v764
          %v768 = vmul.f32 %v757, %v764
          %v769 = vmul.f32 %v758, %v764
          %v770 = vld [vmem:[%s318] sm:$0x1]
          %v772 = vlaneseq
          %v773 = vshrl.u32 %v772, 7
          %v774 = vsub.s32 0, %v773
          %v775 = vrot.slane %v770, %v774
          %v777 = vadd.f32 %v766, %v775
          %v778 = vadd.f32 %v767, %v775
          %v779 = vadd.f32 %v768, %v775
          %v780 = vadd.f32 %v769, %v775
          %v781 = vmax.f32 %v777, 0.0
          %v782 = vmax.f32 %v778, 0.0
          %v783 = vmax.f32 %v779, 0.0
          %v784 = vmax.f32 %v780, 0.0
          %v785 = vpack.c.bf16 %v782, %v781
          %v786 = vpack.c.bf16 %v784, %v783
          %v789 = vunpack.c.l.b16 %v785
          %v790 = vunpack.c.h.b16 %v785
          %v791 = vunpack.c.l.b16 %v786
          %v792 = vunpack.c.h.b16 %v786
          %v793 = vpack.c.b16 %v789, %v789
          %v794 = vpack.c.b16 %v790, %v790
          %v795 = vpack.c.b16 %v791, %v791
          %v796 = vpack.c.b16 %v792, %v792
          %801 = vst [vmem:[%s326] sm:$0xf] %v793
          %802 = vst [vmem:[%s326 + $0x4] sm:$0xf] %v794
          %803 = vst [vmem:[%s326 + $0x8] sm:$0xf] %v795
          %804 = vst [vmem:[%s326 + $0xc] sm:$0xf] %v796
        $region67: #{resnet_forward.18} parent=54 // pred_fallthru
          _
        %s805 = smul.u32 4, %s20
        %p806 = scmp.lt.s32.totalorder %s805, 3
        %s807 = scalar_select %p806, %s805, 3
        %p808 = scmp.lt.s32.totalorder %s21, 0
        %s809 = scalar_select %p808, %s21, 0
        %s810 = sadd.s32 %s809, %s807
        %s811 = smul.addr %s810, 4
        %s812 = scalar_lea.vmem %s4, %s811
        // Predicated region
        $region68: #{resnet_forward.18} parent=54 // pred_check
          %p813 = pneg %p162
        $region69: #{resnet_forward.18} parent=54 // pred_check_branch
          %815 = sbr.rel (%p813) target = $region71
        $region70: #{resnet_forward.18} parent=54 // pred_region
          %s816 = smul.u32 4, %s20
        $region71: #{resnet_forward.18} parent=54 // pred_fallthru
          _
        // Predicated region
        $region72: #{resnet_forward.18} parent=54 // pred_check
          %p817 = pneg %p162
        $region73: #{resnet_forward.18} parent=54 // pred_check_branch
          %819 = sbr.rel (%p817) target = $region75
        $region74: #{resnet_forward.18} parent=54 // pred_region
          %s820 = smul.u32 4, %s20
          %p821 = scmp.lt.s32.totalorder %s820, 3
          %s822 = scalar_select %p821, %s820, 3
          %p823 = scmp.lt.s32.totalorder %s21, 0
          %s824 = scalar_select %p823, %s21, 0
          %s825 = sadd.s32 %s824, %s822
          %s826 = smul.addr %s825, 4
          %s827 = scalar_lea.vmem %s4, %s826
        $region75: #{resnet_forward.18} parent=54 // pred_fallthru
          _
      $region55: #{resnet_forward.18} parent=5 // pred_fallthru
        _
      %p828 = scmp.le.s32.totalorder 2, %s10
      // Predicated region
      $region76: #{resnet_forward.18} parent=5 // pred_check
        %p829 = pneg %p828
      $region77: #{resnet_forward.18} parent=5 // pred_check_branch
        %831 = sbr.rel (%p829) target = $region79
      $region78: #{resnet_forward.18} parent=5 // pred_region
        %s832 = ssub.s32 %s10, 2
      $region79: #{resnet_forward.18} parent=5 // pred_fallthru
        _
    $region6: #{resnet_forward.18} parent=1 // loop_footer
      %s14 = sadd.s32 1, %s10
    $region7: #{resnet_forward.18} parent=1 // loop_footer_branch
      %9 = sbr.rel target = $region3
    $region8: #{resnet_forward.18} parent=1 // loop_exit
      _

// kernel: resnet_forward.17
$region0: #{resnet_forward.17}
  #allocation0 [shape = 'u32[]', space=smem, size = 0x4, offset = 0x4, fixed_abs, tag = 'smem constant byte address 0x4 - core index']
  #allocation1 [shape = 'u32[144,128]{1,0:T(1,128)}', space=vmem, size = 0x12000, scoped, tag = 'internal scratch']
  #allocation2 [shape = 'f32[32,128]{1,0:T(8,128)}', space=vmem, size = 0x4000, scoped, tag = 'scratch operand']
  %s0 = inlined_call_operand.vmem [shape: bf16[32,128], index: 0, kind: input, shape index: {}]
  %s1 = inlined_call_operand.vmem [shape: bf16[128,128], index: 1, kind: input, shape index: {}]
  %s2 = inlined_call_operand.vmem [shape: f32[1,128], index: 2, kind: input, shape index: {}]
  %s3 = inlined_call_operand.vmem [shape: f32[1,128], index: 3, kind: input, shape index: {}]
  %s4 = inlined_call_operand.vmem [shape: bf16[32,128], index: 4, kind: output, shape index: {}]
  %s5 = sld [smem:[#allocation0]]
  $region34: #{resnet_forward.17} parent=0
    _
  %s7 = ssub.s32 1, %s5
  %s8 = scalar_select 0, %s7, %s5
  // Predicated region
  $region2: #{resnet_forward.17} parent=0 // pred_check
    _
  $region3: #{resnet_forward.17} parent=0 // pred_check_branch
    %10 = sbr.rel (0) target = $region5
  $region4: #{resnet_forward.17} parent=0 // pred_region
    _
  $region5: #{resnet_forward.17} parent=0 // pred_fallthru
    _
  // Predicated region
  $region6: #{resnet_forward.17} parent=0 // pred_check
    _
  $region7: #{resnet_forward.17} parent=0 // pred_check_branch
    %12 = sbr.rel (0) target = $region9
  $region8: #{resnet_forward.17} parent=0 // pred_region
    _
  $region9: #{resnet_forward.17} parent=0 // pred_fallthru
    _
  // Predicated region
  $region10: #{resnet_forward.17} parent=0 // pred_check
    _
  $region11: #{resnet_forward.17} parent=0 // pred_check_branch
    %14 = sbr.rel (0) target = $region13
  $region12: #{resnet_forward.17} parent=0 // pred_region
    _
  $region13: #{resnet_forward.17} parent=0 // pred_fallthru
    _
  // Predicated region
  $region14: #{resnet_forward.17} parent=0 // pred_check
    _
  $region15: #{resnet_forward.17} parent=0 // pred_check_branch
    %16 = sbr.rel (0) target = $region17
  $region16: #{resnet_forward.17} parent=0 // pred_region
    _
  $region17: #{resnet_forward.17} parent=0 // pred_fallthru
    _
  %p18 = scmp.eq.s32.totalorder 0, 0
  // Predicated region
  $region18: #{resnet_forward.17} parent=0 // pred_check
    %p19 = pneg %p18
  $region19: #{resnet_forward.17} parent=0 // pred_check_branch
    %21 = sbr.rel (%p19) target = $region21
  $region20: #{resnet_forward.17} parent=0 // pred_region
    %22 = vst [vmem:[#allocation2] sm:$0xff] 0.0
    %23 = vst [vmem:[#allocation2 + $0x8] sm:$0xff] 0.0
    %24 = vst [vmem:[#allocation2 + $0x10] sm:$0xff] 0.0
    %25 = vst [vmem:[#allocation2 + $0x18] sm:$0xff] 0.0
  $region21: #{resnet_forward.17} parent=0 // pred_fallthru
    _
  %v26 = vld [vmem:[#allocation2] sm:$0xff]
  %v27 = vld [vmem:[#allocation2 + $0x8] sm:$0xff]
  %v28 = vld [vmem:[#allocation2 + $0x10] sm:$0xff]
  %v29 = vld [vmem:[#allocation2 + $0x18] sm:$0xff]
  %v30 = vld [vmem:[%s0] sm:$0xf]
  %v31 = vld [vmem:[%s0 + $0x4] sm:$0xf]
  %v32 = vld [vmem:[%s0 + $0x8] sm:$0xf]
  %v33 = vld [vmem:[%s0 + $0xc] sm:$0xf]
  %v34 = vld [vmem:[%s1] sm:$0xf]
  %v35 = vld [vmem:[%s1 + $0x4] sm:$0xf]
  %v36 = vld [vmem:[%s1 + $0x8] sm:$0xf]
  %v37 = vld [vmem:[%s1 + $0xc] sm:$0xf]
  %v38 = vld [vmem:[%s1 + $0x10] sm:$0xf]
  %v39 = vld [vmem:[%s1 + $0x14] sm:$0xf]
  %v40 = vld [vmem:[%s1 + $0x18] sm:$0xf]
  %v41 = vld [vmem:[%s1 + $0x1c] sm:$0xf]
  %v42 = vld [vmem:[%s1 + $0x20] sm:$0xf]
  %v43 = vld [vmem:[%s1 + $0x24] sm:$0xf]
  %v44 = vld [vmem:[%s1 + $0x28] sm:$0xf]
  %v45 = vld [vmem:[%s1 + $0x2c] sm:$0xf]
  %v46 = vld [vmem:[%s1 + $0x30] sm:$0xf]
  %v47 = vld [vmem:[%s1 + $0x34] sm:$0xf]
  %v48 = vld [vmem:[%s1 + $0x38] sm:$0xf]
  %v49 = vld [vmem:[%s1 + $0x3c] sm:$0xf]
  %v54 = vunpack.c.l.b16 %v30
  %v55 = vunpack.c.l.b16 %v31
  %v56 = vunpack.c.l.b16 %v32
  %v57 = vunpack.c.l.b16 %v33
  %v58 = vpack.c.b16 %v55, %v54
  %v59 = vpack.c.b16 %v57, %v56
  %v78 = vunpack.c.l.b16 %v34
  %v79 = vunpack.c.l.b16 %v35
  %v80 = vunpack.c.l.b16 %v36
  %v81 = vunpack.c.l.b16 %v37
  %v82 = vunpack.c.l.b16 %v38
  %v83 = vunpack.c.l.b16 %v39
  %v84 = vunpack.c.l.b16 %v40
  %v85 = vunpack.c.l.b16 %v41
  %v86 = vunpack.c.l.b16 %v42
  %v87 = vunpack.c.l.b16 %v43
  %v88 = vunpack.c.l.b16 %v44
  %v89 = vunpack.c.l.b16 %v45
  %v90 = vunpack.c.l.b16 %v46
  %v91 = vunpack.c.l.b16 %v47
  %v92 = vunpack.c.l.b16 %v48
  %v93 = vunpack.c.l.b16 %v49
  %v94 = vpack.c.b16 %v79, %v78
  %v95 = vpack.c.b16 %v81, %v80
  %v96 = vpack.c.b16 %v83, %v82
  %v97 = vpack.c.b16 %v85, %v84
  %v98 = vpack.c.b16 %v87, %v86
  %v99 = vpack.c.b16 %v89, %v88
  %v100 = vpack.c.b16 %v91, %v90
  %v101 = vpack.c.b16 %v93, %v92
  %110 = vmatprep.subr.bf16.mxu0 0
  %111 = vmatpush1.bf16.msra.mxu0 %v101
  %112 = vmatprep.subr.bf16.mxu0 0
  %113 = vmatpush1.bf16.msra.mxu0 %v100
  %114 = vmatprep.subr.bf16.mxu0 0
  %115 = vmatpush1.bf16.msra.mxu0 %v99
  %116 = vmatprep.subr.bf16.mxu0 0
  %117 = vmatpush1.bf16.msra.mxu0 %v98
  %118 = vmatprep.subr.bf16.mxu0 0
  %119 = vmatpush1.bf16.msra.mxu0 %v97
  %120 = vmatprep.subr.bf16.mxu0 0
  %121 = vmatpush1.bf16.msra.mxu0 %v96
  %122 = vmatprep.subr.bf16.mxu0 0
  %123 = vmatpush1.bf16.msra.mxu0 %v95
  %124 = vmatprep.subr.bf16.mxu0 0
  %125 = vmatpush1.bf16.msra.mxu0 %v94
  %126 = vmatprep.subr.bf16.mxu0 0
  %127 = vmatpush2.bf16.msra.mxu0 0
  %128 = vmatprep.subr.bf16.mxu0 0
  %129 = vmatpush2.bf16.msra.mxu0 0
  %130 = vmatprep.subr.bf16.mxu0 0
  %131 = vmatpush2.bf16.msra.mxu0 0
  %132 = vmatprep.subr.bf16.mxu0 0
  %133 = vmatpush2.bf16.msra.mxu0 0
  %134 = vmatprep.subr.bf16.mxu0 0
  %135 = vmatpush2.bf16.msra.mxu0 0
  %136 = vmatprep.subr.bf16.mxu0 0
  %137 = vmatpush2.bf16.msra.mxu0 0
  %138 = vmatprep.subr.bf16.mxu0 0
  %139 = vmatpush2.bf16.msra.mxu0 0
  %140 = vmatprep.subr.bf16.mxu0 0
  %141 = vmatpush2.bf16.msra.mxu0 0
  %142 = vmatprep.mubr.bf16.mxu0 0
  %143 = vmatmul.mubr.bf16.gmra.mxu0 %v58
  %v144 = vpop.f32.mrf.mxu0
  %v145 = vadd.f32 0.0, %v144
  %v146 = vpop.f32.mrf.mxu0
  %v147 = vpop.f32.mrf.mxu0
  %v148 = vadd.f32 0.0, %v147
  %v149 = vpop.f32.mrf.mxu0
  %150 = vmatprep.mubr.bf16.mxu0 0
  %151 = vmatmul.mubr.bf16.gmra.mxu0 %v59
  %v152 = vpop.f32.mrf.mxu0
  %v153 = vadd.f32 0.0, %v152
  %v154 = vpop.f32.mrf.mxu0
  %v155 = vpop.f32.mrf.mxu0
  %v156 = vadd.f32 0.0, %v155
  %v157 = vpop.f32.mrf.mxu0
  %158 = vdwg.mxu0
  %v159 = vadd.f32 %v26, %v145
  %v160 = vadd.f32 %v27, %v148
  %v161 = vadd.f32 %v28, %v153
  %v162 = vadd.f32 %v29, %v156
  %163 = vst [vmem:[#allocation2] sm:$0xff] %v159
  %164 = vst [vmem:[#allocation2 + $0x8] sm:$0xff] %v160
  %165 = vst [vmem:[#allocation2 + $0x10] sm:$0xff] %v161
  %166 = vst [vmem:[#allocation2 + $0x18] sm:$0xff] %v162
  // Predicated region
  $region22: #{resnet_forward.17} parent=0 // pred_check
    %p167 = pneg %p18
  $region23: #{resnet_forward.17} parent=0 // pred_check_branch
    %169 = sbr.rel (%p167) target = $region25
  $region24: #{resnet_forward.17} parent=0 // pred_region
    %v170 = vld [vmem:[#allocation2] sm:$0xff]
    %v171 = vld [vmem:[#allocation2 + $0x8] sm:$0xff]
    %v172 = vld [vmem:[#allocation2 + $0x10] sm:$0xff]
    %v173 = vld [vmem:[#allocation2 + $0x18] sm:$0xff]
    %v174 = vld [vmem:[%s2] sm:$0x1]
    %v176 = vlaneseq
    %v177 = vshrl.u32 %v176, 7
    %v178 = vsub.s32 0, %v177
    %v179 = vrot.slane %v174, %v178
    %v181 = vmul.f32 %v170, %v179
    %v182 = vmul.f32 %v171, %v179
    %v183 = vmul.f32 %v172, %v179
    %v184 = vmul.f32 %v173, %v179
    %v185 = vld [vmem:[%s3] sm:$0x1]
    %v187 = vlaneseq
    %v188 = vshrl.u32 %v187, 7
    %v189 = vsub.s32 0, %v188
    %v190 = vrot.slane %v185, %v189
    %v192 = vadd.f32 %v181, %v190
    %v193 = vadd.f32 %v182, %v190
    %v194 = vadd.f32 %v183, %v190
    %v195 = vadd.f32 %v184, %v190
    %v196 = vpack.c.bf16 %v193, %v192
    %v197 = vpack.c.bf16 %v195, %v194
    %v200 = vunpack.c.l.b16 %v196
    %v201 = vunpack.c.h.b16 %v196
    %v202 = vunpack.c.l.b16 %v197
    %v203 = vunpack.c.h.b16 %v197
    %v204 = vpack.c.b16 %v200, %v200
    %v205 = vpack.c.b16 %v201, %v201
    %v206 = vpack.c.b16 %v202, %v202
    %v207 = vpack.c.b16 %v203, %v203
    %212 = vst [vmem:[%s4] sm:$0xf] %v204
    %213 = vst [vmem:[%s4 + $0x4] sm:$0xf] %v205
    %214 = vst [vmem:[%s4 + $0x8] sm:$0xf] %v206
    %215 = vst [vmem:[%s4 + $0xc] sm:$0xf] %v207
  $region25: #{resnet_forward.17} parent=0 // pred_fallthru
    _
  // Predicated region
  $region26: #{resnet_forward.17} parent=0 // pred_check
    _
  $region27: #{resnet_forward.17} parent=0 // pred_check_branch
    %217 = sbr.rel (0) target = $region29
  $region28: #{resnet_forward.17} parent=0 // pred_region
    _
  $region29: #{resnet_forward.17} parent=0 // pred_fallthru
    _
  // Predicated region
  $region30: #{resnet_forward.17} parent=0 // pred_check
    _
  $region31: #{resnet_forward.17} parent=0 // pred_check_branch
    %219 = sbr.rel (0) target = $region33
  $region32: #{resnet_forward.17} parent=0 // pred_region
    _
  $region33: #{resnet_forward.17} parent=0 // pred_fallthru
    _

// kernel: resnet_forward.19
$region0: #{resnet_forward.19}
  #allocation0 [shape = 'u32[]', space=smem, size = 0x4, offset = 0x4, fixed_abs, tag = 'smem constant byte address 0x4 - core index']
  #allocation1 [shape = 'u32[144,128]{1,0:T(1,128)}', space=vmem, size = 0x12000, scoped, tag = 'internal scratch']
  #allocation2 [shape = 'f32[32,128]{1,0:T(8,128)}', space=vmem, size = 0x4000, scoped, tag = 'scratch operand']
  %s0 = inlined_call_operand.vmem [shape: bf16[32,1536], index: 0, kind: input, shape index: {}]
  %s1 = inlined_call_operand.vmem [shape: bf16[1536,128], index: 1, kind: input, shape index: {}]
  %s2 = inlined_call_operand.vmem [shape: f32[1,128], index: 2, kind: input, shape index: {}]
  %s3 = inlined_call_operand.vmem [shape: f32[1,128], index: 3, kind: input, shape index: {}]
  %s4 = inlined_call_operand.vmem [shape: bf16[32,128], index: 4, kind: input, shape index: {}]
  %s5 = inlined_call_operand.vmem [shape: bf16[32,128], index: 5, kind: output, shape index: {}]
  %s6 = sld [smem:[#allocation0]]
  $region84: #{resnet_forward.19} parent=0
    _
  %s8 = ssub.s32 1, %s6
  %s9 = scalar_select 0, %s8, %s6
  $region1: #{resnet_forward.19} parent=0
    #allocation3 [shape = 'u8[65536]{0}', space=vmem, size = 0x10000, scoped, tag = 'input window, operand 0']
    loop: start=0, step=1, limit=5
    $region2: #{resnet_forward.19} parent=1 // loop_pre_header
      _
    $region3: #{resnet_forward.19} parent=1 // loop_header
      %s11 = sphi 0, %s15
      %p12 = scmp.ge.s32.totalorder %s11, 5
      %s18 = sphi 0, %s37
      %s19 = sphi 0, %s33
      %s20 = sphi 0, %s29
      %s21 = sphi 0, %s18
      %s22 = sphi 0, %s19
      %s23 = sphi 0, %s20
      %s24 = sphi 0, %s21
      %s25 = sphi 0, %s22
      %s26 = sphi 0, %s23
      %s42 = sphi 0, %s44
      %s45 = sphi 0, %s42
      %s46 = sphi 0, %s45
      %s62 = sphi 0, %s46
      %s70 = sphi 0, %s72
      %s73 = sphi 0, %s70
      %s74 = sphi 0, %s73
      %s90 = sphi 0, %s74
      %s96 = sphi 0, %s98
      %s99 = sphi 0, %s96
      %s100 = sphi 0, %s99
      %s116 = sphi 0, %s100
      %s122 = sphi 0, %s124
      %s125 = sphi 0, %s122
      %s126 = sphi 0, %s125
      %s142 = sphi 0, %s126
      %s150 = sphi 0, %s152
      %s153 = sphi 0, %s150
      %s154 = sphi 0, %s153
      %s170 = sphi 0, %s154
      %s178 = sphi 0, %s180
      %s181 = sphi 0, %s178
      %s182 = sphi 0, %s181
      %s198 = sphi 0, %s182
    $region4: #{resnet_forward.19} parent=1 // loop_header_branch
      %14 = sbr.rel (%p12) target = $region8
    $region5: #{resnet_forward.19} parent=1 // loop_body
      %s16 = ssub.s32 %s11, 1
      %s17 = ssub.s32 %s11, 2
      %s27 = sadd.s32 1, %s20
      %p28 = scmp.ge.s32.totalorder %s27, 3
      %s29 = scalar_select %p28, 0, %s27
      %s30 = sadd.s32 1, %s19
      %s31 = scalar_select %p28, %s30, %s19
      %p32 = scmp.ge.s32.totalorder %s31, 1
      %s33 = scalar_select %p32, 0, %s31
      %s34 = sadd.s32 1, %s18
      %s35 = scalar_select %p32, %s34, %s18
      %p36 = scmp.ge.s32.totalorder %s35, 1
      %s37 = scalar_select %p36, 0, %s35
      %s38 = ssub.s32 %s18, %s37
      %s39 = ssub.s32 %s20, %s29
      %s40 = sor.u32 %s38, %s39
      %p41 = scmp.eq.s32.totalorder %s40, 0
      %s43 = sadd.s32 %s42, 1
      %s44 = scalar_select %p41, %s42, %s43
      %p47 = pneg %p41
      %p48 = scmp.eq.s32.totalorder %s11, 2
      %p49 = por %p47, %p48
      %p50 = scmp.ne.s32.totalorder %s42, %s45
      %p51 = scmp.eq.s32.totalorder %s11, 0
      %p52 = por %p50, %p51
      %p53 = scmp.ne.s32.totalorder %s42, %s45
      %p54 = scmp.eq.s32.totalorder %s16, 2
      %p55 = por %p53, %p54
      %p56 = scmp.ne.s32.totalorder %s45, %s46
      %p57 = scmp.eq.s32.totalorder %s16, 0
      %p58 = por %p56, %p57
      %p59 = scmp.ne.s32.totalorder %s45, %s46
      %p60 = scmp.eq.s32.totalorder %s17, 2
      %p61 = por %p59, %p60
      %p63 = scmp.ne.s32.totalorder %s46, %s62
      %p64 = scmp.eq.s32.totalorder %s17, 0
      %p65 = por %p63, %p64
      %s66 = ssub.s32 %s20, %s29
      %s67 = ssub.s32 %s19, %s33
      %s68 = sor.u32 %s66, %s67
      %p69 = scmp.eq.s32.totalorder %s68, 0
      %s71 = sadd.s32 %s70, 1
      %s72 = scalar_select %p69, %s70, %s71
      %p75 = pneg %p69
      %p76 = scmp.eq.s32.totalorder %s11, 2
      %p77 = por %p75, %p76
      %p78 = scmp.ne.s32.totalorder %s70, %s73
      %p79 = scmp.eq.s32.totalorder %s11, 0
      %p80 = por %p78, %p79
      %p81 = scmp.ne.s32.totalorder %s70, %s73
      %p82 = scmp.eq.s32.totalorder %s16, 2
      %p83 = por %p81, %p82
      %p84 = scmp.ne.s32.totalorder %s73, %s74
      %p85 = scmp.eq.s32.totalorder %s16, 0
      %p86 = por %p84, %p85
      %p87 = scmp.ne.s32.totalorder %s73, %s74
      %p88 = scmp.eq.s32.totalorder %s17, 2
      %p89 = por %p87, %p88
      %p91 = scmp.ne.s32.totalorder %s74, %s90
      %p92 = scmp.eq.s32.totalorder %s17, 0
      %p93 = por %p91, %p92
      %s94 = ssub.s32 %s19, %s33
      %p95 = scmp.eq.s32.totalorder %s94, 0
      %s97 = sadd.s32 %s96, 1
      %s98 = scalar_select %p95, %s96, %s97
      %p101 = pneg %p95
      %p102 = scmp.eq.s32.totalorder %s11, 2
      %p103 = por %p101, %p102
      %p104 = scmp.ne.s32.totalorder %s96, %s99
      %p105 = scmp.eq.s32.totalorder %s11, 0
      %p106 = por %p104, %p105
      %p107 = scmp.ne.s32.totalorder %s96, %s99
      %p108 = scmp.eq.s32.totalorder %s16, 2
      %p109 = por %p107, %p108
      %p110 = scmp.ne.s32.totalorder %s99, %s100
      %p111 = scmp.eq.s32.totalorder %s16, 0
      %p112 = por %p110, %p111
      %p113 = scmp.ne.s32.totalorder %s99, %s100
      %p114 = scmp.eq.s32.totalorder %s17, 2
      %p115 = por %p113, %p114
      %p117 = scmp.ne.s32.totalorder %s100, %s116
      %p118 = scmp.eq.s32.totalorder %s17, 0
      %p119 = por %p117, %p118
      %s120 = ssub.s32 %s19, %s33
      %p121 = scmp.eq.s32.totalorder %s120, 0
      %s123 = sadd.s32 %s122, 1
      %s124 = scalar_select %p121, %s122, %s123
      %p127 = pneg %p121
      %p128 = scmp.eq.s32.totalorder %s11, 2
      %p129 = por %p127, %p128
      %p130 = scmp.ne.s32.totalorder %s122, %s125
      %p131 = scmp.eq.s32.totalorder %s11, 0
      %p132 = por %p130, %p131
      %p133 = scmp.ne.s32.totalorder %s122, %s125
      %p134 = scmp.eq.s32.totalorder %s16, 2
      %p135 = por %p133, %p134
      %p136 = scmp.ne.s32.totalorder %s125, %s126
      %p137 = scmp.eq.s32.totalorder %s16, 0
      %p138 = por %p136, %p137
      %p139 = scmp.ne.s32.totalorder %s125, %s126
      %p140 = scmp.eq.s32.totalorder %s17, 2
      %p141 = por %p139, %p140
      %p143 = scmp.ne.s32.totalorder %s126, %s142
      %p144 = scmp.eq.s32.totalorder %s17, 0
      %p145 = por %p143, %p144
      %s146 = ssub.s32 %s18, %s37
      %s147 = ssub.s32 %s19, %s33
      %s148 = sor.u32 %s146, %s147
      %p149 = scmp.eq.s32.totalorder %s148, 0
      %s151 = sadd.s32 %s150, 1
      %s152 = scalar_select %p149, %s150, %s151
      %p155 = pneg %p149
      %p156 = scmp.eq.s32.totalorder %s11, 2
      %p157 = por %p155, %p156
      %p158 = scmp.ne.s32.totalorder %s150, %s153
      %p159 = scmp.eq.s32.totalorder %s11, 0
      %p160 = por %p158, %p159
      %p161 = scmp.ne.s32.totalorder %s150, %s153
      %p162 = scmp.eq.s32.totalorder %s16, 2
      %p163 = por %p161, %p162
      %p164 = scmp.ne.s32.totalorder %s153, %s154
      %p165 = scmp.eq.s32.totalorder %s16, 0
      %p166 = por %p164, %p165
      %p167 = scmp.ne.s32.totalorder %s153, %s154
      %p168 = scmp.eq.s32.totalorder %s17, 2
      %p169 = por %p167, %p168
      %p171 = scmp.ne.s32.totalorder %s154, %s170
      %p172 = scmp.eq.s32.totalorder %s17, 0
      %p173 = por %p171, %p172
      %s174 = ssub.s32 %s18, %s37
      %s175 = ssub.s32 %s19, %s33
      %s176 = sor.u32 %s174, %s175
      %p177 = scmp.eq.s32.totalorder %s176, 0
      %s179 = sadd.s32 %s178, 1
      %s180 = scalar_select %p177, %s178, %s179
      %p183 = pneg %p177
      %p184 = scmp.eq.s32.totalorder %s11, 2
      %p185 = por %p183, %p184
      %p186 = scmp.ne.s32.totalorder %s178, %s181
      %p187 = scmp.eq.s32.totalorder %s11, 0
      %p188 = por %p186, %p187
      %p189 = scmp.ne.s32.totalorder %s178, %s181
      %p190 = scmp.eq.s32.totalorder %s16, 2
      %p191 = por %p189, %p190
      %p192 = scmp.ne.s32.totalorder %s181, %s182
      %p193 = scmp.eq.s32.totalorder %s16, 0
      %p194 = por %p192, %p193
      %p195 = scmp.ne.s32.totalorder %s181, %s182
      %p196 = scmp.eq.s32.totalorder %s17, 2
      %p197 = por %p195, %p196
      %p199 = scmp.ne.s32.totalorder %s182, %s198
      %p200 = scmp.eq.s32.totalorder %s17, 0
      %p201 = por %p199, %p200
      %p202 = scmp.le.s32.totalorder 1, %s11
      %p203 = scmp.lt.s32.totalorder %s11, 4
      %p204 = pnand %p202, %p203
      %p205 = pneg %p204
      // Predicated region
      $region9: #{resnet_forward.19} parent=5 // pred_check
        _
      $region10: #{resnet_forward.19} parent=5 // pred_check_branch
        %207 = sbr.rel (%p204) target = $region12
      $region11: #{resnet_forward.19} parent=5 // pred_region
        %s208 = ssub.s32 %s11, 1
        // Predicated region
        $region13: #{resnet_forward.19} parent=11 // pred_check
          %p209 = pneg %p112
        $region14: #{resnet_forward.19} parent=11 // pred_check_branch
          %211 = sbr.rel (%p209) target = $region16
        $region15: #{resnet_forward.19} parent=11 // pred_region
          %p212 = scmp.lt.s32.totalorder %s22, 0
          %s213 = scalar_select %p212, %s22, 0
          %s214 = scalar_lea.vmem %s2, %s213
        $region16: #{resnet_forward.19} parent=11 // pred_fallthru
          _
        // Predicated region
        $region17: #{resnet_forward.19} parent=11 // pred_check
          %p215 = pneg %p138
        $region18: #{resnet_forward.19} parent=11 // pred_check_branch
          %217 = sbr.rel (%p215) target = $region20
        $region19: #{resnet_forward.19} parent=11 // pred_region
          %p218 = scmp.lt.s32.totalorder %s22, 0
          %s219 = scalar_select %p218, %s22, 0
          %s220 = scalar_lea.vmem %s3, %s219
        $region20: #{resnet_forward.19} parent=11 // pred_fallthru
          _
        // Predicated region
        $region21: #{resnet_forward.19} parent=11 // pred_check
          %p221 = pneg %p166
        $region22: #{resnet_forward.19} parent=11 // pred_check_branch
          %223 = sbr.rel (%p221) target = $region24
        $region23: #{resnet_forward.19} parent=11 // pred_region
          %s224 = smul.u32 4, %s21
          %p225 = scmp.lt.s32.totalorder %s224, 3
          %s226 = scalar_select %p225, %s224, 3
          %p227 = scmp.lt.s32.totalorder %s22, 0
          %s228 = scalar_select %p227, %s22, 0
          %s229 = sadd.s32 %s228, %s226
          %s230 = smul.addr %s229, 4
          %s231 = scalar_lea.vmem %s4, %s230
          %s232 = smul.u32 4, %s21
        $region24: #{resnet_forward.19} parent=11 // pred_fallthru
          _
      $region12: #{resnet_forward.19} parent=5 // pred_fallthru
        _
      %p233 = scmp.lt.s32.totalorder %s11, 3
      // Predicated region
      $region25: #{resnet_forward.19} parent=5 // pred_check
        %p234 = pneg %p233
      $region26: #{resnet_forward.19} parent=5 // pred_check_branch
        %236 = sbr.rel (%p234) target = $region28
      $region27: #{resnet_forward.19} parent=5 // pred_region
        // Predicated region
        $region29: #{resnet_forward.19} parent=27 // pred_check
          %p237 = pneg %p52
        $region30: #{resnet_forward.19} parent=27 // pred_check_branch
          %239 = sbr.rel (%p237) target = $region32
        $region31: #{resnet_forward.19} parent=27 // pred_region
          %s240 = sand.u32 %s42, 1
          %s241 = sand.u32 %s42, 1
          %s242 = smul.addr %s241, 64
          %s243 = scalar_lea.vmem [#allocation3], %s242
          %s244 = smul.u32 4, %s18
          %s245 = smul.u32 4, %s20
          %s246 = smul.addr %s244, 12
          %s247 = sadd.s32 %s245, %s246
          %s248 = smul.addr %s247, 4
          %s249 = scalar_lea.vmem %s0, %s248
          // Predicated region
          $region33: #{resnet_forward.19} parent=31 // pred_check
            _
          $region34: #{resnet_forward.19} parent=31 // pred_check_branch
            %251 = sbr.rel (0) target = $region36
          $region35: #{resnet_forward.19} parent=31 // pred_region
            // Predicated region
            $region37: #{resnet_forward.19} parent=35 // pred_check
              _
            $region38: #{resnet_forward.19} parent=35 // pred_check_branch
              %253 = sbr.rel (0) target = $region40
            $region39: #{resnet_forward.19} parent=35 // pred_region
              loop: start=0, step=1, limit=1
              $region41: #{resnet_forward.19} parent=39 // loop_pre_header
                _
              $region42: #{resnet_forward.19} parent=39 // loop_header
                %s255 = sphi 0, %s259
                %p256 = scmp.ge.s32.totalorder %s255, 1
                %s260 = sphi %s249, %s249
                %s261 = sphi %s243, %s243
              $region43: #{resnet_forward.19} parent=39 // loop_header_branch
                %258 = sbr.rel (%p256) target = $region47
              $region44: #{resnet_forward.19} parent=39 // loop_body
                %v262 = vld [vmem:[%s260] sm:$0xff]
                %263 = vst [vmem:[%s261] sm:$0xff] %v262
                %v264 = vld [vmem:[%s260 + $0x8] sm:$0xff]
                %265 = vst [vmem:[%s261 + $0x8] sm:$0xff] %v264
                %v266 = vld [vmem:[%s260 + $0x30] sm:$0xff]
                %267 = vst [vmem:[%s261 + $0x10] sm:$0xff] %v266
                %v268 = vld [vmem:[%s260 + $0x38] sm:$0xff]
                %269 = vst [vmem:[%s261 + $0x18] sm:$0xff] %v268
                %v270 = vld [vmem:[%s260 + $0x60] sm:$0xff]
                %271 = vst [vmem:[%s261 + $0x20] sm:$0xff] %v270
                %v272 = vld [vmem:[%s260 + $0x68] sm:$0xff]
                %273 = vst [vmem:[%s261 + $0x28] sm:$0xff] %v272
                %v274 = vld [vmem:[%s260 + $0x90] sm:$0xff]
                %275 = vst [vmem:[%s261 + $0x30] sm:$0xff] %v274
                %v276 = vld [vmem:[%s260 + $0x98] sm:$0xff]
                %277 = vst [vmem:[%s261 + $0x38] sm:$0xff] %v276
              $region45: #{resnet_forward.19} parent=39 // loop_footer
                %s259 = sadd.s32 1, %s255
              $region46: #{resnet_forward.19} parent=39 // loop_footer_branch
                %254 = sbr.rel target = $region42
              $region47: #{resnet_forward.19} parent=39 // loop_exit
                _
            $region40: #{resnet_forward.19} parent=35 // pred_fallthru
              _
            // Predicated region
            $region48: #{resnet_forward.19} parent=35 // pred_check
              _
            $region49: #{resnet_forward.19} parent=35 // pred_check_branch
              %279 = sbr.rel target = $region51
            $region50: #{resnet_forward.19} parent=35 // pred_region
              _
            $region51: #{resnet_forward.19} parent=35 // pred_fallthru
              _
          $region36: #{resnet_forward.19} parent=31 // pred_fallthru
            _
          %280 = vnop
        $region32: #{resnet_forward.19} parent=27 // pred_fallthru
          _
        // Predicated region
        $region52: #{resnet_forward.19} parent=27 // pred_check
          %p281 = pneg %p80
        $region53: #{resnet_forward.19} parent=27 // pred_check_branch
          %283 = sbr.rel (%p281) target = $region55
        $region54: #{resnet_forward.19} parent=27 // pred_region
          %s284 = smul.u32 64, %s20
          %p285 = scmp.lt.s32.totalorder %s284, 191
          %s286 = scalar_select %p285, %s284, 191
          %p287 = scmp.lt.s32.totalorder %s19, 0
          %s288 = scalar_select %p287, %s19, 0
          %s289 = sadd.s32 %s288, %s286
          %s290 = smul.addr %s289, 4
          %s291 = scalar_lea.vmem %s1, %s290
          %s292 = smul.u32 64, %s20
        $region55: #{resnet_forward.19} parent=27 // pred_fallthru
          _
      $region28: #{resnet_forward.19} parent=5 // pred_fallthru
        _
      %p293 = scmp.le.s32.totalorder 1, %s11
      %p294 = scmp.lt.s32.totalorder %s11, 4
      %p295 = pnand %p293, %p294
      %p296 = pneg %p295
      // Predicated region
      $region56: #{resnet_forward.19} parent=5 // pred_check
        _
      $region57: #{resnet_forward.19} parent=5 // pred_check_branch
        %298 = sbr.rel (%p295) target = $region59
      $region58: #{resnet_forward.19} parent=5 // pred_region
        %s299 = ssub.s32 %s11, 1
        %s300 = sand.u32 %s45, 1
        %s301 = sand.u32 %s45, 1
        %s302 = smul.addr %s301, 64
        %s303 = scalar_lea.vmem [#allocation3], %s302
        // Predicated region
        $region60: #{resnet_forward.19} parent=58 // pred_check
          %p304 = pneg %p58
        $region61: #{resnet_forward.19} parent=58 // pred_check_branch
          %306 = sbr.rel (%p304) target = $region63
        $region62: #{resnet_forward.19} parent=58 // pred_region
          _
        $region63: #{resnet_forward.19} parent=58 // pred_fallthru
          _
        %s307 = sand.u32 %s45, 1
        %s308 = sand.u32 %s45, 1
        %s309 = smul.addr %s308, 64
        %s310 = scalar_lea.vmem [#allocation3], %s309
        %p311 = pneg %p58
        %p312 = pneg %p55
        %s313 = smul.u32 64, %s23
        %p314 = scmp.lt.s32.totalorder %s313, 191
        %s315 = scalar_select %p314, %s313, 191
        %p316 = scmp.lt.s32.totalorder %s22, 0
        %s317 = scalar_select %p316, %s22, 0
        %s318 = sadd.s32 %s317, %s315
        %s319 = smul.addr %s318, 4
        %s320 = scalar_lea.vmem %s1, %s319
        %p321 = pneg %p86
        %p322 = pneg %p83
        %p323 = scmp.lt.s32.totalorder %s22, 0
        %s324 = scalar_select %p323, %s22, 0
        %s325 = scalar_lea.vmem %s2, %s324
        %p326 = pneg %p112
        %p327 = pneg %p109
        %p328 = scmp.lt.s32.totalorder %s22, 0
        %s329 = scalar_select %p328, %s22, 0
        %s330 = scalar_lea.vmem %s3, %s329
        %p331 = pneg %p138
        %p332 = pneg %p135
        %s333 = smul.u32 4, %s21
        %p334 = scmp.lt.s32.totalorder %s333, 3
        %s335 = scalar_select %p334, %s333, 3
        %p336 = scmp.lt.s32.totalorder %s22, 0
        %s337 = scalar_select %p336, %s22, 0
        %s338 = sadd.s32 %s337, %s335
        %s339 = smul.addr %s338, 4
        %s340 = scalar_lea.vmem %s4, %s339
        %p341 = pneg %p166
        %p342 = pneg %p163
        %p343 = pneg %p194
        %p344 = pneg %p191
        %s345 = smul.u32 4, %s21
        %p346 = scmp.lt.s32.totalorder %s345, 3
        %s347 = scalar_select %p346, %s345, 3
        %p348 = scmp.lt.s32.totalorder %s22, 0
        %s349 = scalar_select %p348, %s22, 0
        %s350 = sadd.s32 %s349, %s347
        %s351 = smul.addr %s350, 4
        %s352 = scalar_lea.vmem %s5, %s351
        %s353 = smul.u32 4, %s21
        %s354 = smul.u32 4, %s23
        %s355 = smul.u32 64, %s23
        %p356 = scmp.lt.s32.totalorder %s355, 191
        %s357 = scalar_select %p356, %s355, 191
        %p358 = scmp.lt.s32.totalorder %s22, 0
        %s359 = scalar_select %p358, %s22, 0
        %s360 = sadd.s32 %s359, %s357
        %s361 = smul.addr %s360, 4
        %s362 = scalar_lea.vmem %s1, %s361
        %s363 = smul.u32 64, %s23
        %p364 = scmp.lt.s32.totalorder %s22, 0
        %s365 = scalar_select %p364, %s22, 0
        %s366 = scalar_lea.vmem %s2, %s365
        %p367 = scmp.lt.s32.totalorder %s22, 0
        %s368 = scalar_select %p367, %s22, 0
        %s369 = scalar_lea.vmem %s3, %s368
        %s370 = smul.u32 4, %s21
        %p371 = scmp.lt.s32.totalorder %s370, 3
        %s372 = scalar_select %p371, %s370, 3
        %p373 = scmp.lt.s32.totalorder %s22, 0
        %s374 = scalar_select %p373, %s22, 0
        %s375 = sadd.s32 %s374, %s372
        %s376 = smul.addr %s375, 4
        %s377 = scalar_lea.vmem %s4, %s376
        %s378 = smul.u32 4, %s21
        %s379 = smul.u32 4, %s21
        %p380 = scmp.lt.s32.totalorder %s379, 3
        %s381 = scalar_select %p380, %s379, 3
        %p382 = scmp.lt.s32.totalorder %s22, 0
        %s383 = scalar_select %p382, %s22, 0
        %s384 = sadd.s32 %s383, %s381
        %s385 = smul.addr %s384, 4
        %s386 = scalar_lea.vmem %s5, %s385
        %s387 = smul.u32 4, %s21
        %p389 = scmp.eq.s32.totalorder %s23, 0
        // Predicated region
        $region64: #{resnet_forward.19} parent=58 // pred_check
          %p390 = pneg %p389
        $region65: #{resnet_forward.19} parent=58 // pred_check_branch
          %392 = sbr.rel (%p390) target = $region67
        $region66: #{resnet_forward.19} parent=58 // pred_region
          %393 = vst [vmem:[#allocation2] sm:$0xff] 0.0
          %394 = vst [vmem:[#allocation2 + $0x8] sm:$0xff] 0.0
          %395 = vst [vmem:[#allocation2 + $0x10] sm:$0xff] 0.0
          %396 = vst [vmem:[#allocation2 + $0x18] sm:$0xff] 0.0
        $region67: #{resnet_forward.19} parent=58 // pred_fallthru
          _
        %v397 = vld [vmem:[#allocation2] sm:$0xff]
        %v398 = vld [vmem:[#allocation2 + $0x8] sm:$0xff]
        %v399 = vld [vmem:[#allocation2 + $0x10] sm:$0xff]
        %v400 = vld [vmem:[#allocation2 + $0x18] sm:$0xff]
        %v401 = vld [vmem:[%s303] sm:$0xff]
        %v402 = vld [vmem:[%s303 + $0x8] sm:$0xff]
        %v403 = vld [vmem:[%s303 + $0x10] sm:$0xff]
        %v404 = vld [vmem:[%s303 + $0x18] sm:$0xff]
        %v405 = vld [vmem:[%s303 + $0x20] sm:$0xff]
        %v406 = vld [vmem:[%s303 + $0x28] sm:$0xff]
        %v407 = vld [vmem:[%s303 + $0x30] sm:$0xff]
        %v408 = vld [vmem:[%s303 + $0x38] sm:$0xff]
        %v409 = vld [vmem:[%s362] sm:$0xf]
        %v410 = vld [vmem:[%s362 + $0x4] sm:$0xf]
        %v411 = vld [vmem:[%s362 + $0x8] sm:$0xf]
        %v412 = vld [vmem:[%s362 + $0xc] sm:$0xf]
        %v413 = vld [vmem:[%s362 + $0x10] sm:$0xf]
        %v414 = vld [vmem:[%s362 + $0x14] sm:$0xf]
        %v415 = vld [vmem:[%s362 + $0x18] sm:$0xf]
        %v416 = vld [vmem:[%s362 + $0x1c] sm:$0xf]
        %v417 = vld [vmem:[%s362 + $0x20] sm:$0xf]
        %v418 = vld [vmem:[%s362 + $0x24] sm:$0xf]
        %v419 = vld [vmem:[%s362 + $0x28] sm:$0xf]
        %v420 = vld [vmem:[%s362 + $0x2c] sm:$0xf]
        %v421 = vld [vmem:[%s362 + $0x30] sm:$0xf]
        %v422 = vld [vmem:[%s362 + $0x34] sm:$0xf]
        %v423 = vld [vmem:[%s362 + $0x38] sm:$0xf]
        %v424 = vld [vmem:[%s362 + $0x3c] sm:$0xf]
        %v425 = vld [vmem:[%s362 + $0x40] sm:$0xf]
        %v426 = vld [vmem:[%s362 + $0x44] sm:$0xf]
        %v427 = vld [vmem:[%s362 + $0x48] sm:$0xf]
        %v428 = vld [vmem:[%s362 + $0x4c] sm:$0xf]
        %v429 = vld [vmem:[%s362 + $0x50] sm:$0xf]
        %v430 = vld [vmem:[%s362 + $0x54] sm:$0xf]
        %v431 = vld [vmem:[%s362 + $0x58] sm:$0xf]
        %v432 = vld [vmem:[%s362 + $0x5c] sm:$0xf]
        %v433 = vld [vmem:[%s362 + $0x60] sm:$0xf]
        %v434 = vld [vmem:[%s362 + $0x64] sm:$0xf]
        %v435 = vld [vmem:[%s362 + $0x68] sm:$0xf]
        %v436 = vld [vmem:[%s362 + $0x6c] sm:$0xf]
        %v437 = vld [vmem:[%s362 + $0x70] sm:$0xf]
        %v438 = vld [vmem:[%s362 + $0x74] sm:$0xf]
        %v439 = vld [vmem:[%s362 + $0x78] sm:$0xf]
        %v440 = vld [vmem:[%s362 + $0x7c] sm:$0xf]
        %v441 = vld [vmem:[%s362 + $0x80] sm:$0xf]
        %v442 = vld [vmem:[%s362 + $0x84] sm:$0xf]
        %v443 = vld [vmem:[%s362 + $0x88] sm:$0xf]
        %v444 = vld [vmem:[%s362 + $0x8c] sm:$0xf]
        %v445 = vld [vmem:[%s362 + $0x90] sm:$0xf]
        %v446 = vld [vmem:[%s362 + $0x94] sm:$0xf]
        %v447 = vld [vmem:[%s362 + $0x98] sm:$0xf]
        %v448 = vld [vmem:[%s362 + $0x9c] sm:$0xf]
        %v449 = vld [vmem:[%s362 + $0xa0] sm:$0xf]
        %v450 = vld [vmem:[%s362 + $0xa4] sm:$0xf]
        %v451 = vld [vmem:[%s362 + $0xa8] sm:$0xf]
        %v452 = vld [vmem:[%s362 + $0xac] sm:$0xf]
        %v453 = vld [vmem:[%s362 + $0xb0] sm:$0xf]
        %v454 = vld [vmem:[%s362 + $0xb4] sm:$0xf]
        %v455 = vld [vmem:[%s362 + $0xb8] sm:$0xf]
        %v456 = vld [vmem:[%s362 + $0xbc] sm:$0xf]
        %v457 = vld [vmem:[%s362 + $0xc0] sm:$0xf]
        %v458 = vld [vmem:[%s362 + $0xc4] sm:$0xf]
        %v459 = vld [vmem:[%s362 + $0xc8] sm:$0xf]
        %v460 = vld [vmem:[%s362 + $0xcc] sm:$0xf]
        %v461 = vld [vmem:[%s362 + $0xd0] sm:$0xf]
        %v462 = vld [vmem:[%s362 + $0xd4] sm:$0xf]
        %v463 = vld [vmem:[%s362 + $0xd8] sm:$0xf]
        %v464 = vld [vmem:[%s362 + $0xdc] sm:$0xf]
        %v465 = vld [vmem:[%s362 + $0xe0] sm:$0xf]
        %v466 = vld [vmem:[%s362 + $0xe4] sm:$0xf]
        %v467 = vld [vmem:[%s362 + $0xe8] sm:$0xf]
        %v468 = vld [vmem:[%s362 + $0xec] sm:$0xf]
        %v469 = vld [vmem:[%s362 + $0xf0] sm:$0xf]
        %v470 = vld [vmem:[%s362 + $0xf4] sm:$0xf]
        %v471 = vld [vmem:[%s362 + $0xf8] sm:$0xf]
        %v472 = vld [vmem:[%s362 + $0xfc] sm:$0xf]
        %v481 = vunpack.c.l.b16 %v401
        %v482 = vunpack.c.h.b16 %v401
        %v483 = vunpack.c.l.b16 %v402
        %v484 = vunpack.c.h.b16 %v402
        %v485 = vunpack.c.l.b16 %v403
        %v486 = vunpack.c.h.b16 %v403
        %v487 = vunpack.c.l.b16 %v404
        %v488 = vunpack.c.h.b16 %v404
        %v489 = vunpack.c.l.b16 %v405
        %v490 = vunpack.c.h.b16 %v405
        %v491 = vunpack.c.l.b16 %v406
        %v492 = vunpack.c.h.b16 %v406
        %v493 = vunpack.c.l.b16 %v407
        %v494 = vunpack.c.h.b16 %v407
        %v495 = vunpack.c.l.b16 %v408
        %v496 = vunpack.c.h.b16 %v408
        %v497 = vpack.c.b16 %v485, %v481
        %v498 = vpack.c.b16 %v486, %v482
        %v499 = vpack.c.b16 %v487, %v483
        %v500 = vpack.c.b16 %v488, %v484
        %v501 = vpack.c.b16 %v493, %v489
        %v502 = vpack.c.b16 %v494, %v490
        %v503 = vpack.c.b16 %v495, %v491
        %v504 = vpack.c.b16 %v496, %v492
        %v577 = vunpack.c.l.b16 %v409
        %v578 = vunpack.c.l.b16 %v410
        %v579 = vunpack.c.l.b16 %v411
        %v580 = vunpack.c.l.b16 %v412
        %v581 = vunpack.c.l.b16 %v413
        %v582 = vunpack.c.l.b16 %v414
        %v583 = vunpack.c.l.b16 %v415
        %v584 = vunpack.c.l.b16 %v416
        %v585 = vunpack.c.l.b16 %v417
        %v586 = vunpack.c.l.b16 %v418
        %v587 = vunpack.c.l.b16 %v419
        %v588 = vunpack.c.l.b16 %v420
        %v589 = vunpack.c.l.b16 %v421
        %v590 = vunpack.c.l.b16 %v422
        %v591 = vunpack.c.l.b16 %v423
        %v592 = vunpack.c.l.b16 %v424
        %v593 = vunpack.c.l.b16 %v425
        %v594 = vunpack.c.l.b16 %v426
        %v595 = vunpack.c.l.b16 %v427
        %v596 = vunpack.c.l.b16 %v428
        %v597 = vunpack.c.l.b16 %v429
        %v598 = vunpack.c.l.b16 %v430
        %v599 = vunpack.c.l.b16 %v431
        %v600 = vunpack.c.l.b16 %v432
        %v601 = vunpack.c.l.b16 %v433
        %v602 = vunpack.c.l.b16 %v434
        %v603 = vunpack.c.l.b16 %v435
        %v604 = vunpack.c.l.b16 %v436
        %v605 = vunpack.c.l.b16 %v437
        %v606 = vunpack.c.l.b16 %v438
        %v607 = vunpack.c.l.b16 %v439
        %v608 = vunpack.c.l.b16 %v440
        %v609 = vunpack.c.l.b16 %v441
        %v610 = vunpack.c.l.b16 %v442
        %v611 = vunpack.c.l.b16 %v443
        %v612 = vunpack.c.l.b16 %v444
        %v613 = vunpack.c.l.b16 %v445
        %v614 = vunpack.c.l.b16 %v446
        %v615 = vunpack.c.l.b16 %v447
        %v616 = vunpack.c.l.b16 %v448
        %v617 = vunpack.c.l.b16 %v449
        %v618 = vunpack.c.l.b16 %v450
        %v619 = vunpack.c.l.b16 %v451
        %v620 = vunpack.c.l.b16 %v452
        %v621 = vunpack.c.l.b16 %v453
        %v622 = vunpack.c.l.b16 %v454
        %v623 = vunpack.c.l.b16 %v455
        %v624 = vunpack.c.l.b16 %v456
        %v625 = vunpack.c.l.b16 %v457
        %v626 = vunpack.c.l.b16 %v458
        %v627 = vunpack.c.l.b16 %v459
        %v628 = vunpack.c.l.b16 %v460
        %v629 = vunpack.c.l.b16 %v461
        %v630 = vunpack.c.l.b16 %v462
        %v631 = vunpack.c.l.b16 %v463
        %v632 = vunpack.c.l.b16 %v464
        %v633 = vunpack.c.l.b16 %v465
        %v634 = vunpack.c.l.b16 %v466
        %v635 = vunpack.c.l.b16 %v467
        %v636 = vunpack.c.l.b16 %v468
        %v637 = vunpack.c.l.b16 %v469
        %v638 = vunpack.c.l.b16 %v470
        %v639 = vunpack.c.l.b16 %v471
        %v640 = vunpack.c.l.b16 %v472
        %v641 = vpack.c.b16 %v578, %v577
        %v642 = vpack.c.b16 %v580, %v579
        %v643 = vpack.c.b16 %v582, %v581
        %v644 = vpack.c.b16 %v584, %v583
        %v645 = vpack.c.b16 %v586, %v585
        %v646 = vpack.c.b16 %v588, %v587
        %v647 = vpack.c.b16 %v590, %v589
        %v648 = vpack.c.b16 %v592, %v591
        %v649 = vpack.c.b16 %v594, %v593
        %v650 = vpack.c.b16 %v596, %v595
        %v651 = vpack.c.b16 %v598, %v597
        %v652 = vpack.c.b16 %v600, %v599
        %v653 = vpack.c.b16 %v602, %v601
        %v654 = vpack.c.b16 %v604, %v603
        %v655 = vpack.c.b16 %v606, %v605
        %v656 = vpack.c.b16 %v608, %v607
        %v657 = vpack.c.b16 %v610, %v609
        %v658 = vpack.c.b16 %v612, %v611
        %v659 = vpack.c.b16 %v614, %v613
        %v660 = vpack.c.b16 %v616, %v615
        %v661 = vpack.c.b16 %v618, %v617
        %v662 = vpack.c.b16 %v620, %v619
        %v663 = vpack.c.b16 %v622, %v621
        %v664 = vpack.c.b16 %v624, %v623
        %v665 = vpack.c.b16 %v626, %v625
        %v666 = vpack.c.b16 %v628, %v627
        %v667 = vpack.c.b16 %v630, %v629
        %v668 = vpack.c.b16 %v632, %v631
        %v669 = vpack.c.b16 %v634, %v633
        %v670 = vpack.c.b16 %v636, %v635
        %v671 = vpack.c.b16 %v638, %v637
        %v672 = vpack.c.b16 %v640, %v639
        %705 = vmatprep.subr.bf16.mxu0 0
        %706 = vmatpush1.bf16.msra.mxu0 %v648
        %707 = vmatprep.subr.bf16.mxu0 0
        %708 = vmatpush1.bf16.msra.mxu0 %v647
        %709 = vmatprep.subr.bf16.mxu0 0
        %710 = vmatpush1.bf16.msra.mxu0 %v646
        %711 = vmatprep.subr.bf16.mxu0 0
        %712 = vmatpush1.bf16.msra.mxu0 %v645
        %713 = vmatprep.subr.bf16.mxu0 0
        %714 = vmatpush1.bf16.msra.mxu0 %v644
        %715 = vmatprep.subr.bf16.mxu0 0
        %716 = vmatpush1.bf16.msra.mxu0 %v643
        %717 = vmatprep.subr.bf16.mxu0 0
        %718 = vmatpush1.bf16.msra.mxu0 %v642
        %719 = vmatprep.subr.bf16.mxu0 0
        %720 = vmatpush1.bf16.msra.mxu0 %v641
        %721 = vmatprep.subr.bf16.mxu0 0
        %722 = vmatpush2.bf16.msra.mxu0 %v656
        %723 = vmatprep.subr.bf16.mxu0 0
        %724 = vmatpush2.bf16.msra.mxu0 %v655
        %725 = vmatprep.subr.bf16.mxu0 0
        %726 = vmatpush2.bf16.msra.mxu0 %v654
        %727 = vmatprep.subr.bf16.mxu0 0
        %728 = vmatpush2.bf16.msra.mxu0 %v653
        %729 = vmatprep.subr.bf16.mxu0 0
        %730 = vmatpush2.bf16.msra.mxu0 %v652
        %731 = vmatprep.subr.bf16.mxu0 0
        %732 = vmatpush2.bf16.msra.mxu0 %v651
        %733 = vmatprep.subr.bf16.mxu0 0
        %734 = vmatpush2.bf16.msra.mxu0 %v650
        %735 = vmatprep.subr.bf16.mxu0 0
        %736 = vmatpush2.bf16.msra.mxu0 %v649
        %737 = vmatprep.mubr.bf16.mxu0 %v498
        %738 = vmatmul.mubr.bf16.gmra.mxu0 %v497
        %v739 = vpop.f32.mrf.mxu0
        %v740 = vadd.f32 0.0, %v739
        %v741 = vpop.f32.mrf.mxu0
        %v742 = vpop.f32.mrf.mxu0
        %v743 = vadd.f32 0.0, %v742
        %v744 = vpop.f32.mrf.mxu0
        %745 = vmatprep.mubr.bf16.mxu0 %v502
        %746 = vmatmul.mubr.bf16.gmra.mxu0 %v501
        %v747 = vpop.f32.mrf.mxu0
        %v748 = vadd.f32 0.0, %v747
        %v749 = vpop.f32.mrf.mxu0
        %v750 = vpop.f32.mrf.mxu0
        %v751 = vadd.f32 0.0, %v750
        %v752 = vpop.f32.mrf.mxu0
        %753 = vdwg.mxu0
        %754 = vmatprep.subr.bf16.mxu0 0
        %755 = vmatpush1.bf16.msra.mxu0 %v664
        %756 = vmatprep.subr.bf16.mxu0 0
        %757 = vmatpush1.bf16.msra.mxu0 %v663
        %758 = vmatprep.subr.bf16.mxu0 0
        %759 = vmatpush1.bf16.msra.mxu0 %v662
        %760 = vmatprep.subr.bf16.mxu0 0
        %761 = vmatpush1.bf16.msra.mxu0 %v661
        %762 = vmatprep.subr.bf16.mxu0 0
        %763 = vmatpush1.bf16.msra.mxu0 %v660
        %764 = vmatprep.subr.bf16.mxu0 0
        %765 = vmatpush1.bf16.msra.mxu0 %v659
        %766 = vmatprep.subr.bf16.mxu0 0
        %767 = vmatpush1.bf16.msra.mxu0 %v658
        %768 = vmatprep.subr.bf16.mxu0 0
        %769 = vmatpush1.bf16.msra.mxu0 %v657
        %770 = vmatprep.subr.bf16.mxu0 0
        %771 = vmatpush2.bf16.msra.mxu0 %v672
        %772 = vmatprep.subr.bf16.mxu0 0
        %773 = vmatpush2.bf16.msra.mxu0 %v671
        %774 = vmatprep.subr.bf16.mxu0 0
        %775 = vmatpush2.bf16.msra.mxu0 %v670
        %776 = vmatprep.subr.bf16.mxu0 0
        %777 = vmatpush2.bf16.msra.mxu0 %v669
        %778 = vmatprep.subr.bf16.mxu0 0
        %779 = vmatpush2.bf16.msra.mxu0 %v668
        %780 = vmatprep.subr.bf16.mxu0 0
        %781 = vmatpush2.bf16.msra.mxu0 %v667
        %782 = vmatprep.subr.bf16.mxu0 0
        %783 = vmatpush2.bf16.msra.mxu0 %v666
        %784 = vmatprep.subr.bf16.mxu0 0
        %785 = vmatpush2.bf16.msra.mxu0 %v665
        %786 = vmatprep.mubr.bf16.mxu0 %v500
        %787 = vmatmul.mubr.bf16.gmra.mxu0 %v499
        %v788 = vpop.f32.mrf.mxu0
        %v789 = vadd.f32 %v740, %v788
        %v790 = vpop.f32.mrf.mxu0
        %v791 = vpop.f32.mrf.mxu0
        %v792 = vadd.f32 %v743, %v791
        %v793 = vpop.f32.mrf.mxu0
        %794 = vmatprep.mubr.bf16.mxu0 %v504
        %795 = vmatmul.mubr.bf16.gmra.mxu0 %v503
        %v796 = vpop.f32.mrf.mxu0
        %v797 = vadd.f32 %v748, %v796
        %v798 = vpop.f32.mrf.mxu0
        %v799 = vpop.f32.mrf.mxu0
        %v800 = vadd.f32 %v751, %v799
        %v801 = vpop.f32.mrf.mxu0
        %802 = vdwg.mxu0
        %v803 = vadd.f32 %v397, %v789
        %v804 = vadd.f32 %v398, %v792
        %v805 = vadd.f32 %v399, %v797
        %v806 = vadd.f32 %v400, %v800
        %807 = vst [vmem:[#allocation2] sm:$0xff] %v803
        %808 = vst [vmem:[#allocation2 + $0x8] sm:$0xff] %v804
        %809 = vst [vmem:[#allocation2 + $0x10] sm:$0xff] %v805
        %810 = vst [vmem:[#allocation2 + $0x18] sm:$0xff] %v806
        %p811 = scmp.eq.s32.totalorder %s23, 2
        // Predicated region
        $region68: #{resnet_forward.19} parent=58 // pred_check
          %p812 = pneg %p811
        $region69: #{resnet_forward.19} parent=58 // pred_check_branch
          %814 = sbr.rel (%p812) target = $region71
        $region70: #{resnet_forward.19} parent=58 // pred_region
          %v815 = vld [vmem:[#allocation2] sm:$0xff]
          %v816 = vld [vmem:[#allocation2 + $0x8] sm:$0xff]
          %v817 = vld [vmem:[#allocation2 + $0x10] sm:$0xff]
          %v818 = vld [vmem:[#allocation2 + $0x18] sm:$0xff]
          %v819 = vld [vmem:[%s366] sm:$0x1]
          %v821 = vlaneseq
          %v822 = vshrl.u32 %v821, 7
          %v823 = vsub.s32 0, %v822
          %v824 = vrot.slane %v819, %v823
          %v826 = vmul.f32 %v815, %v824
          %v827 = vmul.f32 %v816, %v824
          %v828 = vmul.f32 %v817, %v824
          %v829 = vmul.f32 %v818, %v824
          %v830 = vld [vmem:[%s369] sm:$0x1]
          %v832 = vlaneseq
          %v833 = vshrl.u32 %v832, 7
          %v834 = vsub.s32 0, %v833
          %v835 = vrot.slane %v830, %v834
          %v837 = vadd.f32 %v826, %v835
          %v838 = vadd.f32 %v827, %v835
          %v839 = vadd.f32 %v828, %v835
          %v840 = vadd.f32 %v829, %v835
          %v841 = vld [vmem:[%s377] sm:$0xf]
          %v842 = vld [vmem:[%s377 + $0x4] sm:$0xf]
          %v843 = vld [vmem:[%s377 + $0x8] sm:$0xf]
          %v844 = vld [vmem:[%s377 + $0xc] sm:$0xf]
          %v845 = vunpack.c.l.bf16 %v841
          %v846 = vunpack.c.l.bf16 %v842
          %v847 = vunpack.c.l.bf16 %v843
          %v848 = vunpack.c.l.bf16 %v844
          %v849 = vadd.f32 %v837, %v845
          %v850 = vadd.f32 %v838, %v846
          %v851 = vadd.f32 %v839, %v847
          %v852 = vadd.f32 %v840, %v848
          %v853 = vmax.f32 %v849, 0.0
          %v854 = vmax.f32 %v850, 0.0
          %v855 = vmax.f32 %v851, 0.0
          %v856 = vmax.f32 %v852, 0.0
          %v857 = vpack.c.bf16 %v854, %v853
          %v858 = vpack.c.bf16 %v856, %v855
          %v861 = vunpack.c.l.b16 %v857
          %v862 = vunpack.c.h.b16 %v857
          %v863 = vunpack.c.l.b16 %v858
          %v864 = vunpack.c.h.b16 %v858
          %v865 = vpack.c.b16 %v861, %v861
          %v866 = vpack.c.b16 %v862, %v862
          %v867 = vpack.c.b16 %v863, %v863
          %v868 = vpack.c.b16 %v864, %v864
          %873 = vst [vmem:[%s386] sm:$0xf] %v865
          %874 = vst [vmem:[%s386 + $0x4] sm:$0xf] %v866
          %875 = vst [vmem:[%s386 + $0x8] sm:$0xf] %v867
          %876 = vst [vmem:[%s386 + $0xc] sm:$0xf] %v868
        $region71: #{resnet_forward.19} parent=58 // pred_fallthru
          _
        %s877 = smul.u32 4, %s21
        %p878 = scmp.lt.s32.totalorder %s877, 3
        %s879 = scalar_select %p878, %s877, 3
        %p880 = scmp.lt.s32.totalorder %s22, 0
        %s881 = scalar_select %p880, %s22, 0
        %s882 = sadd.s32 %s881, %s879
        %s883 = smul.addr %s882, 4
        %s884 = scalar_lea.vmem %s5, %s883
        // Predicated region
        $region72: #{resnet_forward.19} parent=58 // pred_check
          %p885 = pneg %p191
        $region73: #{resnet_forward.19} parent=58 // pred_check_branch
          %887 = sbr.rel (%p885) target = $region75
        $region74: #{resnet_forward.19} parent=58 // pred_region
          %s888 = smul.u32 4, %s21
        $region75: #{resnet_forward.19} parent=58 // pred_fallthru
          _
        // Predicated region
        $region76: #{resnet_forward.19} parent=58 // pred_check
          %p889 = pneg %p191
        $region77: #{resnet_forward.19} parent=58 // pred_check_branch
          %891 = sbr.rel (%p889) target = $region79
        $region78: #{resnet_forward.19} parent=58 // pred_region
          %s892 = smul.u32 4, %s21
          %p893 = scmp.lt.s32.totalorder %s892, 3
          %s894 = scalar_select %p893, %s892, 3
          %p895 = scmp.lt.s32.totalorder %s22, 0
          %s896 = scalar_select %p895, %s22, 0
          %s897 = sadd.s32 %s896, %s894
          %s898 = smul.addr %s897, 4
          %s899 = scalar_lea.vmem %s5, %s898
        $region79: #{resnet_forward.19} parent=58 // pred_fallthru
          _
      $region59: #{resnet_forward.19} parent=5 // pred_fallthru
        _
      %p900 = scmp.le.s32.totalorder 2, %s11
      // Predicated region
      $region80: #{resnet_forward.19} parent=5 // pred_check
        %p901 = pneg %p900
      $region81: #{resnet_forward.19} parent=5 // pred_check_branch
        %903 = sbr.rel (%p901) target = $region83
      $region82: #{resnet_forward.19} parent=5 // pred_region
        %s904 = ssub.s32 %s11, 2
      $region83: #{resnet_forward.19} parent=5 // pred_fallthru
        _
    $region6: #{resnet_forward.19} parent=1 // loop_footer
      %s15 = sadd.s32 1, %s11
    $region7: #{resnet_forward.19} parent=1 // loop_footer_branch
      %10 = sbr.rel target = $region3
    $region8: #{resnet_forward.19} parent=1 // loop_exit
      _

// kernel: resnet_forward.21
$region0: #{resnet_forward.21}
  #allocation0 [shape = 'u32[]', space=smem, size = 0x4, offset = 0x4, fixed_abs, tag = 'smem constant byte address 0x4 - core index']
  #allocation1 [shape = 'u32[144,128]{1,0:T(1,128)}', space=vmem, size = 0x12000, scoped, tag = 'internal scratch']
  #allocation2 [shape = 'f32[16,256]{1,0:T(8,128)}', space=vmem, size = 0x4000, scoped, tag = 'scratch operand']
  %s0 = inlined_call_operand.vmem [shape: bf16[16,1536], index: 0, kind: input, shape index: {}]
  %s1 = inlined_call_operand.vmem [shape: bf16[1536,256], index: 1, kind: input, shape index: {}]
  %s2 = inlined_call_operand.vmem [shape: f32[1,256], index: 2, kind: input, shape index: {}]
  %s3 = inlined_call_operand.vmem [shape: f32[1,256], index: 3, kind: input, shape index: {}]
  %s4 = inlined_call_operand.vmem [shape: bf16[16,256], index: 4, kind: output, shape index: {}]
  %s5 = sld [smem:[#allocation0]]
  $region80: #{resnet_forward.21} parent=0
    _
  %s7 = ssub.s32 1, %s5
  %s8 = scalar_select 0, %s7, %s5
  $region1: #{resnet_forward.21} parent=0
    #allocation3 [shape = 'u8[32768]{0}', space=vmem, size = 0x8000, scoped, tag = 'input window, operand 0']
    loop: start=0, step=1, limit=5
    $region2: #{resnet_forward.21} parent=1 // loop_pre_header
      _
    $region3: #{resnet_forward.21} parent=1 // loop_header
      %s10 = sphi 0, %s14
      %p11 = scmp.ge.s32.totalorder %s10, 5
      %s17 = sphi 0, %s36
      %s18 = sphi 0, %s32
      %s19 = sphi 0, %s28
      %s20 = sphi 0, %s17
      %s21 = sphi 0, %s18
      %s22 = sphi 0, %s19
      %s23 = sphi 0, %s20
      %s24 = sphi 0, %s21
      %s25 = sphi 0, %s22
      %s41 = sphi 0, %s43
      %s44 = sphi 0, %s41
      %s45 = sphi 0, %s44
      %s61 = sphi 0, %s45
      %s69 = sphi 0, %s71
      %s72 = sphi 0, %s69
      %s73 = sphi 0, %s72
      %s89 = sphi 0, %s73
      %s95 = sphi 0, %s97
      %s98 = sphi 0, %s95
      %s99 = sphi 0, %s98
      %s115 = sphi 0, %s99
      %s121 = sphi 0, %s123
      %s124 = sphi 0, %s121
      %s125 = sphi 0, %s124
      %s141 = sphi 0, %s125
      %s149 = sphi 0, %s151
      %s152 = sphi 0, %s149
      %s153 = sphi 0, %s152
      %s169 = sphi 0, %s153
    $region4: #{resnet_forward.21} parent=1 // loop_header_branch
      %13 = sbr.rel (%p11) target = $region8
    $region5: #{resnet_forward.21} parent=1 // loop_body
      %s15 = ssub.s32 %s10, 1
      %s16 = ssub.s32 %s10, 2
      %s26 = sadd.s32 1, %s19
      %p27 = scmp.ge.s32.totalorder %s26, 3
      %s28 = scalar_select %p27, 0, %s26
      %s29 = sadd.s32 1, %s18
      %s30 = scalar_select %p27, %s29, %s18
      %p31 = scmp.ge.s32.totalorder %s30, 1
      %s32 = scalar_select %p31, 0, %s30
      %s33 = sadd.s32 1, %s17
      %s34 = scalar_select %p31, %s33, %s17
      %p35 = scmp.ge.s32.totalorder %s34, 1
      %s36 = scalar_select %p35, 0, %s34
      %s37 = ssub.s32 %s17, %s36
      %s38 = ssub.s32 %s19, %s28
      %s39 = sor.u32 %s37, %s38
      %p40 = scmp.eq.s32.totalorder %s39, 0
      %s42 = sadd.s32 %s41, 1
      %s43 = scalar_select %p40, %s41, %s42
      %p46 = pneg %p40
      %p47 = scmp.eq.s32.totalorder %s10, 2
      %p48 = por %p46, %p47
      %p49 = scmp.ne.s32.totalorder %s41, %s44
      %p50 = scmp.eq.s32.totalorder %s10, 0
      %p51 = por %p49, %p50
      %p52 = scmp.ne.s32.totalorder %s41, %s44
      %p53 = scmp.eq.s32.totalorder %s15, 2
      %p54 = por %p52, %p53
      %p55 = scmp.ne.s32.totalorder %s44, %s45
      %p56 = scmp.eq.s32.totalorder %s15, 0
      %p57 = por %p55, %p56
      %p58 = scmp.ne.s32.totalorder %s44, %s45
      %p59 = scmp.eq.s32.totalorder %s16, 2
      %p60 = por %p58, %p59
      %p62 = scmp.ne.s32.totalorder %s45, %s61
      %p63 = scmp.eq.s32.totalorder %s16, 0
      %p64 = por %p62, %p63
      %s65 = ssub.s32 %s19, %s28
      %s66 = ssub.s32 %s18, %s32
      %s67 = sor.u32 %s65, %s66
      %p68 = scmp.eq.s32.totalorder %s67, 0
      %s70 = sadd.s32 %s69, 1
      %s71 = scalar_select %p68, %s69, %s70
      %p74 = pneg %p68
      %p75 = scmp.eq.s32.totalorder %s10, 2
      %p76 = por %p74, %p75
      %p77 = scmp.ne.s32.totalorder %s69, %s72
      %p78 = scmp.eq.s32.totalorder %s10, 0
      %p79 = por %p77, %p78
      %p80 = scmp.ne.s32.totalorder %s69, %s72
      %p81 = scmp.eq.s32.totalorder %s15, 2
      %p82 = por %p80, %p81
      %p83 = scmp.ne.s32.totalorder %s72, %s73
      %p84 = scmp.eq.s32.totalorder %s15, 0
      %p85 = por %p83, %p84
      %p86 = scmp.ne.s32.totalorder %s72, %s73
      %p87 = scmp.eq.s32.totalorder %s16, 2
      %p88 = por %p86, %p87
      %p90 = scmp.ne.s32.totalorder %s73, %s89
      %p91 = scmp.eq.s32.totalorder %s16, 0
      %p92 = por %p90, %p91
      %s93 = ssub.s32 %s18, %s32
      %p94 = scmp.eq.s32.totalorder %s93, 0
      %s96 = sadd.s32 %s95, 1
      %s97 = scalar_select %p94, %s95, %s96
      %p100 = pneg %p94
      %p101 = scmp.eq.s32.totalorder %s10, 2
      %p102 = por %p100, %p101
      %p103 = scmp.ne.s32.totalorder %s95, %s98
      %p104 = scmp.eq.s32.totalorder %s10, 0
      %p105 = por %p103, %p104
      %p106 = scmp.ne.s32.totalorder %s95, %s98
      %p107 = scmp.eq.s32.totalorder %s15, 2
      %p108 = por %p106, %p107
      %p109 = scmp.ne.s32.totalorder %s98, %s99
      %p110 = scmp.eq.s32.totalorder %s15, 0
      %p111 = por %p109, %p110
      %p112 = scmp.ne.s32.totalorder %s98, %s99
      %p113 = scmp.eq.s32.totalorder %s16, 2
      %p114 = por %p112, %p113
      %p116 = scmp.ne.s32.totalorder %s99, %s115
      %p117 = scmp.eq.s32.totalorder %s16, 0
      %p118 = por %p116, %p117
      %s119 = ssub.s32 %s18, %s32
      %p120 = scmp.eq.s32.totalorder %s119, 0
      %s122 = sadd.s32 %s121, 1
      %s123 = scalar_select %p120, %s121, %s122
      %p126 = pneg %p120
      %p127 = scmp.eq.s32.totalorder %s10, 2
      %p128 = por %p126, %p127
      %p129 = scmp.ne.s32.totalorder %s121, %s124
      %p130 = scmp.eq.s32.totalorder %s10, 0
      %p131 = por %p129, %p130
      %p132 = scmp.ne.s32.totalorder %s121, %s124
      %p133 = scmp.eq.s32.totalorder %s15, 2
      %p134 = por %p132, %p133
      %p135 = scmp.ne.s32.totalorder %s124, %s125
      %p136 = scmp.eq.s32.totalorder %s15, 0
      %p137 = por %p135, %p136
      %p138 = scmp.ne.s32.totalorder %s124, %s125
      %p139 = scmp.eq.s32.totalorder %s16, 2
      %p140 = por %p138, %p139
      %p142 = scmp.ne.s32.totalorder %s125, %s141
      %p143 = scmp.eq.s32.totalorder %s16, 0
      %p144 = por %p142, %p143
      %s145 = ssub.s32 %s17, %s36
      %s146 = ssub.s32 %s18, %s32
      %s147 = sor.u32 %s145, %s146
      %p148 = scmp.eq.s32.totalorder %s147, 0
      %s150 = sadd.s32 %s149, 1
      %s151 = scalar_select %p148, %s149, %s150
      %p154 = pneg %p148
      %p155 = scmp.eq.s32.totalorder %s10, 2
      %p156 = por %p154, %p155
      %p157 = scmp.ne.s32.totalorder %s149, %s152
      %p158 = scmp.eq.s32.totalorder %s10, 0
      %p159 = por %p157, %p158
      %p160 = scmp.ne.s32.totalorder %s149, %s152
      %p161 = scmp.eq.s32.totalorder %s15, 2
      %p162 = por %p160, %p161
      %p163 = scmp.ne.s32.totalorder %s152, %s153
      %p164 = scmp.eq.s32.totalorder %s15, 0
      %p165 = por %p163, %p164
      %p166 = scmp.ne.s32.totalorder %s152, %s153
      %p167 = scmp.eq.s32.totalorder %s16, 2
      %p168 = por %p166, %p167
      %p170 = scmp.ne.s32.totalorder %s153, %s169
      %p171 = scmp.eq.s32.totalorder %s16, 0
      %p172 = por %p170, %p171
      %p173 = scmp.le.s32.totalorder 1, %s10
      %p174 = scmp.lt.s32.totalorder %s10, 4
      %p175 = pnand %p173, %p174
      %p176 = pneg %p175
      // Predicated region
      $region9: #{resnet_forward.21} parent=5 // pred_check
        _
      $region10: #{resnet_forward.21} parent=5 // pred_check_branch
        %178 = sbr.rel (%p175) target = $region12
      $region11: #{resnet_forward.21} parent=5 // pred_region
        %s179 = ssub.s32 %s10, 1
        // Predicated region
        $region13: #{resnet_forward.21} parent=11 // pred_check
          %p180 = pneg %p111
        $region14: #{resnet_forward.21} parent=11 // pred_check_branch
          %182 = sbr.rel (%p180) target = $region16
        $region15: #{resnet_forward.21} parent=11 // pred_region
          %s183 = smul.u32 2, %s21
          %p184 = scmp.lt.s32.totalorder %s183, 1
          %s185 = scalar_select %p184, %s183, 1
          %s186 = scalar_lea.vmem %s2, %s185
          %s187 = smul.u32 2, %s21
        $region16: #{resnet_forward.21} parent=11 // pred_fallthru
          _
        // Predicated region
        $region17: #{resnet_forward.21} parent=11 // pred_check
          %p188 = pneg %p137
        $region18: #{resnet_forward.21} parent=11 // pred_check_branch
          %190 = sbr.rel (%p188) target = $region20
        $region19: #{resnet_forward.21} parent=11 // pred_region
          %s191 = smul.u32 2, %s21
          %p192 = scmp.lt.s32.totalorder %s191, 1
          %s193 = scalar_select %p192, %s191, 1
          %s194 = scalar_lea.vmem %s3, %s193
          %s195 = smul.u32 2, %s21
        $region20: #{resnet_forward.21} parent=11 // pred_fallthru
          _
      $region12: #{resnet_forward.21} parent=5 // pred_fallthru
        _
      %p196 = scmp.lt.s32.totalorder %s10, 3
      // Predicated region
      $region21: #{resnet_forward.21} parent=5 // pred_check
        %p197 = pneg %p196
      $region22: #{resnet_forward.21} parent=5 // pred_check_branch
        %199 = sbr.rel (%p197) target = $region24
      $region23: #{resnet_forward.21} parent=5 // pred_region
        // Predicated region
        $region25: #{resnet_forward.21} parent=23 // pred_check
          %p200 = pneg %p51
        $region26: #{resnet_forward.21} parent=23 // pred_check_branch
          %202 = sbr.rel (%p200) target = $region28
        $region27: #{resnet_forward.21} parent=23 // pred_region
          %s203 = sand.u32 %s41, 1
          %s204 = sand.u32 %s41, 1
          %s205 = smul.addr %s204, 32
          %s206 = scalar_lea.vmem [#allocation3], %s205
          %s207 = smul.u32 2, %s17
          %s208 = smul.u32 4, %s19
          %s209 = smul.addr %s207, 12
          %s210 = sadd.s32 %s208, %s209
          %s211 = smul.addr %s210, 4
          %s212 = scalar_lea.vmem %s0, %s211
          // Predicated region
          $region29: #{resnet_forward.21} parent=27 // pred_check
            _
          $region30: #{resnet_forward.21} parent=27 // pred_check_branch
            %214 = sbr.rel (0) target = $region32
          $region31: #{resnet_forward.21} parent=27 // pred_region
            // Predicated region
            $region33: #{resnet_forward.21} parent=31 // pred_check
              _
            $region34: #{resnet_forward.21} parent=31 // pred_check_branch
              %216 = sbr.rel (0) target = $region36
            $region35: #{resnet_forward.21} parent=31 // pred_region
              loop: start=0, step=1, limit=1
              $region37: #{resnet_forward.21} parent=35 // loop_pre_header
                _
              $region38: #{resnet_forward.21} parent=35 // loop_header
                %s218 = sphi 0, %s222
                %p219 = scmp.ge.s32.totalorder %s218, 1
                %s223 = sphi %s212, %s212
                %s224 = sphi %s206, %s206
              $region39: #{resnet_forward.21} parent=35 // loop_header_branch
                %221 = sbr.rel (%p219) target = $region43
              $region40: #{resnet_forward.21} parent=35 // loop_body
                %v225 = vld [vmem:[%s223] sm:$0xff]
                %226 = vst [vmem:[%s224] sm:$0xff] %v225
                %v227 = vld [vmem:[%s223 + $0x8] sm:$0xff]
                %228 = vst [vmem:[%s224 + $0x8] sm:$0xff] %v227
                %v229 = vld [vmem:[%s223 + $0x30] sm:$0xff]
                %230 = vst [vmem:[%s224 + $0x10] sm:$0xff] %v229
                %v231 = vld [vmem:[%s223 + $0x38] sm:$0xff]
                %232 = vst [vmem:[%s224 + $0x18] sm:$0xff] %v231
              $region41: #{resnet_forward.21} parent=35 // loop_footer
                %s222 = sadd.s32 1, %s218
              $region42: #{resnet_forward.21} parent=35 // loop_footer_branch
                %217 = sbr.rel target = $region38
              $region43: #{resnet_forward.21} parent=35 // loop_exit
                _
            $region36: #{resnet_forward.21} parent=31 // pred_fallthru
              _
            // Predicated region
            $region44: #{resnet_forward.21} parent=31 // pred_check
              _
            $region45: #{resnet_forward.21} parent=31 // pred_check_branch
              %234 = sbr.rel target = $region47
            $region46: #{resnet_forward.21} parent=31 // pred_region
              _
            $region47: #{resnet_forward.21} parent=31 // pred_fallthru
              _
          $region32: #{resnet_forward.21} parent=27 // pred_fallthru
            _
          %235 = vnop
        $region28: #{resnet_forward.21} parent=23 // pred_fallthru
          _
        // Predicated region
        $region48: #{resnet_forward.21} parent=23 // pred_check
          %p236 = pneg %p79
        $region49: #{resnet_forward.21} parent=23 // pred_check_branch
          %238 = sbr.rel (%p236) target = $region51
        $region50: #{resnet_forward.21} parent=23 // pred_region
          %s239 = smul.u32 64, %s19
          %s240 = smul.u32 2, %s18
          %p241 = scmp.lt.s32.totalorder %s239, 191
          %s242 = scalar_select %p241, %s239, 191
          %p243 = scmp.lt.s32.totalorder %s240, 1
          %s244 = scalar_select %p243, %s240, 1
          %s245 = smul.addr %s242, 2
          %s246 = sadd.s32 %s244, %s245
          %s247 = smul.addr %s246, 4
          %s248 = scalar_lea.vmem %s1, %s247
          %s249 = smul.u32 64, %s19
          %s250 = smul.u32 2, %s18
        $region51: #{resnet_forward.21} parent=23 // pred_fallthru
          _
      $region24: #{resnet_forward.21} parent=5 // pred_fallthru
        _
      %p251 = scmp.le.s32.totalorder 1, %s10
      %p252 = scmp.lt.s32.totalorder %s10, 4
      %p253 = pnand %p251, %p252
      %p254 = pneg %p253
      // Predicated region
      $region52: #{resnet_forward.21} parent=5 // pred_check
        _
      $region53: #{resnet_forward.21} parent=5 // pred_check_branch
        %256 = sbr.rel (%p253) target = $region55
      $region54: #{resnet_forward.21} parent=5 // pred_region
        %s257 = ssub.s32 %s10, 1
        %s258 = sand.u32 %s44, 1
        %s259 = sand.u32 %s44, 1
        %s260 = smul.addr %s259, 32
        %s261 = scalar_lea.vmem [#allocation3], %s260
        // Predicated region
        $region56: #{resnet_forward.21} parent=54 // pred_check
          %p262 = pneg %p57
        $region57: #{resnet_forward.21} parent=54 // pred_check_branch
          %264 = sbr.rel (%p262) target = $region59
        $region58: #{resnet_forward.21} parent=54 // pred_region
          _
        $region59: #{resnet_forward.21} parent=54 // pred_fallthru
          _
        %s265 = sand.u32 %s44, 1
        %s266 = sand.u32 %s44, 1
        %s267 = smul.addr %s266, 32
        %s268 = scalar_lea.vmem [#allocation3], %s267
        %p269 = pneg %p57
        %p270 = pneg %p54
        %s271 = smul.u32 64, %s22
        %s272 = smul.u32 2, %s21
        %p273 = scmp.lt.s32.totalorder %s271, 191
        %s274 = scalar_select %p273, %s271, 191
        %p275 = scmp.lt.s32.totalorder %s272, 1
        %s276 = scalar_select %p275, %s272, 1
        %s277 = smul.addr %s274, 2
        %s278 = sadd.s32 %s276, %s277
        %s279 = smul.addr %s278, 4
        %s280 = scalar_lea.vmem %s1, %s279
        %p281 = pneg %p85
        %p282 = pneg %p82
        %s283 = smul.u32 2, %s21
        %p284 = scmp.lt.s32.totalorder %s283, 1
        %s285 = scalar_select %p284, %s283, 1
        %s286 = scalar_lea.vmem %s2, %s285
        %p287 = pneg %p111
        %p288 = pneg %p108
        %s289 = smul.u32 2, %s21
        %p290 = scmp.lt.s32.totalorder %s289, 1
        %s291 = scalar_select %p290, %s289, 1
        %s292 = scalar_lea.vmem %s3, %s291
        %p293 = pneg %p137
        %p294 = pneg %p134
        %p295 = pneg %p165
        %p296 = pneg %p162
        %s297 = smul.u32 2, %s20
        %s298 = smul.u32 2, %s21
        %p299 = scmp.lt.s32.totalorder %s297, 1
        %s300 = scalar_select %p299, %s297, 1
        %p301 = scmp.lt.s32.totalorder %s298, 1
        %s302 = scalar_select %p301, %s298, 1
        %s303 = smul.addr %s300, 2
        %s304 = sadd.s32 %s302, %s303
        %s305 = smul.addr %s304, 4
        %s306 = scalar_lea.vmem %s4, %s305
        %s307 = smul.u32 2, %s20
        %s308 = smul.u32 4, %s22
        %s309 = smul.u32 64, %s22
        %s310 = smul.u32 2, %s21
        %p311 = scmp.lt.s32.totalorder %s309, 191
        %s312 = scalar_select %p311, %s309, 191
        %p313 = scmp.lt.s32.totalorder %s310, 1
        %s314 = scalar_select %p313, %s310, 1
        %s315 = smul.addr %s312, 2
        %s316 = sadd.s32 %s314, %s315
        %s317 = smul.addr %s316, 4
        %s318 = scalar_lea.vmem %s1, %s317
        %s319 = smul.u32 64, %s22
        %s320 = smul.u32 2, %s21
        %s321 = smul.u32 2, %s21
        %p322 = scmp.lt.s32.totalorder %s321, 1
        %s323 = scalar_select %p322, %s321, 1
        %s324 = scalar_lea.vmem %s2, %s323
        %s325 = smul.u32 2, %s21
        %s326 = smul.u32 2, %s21
        %p327 = scmp.lt.s32.totalorder %s326, 1
        %s328 = scalar_select %p327, %s326, 1
        %s329 = scalar_lea.vmem %s3, %s328
        %s330 = smul.u32 2, %s21
        %s331 = smul.u32 2, %s20
        %s332 = smul.u32 2, %s21
        %p333 = scmp.lt.s32.totalorder %s331, 1
        %s334 = scalar_select %p333, %s331, 1
        %p335 = scmp.lt.s32.totalorder %s332, 1
        %s336 = scalar_select %p335, %s332, 1
        %s337 = smul.addr %s334, 2
        %s338 = sadd.s32 %s336, %s337
        %s339 = smul.addr %s338, 4
        %s340 = scalar_lea.vmem %s4, %s339
        %s341 = smul.u32 2, %s20
        %s342 = smul.u32 2, %s21
        %p343 = scmp.eq.s32.totalorder %s22, 0
        // Predicated region
        $region60: #{resnet_forward.21} parent=54 // pred_check
          %p344 = pneg %p343
        $region61: #{resnet_forward.21} parent=54 // pred_check_branch
          %346 = sbr.rel (%p344) target = $region63
        $region62: #{resnet_forward.21} parent=54 // pred_region
          %347 = vst [vmem:[#allocation2] sm:$0xff] 0.0
          %348 = vst [vmem:[#allocation2 + $0x8] sm:$0xff] 0.0
          %349 = vst [vmem:[#allocation2 + $0x10] sm:$0xff] 0.0
          %350 = vst [vmem:[#allocation2 + $0x18] sm:$0xff] 0.0
        $region63: #{resnet_forward.21} parent=54 // pred_fallthru
          _
        %v351 = vld [vmem:[#allocation2] sm:$0xff]
        %v352 = vld [vmem:[#allocation2 + $0x8] sm:$0xff]
        %v353 = vld [vmem:[#allocation2 + $0x10] sm:$0xff]
        %v354 = vld [vmem:[#allocation2 + $0x18] sm:$0xff]
        %v355 = vld [vmem:[%s261] sm:$0xff]
        %v356 = vld [vmem:[%s261 + $0x8] sm:$0xff]
        %v357 = vld [vmem:[%s261 + $0x10] sm:$0xff]
        %v358 = vld [vmem:[%s261 + $0x18] sm:$0xff]
        %v359 = vld [vmem:[%s318] sm:$0xff]
        %v360 = vld [vmem:[%s318 + $0x8] sm:$0xff]
        %v361 = vld [vmem:[%s318 + $0x10] sm:$0xff]
        %v362 = vld [vmem:[%s318 + $0x18] sm:$0xff]
        %v363 = vld [vmem:[%s318 + $0x20] sm:$0xff]
        %v364 = vld [vmem:[%s318 + $0x28] sm:$0xff]
        %v365 = vld [vmem:[%s318 + $0x30] sm:$0xff]
        %v366 = vld [vmem:[%s318 + $0x38] sm:$0xff]
        %v367 = vld [vmem:[%s318 + $0x40] sm:$0xff]
        %v368 = vld [vmem:[%s318 + $0x48] sm:$0xff]
        %v369 = vld [vmem:[%s318 + $0x50] sm:$0xff]
        %v370 = vld [vmem:[%s318 + $0x58] sm:$0xff]
        %v371 = vld [vmem:[%s318 + $0x60] sm:$0xff]
        %v372 = vld [vmem:[%s318 + $0x68] sm:$0xff]
        %v373 = vld [vmem:[%s318 + $0x70] sm:$0xff]
        %v374 = vld [vmem:[%s318 + $0x78] sm:$0xff]
        %v375 = vld [vmem:[%s318 + $0x80] sm:$0xff]
        %v376 = vld [vmem:[%s318 + $0x88] sm:$0xff]
        %v377 = vld [vmem:[%s318 + $0x90] sm:$0xff]
        %v378 = vld [vmem:[%s318 + $0x98] sm:$0xff]
        %v379 = vld [vmem:[%s318 + $0xa0] sm:$0xff]
        %v380 = vld [vmem:[%s318 + $0xa8] sm:$0xff]
        %v381 = vld [vmem:[%s318 + $0xb0] sm:$0xff]
        %v382 = vld [vmem:[%s318 + $0xb8] sm:$0xff]
        %v383 = vld [vmem:[%s318 + $0xc0] sm:$0xff]
        %v384 = vld [vmem:[%s318 + $0xc8] sm:$0xff]
        %v385 = vld [vmem:[%s318 + $0xd0] sm:$0xff]
        %v386 = vld [vmem:[%s318 + $0xd8] sm:$0xff]
        %v387 = vld [vmem:[%s318 + $0xe0] sm:$0xff]
        %v388 = vld [vmem:[%s318 + $0xe8] sm:$0xff]
        %v389 = vld [vmem:[%s318 + $0xf0] sm:$0xff]
        %v390 = vld [vmem:[%s318 + $0xf8] sm:$0xff]
        %v391 = vld [vmem:[%s318 + $0x100] sm:$0xff]
        %v392 = vld [vmem:[%s318 + $0x108] sm:$0xff]
        %v393 = vld [vmem:[%s318 + $0x110] sm:$0xff]
        %v394 = vld [vmem:[%s318 + $0x118] sm:$0xff]
        %v395 = vld [vmem:[%s318 + $0x120] sm:$0xff]
        %v396 = vld [vmem:[%s318 + $0x128] sm:$0xff]
        %v397 = vld [vmem:[%s318 + $0x130] sm:$0xff]
        %v398 = vld [vmem:[%s318 + $0x138] sm:$0xff]
        %v399 = vld [vmem:[%s318 + $0x140] sm:$0xff]
        %v400 = vld [vmem:[%s318 + $0x148] sm:$0xff]
        %v401 = vld [vmem:[%s318 + $0x150] sm:$0xff]
        %v402 = vld [vmem:[%s318 + $0x158] sm:$0xff]
        %v403 = vld [vmem:[%s318 + $0x160] sm:$0xff]
        %v404 = vld [vmem:[%s318 + $0x168] sm:$0xff]
        %v405 = vld [vmem:[%s318 + $0x170] sm:$0xff]
        %v406 = vld [vmem:[%s318 + $0x178] sm:$0xff]
        %v407 = vld [vmem:[%s318 + $0x180] sm:$0xff]
        %v408 = vld [vmem:[%s318 + $0x188] sm:$0xff]
        %v409 = vld [vmem:[%s318 + $0x190] sm:$0xff]
        %v410 = vld [vmem:[%s318 + $0x198] sm:$0xff]
        %v411 = vld [vmem:[%s318 + $0x1a0] sm:$0xff]
        %v412 = vld [vmem:[%s318 + $0x1a8] sm:$0xff]
        %v413 = vld [vmem:[%s318 + $0x1b0] sm:$0xff]
        %v414 = vld [vmem:[%s318 + $0x1b8] sm:$0xff]
        %v415 = vld [vmem:[%s318 + $0x1c0] sm:$0xff]
        %v416 = vld [vmem:[%s318 + $0x1c8] sm:$0xff]
        %v417 = vld [vmem:[%s318 + $0x1d0] sm:$0xff]
        %v418 = vld [vmem:[%s318 + $0x1d8] sm:$0xff]
        %v419 = vld [vmem:[%s318 + $0x1e0] sm:$0xff]
        %v420 = vld [vmem:[%s318 + $0x1e8] sm:$0xff]
        %v421 = vld [vmem:[%s318 + $0x1f0] sm:$0xff]
        %v422 = vld [vmem:[%s318 + $0x1f8] sm:$0xff]
        %v427 = vunpack.c.l.b16 %v355
        %v428 = vunpack.c.h.b16 %v355
        %v429 = vunpack.c.l.b16 %v356
        %v430 = vunpack.c.h.b16 %v356
        %v431 = vunpack.c.l.b16 %v357
        %v432 = vunpack.c.h.b16 %v357
        %v433 = vunpack.c.l.b16 %v358
        %v434 = vunpack.c.h.b16 %v358
        %v435 = vpack.c.b16 %v431, %v427
        %v436 = vpack.c.b16 %v432, %v428
        %v437 = vpack.c.b16 %v433, %v429
        %v438 = vpack.c.b16 %v434, %v430
        %v507 = vunpack.c.l.b16 %v359
        %v508 = vunpack.c.h.b16 %v359
        %v509 = vunpack.c.l.b16 %v360
        %v510 = vunpack.c.h.b16 %v360
        %v511 = vunpack.c.l.b16 %v361
        %v512 = vunpack.c.h.b16 %v361
        %v513 = vunpack.c.l.b16 %v362
        %v514 = vunpack.c.h.b16 %v362
        %v515 = vunpack.c.l.b16 %v363
        %v516 = vunpack.c.h.b16 %v363
        %v517 = vunpack.c.l.b16 %v364
        %v518 = vunpack.c.h.b16 %v364
        %v519 = vunpack.c.l.b16 %v365
        %v520 = vunpack.c.h.b16 %v365
        %v521 = vunpack.c.l.b16 %v366
        %v522 = vunpack.c.h.b16 %v366
        %v523 = vunpack.c.l.b16 %v367
        %v524 = vunpack.c.h.b16 %v367
        %v525 = vunpack.c.l.b16 %v368
        %v526 = vunpack.c.h.b16 %v368
        %v527 = vunpack.c.l.b16 %v369
        %v528 = vunpack.c.h.b16 %v369
        %v529 = vunpack.c.l.b16 %v370
        %v530 = vunpack.c.h.b16 %v370
        %v531 = vunpack.c.l.b16 %v371
        %v532 = vunpack.c.h.b16 %v371
        %v533 = vunpack.c.l.b16 %v372
        %v534 = vunpack.c.h.b16 %v372
        %v535 = vunpack.c.l.b16 %v373
        %v536 = vunpack.c.h.b16 %v373
        %v537 = vunpack.c.l.b16 %v374
        %v538 = vunpack.c.h.b16 %v374
        %v539 = vunpack.c.l.b16 %v375
        %v540 = vunpack.c.h.b16 %v375
        %v541 = vunpack.c.l.b16 %v376
        %v542 = vunpack.c.h.b16 %v376
        %v543 = vunpack.c.l.b16 %v377
        %v544 = vunpack.c.h.b16 %v377
        %v545 = vunpack.c.l.b16 %v378
        %v546 = vunpack.c.h.b16 %v378
        %v547 = vunpack.c.l.b16 %v379
        %v548 = vunpack.c.h.b16 %v379
        %v549 = vunpack.c.l.b16 %v380
        %v550 = vunpack.c.h.b16 %v380
        %v551 = vunpack.c.l.b16 %v381
        %v552 = vunpack.c.h.b16 %v381
        %v553 = vunpack.c.l.b16 %v382
        %v554 = vunpack.c.h.b16 %v382
        %v555 = vunpack.c.l.b16 %v383
        %v556 = vunpack.c.h.b16 %v383
        %v557 = vunpack.c.l.b16 %v384
        %v558 = vunpack.c.h.b16 %v384
        %v559 = vunpack.c.l.b16 %v385
        %v560 = vunpack.c.h.b16 %v385
        %v561 = vunpack.c.l.b16 %v386
        %v562 = vunpack.c.h.b16 %v386
        %v563 = vunpack.c.l.b16 %v387
        %v564 = vunpack.c.h.b16 %v387
        %v565 = vunpack.c.l.b16 %v388
        %v566 = vunpack.c.h.b16 %v388
        %v567 = vunpack.c.l.b16 %v389
        %v568 = vunpack.c.h.b16 %v389
        %v569 = vunpack.c.l.b16 %v390
        %v570 = vunpack.c.h.b16 %v390
        %v571 = vunpack.c.l.b16 %v391
        %v572 = vunpack.c.h.b16 %v391
        %v573 = vunpack.c.l.b16 %v392
        %v574 = vunpack.c.h.b16 %v392
        %v575 = vunpack.c.l.b16 %v393
        %v576 = vunpack.c.h.b16 %v393
        %v577 = vunpack.c.l.b16 %v394
        %v578 = vunpack.c.h.b16 %v394
        %v579 = vunpack.c.l.b16 %v395
        %v580 = vunpack.c.h.b16 %v395
        %v581 = vunpack.c.l.b16 %v396
        %v582 = vunpack.c.h.b16 %v396
        %v583 = vunpack.c.l.b16 %v397
        %v584 = vunpack.c.h.b16 %v397
        %v585 = vunpack.c.l.b16 %v398
        %v586 = vunpack.c.h.b16 %v398
        %v587 = vunpack.c.l.b16 %v399
        %v588 = vunpack.c.h.b16 %v399
        %v589 = vunpack.c.l.b16 %v400
        %v590 = vunpack.c.h.b16 %v400
        %v591 = vunpack.c.l.b16 %v401
        %v592 = vunpack.c.h.b16 %v401
        %v593 = vunpack.c.l.b16 %v402
        %v594 = vunpack.c.h.b16 %v402
        %v595 = vunpack.c.l.b16 %v403
        %v596 = vunpack.c.h.b16 %v403
        %v597 = vunpack.c.l.b16 %v404
        %v598 = vunpack.c.h.b16 %v404
        %v599 = vunpack.c.l.b16 %v405
        %v600 = vunpack.c.h.b16 %v405
        %v601 = vunpack.c.l.b16 %v406
        %v602 = vunpack.c.h.b16 %v406
        %v603 = vunpack.c.l.b16 %v407
        %v604 = vunpack.c.h.b16 %v407
        %v605 = vunpack.c.l.b16 %v408
        %v606 = vunpack.c.h.b16 %v408
        %v607 = vunpack.c.l.b16 %v409
        %v608 = vunpack.c.h.b16 %v409
        %v609 = vunpack.c.l.b16 %v410
        %v610 = vunpack.c.h.b16 %v410
        %v611 = vunpack.c.l.b16 %v411
        %v612 = vunpack.c.h.b16 %v411
        %v613 = vunpack.c.l.b16 %v412
        %v614 = vunpack.c.h.b16 %v412
        %v615 = vunpack.c.l.b16 %v413
        %v616 = vunpack.c.h.b16 %v413
        %v617 = vunpack.c.l.b16 %v414
        %v618 = vunpack.c.h.b16 %v414
        %v619 = vunpack.c.l.b16 %v415
        %v620 = vunpack.c.h.b16 %v415
        %v621 = vunpack.c.l.b16 %v416
        %v622 = vunpack.c.h.b16 %v416
        %v623 = vunpack.c.l.b16 %v417
        %v624 = vunpack.c.h.b16 %v417
        %v625 = vunpack.c.l.b16 %v418
        %v626 = vunpack.c.h.b16 %v418
        %v627 = vunpack.c.l.b16 %v419
        %v628 = vunpack.c.h.b16 %v419
        %v629 = vunpack.c.l.b16 %v420
        %v630 = vunpack.c.h.b16 %v420
        %v631 = vunpack.c.l.b16 %v421
        %v632 = vunpack.c.h.b16 %v421
        %v633 = vunpack.c.l.b16 %v422
        %v634 = vunpack.c.h.b16 %v422
        %v635 = vpack.c.b16 %v509, %v507
        %v636 = vpack.c.b16 %v510, %v508
        %v637 = vpack.c.b16 %v513, %v511
        %v638 = vpack.c.b16 %v514, %v512
        %v639 = vpack.c.b16 %v517, %v515
        %v640 = vpack.c.b16 %v518, %v516
        %v641 = vpack.c.b16 %v521, %v519
        %v642 = vpack.c.b16 %v522, %v520
        %v643 = vpack.c.b16 %v525, %v523
        %v644 = vpack.c.b16 %v526, %v524
        %v645 = vpack.c.b16 %v529, %v527
        %v646 = vpack.c.b16 %v530, %v528
        %v647 = vpack.c.b16 %v533, %v531
        %v648 = vpack.c.b16 %v534, %v532
        %v649 = vpack.c.b16 %v537, %v535
        %v650 = vpack.c.b16 %v538, %v536
        %v651 = vpack.c.b16 %v541, %v539
        %v652 = vpack.c.b16 %v542, %v540
        %v653 = vpack.c.b16 %v545, %v543
        %v654 = vpack.c.b16 %v546, %v544
        %v655 = vpack.c.b16 %v549, %v547
        %v656 = vpack.c.b16 %v550, %v548
        %v657 = vpack.c.b16 %v553, %v551
        %v658 = vpack.c.b16 %v554, %v552
        %v659 = vpack.c.b16 %v557, %v555
        %v660 = vpack.c.b16 %v558, %v556
        %v661 = vpack.c.b16 %v561, %v559
        %v662 = vpack.c.b16 %v562, %v560
        %v663 = vpack.c.b16 %v565, %v563
        %v664 = vpack.c.b16 %v566, %v564
        %v665 = vpack.c.b16 %v569, %v567
        %v666 = vpack.c.b16 %v570, %v568
        %v667 = vpack.c.b16 %v573, %v571
        %v668 = vpack.c.b16 %v574, %v572
        %v669 = vpack.c.b16 %v577, %v575
        %v670 = vpack.c.b16 %v578, %v576
        %v671 = vpack.c.b16 %v581, %v579
        %v672 = vpack.c.b16 %v582, %v580
        %v673 = vpack.c.b16 %v585, %v583
        %v674 = vpack.c.b16 %v586, %v584
        %v675 = vpack.c.b16 %v589, %v587
        %v676 = vpack.c.b16 %v590, %v588
        %v677 = vpack.c.b16 %v593, %v591
        %v678 = vpack.c.b16 %v594, %v592
        %v679 = vpack.c.b16 %v597, %v595
        %v680 = vpack.c.b16 %v598, %v596
        %v681 = vpack.c.b16 %v601, %v599
        %v682 = vpack.c.b16 %v602, %v600
        %v683 = vpack.c.b16 %v605, %v603
        %v684 = vpack.c.b16 %v606, %v604
        %v685 = vpack.c.b16 %v609, %v607
        %v686 = vpack.c.b16 %v610, %v608
        %v687 = vpack.c.b16 %v613, %v611
        %v688 = vpack.c.b16 %v614, %v612
        %v689 = vpack.c.b16 %v617, %v615
        %v690 = vpack.c.b16 %v618, %v616
        %v691 = vpack.c.b16 %v621, %v619
        %v692 = vpack.c.b16 %v622, %v620
        %v693 = vpack.c.b16 %v625, %v623
        %v694 = vpack.c.b16 %v626, %v624
        %v695 = vpack.c.b16 %v629, %v627
        %v696 = vpack.c.b16 %v630, %v628
        %v697 = vpack.c.b16 %v633, %v631
        %v698 = vpack.c.b16 %v634, %v632
        %763 = vmatprep.subr.bf16.mxu0 %v650
        %764 = vmatpush1.bf16.msra.mxu0 %v649
        %765 = vmatprep.subr.bf16.mxu0 %v648
        %766 = vmatpush1.bf16.msra.mxu0 %v647
        %767 = vmatprep.subr.bf16.mxu0 %v646
        %768 = vmatpush1.bf16.msra.mxu0 %v645
        %769 = vmatprep.subr.bf16.mxu0 %v644
        %770 = vmatpush1.bf16.msra.mxu0 %v643
        %771 = vmatprep.subr.bf16.mxu0 %v642
        %772 = vmatpush1.bf16.msra.mxu0 %v641
        %773 = vmatprep.subr.bf16.mxu0 %v640
        %774 = vmatpush1.bf16.msra.mxu0 %v639
        %775 = vmatprep.subr.bf16.mxu0 %v638
        %776 = vmatpush1.bf16.msra.mxu0 %v637
        %777 = vmatprep.subr.bf16.mxu0 %v636
        %778 = vmatpush1.bf16.msra.mxu0 %v635
        %779 = vmatprep.subr.bf16.mxu0 %v666
        %780 = vmatpush2.bf16.msra.mxu0 %v665
        %781 = vmatprep.subr.bf16.mxu0 %v664
        %782 = vmatpush2.bf16.msra.mxu0 %v663
        %783 = vmatprep.subr.bf16.mxu0 %v662
        %784 = vmatpush2.bf16.msra.mxu0 %v661
        %785 = vmatprep.subr.bf16.mxu0 %v660
        %786 = vmatpush2.bf16.msra.mxu0 %v659
        %787 = vmatprep.subr.bf16.mxu0 %v658
        %788 = vmatpush2.bf16.msra.mxu0 %v657
        %789 = vmatprep.subr.bf16.mxu0 %v656
        %790 = vmatpush2.bf16.msra.mxu0 %v655
        %791 = vmatprep.subr.bf16.mxu0 %v654
        %792 = vmatpush2.bf16.msra.mxu0 %v653
        %793 = vmatprep.subr.bf16.mxu0 %v652
        %794 = vmatpush2.bf16.msra.mxu0 %v651
        %795 = vmatprep.mubr.bf16.mxu0 %v436
        %796 = vmatmul.mubr.bf16.gmra.mxu0 %v435
        %v797 = vpop.f32.mrf.mxu0
        %v798 = vadd.f32 0.0, %v797
        %v799 = vpop.f32.mrf.mxu0
        %v800 = vadd.f32 0.0, %v799
        %v801 = vpop.f32.mrf.mxu0
        %v802 = vadd.f32 0.0, %v801
        %v803 = vpop.f32.mrf.mxu0
        %v804 = vadd.f32 0.0, %v803
        %805 = vdwg.mxu0
        %806 = vmatprep.subr.bf16.mxu0 %v682
        %807 = vmatpush1.bf16.msra.mxu0 %v681
        %808 = vmatprep.subr.bf16.mxu0 %v680
        %809 = vmatpush1.bf16.msra.mxu0 %v679
        %810 = vmatprep.subr.bf16.mxu0 %v678
        %811 = vmatpush1.bf16.msra.mxu0 %v677
        %812 = vmatprep.subr.bf16.mxu0 %v676
        %813 = vmatpush1.bf16.msra.mxu0 %v675
        %814 = vmatprep.subr.bf16.mxu0 %v674
        %815 = vmatpush1.bf16.msra.mxu0 %v673
        %816 = vmatprep.subr.bf16.mxu0 %v672
        %817 = vmatpush1.bf16.msra.mxu0 %v671
        %818 = vmatprep.subr.bf16.mxu0 %v670
        %819 = vmatpush1.bf16.msra.mxu0 %v669
        %820 = vmatprep.subr.bf16.mxu0 %v668
        %821 = vmatpush1.bf16.msra.mxu0 %v667
        %822 = vmatprep.subr.bf16.mxu0 %v698
        %823 = vmatpush2.bf16.msra.mxu0 %v697
        %824 = vmatprep.subr.bf16.mxu0 %v696
        %825 = vmatpush2.bf16.msra.mxu0 %v695
        %826 = vmatprep.subr.bf16.mxu0 %v694
        %827 = vmatpush2.bf16.msra.mxu0 %v693
        %828 = vmatprep.subr.bf16.mxu0 %v692
        %829 = vmatpush2.bf16.msra.mxu0 %v691
        %830 = vmatprep.subr.bf16.mxu0 %v690
        %831 = vmatpush2.bf16.msra.mxu0 %v689
        %832 = vmatprep.subr.bf16.mxu0 %v688
        %833 = vmatpush2.bf16.msra.mxu0 %v687
        %834 = vmatprep.subr.bf16.mxu0 %v686
        %835 = vmatpush2.bf16.msra.mxu0 %v685
        %836 = vmatprep.subr.bf16.mxu0 %v684
        %837 = vmatpush2.bf16.msra.mxu0 %v683
        %838 = vmatprep.mubr.bf16.mxu0 %v438
        %839 = vmatmul.mubr.bf16.gmra.mxu0 %v437
        %v840 = vpop.f32.mrf.mxu0
        %v841 = vadd.f32 %v798, %v840
        %v842 = vpop.f32.mrf.mxu0
        %v843 = vadd.f32 %v800, %v842
        %v844 = vpop.f32.mrf.mxu0
        %v845 = vadd.f32 %v802, %v844
        %v846 = vpop.f32.mrf.mxu0
        %v847 = vadd.f32 %v804, %v846
        %848 = vdwg.mxu0
        %v849 = vadd.f32 %v351, %v841
        %v850 = vadd.f32 %v352, %v843
        %v851 = vadd.f32 %v353, %v845
        %v852 = vadd.f32 %v354, %v847
        %853 = vst [vmem:[#allocation2] sm:$0xff] %v849
        %854 = vst [vmem:[#allocation2 + $0x8] sm:$0xff] %v850
        %855 = vst [vmem:[#allocation2 + $0x10] sm:$0xff] %v851
        %856 = vst [vmem:[#allocation2 + $0x18] sm:$0xff] %v852
        %p857 = scmp.eq.s32.totalorder %s22, 2
        // Predicated region
        $region64: #{resnet_forward.21} parent=54 // pred_check
          %p858 = pneg %p857
        $region65: #{resnet_forward.21} parent=54 // pred_check_branch
          %860 = sbr.rel (%p858) target = $region67
        $region66: #{resnet_forward.21} parent=54 // pred_region
          %v861 = vld [vmem:[#allocation2] sm:$0xff]
          %v862 = vld [vmem:[#allocation2 + $0x8] sm:$0xff]
          %v863 = vld [vmem:[#allocation2 + $0x10] sm:$0xff]
          %v864 = vld [vmem:[#allocation2 + $0x18] sm:$0xff]
          %v865 = vld [vmem:[%s324] sm:$0x3]
          %v867 = vlaneseq
          %v868 = vshrl.u32 %v867, 7
          %v869 = vsub.s32 0, %v868
          %v870 = vrot.slane %v865, %v869
          %v871 = vlaneseq
          %v872 = vshrl.u32 %v871, 7
          %v873 = vsub.s32 1, %v872
          %v874 = vrot.slane %v865, %v873
          %v877 = vmul.f32 %v861, %v870
          %v878 = vmul.f32 %v862, %v874
          %v879 = vmul.f32 %v863, %v870
          %v880 = vmul.f32 %v864, %v874
          %v881 = vld [vmem:[%s329] sm:$0x3]
          %v883 = vlaneseq
          %v884 = vshrl.u32 %v883, 7
          %v885 = vsub.s32 0, %v884
          %v886 = vrot.slane %v881, %v885
          %v887 = vlaneseq
          %v888 = vshrl.u32 %v887, 7
          %v889 = vsub.s32 1, %v888
          %v890 = vrot.slane %v881, %v889
          %v893 = vadd.f32 %v877, %v886
          %v894 = vadd.f32 %v878, %v890
          %v895 = vadd.f32 %v879, %v886
          %v896 = vadd.f32 %v880, %v890
          %v897 = vmax.f32 %v893, 0.0
          %v898 = vmax.f32 %v894, 0.0
          %v899 = vmax.f32 %v895, 0.0
          %v900 = vmax.f32 %v896, 0.0
          %v901 = vpack.c.bf16 %v899, %v897
          %v902 = vpack.c.bf16 %v900, %v898
          %v905 = vunpack.c.l.b16 %v901
          %v906 = vunpack.c.l.b16 %v902
          %v907 = vunpack.c.h.b16 %v901
          %v908 = vunpack.c.h.b16 %v902
          %v909 = vpack.c.b16 %v906, %v905
          %v910 = vpack.c.b16 %v908, %v907
          %913 = vst [vmem:[%s340] sm:$0xff] %v909
          %914 = vst [vmem:[%s340 + $0x8] sm:$0xff] %v910
        $region67: #{resnet_forward.21} parent=54 // pred_fallthru
          _
        %s915 = smul.u32 2, %s20
        %s916 = smul.u32 2, %s21
        %p917 = scmp.lt.s32.totalorder %s915, 1
        %s918 = scalar_select %p917, %s915, 1
        %p919 = scmp.lt.s32.totalorder %s916, 1
        %s920 = scalar_select %p919, %s916, 1
        %s921 = smul.addr %s918, 2
        %s922 = sadd.s32 %s920, %s921
        %s923 = smul.addr %s922, 4
        %s924 = scalar_lea.vmem %s4, %s923
        // Predicated region
        $region68: #{resnet_forward.21} parent=54 // pred_check
          %p925 = pneg %p162
        $region69: #{resnet_forward.21} parent=54 // pred_check_branch
          %927 = sbr.rel (%p925) target = $region71
        $region70: #{resnet_forward.21} parent=54 // pred_region
          %s928 = smul.u32 2, %s20
          %s929 = smul.u32 2, %s21
        $region71: #{resnet_forward.21} parent=54 // pred_fallthru
          _
        // Predicated region
        $region72: #{resnet_forward.21} parent=54 // pred_check
          %p930 = pneg %p162
        $region73: #{resnet_forward.21} parent=54 // pred_check_branch
          %932 = sbr.rel (%p930) target = $region75
        $region74: #{resnet_forward.21} parent=54 // pred_region
          %s933 = smul.u32 2, %s20
          %s934 = smul.u32 2, %s21
          %p935 = scmp.lt.s32.totalorder %s933, 1
          %s936 = scalar_select %p935, %s933, 1
          %p937 = scmp.lt.s32.totalorder %s934, 1
          %s938 = scalar_select %p937, %s934, 1
          %s939 = smul.addr %s936, 2
          %s940 = sadd.s32 %s938, %s939
          %s941 = smul.addr %s940, 4
          %s942 = scalar_lea.vmem %s4, %s941
        $region75: #{resnet_forward.21} parent=54 // pred_fallthru
          _
      $region55: #{resnet_forward.21} parent=5 // pred_fallthru
        _
      %p943 = scmp.le.s32.totalorder 2, %s10
      // Predicated region
      $region76: #{resnet_forward.21} parent=5 // pred_check
        %p944 = pneg %p943
      $region77: #{resnet_forward.21} parent=5 // pred_check_branch
        %946 = sbr.rel (%p944) target = $region79
      $region78: #{resnet_forward.21} parent=5 // pred_region
        %s947 = ssub.s32 %s10, 2
      $region79: #{resnet_forward.21} parent=5 // pred_fallthru
        _
    $region6: #{resnet_forward.21} parent=1 // loop_footer
      %s14 = sadd.s32 1, %s10
    $region7: #{resnet_forward.21} parent=1 // loop_footer_branch
      %9 = sbr.rel target = $region3
    $region8: #{resnet_forward.21} parent=1 // loop_exit
      _

// kernel: resnet_forward.20
$region0: #{resnet_forward.20}
  #allocation0 [shape = 'u32[]', space=smem, size = 0x4, offset = 0x4, fixed_abs, tag = 'smem constant byte address 0x4 - core index']
  #allocation1 [shape = 'u32[144,128]{1,0:T(1,128)}', space=vmem, size = 0x12000, scoped, tag = 'internal scratch']
  #allocation2 [shape = 'f32[16,256]{1,0:T(8,128)}', space=vmem, size = 0x4000, scoped, tag = 'scratch operand']
  %s0 = inlined_call_operand.vmem [shape: bf16[16,128], index: 0, kind: input, shape index: {}]
  %s1 = inlined_call_operand.vmem [shape: bf16[128,256], index: 1, kind: input, shape index: {}]
  %s2 = inlined_call_operand.vmem [shape: f32[1,256], index: 2, kind: input, shape index: {}]
  %s3 = inlined_call_operand.vmem [shape: f32[1,256], index: 3, kind: input, shape index: {}]
  %s4 = inlined_call_operand.vmem [shape: bf16[16,256], index: 4, kind: output, shape index: {}]
  %s5 = sld [smem:[#allocation0]]
  $region34: #{resnet_forward.20} parent=0
    _
  %s7 = ssub.s32 1, %s5
  %s8 = scalar_select 0, %s7, %s5
  // Predicated region
  $region2: #{resnet_forward.20} parent=0 // pred_check
    _
  $region3: #{resnet_forward.20} parent=0 // pred_check_branch
    %10 = sbr.rel (0) target = $region5
  $region4: #{resnet_forward.20} parent=0 // pred_region
    _
  $region5: #{resnet_forward.20} parent=0 // pred_fallthru
    _
  // Predicated region
  $region6: #{resnet_forward.20} parent=0 // pred_check
    _
  $region7: #{resnet_forward.20} parent=0 // pred_check_branch
    %12 = sbr.rel (0) target = $region9
  $region8: #{resnet_forward.20} parent=0 // pred_region
    _
  $region9: #{resnet_forward.20} parent=0 // pred_fallthru
    _
  // Predicated region
  $region10: #{resnet_forward.20} parent=0 // pred_check
    _
  $region11: #{resnet_forward.20} parent=0 // pred_check_branch
    %14 = sbr.rel (0) target = $region13
  $region12: #{resnet_forward.20} parent=0 // pred_region
    _
  $region13: #{resnet_forward.20} parent=0 // pred_fallthru
    _
  // Predicated region
  $region14: #{resnet_forward.20} parent=0 // pred_check
    _
  $region15: #{resnet_forward.20} parent=0 // pred_check_branch
    %16 = sbr.rel (0) target = $region17
  $region16: #{resnet_forward.20} parent=0 // pred_region
    _
  $region17: #{resnet_forward.20} parent=0 // pred_fallthru
    _
  %p18 = scmp.eq.s32.totalorder 0, 0
  // Predicated region
  $region18: #{resnet_forward.20} parent=0 // pred_check
    %p19 = pneg %p18
  $region19: #{resnet_forward.20} parent=0 // pred_check_branch
    %21 = sbr.rel (%p19) target = $region21
  $region20: #{resnet_forward.20} parent=0 // pred_region
    %22 = vst [vmem:[#allocation2] sm:$0xff] 0.0
    %23 = vst [vmem:[#allocation2 + $0x8] sm:$0xff] 0.0
    %24 = vst [vmem:[#allocation2 + $0x10] sm:$0xff] 0.0
    %25 = vst [vmem:[#allocation2 + $0x18] sm:$0xff] 0.0
  $region21: #{resnet_forward.20} parent=0 // pred_fallthru
    _
  %v26 = vld [vmem:[#allocation2] sm:$0xff]
  %v27 = vld [vmem:[#allocation2 + $0x8] sm:$0xff]
  %v28 = vld [vmem:[#allocation2 + $0x10] sm:$0xff]
  %v29 = vld [vmem:[#allocation2 + $0x18] sm:$0xff]
  %v30 = vld [vmem:[%s0] sm:$0xf]
  %v31 = vld [vmem:[%s0 + $0x4] sm:$0xf]
  %v32 = vld [vmem:[%s1] sm:$0xff]
  %v33 = vld [vmem:[%s1 + $0x8] sm:$0xff]
  %v34 = vld [vmem:[%s1 + $0x10] sm:$0xff]
  %v35 = vld [vmem:[%s1 + $0x18] sm:$0xff]
  %v36 = vld [vmem:[%s1 + $0x20] sm:$0xff]
  %v37 = vld [vmem:[%s1 + $0x28] sm:$0xff]
  %v38 = vld [vmem:[%s1 + $0x30] sm:$0xff]
  %v39 = vld [vmem:[%s1 + $0x38] sm:$0xff]
  %v40 = vld [vmem:[%s1 + $0x40] sm:$0xff]
  %v41 = vld [vmem:[%s1 + $0x48] sm:$0xff]
  %v42 = vld [vmem:[%s1 + $0x50] sm:$0xff]
  %v43 = vld [vmem:[%s1 + $0x58] sm:$0xff]
  %v44 = vld [vmem:[%s1 + $0x60] sm:$0xff]
  %v45 = vld [vmem:[%s1 + $0x68] sm:$0xff]
  %v46 = vld [vmem:[%s1 + $0x70] sm:$0xff]
  %v47 = vld [vmem:[%s1 + $0x78] sm:$0xff]
  %v50 = vunpack.c.l.b16 %v30
  %v51 = vunpack.c.l.b16 %v31
  %v52 = vpack.c.b16 %v51, %v50
  %v70 = vunpack.c.l.b16 %v32
  %v71 = vunpack.c.h.b16 %v32
  %v72 = vunpack.c.l.b16 %v33
  %v73 = vunpack.c.h.b16 %v33
  %v74 = vunpack.c.l.b16 %v34
  %v75 = vunpack.c.h.b16 %v34
  %v76 = vunpack.c.l.b16 %v35
  %v77 = vunpack.c.h.b16 %v35
  %v78 = vunpack.c.l.b16 %v36
  %v79 = vunpack.c.h.b16 %v36
  %v80 = vunpack.c.l.b16 %v37
  %v81 = vunpack.c.h.b16 %v37
  %v82 = vunpack.c.l.b16 %v38
  %v83 = vunpack.c.h.b16 %v38
  %v84 = vunpack.c.l.b16 %v39
  %v85 = vunpack.c.h.b16 %v39
  %v86 = vunpack.c.l.b16 %v40
  %v87 = vunpack.c.h.b16 %v40
  %v88 = vunpack.c.l.b16 %v41
  %v89 = vunpack.c.h.b16 %v41
  %v90 = vunpack.c.l.b16 %v42
  %v91 = vunpack.c.h.b16 %v42
  %v92 = vunpack.c.l.b16 %v43
  %v93 = vunpack.c.h.b16 %v43
  %v94 = vunpack.c.l.b16 %v44
  %v95 = vunpack.c.h.b16 %v44
  %v96 = vunpack.c.l.b16 %v45
  %v97 = vunpack.c.h.b16 %v45
  %v98 = vunpack.c.l.b16 %v46
  %v99 = vunpack.c.h.b16 %v46
  %v100 = vunpack.c.l.b16 %v47
  %v101 = vunpack.c.h.b16 %v47
  %v102 = vpack.c.b16 %v72, %v70
  %v103 = vpack.c.b16 %v73, %v71
  %v104 = vpack.c.b16 %v76, %v74
  %v105 = vpack.c.b16 %v77, %v75
  %v106 = vpack.c.b16 %v80, %v78
  %v107 = vpack.c.b16 %v81, %v79
  %v108 = vpack.c.b16 %v84, %v82
  %v109 = vpack.c.b16 %v85, %v83
  %v110 = vpack.c.b16 %v88, %v86
  %v111 = vpack.c.b16 %v89, %v87
  %v112 = vpack.c.b16 %v92, %v90
  %v113 = vpack.c.b16 %v93, %v91
  %v114 = vpack.c.b16 %v96, %v94
  %v115 = vpack.c.b16 %v97, %v95
  %v116 = vpack.c.b16 %v100, %v98
  %v117 = vpack.c.b16 %v101, %v99
  %134 = vmatprep.subr.bf16.mxu0 %v117
  %135 = vmatpush1.bf16.msra.mxu0 %v116
  %136 = vmatprep.subr.bf16.mxu0 %v115
  %137 = vmatpush1.bf16.msra.mxu0 %v114
  %138 = vmatprep.subr.bf16.mxu0 %v113
  %139 = vmatpush1.bf16.msra.mxu0 %v112
  %140 = vmatprep.subr.bf16.mxu0 %v111
  %141 = vmatpush1.bf16.msra.mxu0 %v110
  %142 = vmatprep.subr.bf16.mxu0 %v109
  %143 = vmatpush1.bf16.msra.mxu0 %v108
  %144 = vmatprep.subr.bf16.mxu0 %v107
  %145 = vmatpush1.bf16.msra.mxu0 %v106
  %146 = vmatprep.subr.bf16.mxu0 %v105
  %147 = vmatpush1.bf16.msra.mxu0 %v104
  %148 = vmatprep.subr.bf16.mxu0 %v103
  %149 = vmatpush1.bf16.msra.mxu0 %v102
  %150 = vmatprep.subr.bf16.mxu0 0
  %151 = vmatpush2.bf16.msra.mxu0 0
  %152 = vmatprep.subr.bf16.mxu0 0
  %153 = vmatpush2.bf16.msra.mxu0 0
  %154 = vmatprep.subr.bf16.mxu0 0
  %155 = vmatpush2.bf16.msra.mxu0 0
  %156 = vmatprep.subr.bf16.mxu0 0
  %157 = vmatpush2.bf16.msra.mxu0 0
  %158 = vmatprep.subr.bf16.mxu0 0
  %159 = vmatpush2.bf16.msra.mxu0 0
  %160 = vmatprep.subr.bf16.mxu0 0
  %161 = vmatpush2.bf16.msra.mxu0 0
  %162 = vmatprep.subr.bf16.mxu0 0
  %163 = vmatpush2.bf16.msra.mxu0 0
  %164 = vmatprep.subr.bf16.mxu0 0
  %165 = vmatpush2.bf16.msra.mxu0 0
  %166 = vmatprep.mubr.bf16.mxu0 0
  %167 = vmatmul.mubr.bf16.gmra.mxu0 %v52
  %v168 = vpop.f32.mrf.mxu0
  %v169 = vadd.f32 0.0, %v168
  %v170 = vpop.f32.mrf.mxu0
  %v171 = vadd.f32 0.0, %v170
  %v172 = vpop.f32.mrf.mxu0
  %v173 = vadd.f32 0.0, %v172
  %v174 = vpop.f32.mrf.mxu0
  %v175 = vadd.f32 0.0, %v174
  %176 = vdwg.mxu0
  %v177 = vadd.f32 %v26, %v169
  %v178 = vadd.f32 %v27, %v171
  %v179 = vadd.f32 %v28, %v173
  %v180 = vadd.f32 %v29, %v175
  %181 = vst [vmem:[#allocation2] sm:$0xff] %v177
  %182 = vst [vmem:[#allocation2 + $0x8] sm:$0xff] %v178
  %183 = vst [vmem:[#allocation2 + $0x10] sm:$0xff] %v179
  %184 = vst [vmem:[#allocation2 + $0x18] sm:$0xff] %v180
  // Predicated region
  $region22: #{resnet_forward.20} parent=0 // pred_check
    %p185 = pneg %p18
  $region23: #{resnet_forward.20} parent=0 // pred_check_branch
    %187 = sbr.rel (%p185) target = $region25
  $region24: #{resnet_forward.20} parent=0 // pred_region
    %v188 = vld [vmem:[#allocation2] sm:$0xff]
    %v189 = vld [vmem:[#allocation2 + $0x8] sm:$0xff]
    %v190 = vld [vmem:[#allocation2 + $0x10] sm:$0xff]
    %v191 = vld [vmem:[#allocation2 + $0x18] sm:$0xff]
    %v192 = vld [vmem:[%s2] sm:$0x3]
    %v194 = vlaneseq
    %v195 = vshrl.u32 %v194, 7
    %v196 = vsub.s32 0, %v195
    %v197 = vrot.slane %v192, %v196
    %v198 = vlaneseq
    %v199 = vshrl.u32 %v198, 7
    %v200 = vsub.s32 1, %v199
    %v201 = vrot.slane %v192, %v200
    %v204 = vmul.f32 %v188, %v197
    %v205 = vmul.f32 %v189, %v201
    %v206 = vmul.f32 %v190, %v197
    %v207 = vmul.f32 %v191, %v201
    %v208 = vld [vmem:[%s3] sm:$0x3]
    %v210 = vlaneseq
    %v211 = vshrl.u32 %v210, 7
    %v212 = vsub.s32 0, %v211
    %v213 = vrot.slane %v208, %v212
    %v214 = vlaneseq
    %v215 = vshrl.u32 %v214, 7
    %v216 = vsub.s32 1, %v215
    %v217 = vrot.slane %v208, %v216
    %v220 = vadd.f32 %v204, %v213
    %v221 = vadd.f32 %v205, %v217
    %v222 = vadd.f32 %v206, %v213
    %v223 = vadd.f32 %v207, %v217
    %v224 = vpack.c.bf16 %v222, %v220
    %v225 = vpack.c.bf16 %v223, %v221
    %v228 = vunpack.c.l.b16 %v224
    %v229 = vunpack.c.l.b16 %v225
    %v230 = vunpack.c.h.b16 %v224
    %v231 = vunpack.c.h.b16 %v225
    %v232 = vpack.c.b16 %v229, %v228
    %v233 = vpack.c.b16 %v231, %v230
    %236 = vst [vmem:[%s4] sm:$0xff] %v232
    %237 = vst [vmem:[%s4 + $0x8] sm:$0xff] %v233
  $region25: #{resnet_forward.20} parent=0 // pred_fallthru
    _
  // Predicated region
  $region26: #{resnet_forward.20} parent=0 // pred_check
    _
  $region27: #{resnet_forward.20} parent=0 // pred_check_branch
    %239 = sbr.rel (0) target = $region29
  $region28: #{resnet_forward.20} parent=0 // pred_region
    _
  $region29: #{resnet_forward.20} parent=0 // pred_fallthru
    _
  // Predicated region
  $region30: #{resnet_forward.20} parent=0 // pred_check
    _
  $region31: #{resnet_forward.20} parent=0 // pred_check_branch
    %241 = sbr.rel (0) target = $region33
  $region32: #{resnet_forward.20} parent=0 // pred_region
    _
  $region33: #{resnet_forward.20} parent=0 // pred_fallthru
    _

// kernel: resnet_forward.22
$region0: #{resnet_forward.22}
  #allocation0 [shape = 'u32[]', space=smem, size = 0x4, offset = 0x4, fixed_abs, tag = 'smem constant byte address 0x4 - core index']
  #allocation1 [shape = 'u32[144,128]{1,0:T(1,128)}', space=vmem, size = 0x12000, scoped, tag = 'internal scratch']
  #allocation2 [shape = 'f32[16,256]{1,0:T(8,128)}', space=vmem, size = 0x4000, scoped, tag = 'scratch operand']
  %s0 = inlined_call_operand.vmem [shape: bf16[16,2560], index: 0, kind: input, shape index: {}]
  %s1 = inlined_call_operand.vmem [shape: bf16[2560,256], index: 1, kind: input, shape index: {}]
  %s2 = inlined_call_operand.vmem [shape: f32[1,256], index: 2, kind: input, shape index: {}]
  %s3 = inlined_call_operand.vmem [shape: f32[1,256], index: 3, kind: input, shape index: {}]
  %s4 = inlined_call_operand.vmem [shape: bf16[16,256], index: 4, kind: input, shape index: {}]
  %s5 = inlined_call_operand.vmem [shape: bf16[16,256], index: 5, kind: output, shape index: {}]
  %s6 = sld [smem:[#allocation0]]
  $region84: #{resnet_forward.22} parent=0
    _
  %s8 = ssub.s32 1, %s6
  %s9 = scalar_select 0, %s8, %s6
  $region1: #{resnet_forward.22} parent=0
    #allocation3 [shape = 'u8[32768]{0}', space=vmem, size = 0x8000, scoped, tag = 'input window, operand 0']
    loop: start=0, step=1, limit=7
    $region2: #{resnet_forward.22} parent=1 // loop_pre_header
      _
    $region3: #{resnet_forward.22} parent=1 // loop_header
      %s11 = sphi 0, %s15
      %p12 = scmp.ge.s32.totalorder %s11, 7
      %s18 = sphi 0, %s37
      %s19 = sphi 0, %s33
      %s20 = sphi 0, %s29
      %s21 = sphi 0, %s18
      %s22 = sphi 0, %s19
      %s23 = sphi 0, %s20
      %s24 = sphi 0, %s21
      %s25 = sphi 0, %s22
      %s26 = sphi 0, %s23
      %s42 = sphi 0, %s44
      %s45 = sphi 0, %s42
      %s46 = sphi 0, %s45
      %s62 = sphi 0, %s46
      %s70 = sphi 0, %s72
      %s73 = sphi 0, %s70
      %s74 = sphi 0, %s73
      %s90 = sphi 0, %s74
      %s96 = sphi 0, %s98
      %s99 = sphi 0, %s96
      %s100 = sphi 0, %s99
      %s116 = sphi 0, %s100
      %s122 = sphi 0, %s124
      %s125 = sphi 0, %s122
      %s126 = sphi 0, %s125
      %s142 = sphi 0, %s126
      %s150 = sphi 0, %s152
      %s153 = sphi 0, %s150
      %s154 = sphi 0, %s153
      %s170 = sphi 0, %s154
      %s178 = sphi 0, %s180
      %s181 = sphi 0, %s178
      %s182 = sphi 0, %s181
      %s198 = sphi 0, %s182
    $region4: #{resnet_forward.22} parent=1 // loop_header_branch
      %14 = sbr.rel (%p12) target = $region8
    $region5: #{resnet_forward.22} parent=1 // loop_body
      %s16 = ssub.s32 %s11, 1
      %s17 = ssub.s32 %s11, 2
      %s27 = sadd.s32 1, %s20
      %p28 = scmp.ge.s32.totalorder %s27, 5
      %s29 = scalar_select %p28, 0, %s27
      %s30 = sadd.s32 1, %s19
      %s31 = scalar_select %p28, %s30, %s19
      %p32 = scmp.ge.s32.totalorder %s31, 1
      %s33 = scalar_select %p32, 0, %s31
      %s34 = sadd.s32 1, %s18
      %s35 = scalar_select %p32, %s34, %s18
      %p36 = scmp.ge.s32.totalorder %s35, 1
      %s37 = scalar_select %p36, 0, %s35
      %s38 = ssub.s32 %s18, %s37
      %s39 = ssub.s32 %s20, %s29
      %s40 = sor.u32 %s38, %s39
      %p41 = scmp.eq.s32.totalorder %s40, 0
      %s43 = sadd.s32 %s42, 1
      %s44 = scalar_select %p41, %s42, %s43
      %p47 = pneg %p41
      %p48 = scmp.eq.s32.totalorder %s11, 4
      %p49 = por %p47, %p48
      %p50 = scmp.ne.s32.totalorder %s42, %s45
      %p51 = scmp.eq.s32.totalorder %s11, 0
      %p52 = por %p50, %p51
      %p53 = scmp.ne.s32.totalorder %s42, %s45
      %p54 = scmp.eq.s32.totalorder %s16, 4
      %p55 = por %p53, %p54
      %p56 = scmp.ne.s32.totalorder %s45, %s46
      %p57 = scmp.eq.s32.totalorder %s16, 0
      %p58 = por %p56, %p57
      %p59 = scmp.ne.s32.totalorder %s45, %s46
      %p60 = scmp.eq.s32.totalorder %s17, 4
      %p61 = por %p59, %p60
      %p63 = scmp.ne.s32.totalorder %s46, %s62
      %p64 = scmp.eq.s32.totalorder %s17, 0
      %p65 = por %p63, %p64
      %s66 = ssub.s32 %s20, %s29
      %s67 = ssub.s32 %s19, %s33
      %s68 = sor.u32 %s66, %s67
      %p69 = scmp.eq.s32.totalorder %s68, 0
      %s71 = sadd.s32 %s70, 1
      %s72 = scalar_select %p69, %s70, %s71
      %p75 = pneg %p69
      %p76 = scmp.eq.s32.totalorder %s11, 4
      %p77 = por %p75, %p76
      %p78 = scmp.ne.s32.totalorder %s70, %s73
      %p79 = scmp.eq.s32.totalorder %s11, 0
      %p80 = por %p78, %p79
      %p81 = scmp.ne.s32.totalorder %s70, %s73
      %p82 = scmp.eq.s32.totalorder %s16, 4
      %p83 = por %p81, %p82
      %p84 = scmp.ne.s32.totalorder %s73, %s74
      %p85 = scmp.eq.s32.totalorder %s16, 0
      %p86 = por %p84, %p85
      %p87 = scmp.ne.s32.totalorder %s73, %s74
      %p88 = scmp.eq.s32.totalorder %s17, 4
      %p89 = por %p87, %p88
      %p91 = scmp.ne.s32.totalorder %s74, %s90
      %p92 = scmp.eq.s32.totalorder %s17, 0
      %p93 = por %p91, %p92
      %s94 = ssub.s32 %s19, %s33
      %p95 = scmp.eq.s32.totalorder %s94, 0
      %s97 = sadd.s32 %s96, 1
      %s98 = scalar_select %p95, %s96, %s97
      %p101 = pneg %p95
      %p102 = scmp.eq.s32.totalorder %s11, 4
      %p103 = por %p101, %p102
      %p104 = scmp.ne.s32.totalorder %s96, %s99
      %p105 = scmp.eq.s32.totalorder %s11, 0
      %p106 = por %p104, %p105
      %p107 = scmp.ne.s32.totalorder %s96, %s99
      %p108 = scmp.eq.s32.totalorder %s16, 4
      %p109 = por %p107, %p108
      %p110 = scmp.ne.s32.totalorder %s99, %s100
      %p111 = scmp.eq.s32.totalorder %s16, 0
      %p112 = por %p110, %p111
      %p113 = scmp.ne.s32.totalorder %s99, %s100
      %p114 = scmp.eq.s32.totalorder %s17, 4
      %p115 = por %p113, %p114
      %p117 = scmp.ne.s32.totalorder %s100, %s116
      %p118 = scmp.eq.s32.totalorder %s17, 0
      %p119 = por %p117, %p118
      %s120 = ssub.s32 %s19, %s33
      %p121 = scmp.eq.s32.totalorder %s120, 0
      %s123 = sadd.s32 %s122, 1
      %s124 = scalar_select %p121, %s122, %s123
      %p127 = pneg %p121
      %p128 = scmp.eq.s32.totalorder %s11, 4
      %p129 = por %p127, %p128
      %p130 = scmp.ne.s32.totalorder %s122, %s125
      %p131 = scmp.eq.s32.totalorder %s11, 0
      %p132 = por %p130, %p131
      %p133 = scmp.ne.s32.totalorder %s122, %s125
      %p134 = scmp.eq.s32.totalorder %s16, 4
      %p135 = por %p133, %p134
      %p136 = scmp.ne.s32.totalorder %s125, %s126
      %p137 = scmp.eq.s32.totalorder %s16, 0
      %p138 = por %p136, %p137
      %p139 = scmp.ne.s32.totalorder %s125, %s126
      %p140 = scmp.eq.s32.totalorder %s17, 4
      %p141 = por %p139, %p140
      %p143 = scmp.ne.s32.totalorder %s126, %s142
      %p144 = scmp.eq.s32.totalorder %s17, 0
      %p145 = por %p143, %p144
      %s146 = ssub.s32 %s18, %s37
      %s147 = ssub.s32 %s19, %s33
      %s148 = sor.u32 %s146, %s147
      %p149 = scmp.eq.s32.totalorder %s148, 0
      %s151 = sadd.s32 %s150, 1
      %s152 = scalar_select %p149, %s150, %s151
      %p155 = pneg %p149
      %p156 = scmp.eq.s32.totalorder %s11, 4
      %p157 = por %p155, %p156
      %p158 = scmp.ne.s32.totalorder %s150, %s153
      %p159 = scmp.eq.s32.totalorder %s11, 0
      %p160 = por %p158, %p159
      %p161 = scmp.ne.s32.totalorder %s150, %s153
      %p162 = scmp.eq.s32.totalorder %s16, 4
      %p163 = por %p161, %p162
      %p164 = scmp.ne.s32.totalorder %s153, %s154
      %p165 = scmp.eq.s32.totalorder %s16, 0
      %p166 = por %p164, %p165
      %p167 = scmp.ne.s32.totalorder %s153, %s154
      %p168 = scmp.eq.s32.totalorder %s17, 4
      %p169 = por %p167, %p168
      %p171 = scmp.ne.s32.totalorder %s154, %s170
      %p172 = scmp.eq.s32.totalorder %s17, 0
      %p173 = por %p171, %p172
      %s174 = ssub.s32 %s18, %s37
      %s175 = ssub.s32 %s19, %s33
      %s176 = sor.u32 %s174, %s175
      %p177 = scmp.eq.s32.totalorder %s176, 0
      %s179 = sadd.s32 %s178, 1
      %s180 = scalar_select %p177, %s178, %s179
      %p183 = pneg %p177
      %p184 = scmp.eq.s32.totalorder %s11, 4
      %p185 = por %p183, %p184
      %p186 = scmp.ne.s32.totalorder %s178, %s181
      %p187 = scmp.eq.s32.totalorder %s11, 0
      %p188 = por %p186, %p187
      %p189 = scmp.ne.s32.totalorder %s178, %s181
      %p190 = scmp.eq.s32.totalorder %s16, 4
      %p191 = por %p189, %p190
      %p192 = scmp.ne.s32.totalorder %s181, %s182
      %p193 = scmp.eq.s32.totalorder %s16, 0
      %p194 = por %p192, %p193
      %p195 = scmp.ne.s32.totalorder %s181, %s182
      %p196 = scmp.eq.s32.totalorder %s17, 4
      %p197 = por %p195, %p196
      %p199 = scmp.ne.s32.totalorder %s182, %s198
      %p200 = scmp.eq.s32.totalorder %s17, 0
      %p201 = por %p199, %p200
      %p202 = scmp.le.s32.totalorder 1, %s11
      %p203 = scmp.lt.s32.totalorder %s11, 6
      %p204 = pnand %p202, %p203
      %p205 = pneg %p204
      // Predicated region
      $region9: #{resnet_forward.22} parent=5 // pred_check
        _
      $region10: #{resnet_forward.22} parent=5 // pred_check_branch
        %207 = sbr.rel (%p204) target = $region12
      $region11: #{resnet_forward.22} parent=5 // pred_region
        %s208 = ssub.s32 %s11, 1
        // Predicated region
        $region13: #{resnet_forward.22} parent=11 // pred_check
          %p209 = pneg %p112
        $region14: #{resnet_forward.22} parent=11 // pred_check_branch
          %211 = sbr.rel (%p209) target = $region16
        $region15: #{resnet_forward.22} parent=11 // pred_region
          %s212 = smul.u32 2, %s22
          %p213 = scmp.lt.s32.totalorder %s212, 1
          %s214 = scalar_select %p213, %s212, 1
          %s215 = scalar_lea.vmem %s2, %s214
          %s216 = smul.u32 2, %s22
        $region16: #{resnet_forward.22} parent=11 // pred_fallthru
          _
        // Predicated region
        $region17: #{resnet_forward.22} parent=11 // pred_check
          %p217 = pneg %p138
        $region18: #{resnet_forward.22} parent=11 // pred_check_branch
          %219 = sbr.rel (%p217) target = $region20
        $region19: #{resnet_forward.22} parent=11 // pred_region
          %s220 = smul.u32 2, %s22
          %p221 = scmp.lt.s32.totalorder %s220, 1
          %s222 = scalar_select %p221, %s220, 1
          %s223 = scalar_lea.vmem %s3, %s222
          %s224 = smul.u32 2, %s22
        $region20: #{resnet_forward.22} parent=11 // pred_fallthru
          _
        // Predicated region
        $region21: #{resnet_forward.22} parent=11 // pred_check
          %p225 = pneg %p166
        $region22: #{resnet_forward.22} parent=11 // pred_check_branch
          %227 = sbr.rel (%p225) target = $region24
        $region23: #{resnet_forward.22} parent=11 // pred_region
          %s228 = smul.u32 2, %s21
          %s229 = smul.u32 2, %s22
          %p230 = scmp.lt.s32.totalorder %s228, 1
          %s231 = scalar_select %p230, %s228, 1
          %p232 = scmp.lt.s32.totalorder %s229, 1
          %s233 = scalar_select %p232, %s229, 1
          %s234 = smul.addr %s231, 2
          %s235 = sadd.s32 %s233, %s234
          %s236 = smul.addr %s235, 4
          %s237 = scalar_lea.vmem %s4, %s236
          %s238 = smul.u32 2, %s21
          %s239 = smul.u32 2, %s22
        $region24: #{resnet_forward.22} parent=11 // pred_fallthru
          _
      $region12: #{resnet_forward.22} parent=5 // pred_fallthru
        _
      %p240 = scmp.lt.s32.totalorder %s11, 5
      // Predicated region
      $region25: #{resnet_forward.22} parent=5 // pred_check
        %p241 = pneg %p240
      $region26: #{resnet_forward.22} parent=5 // pred_check_branch
        %243 = sbr.rel (%p241) target = $region28
      $region27: #{resnet_forward.22} parent=5 // pred_region
        // Predicated region
        $region29: #{resnet_forward.22} parent=27 // pred_check
          %p244 = pneg %p52
        $region30: #{resnet_forward.22} parent=27 // pred_check_branch
          %246 = sbr.rel (%p244) target = $region32
        $region31: #{resnet_forward.22} parent=27 // pred_region
          %s247 = sand.u32 %s42, 1
          %s248 = sand.u32 %s42, 1
          %s249 = smul.addr %s248, 32
          %s250 = scalar_lea.vmem [#allocation3], %s249
          %s251 = smul.u32 2, %s18
          %s252 = smul.u32 4, %s20
          %s253 = smul.addr %s251, 20
          %s254 = sadd.s32 %s252, %s253
          %s255 = smul.addr %s254, 4
          %s256 = scalar_lea.vmem %s0, %s255
          // Predicated region
          $region33: #{resnet_forward.22} parent=31 // pred_check
            _
          $region34: #{resnet_forward.22} parent=31 // pred_check_branch
            %258 = sbr.rel (0) target = $region36
          $region35: #{resnet_forward.22} parent=31 // pred_region
            // Predicated region
            $region37: #{resnet_forward.22} parent=35 // pred_check
              _
            $region38: #{resnet_forward.22} parent=35 // pred_check_branch
              %260 = sbr.rel (0) target = $region40
            $region39: #{resnet_forward.22} parent=35 // pred_region
              loop: start=0, step=1, limit=1
              $region41: #{resnet_forward.22} parent=39 // loop_pre_header
                _
              $region42: #{resnet_forward.22} parent=39 // loop_header
                %s262 = sphi 0, %s266
                %p263 = scmp.ge.s32.totalorder %s262, 1
                %s267 = sphi %s256, %s256
                %s268 = sphi %s250, %s250
              $region43: #{resnet_forward.22} parent=39 // loop_header_branch
                %265 = sbr.rel (%p263) target = $region47
              $region44: #{resnet_forward.22} parent=39 // loop_body
                %v269 = vld [vmem:[%s267] sm:$0xff]
                %270 = vst [vmem:[%s268] sm:$0xff] %v269
                %v271 = vld [vmem:[%s267 + $0x8] sm:$0xff]
                %272 = vst [vmem:[%s268 + $0x8] sm:$0xff] %v271
                %v273 = vld [vmem:[%s267 + $0x50] sm:$0xff]
                %274 = vst [vmem:[%s268 + $0x10] sm:$0xff] %v273
                %v275 = vld [vmem:[%s267 + $0x58] sm:$0xff]
                %276 = vst [vmem:[%s268 + $0x18] sm:$0xff] %v275
              $region45: #{resnet_forward.22} parent=39 // loop_footer
                %s266 = sadd.s32 1, %s262
              $region46: #{resnet_forward.22} parent=39 // loop_footer_branch
                %261 = sbr.rel target = $region42
              $region47: #{resnet_forward.22} parent=39 // loop_exit
                _
            $region40: #{resnet_forward.22} parent=35 // pred_fallthru
              _
            // Predicated region
            $region48: #{resnet_forward.22} parent=35 // pred_check
              _
            $region49: #{resnet_forward.22} parent=35 // pred_check_branch
              %278 = sbr.rel target = $region51
            $region50: #{resnet_forward.22} parent=35 // pred_region
              _
            $region51: #{resnet_forward.22} parent=35 // pred_fallthru
              _
          $region36: #{resnet_forward.22} parent=31 // pred_fallthru
            _
          %279 = vnop
        $region32: #{resnet_forward.22} parent=27 // pred_fallthru
          _
        // Predicated region
        $region52: #{resnet_forward.22} parent=27 // pred_check
          %p280 = pneg %p80
        $region53: #{resnet_forward.22} parent=27 // pred_check_branch
          %282 = sbr.rel (%p280) target = $region55
        $region54: #{resnet_forward.22} parent=27 // pred_region
          %s283 = smul.u32 64, %s20
          %s284 = smul.u32 2, %s19
          %p285 = scmp.lt.s32.totalorder %s283, 319
          %s286 = scalar_select %p285, %s283, 319
          %p287 = scmp.lt.s32.totalorder %s284, 1
          %s288 = scalar_select %p287, %s284, 1
          %s289 = smul.addr %s286, 2
          %s290 = sadd.s32 %s288, %s289
          %s291 = smul.addr %s290, 4
          %s292 = scalar_lea.vmem %s1, %s291
          %s293 = smul.u32 64, %s20
          %s294 = smul.u32 2, %s19
        $region55: #{resnet_forward.22} parent=27 // pred_fallthru
          _
      $region28: #{resnet_forward.22} parent=5 // pred_fallthru
        _
      %p295 = scmp.le.s32.totalorder 1, %s11
      %p296 = scmp.lt.s32.totalorder %s11, 6
      %p297 = pnand %p295, %p296
      %p298 = pneg %p297
      // Predicated region
      $region56: #{resnet_forward.22} parent=5 // pred_check
        _
      $region57: #{resnet_forward.22} parent=5 // pred_check_branch
        %300 = sbr.rel (%p297) target = $region59
      $region58: #{resnet_forward.22} parent=5 // pred_region
        %s301 = ssub.s32 %s11, 1
        %s302 = sand.u32 %s45, 1
        %s303 = sand.u32 %s45, 1
        %s304 = smul.addr %s303, 32
        %s305 = scalar_lea.vmem [#allocation3], %s304
        // Predicated region
        $region60: #{resnet_forward.22} parent=58 // pred_check
          %p306 = pneg %p58
        $region61: #{resnet_forward.22} parent=58 // pred_check_branch
          %308 = sbr.rel (%p306) target = $region63
        $region62: #{resnet_forward.22} parent=58 // pred_region
          _
        $region63: #{resnet_forward.22} parent=58 // pred_fallthru
          _
        %s309 = sand.u32 %s45, 1
        %s310 = sand.u32 %s45, 1
        %s311 = smul.addr %s310, 32
        %s312 = scalar_lea.vmem [#allocation3], %s311
        %p313 = pneg %p58
        %p314 = pneg %p55
        %s315 = smul.u32 64, %s23
        %s316 = smul.u32 2, %s22
        %p317 = scmp.lt.s32.totalorder %s315, 319
        %s318 = scalar_select %p317, %s315, 319
        %p319 = scmp.lt.s32.totalorder %s316, 1
        %s320 = scalar_select %p319, %s316, 1
        %s321 = smul.addr %s318, 2
        %s322 = sadd.s32 %s320, %s321
        %s323 = smul.addr %s322, 4
        %s324 = scalar_lea.vmem %s1, %s323
        %p325 = pneg %p86
        %p326 = pneg %p83
        %s327 = smul.u32 2, %s22
        %p328 = scmp.lt.s32.totalorder %s327, 1
        %s329 = scalar_select %p328, %s327, 1
        %s330 = scalar_lea.vmem %s2, %s329
        %p331 = pneg %p112
        %p332 = pneg %p109
        %s333 = smul.u32 2, %s22
        %p334 = scmp.lt.s32.totalorder %s333, 1
        %s335 = scalar_select %p334, %s333, 1
        %s336 = scalar_lea.vmem %s3, %s335
        %p337 = pneg %p138
        %p338 = pneg %p135
        %s339 = smul.u32 2, %s21
        %s340 = smul.u32 2, %s22
        %p341 = scmp.lt.s32.totalorder %s339, 1
        %s342 = scalar_select %p341, %s339, 1
        %p343 = scmp.lt.s32.totalorder %s340, 1
        %s344 = scalar_select %p343, %s340, 1
        %s345 = smul.addr %s342, 2
        %s346 = sadd.s32 %s344, %s345
        %s347 = smul.addr %s346, 4
        %s348 = scalar_lea.vmem %s4, %s347
        %p349 = pneg %p166
        %p350 = pneg %p163
        %p351 = pneg %p194
        %p352 = pneg %p191
        %s353 = smul.u32 2, %s21
        %s354 = smul.u32 2, %s22
        %p355 = scmp.lt.s32.totalorder %s353, 1
        %s356 = scalar_select %p355, %s353, 1
        %p357 = scmp.lt.s32.totalorder %s354, 1
        %s358 = scalar_select %p357, %s354, 1
        %s359 = smul.addr %s356, 2
        %s360 = sadd.s32 %s358, %s359
        %s361 = smul.addr %s360, 4
        %s362 = scalar_lea.vmem %s5, %s361
        %s363 = smul.u32 2, %s21
        %s364 = smul.u32 4, %s23
        %s365 = smul.u32 64, %s23
        %s366 = smul.u32 2, %s22
        %p367 = scmp.lt.s32.totalorder %s365, 319
        %s368 = scalar_select %p367, %s365, 319
        %p369 = scmp.lt.s32.totalorder %s366, 1
        %s370 = scalar_select %p369, %s366, 1
        %s371 = smul.addr %s368, 2
        %s372 = sadd.s32 %s370, %s371
        %s373 = smul.addr %s372, 4
        %s374 = scalar_lea.vmem %s1, %s373
        %s375 = smul.u32 64, %s23
        %s376 = smul.u32 2, %s22
        %s377 = smul.u32 2, %s22
        %p378 = scmp.lt.s32.totalorder %s377, 1
        %s379 = scalar_select %p378, %s377, 1
        %s380 = scalar_lea.vmem %s2, %s379
        %s381 = smul.u32 2, %s22
        %s382 = smul.u32 2, %s22
        %p383 = scmp.lt.s32.totalorder %s382, 1
        %s384 = scalar_select %p383, %s382, 1
        %s385 = scalar_lea.vmem %s3, %s384
        %s386 = smul.u32 2, %s22
        %s387 = smul.u32 2, %s21
        %s388 = smul.u32 2, %s22
        %p389 = scmp.lt.s32.totalorder %s387, 1
        %s390 = scalar_select %p389, %s387, 1
        %p391 = scmp.lt.s32.totalorder %s388, 1
        %s392 = scalar_select %p391, %s388, 1
        %s393 = smul.addr %s390, 2
        %s394 = sadd.s32 %s392, %s393
        %s395 = smul.addr %s394, 4
        %s396 = scalar_lea.vmem %s4, %s395
        %s397 = smul.u32 2, %s21
        %s398 = smul.u32 2, %s22
        %s399 = smul.u32 2, %s21
        %s400 = smul.u32 2, %s22
        %p401 = scmp.lt.s32.totalorder %s399, 1
        %s402 = scalar_select %p401, %s399, 1
        %p403 = scmp.lt.s32.totalorder %s400, 1
        %s404 = scalar_select %p403, %s400, 1
        %s405 = smul.addr %s402, 2
        %s406 = sadd.s32 %s404, %s405
        %s407 = smul.addr %s406, 4
        %s408 = scalar_lea.vmem %s5, %s407
        %s409 = smul.u32 2, %s21
        %s410 = smul.u32 2, %s22
        %p411 = scmp.eq.s32.totalorder %s23, 0
        // Predicated region
        $region64: #{resnet_forward.22} parent=58 // pred_check
          %p412 = pneg %p411
        $region65: #{resnet_forward.22} parent=58 // pred_check_branch
          %414 = sbr.rel (%p412) target = $region67
        $region66: #{resnet_forward.22} parent=58 // pred_region
          %415 = vst [vmem:[#allocation2] sm:$0xff] 0.0
          %416 = vst [vmem:[#allocation2 + $0x8] sm:$0xff] 0.0
          %417 = vst [vmem:[#allocation2 + $0x10] sm:$0xff] 0.0
          %418 = vst [vmem:[#allocation2 + $0x18] sm:$0xff] 0.0
        $region67: #{resnet_forward.22} parent=58 // pred_fallthru
          _
        %v419 = vld [vmem:[#allocation2] sm:$0xff]
        %v420 = vld [vmem:[#allocation2 + $0x8] sm:$0xff]
        %v421 = vld [vmem:[#allocation2 + $0x10] sm:$0xff]
        %v422 = vld [vmem:[#allocation2 + $0x18] sm:$0xff]
        %v423 = vld [vmem:[%s305] sm:$0xff]
        %v424 = vld [vmem:[%s305 + $0x8] sm:$0xff]
        %v425 = vld [vmem:[%s305 + $0x10] sm:$0xff]
        %v426 = vld [vmem:[%s305 + $0x18] sm:$0xff]
        %v427 = vld [vmem:[%s374] sm:$0xff]
        %v428 = vld [vmem:[%s374 + $0x8] sm:$0xff]
        %v429 = vld [vmem:[%s374 + $0x10] sm:$0xff]
        %v430 = vld [vmem:[%s374 + $0x18] sm:$0xff]
        %v431 = vld [vmem:[%s374 + $0x20] sm:$0xff]
        %v432 = vld [vmem:[%s374 + $0x28] sm:$0xff]
        %v433 = vld [vmem:[%s374 + $0x30] sm:$0xff]
        %v434 = vld [vmem:[%s374 + $0x38] sm:$0xff]
        %v435 = vld [vmem:[%s374 + $0x40] sm:$0xff]
        %v436 = vld [vmem:[%s374 + $0x48] sm:$0xff]
        %v437 = vld [vmem:[%s374 + $0x50] sm:$0xff]
        %v438 = vld [vmem:[%s374 + $0x58] sm:$0xff]
        %v439 = vld [vmem:[%s374 + $0x60] sm:$0xff]
        %v440 = vld [vmem:[%s374 + $0x68] sm:$0xff]
        %v441 = vld [vmem:[%s374 + $0x70] sm:$0xff]
        %v442 = vld [vmem:[%s374 + $0x78] sm:$0xff]
        %v443 = vld [vmem:[%s374 + $0x80] sm:$0xff]
        %v444 = vld [vmem:[%s374 + $0x88] sm:$0xff]
        %v445 = vld [vmem:[%s374 + $0x90] sm:$0xff]
        %v446 = vld [vmem:[%s374 + $0x98] sm:$0xff]
        %v447 = vld [vmem:[%s374 + $0xa0] sm:$0xff]
        %v448 = vld [vmem:[%s374 + $0xa8] sm:$0xff]
        %v449 = vld [vmem:[%s374 + $0xb0] sm:$0xff]
        %v450 = vld [vmem:[%s374 + $0xb8] sm:$0xff]
        %v451 = vld [vmem:[%s374 + $0xc0] sm:$0xff]
        %v452 = vld [vmem:[%s374 + $0xc8] sm:$0xff]
        %v453 = vld [vmem:[%s374 + $0xd0] sm:$0xff]
        %v454 = vld [vmem:[%s374 + $0xd8] sm:$0xff]
        %v455 = vld [vmem:[%s374 + $0xe0] sm:$0xff]
        %v456 = vld [vmem:[%s374 + $0xe8] sm:$0xff]
        %v457 = vld [vmem:[%s374 + $0xf0] sm:$0xff]
        %v458 = vld [vmem:[%s374 + $0xf8] sm:$0xff]
        %v459 = vld [vmem:[%s374 + $0x100] sm:$0xff]
        %v460 = vld [vmem:[%s374 + $0x108] sm:$0xff]
        %v461 = vld [vmem:[%s374 + $0x110] sm:$0xff]
        %v462 = vld [vmem:[%s374 + $0x118] sm:$0xff]
        %v463 = vld [vmem:[%s374 + $0x120] sm:$0xff]
        %v464 = vld [vmem:[%s374 + $0x128] sm:$0xff]
        %v465 = vld [vmem:[%s374 + $0x130] sm:$0xff]
        %v466 = vld [vmem:[%s374 + $0x138] sm:$0xff]
        %v467 = vld [vmem:[%s374 + $0x140] sm:$0xff]
        %v468 = vld [vmem:[%s374 + $0x148] sm:$0xff]
        %v469 = vld [vmem:[%s374 + $0x150] sm:$0xff]
        %v470 = vld [vmem:[%s374 + $0x158] sm:$0xff]
        %v471 = vld [vmem:[%s374 + $0x160] sm:$0xff]
        %v472 = vld [vmem:[%s374 + $0x168] sm:$0xff]
        %v473 = vld [vmem:[%s374 + $0x170] sm:$0xff]
        %v474 = vld [vmem:[%s374 + $0x178] sm:$0xff]
        %v475 = vld [vmem:[%s374 + $0x180] sm:$0xff]
        %v476 = vld [vmem:[%s374 + $0x188] sm:$0xff]
        %v477 = vld [vmem:[%s374 + $0x190] sm:$0xff]
        %v478 = vld [vmem:[%s374 + $0x198] sm:$0xff]
        %v479 = vld [vmem:[%s374 + $0x1a0] sm:$0xff]
        %v480 = vld [vmem:[%s374 + $0x1a8] sm:$0xff]
        %v481 = vld [vmem:[%s374 + $0x1b0] sm:$0xff]
        %v482 = vld [vmem:[%s374 + $0x1b8] sm:$0xff]
        %v483 = vld [vmem:[%s374 + $0x1c0] sm:$0xff]
        %v484 = vld [vmem:[%s374 + $0x1c8] sm:$0xff]
        %v485 = vld [vmem:[%s374 + $0x1d0] sm:$0xff]
        %v486 = vld [vmem:[%s374 + $0x1d8] sm:$0xff]
        %v487 = vld [vmem:[%s374 + $0x1e0] sm:$0xff]
        %v488 = vld [vmem:[%s374 + $0x1e8] sm:$0xff]
        %v489 = vld [vmem:[%s374 + $0x1f0] sm:$0xff]
        %v490 = vld [vmem:[%s374 + $0x1f8] sm:$0xff]
        %v495 = vunpack.c.l.b16 %v423
        %v496 = vunpack.c.h.b16 %v423
        %v497 = vunpack.c.l.b16 %v424
        %v498 = vunpack.c.h.b16 %v424
        %v499 = vunpack.c.l.b16 %v425
        %v500 = vunpack.c.h.b16 %v425
        %v501 = vunpack.c.l.b16 %v426
        %v502 = vunpack.c.h.b16 %v426
        %v503 = vpack.c.b16 %v499, %v495
        %v504 = vpack.c.b16 %v500, %v496
        %v505 = vpack.c.b16 %v501, %v497
        %v506 = vpack.c.b16 %v502, %v498
        %v575 = vunpack.c.l.b16 %v427
        %v576 = vunpack.c.h.b16 %v427
        %v577 = vunpack.c.l.b16 %v428
        %v578 = vunpack.c.h.b16 %v428
        %v579 = vunpack.c.l.b16 %v429
        %v580 = vunpack.c.h.b16 %v429
        %v581 = vunpack.c.l.b16 %v430
        %v582 = vunpack.c.h.b16 %v430
        %v583 = vunpack.c.l.b16 %v431
        %v584 = vunpack.c.h.b16 %v431
        %v585 = vunpack.c.l.b16 %v432
        %v586 = vunpack.c.h.b16 %v432
        %v587 = vunpack.c.l.b16 %v433
        %v588 = vunpack.c.h.b16 %v433
        %v589 = vunpack.c.l.b16 %v434
        %v590 = vunpack.c.h.b16 %v434
        %v591 = vunpack.c.l.b16 %v435
        %v592 = vunpack.c.h.b16 %v435
        %v593 = vunpack.c.l.b16 %v436
        %v594 = vunpack.c.h.b16 %v436
        %v595 = vunpack.c.l.b16 %v437
        %v596 = vunpack.c.h.b16 %v437
        %v597 = vunpack.c.l.b16 %v438
        %v598 = vunpack.c.h.b16 %v438
        %v599 = vunpack.c.l.b16 %v439
        %v600 = vunpack.c.h.b16 %v439
        %v601 = vunpack.c.l.b16 %v440
        %v602 = vunpack.c.h.b16 %v440
        %v603 = vunpack.c.l.b16 %v441
        %v604 = vunpack.c.h.b16 %v441
        %v605 = vunpack.c.l.b16 %v442
        %v606 = vunpack.c.h.b16 %v442
        %v607 = vunpack.c.l.b16 %v443
        %v608 = vunpack.c.h.b16 %v443
        %v609 = vunpack.c.l.b16 %v444
        %v610 = vunpack.c.h.b16 %v444
        %v611 = vunpack.c.l.b16 %v445
        %v612 = vunpack.c.h.b16 %v445
        %v613 = vunpack.c.l.b16 %v446
        %v614 = vunpack.c.h.b16 %v446
        %v615 = vunpack.c.l.b16 %v447
        %v616 = vunpack.c.h.b16 %v447
        %v617 = vunpack.c.l.b16 %v448
        %v618 = vunpack.c.h.b16 %v448
        %v619 = vunpack.c.l.b16 %v449
        %v620 = vunpack.c.h.b16 %v449
        %v621 = vunpack.c.l.b16 %v450
        %v622 = vunpack.c.h.b16 %v450
        %v623 = vunpack.c.l.b16 %v451
        %v624 = vunpack.c.h.b16 %v451
        %v625 = vunpack.c.l.b16 %v452
        %v626 = vunpack.c.h.b16 %v452
        %v627 = vunpack.c.l.b16 %v453
        %v628 = vunpack.c.h.b16 %v453
        %v629 = vunpack.c.l.b16 %v454
        %v630 = vunpack.c.h.b16 %v454
        %v631 = vunpack.c.l.b16 %v455
        %v632 = vunpack.c.h.b16 %v455
        %v633 = vunpack.c.l.b16 %v456
        %v634 = vunpack.c.h.b16 %v456
        %v635 = vunpack.c.l.b16 %v457
        %v636 = vunpack.c.h.b16 %v457
        %v637 = vunpack.c.l.b16 %v458
        %v638 = vunpack.c.h.b16 %v458
        %v639 = vunpack.c.l.b16 %v459
        %v640 = vunpack.c.h.b16 %v459
        %v641 = vunpack.c.l.b16 %v460
        %v642 = vunpack.c.h.b16 %v460
        %v643 = vunpack.c.l.b16 %v461
        %v644 = vunpack.c.h.b16 %v461
        %v645 = vunpack.c.l.b16 %v462
        %v646 = vunpack.c.h.b16 %v462
        %v647 = vunpack.c.l.b16 %v463
        %v648 = vunpack.c.h.b16 %v463
        %v649 = vunpack.c.l.b16 %v464
        %v650 = vunpack.c.h.b16 %v464
        %v651 = vunpack.c.l.b16 %v465
        %v652 = vunpack.c.h.b16 %v465
        %v653 = vunpack.c.l.b16 %v466
        %v654 = vunpack.c.h.b16 %v466
        %v655 = vunpack.c.l.b16 %v467
        %v656 = vunpack.c.h.b16 %v467
        %v657 = vunpack.c.l.b16 %v468
        %v658 = vunpack.c.h.b16 %v468
        %v659 = vunpack.c.l.b16 %v469
        %v660 = vunpack.c.h.b16 %v469
        %v661 = vunpack.c.l.b16 %v470
        %v662 = vunpack.c.h.b16 %v470
        %v663 = vunpack.c.l.b16 %v471
        %v664 = vunpack.c.h.b16 %v471
        %v665 = vunpack.c.l.b16 %v472
        %v666 = vunpack.c.h.b16 %v472
        %v667 = vunpack.c.l.b16 %v473
        %v668 = vunpack.c.h.b16 %v473
        %v669 = vunpack.c.l.b16 %v474
        %v670 = vunpack.c.h.b16 %v474
        %v671 = vunpack.c.l.b16 %v475
        %v672 = vunpack.c.h.b16 %v475
        %v673 = vunpack.c.l.b16 %v476
        %v674 = vunpack.c.h.b16 %v476
        %v675 = vunpack.c.l.b16 %v477
        %v676 = vunpack.c.h.b16 %v477
        %v677 = vunpack.c.l.b16 %v478
        %v678 = vunpack.c.h.b16 %v478
        %v679 = vunpack.c.l.b16 %v479
        %v680 = vunpack.c.h.b16 %v479
        %v681 = vunpack.c.l.b16 %v480
        %v682 = vunpack.c.h.b16 %v480
        %v683 = vunpack.c.l.b16 %v481
        %v684 = vunpack.c.h.b16 %v481
        %v685 = vunpack.c.l.b16 %v482
        %v686 = vunpack.c.h.b16 %v482
        %v687 = vunpack.c.l.b16 %v483
        %v688 = vunpack.c.h.b16 %v483
        %v689 = vunpack.c.l.b16 %v484
        %v690 = vunpack.c.h.b16 %v484
        %v691 = vunpack.c.l.b16 %v485
        %v692 = vunpack.c.h.b16 %v485
        %v693 = vunpack.c.l.b16 %v486
        %v694 = vunpack.c.h.b16 %v486
        %v695 = vunpack.c.l.b16 %v487
        %v696 = vunpack.c.h.b16 %v487
        %v697 = vunpack.c.l.b16 %v488
        %v698 = vunpack.c.h.b16 %v488
        %v699 = vunpack.c.l.b16 %v489
        %v700 = vunpack.c.h.b16 %v489
        %v701 = vunpack.c.l.b16 %v490
        %v702 = vunpack.c.h.b16 %v490
        %v703 = vpack.c.b16 %v577, %v575
        %v704 = vpack.c.b16 %v578, %v576
        %v705 = vpack.c.b16 %v581, %v579
        %v706 = vpack.c.b16 %v582, %v580
        %v707 = vpack.c.b16 %v585, %v583
        %v708 = vpack.c.b16 %v586, %v584
        %v709 = vpack.c.b16 %v589, %v587
        %v710 = vpack.c.b16 %v590, %v588
        %v711 = vpack.c.b16 %v593, %v591
        %v712 = vpack.c.b16 %v594, %v592
        %v713 = vpack.c.b16 %v597, %v595
        %v714 = vpack.c.b16 %v598, %v596
        %v715 = vpack.c.b16 %v601, %v599
        %v716 = vpack.c.b16 %v602, %v600
        %v717 = vpack.c.b16 %v605, %v603
        %v718 = vpack.c.b16 %v606, %v604
        %v719 = vpack.c.b16 %v609, %v607
        %v720 = vpack.c.b16 %v610, %v608
        %v721 = vpack.c.b16 %v613, %v611
        %v722 = vpack.c.b16 %v614, %v612
        %v723 = vpack.c.b16 %v617, %v615
        %v724 = vpack.c.b16 %v618, %v616
        %v725 = vpack.c.b16 %v621, %v619
        %v726 = vpack.c.b16 %v622, %v620
        %v727 = vpack.c.b16 %v625, %v623
        %v728 = vpack.c.b16 %v626, %v624
        %v729 = vpack.c.b16 %v629, %v627
        %v730 = vpack.c.b16 %v630, %v628
        %v731 = vpack.c.b16 %v633, %v631
        %v732 = vpack.c.b16 %v634, %v632
        %v733 = vpack.c.b16 %v637, %v635
        %v734 = vpack.c.b16 %v638, %v636
        %v735 = vpack.c.b16 %v641, %v639
        %v736 = vpack.c.b16 %v642, %v640
        %v737 = vpack.c.b16 %v645, %v643
        %v738 = vpack.c.b16 %v646, %v644
        %v739 = vpack.c.b16 %v649, %v647
        %v740 = vpack.c.b16 %v650, %v648
        %v741 = vpack.c.b16 %v653, %v651
        %v742 = vpack.c.b16 %v654, %v652
        %v743 = vpack.c.b16 %v657, %v655
        %v744 = vpack.c.b16 %v658, %v656
        %v745 = vpack.c.b16 %v661, %v659
        %v746 = vpack.c.b16 %v662, %v660
        %v747 = vpack.c.b16 %v665, %v663
        %v748 = vpack.c.b16 %v666, %v664
        %v749 = vpack.c.b16 %v669, %v667
        %v750 = vpack.c.b16 %v670, %v668
        %v751 = vpack.c.b16 %v673, %v671
        %v752 = vpack.c.b16 %v674, %v672
        %v753 = vpack.c.b16 %v677, %v675
        %v754 = vpack.c.b16 %v678, %v676
        %v755 = vpack.c.b16 %v681, %v679
        %v756 = vpack.c.b16 %v682, %v680
        %v757 = vpack.c.b16 %v685, %v683
        %v758 = vpack.c.b16 %v686, %v684
        %v759 = vpack.c.b16 %v689, %v687
        %v760 = vpack.c.b16 %v690, %v688
        %v761 = vpack.c.b16 %v693, %v691
        %v762 = vpack.c.b16 %v694, %v692
        %v763 = vpack.c.b16 %v697, %v695
        %v764 = vpack.c.b16 %v698, %v696
        %v765 = vpack.c.b16 %v701, %v699
        %v766 = vpack.c.b16 %v702, %v700
        %831 = vmatprep.subr.bf16.mxu0 %v718
        %832 = vmatpush1.bf16.msra.mxu0 %v717
        %833 = vmatprep.subr.bf16.mxu0 %v716
        %834 = vmatpush1.bf16.msra.mxu0 %v715
        %835 = vmatprep.subr.bf16.mxu0 %v714
        %836 = vmatpush1.bf16.msra.mxu0 %v713
        %837 = vmatprep.subr.bf16.mxu0 %v712
        %838 = vmatpush1.bf16.msra.mxu0 %v711
        %839 = vmatprep.subr.bf16.mxu0 %v710
        %840 = vmatpush1.bf16.msra.mxu0 %v709
        %841 = vmatprep.subr.bf16.mxu0 %v708
        %842 = vmatpush1.bf16.msra.mxu0 %v707
        %843 = vmatprep.subr.bf16.mxu0 %v706
        %844 = vmatpush1.bf16.msra.mxu0 %v705
        %845 = vmatprep.subr.bf16.mxu0 %v704
        %846 = vmatpush1.bf16.msra.mxu0 %v703
        %847 = vmatprep.subr.bf16.mxu0 %v734
        %848 = vmatpush2.bf16.msra.mxu0 %v733
        %849 = vmatprep.subr.bf16.mxu0 %v732
        %850 = vmatpush2.bf16.msra.mxu0 %v731
        %851 = vmatprep.subr.bf16.mxu0 %v730
        %852 = vmatpush2.bf16.msra.mxu0 %v729
        %853 = vmatprep.subr.bf16.mxu0 %v728
        %854 = vmatpush2.bf16.msra.mxu0 %v727
        %855 = vmatprep.subr.bf16.mxu0 %v726
        %856 = vmatpush2.bf16.msra.mxu0 %v725
        %857 = vmatprep.subr.bf16.mxu0 %v724
        %858 = vmatpush2.bf16.msra.mxu0 %v723
        %859 = vmatprep.subr.bf16.mxu0 %v722
        %860 = vmatpush2.bf16.msra.mxu0 %v721
        %861 = vmatprep.subr.bf16.mxu0 %v720
        %862 = vmatpush2.bf16.msra.mxu0 %v719
        %863 = vmatprep.mubr.bf16.mxu0 %v504
        %864 = vmatmul.mubr.bf16.gmra.mxu0 %v503
        %v865 = vpop.f32.mrf.mxu0
        %v866 = vadd.f32 0.0, %v865
        %v867 = vpop.f32.mrf.mxu0
        %v868 = vadd.f32 0.0, %v867
        %v869 = vpop.f32.mrf.mxu0
        %v870 = vadd.f32 0.0, %v869
        %v871 = vpop.f32.mrf.mxu0
        %v872 = vadd.f32 0.0, %v871
        %873 = vdwg.mxu0
        %874 = vmatprep.subr.bf16.mxu0 %v750
        %875 = vmatpush1.bf16.msra.mxu0 %v749
        %876 = vmatprep.subr.bf16.mxu0 %v748
        %877 = vmatpush1.bf16.msra.mxu0 %v747
        %878 = vmatprep.subr.bf16.mxu0 %v746
        %879 = vmatpush1.bf16.msra.mxu0 %v745
        %880 = vmatprep.subr.bf16.mxu0 %v744
        %881 = vmatpush1.bf16.msra.mxu0 %v743
        %882 = vmatprep.subr.bf16.mxu0 %v742
        %883 = vmatpush1.bf16.msra.mxu0 %v741
        %884 = vmatprep.subr.bf16.mxu0 %v740
        %885 = vmatpush1.bf16.msra.mxu0 %v739
        %886 = vmatprep.subr.bf16.mxu0 %v738
        %887 = vmatpush1.bf16.msra.mxu0 %v737
        %888 = vmatprep.subr.bf16.mxu0 %v736
        %889 = vmatpush1.bf16.msra.mxu0 %v735
        %890 = vmatprep.subr.bf16.mxu0 %v766
        %891 = vmatpush2.bf16.msra.mxu0 %v765
        %892 = vmatprep.subr.bf16.mxu0 %v764
        %893 = vmatpush2.bf16.msra.mxu0 %v763
        %894 = vmatprep.subr.bf16.mxu0 %v762
        %895 = vmatpush2.bf16.msra.mxu0 %v761
        %896 = vmatprep.subr.bf16.mxu0 %v760
        %897 = vmatpush2.bf16.msra.mxu0 %v759
        %898 = vmatprep.subr.bf16.mxu0 %v758
        %899 = vmatpush2.bf16.msra.mxu0 %v757
        %900 = vmatprep.subr.bf16.mxu0 %v756
        %901 = vmatpush2.bf16.msra.mxu0 %v755
        %902 = vmatprep.subr.bf16.mxu0 %v754
        %903 = vmatpush2.bf16.msra.mxu0 %v753
        %904 = vmatprep.subr.bf16.mxu0 %v752
        %905 = vmatpush2.bf16.msra.mxu0 %v751
        %906 = vmatprep.mubr.bf16.mxu0 %v506
        %907 = vmatmul.mubr.bf16.gmra.mxu0 %v505
        %v908 = vpop.f32.mrf.mxu0
        %v909 = vadd.f32 %v866, %v908
        %v910 = vpop.f32.mrf.mxu0
        %v911 = vadd.f32 %v868, %v910
        %v912 = vpop.f32.mrf.mxu0
        %v913 = vadd.f32 %v870, %v912
        %v914 = vpop.f32.mrf.mxu0
        %v915 = vadd.f32 %v872, %v914
        %916 = vdwg.mxu0
        %v917 = vadd.f32 %v419, %v909
        %v918 = vadd.f32 %v420, %v911
        %v919 = vadd.f32 %v421, %v913
        %v920 = vadd.f32 %v422, %v915
        %921 = vst [vmem:[#allocation2] sm:$0xff] %v917
        %922 = vst [vmem:[#allocation2 + $0x8] sm:$0xff] %v918
        %923 = vst [vmem:[#allocation2 + $0x10] sm:$0xff] %v919
        %924 = vst [vmem:[#allocation2 + $0x18] sm:$0xff] %v920
        %p925 = scmp.eq.s32.totalorder %s23, 4
        // Predicated region
        $region68: #{resnet_forward.22} parent=58 // pred_check
          %p926 = pneg %p925
        $region69: #{resnet_forward.22} parent=58 // pred_check_branch
          %928 = sbr.rel (%p926) target = $region71
        $region70: #{resnet_forward.22} parent=58 // pred_region
          %v929 = vld [vmem:[#allocation2] sm:$0xff]
          %v930 = vld [vmem:[#allocation2 + $0x8] sm:$0xff]
          %v931 = vld [vmem:[#allocation2 + $0x10] sm:$0xff]
          %v932 = vld [vmem:[#allocation2 + $0x18] sm:$0xff]
          %v933 = vld [vmem:[%s380] sm:$0x3]
          %v935 = vlaneseq
          %v936 = vshrl.u32 %v935, 7
          %v937 = vsub.s32 0, %v936
          %v938 = vrot.slane %v933, %v937
          %v939 = vlaneseq
          %v940 = vshrl.u32 %v939, 7
          %v941 = vsub.s32 1, %v940
          %v942 = vrot.slane %v933, %v941
          %v945 = vmul.f32 %v929, %v938
          %v946 = vmul.f32 %v930, %v942
          %v947 = vmul.f32 %v931, %v938
          %v948 = vmul.f32 %v932, %v942
          %v949 = vld [vmem:[%s385] sm:$0x3]
          %v951 = vlaneseq
          %v952 = vshrl.u32 %v951, 7
          %v953 = vsub.s32 0, %v952
          %v954 = vrot.slane %v949, %v953
          %v955 = vlaneseq
          %v956 = vshrl.u32 %v955, 7
          %v957 = vsub.s32 1, %v956
          %v958 = vrot.slane %v949, %v957
          %v961 = vadd.f32 %v945, %v954
          %v962 = vadd.f32 %v946, %v958
          %v963 = vadd.f32 %v947, %v954
          %v964 = vadd.f32 %v948, %v958
          %v965 = vld [vmem:[%s396] sm:$0xff]
          %v966 = vld [vmem:[%s396 + $0x8] sm:$0xff]
          %v967 = vunpack.c.l.bf16 %v965
          %v968 = vunpack.c.h.bf16 %v965
          %v969 = vunpack.c.l.bf16 %v966
          %v970 = vunpack.c.h.bf16 %v966
          %v971 = vadd.f32 %v961, %v967
          %v972 = vadd.f32 %v962, %v968
          %v973 = vadd.f32 %v963, %v969
          %v974 = vadd.f32 %v964, %v970
          %v975 = vmax.f32 %v971, 0.0
          %v976 = vmax.f32 %v972, 0.0
          %v977 = vmax.f32 %v973, 0.0
          %v978 = vmax.f32 %v974, 0.0
          %v979 = vpack.c.bf16 %v977, %v975
          %v980 = vpack.c.bf16 %v978, %v976
          %v983 = vunpack.c.l.b16 %v979
          %v984 = vunpack.c.l.b16 %v980
          %v985 = vunpack.c.h.b16 %v979
          %v986 = vunpack.c.h.b16 %v980
          %v987 = vpack.c.b16 %v984, %v983
          %v988 = vpack.c.b16 %v986, %v985
          %991 = vst [vmem:[%s408] sm:$0xff] %v987
          %992 = vst [vmem:[%s408 + $0x8] sm:$0xff] %v988
        $region71: #{resnet_forward.22} parent=58 // pred_fallthru
          _
        %s993 = smul.u32 2, %s21
        %s994 = smul.u32 2, %s22
        %p995 = scmp.lt.s32.totalorder %s993, 1
        %s996 = scalar_select %p995, %s993, 1
        %p997 = scmp.lt.s32.totalorder %s994, 1
        %s998 = scalar_select %p997, %s994, 1
        %s999 = smul.addr %s996, 2
        %s1000 = sadd.s32 %s998, %s999
        %s1001 = smul.addr %s1000, 4
        %s1002 = scalar_lea.vmem %s5, %s1001
        // Predicated region
        $region72: #{resnet_forward.22} parent=58 // pred_check
          %p1003 = pneg %p191
        $region73: #{resnet_forward.22} parent=58 // pred_check_branch
          %1005 = sbr.rel (%p1003) target = $region75
        $region74: #{resnet_forward.22} parent=58 // pred_region
          %s1006 = smul.u32 2, %s21
          %s1007 = smul.u32 2, %s22
        $region75: #{resnet_forward.22} parent=58 // pred_fallthru
          _
        // Predicated region
        $region76: #{resnet_forward.22} parent=58 // pred_check
          %p1008 = pneg %p191
        $region77: #{resnet_forward.22} parent=58 // pred_check_branch
          %1010 = sbr.rel (%p1008) target = $region79
        $region78: #{resnet_forward.22} parent=58 // pred_region
          %s1011 = smul.u32 2, %s21
          %s1012 = smul.u32 2, %s22
          %p1013 = scmp.lt.s32.totalorder %s1011, 1
          %s1014 = scalar_select %p1013, %s1011, 1
          %p1015 = scmp.lt.s32.totalorder %s1012, 1
          %s1016 = scalar_select %p1015, %s1012, 1
          %s1017 = smul.addr %s1014, 2
          %s1018 = sadd.s32 %s1016, %s1017
          %s1019 = smul.addr %s1018, 4
          %s1020 = scalar_lea.vmem %s5, %s1019
        $region79: #{resnet_forward.22} parent=58 // pred_fallthru
          _
      $region59: #{resnet_forward.22} parent=5 // pred_fallthru
        _
      %p1021 = scmp.le.s32.totalorder 2, %s11
      // Predicated region
      $region80: #{resnet_forward.22} parent=5 // pred_check
        %p1022 = pneg %p1021
      $region81: #{resnet_forward.22} parent=5 // pred_check_branch
        %1024 = sbr.rel (%p1022) target = $region83
      $region82: #{resnet_forward.22} parent=5 // pred_region
        %s1025 = ssub.s32 %s11, 2
      $region83: #{resnet_forward.22} parent=5 // pred_fallthru
        _
    $region6: #{resnet_forward.22} parent=1 // loop_footer
      %s15 = sadd.s32 1, %s11
    $region7: #{resnet_forward.22} parent=1 // loop_footer_branch
      %10 = sbr.rel target = $region3
    $region8: #{resnet_forward.22} parent=1 // loop_exit
      _

// kernel: resnet_forward.23
$region0: #{resnet_forward.23}
  #allocation0 [shape = 'u32[]', space=smem, size = 0x4, offset = 0x4, fixed_abs, tag = 'smem constant byte address 0x4 - core index']
  #allocation1 [shape = 'u32[144,128]{1,0:T(1,128)}', space=vmem, size = 0x12000, scoped, tag = 'internal scratch']
  %s0 = inlined_call_operand.vmem [shape: bf16[2,4,256], index: 0, kind: input, shape index: {}]
  %s1 = inlined_call_operand.vmem [shape: f32[256,10], index: 1, kind: input, shape index: {}]
  %s2 = inlined_call_operand.vmem [shape: f32[1,10], index: 2, kind: input, shape index: {}]
  %s3 = inlined_call_operand.hbm [shape: f32[2,10], index: 3, kind: output, shape index: {}]
  %s4 = sld [smem:[#allocation0]]
  $region22: #{resnet_forward.23} parent=0
    _
  %s6 = ssub.s32 1, %s4
  %s7 = scalar_select 0, %s6, %s4
  $region1: #{resnet_forward.23} parent=0
    #allocation2 [shape = 'u8[1024]{0}', space=vmem, size = 0x400, scoped, tag = 'output window, operand 0, single buffered']
    #allocation3 [shape = 's32[1]{0}', space=sflag, size = 0x4, scoped, tag = 'scoped memory for resnet_forward.23']
    %8 = vsyncpa [#allocation3], 0
    // Predicated region
    $region2: #{resnet_forward.23} parent=1 // pred_check
      _
    $region3: #{resnet_forward.23} parent=1 // pred_check_branch
      %10 = sbr.rel (0) target = $region5
    $region4: #{resnet_forward.23} parent=1 // pred_region
      _
    $region5: #{resnet_forward.23} parent=1 // pred_fallthru
      _
    // Predicated region
    $region6: #{resnet_forward.23} parent=1 // pred_check
      _
    $region7: #{resnet_forward.23} parent=1 // pred_check_branch
      %12 = sbr.rel (0) target = $region9
    $region8: #{resnet_forward.23} parent=1 // pred_region
      _
    $region9: #{resnet_forward.23} parent=1 // pred_fallthru
      _
    // Predicated region
    $region10: #{resnet_forward.23} parent=1 // pred_check
      _
    $region11: #{resnet_forward.23} parent=1 // pred_check_branch
      %14 = sbr.rel (0) target = $region13
    $region12: #{resnet_forward.23} parent=1 // pred_region
      _
    $region13: #{resnet_forward.23} parent=1 // pred_fallthru
      _
    %v15 = vld [vmem:[%s0] sm:$0xf]
    %v16 = vld [vmem:[%s0 + $0x4] sm:$0xf]
    %v17 = vunpack.c.l.bf16 %v15
    %v18 = vunpack.c.l.bf16 %v16
    %v21 = vcombine.high %v17, %v17
    %v22 = vcombine.high %v18, %v18
    %vm25 = vcmask 1043456
    %v26 = vsel %vm25, %v17, 0.0
    %v27 = vrot.slane %v26, 4
    %v28 = vadd.f32 %v26, %v27
    %v29 = vrot.slane %v28, 2
    %v30 = vadd.f32 %v28, %v29
    %v31 = vrot.slane %v30, 1
    %v32 = vadd.f32 %v30, %v31
    %v33 = vsel %vm25, %v21, 0.0
    %v34 = vrot.slane %v33, 4
    %v35 = vadd.f32 %v33, %v34
    %v36 = vrot.slane %v35, 2
    %v37 = vadd.f32 %v35, %v36
    %v38 = vrot.slane %v37, 1
    %v39 = vadd.f32 %v37, %v38
    %v40 = vsel %vm25, %v18, 0.0
    %v41 = vrot.slane %v40, 4
    %v42 = vadd.f32 %v40, %v41
    %v43 = vrot.slane %v42, 2
    %v44 = vadd.f32 %v42, %v43
    %v45 = vrot.slane %v44, 1
    %v46 = vadd.f32 %v44, %v45
    %v47 = vsel %vm25, %v22, 0.0
    %v48 = vrot.slane %v47, 4
    %v49 = vadd.f32 %v47, %v48
    %v50 = vrot.slane %v49, 2
    %v51 = vadd.f32 %v49, %v50
    %v52 = vrot.slane %v51, 1
    %v53 = vadd.f32 %v51, %v52
    %v54 = vrcp.pop 4.0
    %v55 = vmul.f32 %v32, %v54
    %v56 = vmul.f32 %v39, %v54
    %v57 = vmul.f32 %v46, %v54
    %v58 = vmul.f32 %v53, %v54
    %v59 = vld [vmem:[%s1] sm:$0xff]
    %v60 = vld [vmem:[%s1 + $0x8] sm:$0xff]
    %v61 = vld [vmem:[%s1 + $0x10] sm:$0xff]
    %v62 = vld [vmem:[%s1 + $0x18] sm:$0xff]
    %v63 = vld [vmem:[%s1 + $0x20] sm:$0xff]
    %v64 = vld [vmem:[%s1 + $0x28] sm:$0xff]
    %v65 = vld [vmem:[%s1 + $0x30] sm:$0xff]
    %v66 = vld [vmem:[%s1 + $0x38] sm:$0xff]
    %v67 = vld [vmem:[%s1 + $0x40] sm:$0xff]
    %v68 = vld [vmem:[%s1 + $0x48] sm:$0xff]
    %v69 = vld [vmem:[%s1 + $0x50] sm:$0xff]
    %v70 = vld [vmem:[%s1 + $0x58] sm:$0xff]
    %v71 = vld [vmem:[%s1 + $0x60] sm:$0xff]
    %v72 = vld [vmem:[%s1 + $0x68] sm:$0xff]
    %v73 = vld [vmem:[%s1 + $0x70] sm:$0xff]
    %v74 = vld [vmem:[%s1 + $0x78] sm:$0xff]
    %v75 = vld [vmem:[%s1 + $0x80] sm:$0xff]
    %v76 = vld [vmem:[%s1 + $0x88] sm:$0xff]
    %v77 = vld [vmem:[%s1 + $0x90] sm:$0xff]
    %v78 = vld [vmem:[%s1 + $0x98] sm:$0xff]
    %v79 = vld [vmem:[%s1 + $0xa0] sm:$0xff]
    %v80 = vld [vmem:[%s1 + $0xa8] sm:$0xff]
    %v81 = vld [vmem:[%s1 + $0xb0] sm:$0xff]
    %v82 = vld [vmem:[%s1 + $0xb8] sm:$0xff]
    %v83 = vld [vmem:[%s1 + $0xc0] sm:$0xff]
    %v84 = vld [vmem:[%s1 + $0xc8] sm:$0xff]
    %v85 = vld [vmem:[%s1 + $0xd0] sm:$0xff]
    %v86 = vld [vmem:[%s1 + $0xd8] sm:$0xff]
    %v87 = vld [vmem:[%s1 + $0xe0] sm:$0xff]
    %v88 = vld [vmem:[%s1 + $0xe8] sm:$0xff]
    %v89 = vld [vmem:[%s1 + $0xf0] sm:$0xff]
    %v90 = vld [vmem:[%s1 + $0xf8] sm:$0xff]
    %v91 = vld [vmem:[%s2] sm:$0x1]
    %v93 = vlaneseq
    %v94 = vshrl.u32 %v93, 7
    %v95 = vsub.s32 0, %v94
    %v96 = vrot.slane %v91, %v95
    %vm102 = vcmask 1041409
    %v103 = vsel %vm102, %v57, %v55
    %v104 = vsel %vm102, %v58, %v56
    %107 = vmatprep.subr.mxu0 0.0
    %108 = vmatpush1.msra.mxu0 %v74
    %109 = vmatprep.subr.mxu0 0.0
    %110 = vmatpush1.msra.mxu0 %v73
    %111 = vmatprep.subr.mxu0 0.0
    %112 = vmatpush1.msra.mxu0 %v72
    %113 = vmatprep.subr.mxu0 0.0
    %114 = vmatpush1.msra.mxu0 %v71
    %115 = vmatprep.subr.mxu0 0.0
    %116 = vmatpush1.msra.mxu0 %v70
    %117 = vmatprep.subr.mxu0 0.0
    %118 = vmatpush1.msra.mxu0 %v69
    %119 = vmatprep.subr.mxu0 0.0
    %120 = vmatpush1.msra.mxu0 %v68
    %121 = vmatprep.subr.mxu0 0.0
    %122 = vmatpush1.msra.mxu0 %v67
    %123 = vmatprep.subr.mxu0 0.0
    %124 = vmatpush1.msra.mxu0 %v66
    %125 = vmatprep.subr.mxu0 0.0
    %126 = vmatpush1.msra.mxu0 %v65
    %127 = vmatprep.subr.mxu0 0.0
    %128 = vmatpush1.msra.mxu0 %v64
    %129 = vmatprep.subr.mxu0 0.0
    %130 = vmatpush1.msra.mxu0 %v63
    %131 = vmatprep.subr.mxu0 0.0
    %132 = vmatpush1.msra.mxu0 %v62
    %133 = vmatprep.subr.mxu0 0.0
    %134 = vmatpush1.msra.mxu0 %v61
    %135 = vmatprep.subr.mxu0 0.0
    %136 = vmatpush1.msra.mxu0 %v60
    %137 = vmatprep.subr.mxu0 0.0
    %138 = vmatpush1.msra.mxu0 %v59
    %139 = vmatprep.subr.mxu0 0.0
    %140 = vmatpush2.msra.mxu0 %v90
    %141 = vmatprep.subr.mxu0 0.0
    %142 = vmatpush2.msra.mxu0 %v89
    %143 = vmatprep.subr.mxu0 0.0
    %144 = vmatpush2.msra.mxu0 %v88
    %145 = vmatprep.subr.mxu0 0.0
    %146 = vmatpush2.msra.mxu0 %v87
    %147 = vmatprep.subr.mxu0 0.0
    %148 = vmatpush2.msra.mxu0 %v86
    %149 = vmatprep.subr.mxu0 0.0
    %150 = vmatpush2.msra.mxu0 %v85
    %151 = vmatprep.subr.mxu0 0.0
    %152 = vmatpush2.msra.mxu0 %v84
    %153 = vmatprep.subr.mxu0 0.0
    %154 = vmatpush2.msra.mxu0 %v83
    %155 = vmatprep.subr.mxu0 0.0
    %156 = vmatpush2.msra.mxu0 %v82
    %157 = vmatprep.subr.mxu0 0.0
    %158 = vmatpush2.msra.mxu0 %v81
    %159 = vmatprep.subr.mxu0 0.0
    %160 = vmatpush2.msra.mxu0 %v80
    %161 = vmatprep.subr.mxu0 0.0
    %162 = vmatpush2.msra.mxu0 %v79
    %163 = vmatprep.subr.mxu0 0.0
    %164 = vmatpush2.msra.mxu0 %v78
    %165 = vmatprep.subr.mxu0 0.0
    %166 = vmatpush2.msra.mxu0 %v77
    %167 = vmatprep.subr.mxu0 0.0
    %168 = vmatpush2.msra.mxu0 %v76
    %169 = vmatprep.subr.mxu0 0.0
    %170 = vmatpush2.msra.mxu0 %v75
    %171 = vmatprep.mubr.f32.mxu0 %v104
    %172 = vmatmul.mubr.f32.gmra.mxu0 %v103
    %v173 = vpop.f32.mrf.mxu0
    %v174 = vadd.f32 %v96, %v173
    %v175 = vpop.f32.mrf.mxu0
    %176 = vdwg.mxu0
    %vm177 = vcmask 74752
    %178 = vst.msk [vmem:[#allocation2] sm:$0x3] %vm177, %v174
    // Predicated region
    $region14: #{resnet_forward.23} parent=1 // pred_check
      _
    $region15: #{resnet_forward.23} parent=1 // pred_check_branch
      %180 = sbr.rel (0) target = $region17
    $region16: #{resnet_forward.23} parent=1 // pred_region
      %s182 = ssub.s32 32, 32
      %183 = vsyncadd [#allocation3], %s182
      %s185 = sshll.u32 [#allocation2], 4
      %s186 = int_to_ptr.vmem [resolvable:$true] %s185
      %188 = dma.vmem_to_hbm [thread:$0]  %s186, 32, %s3, [#allocation3]
    $region17: #{resnet_forward.23} parent=1 // pred_fallthru
      _
    // Predicated region
    $region18: #{resnet_forward.23} parent=1 // pred_check
      _
    $region19: #{resnet_forward.23} parent=1 // pred_check_branch
      %190 = sbr.rel (0) target = $region21
    $region20: #{resnet_forward.23} parent=1 // pred_region
      %191 = dma.done [#allocation3], 32
    $region21: #{resnet_forward.23} parent=1 // pred_fallthru
      _
    %192 = vsyncpa [#allocation3], 1

</llo_original>
